<compile_context>
chip_gen: v5e
topology: v5e:2x2
jax: 0.10.0
libtpu: 0.0.40
codegen_flags: <defaults>
</compile_context>

<pallas_src>
import functools

import jax
import jax.numpy as jnp
from jax.experimental import pallas as pl
from jax.experimental.pallas import tpu as pltpu


def mlp_kernel(x_ref, w1_ref, b1_ref, w2_ref, b2_ref, w3_ref, b3_ref, o_ref):
    # Layer 1: Linear(inp -> 2048) + ReLU.  bf16 MXU inputs, f32 accumulation.
    h1 = jnp.dot(x_ref[...], w1_ref[...], preferred_element_type=jnp.float32)
    h1 = jnp.maximum(h1 + b1_ref[...], 0.0).astype(jnp.bfloat16)

    # Layer 2: Linear(2048 -> 1024) + ReLU.
    h2 = jnp.dot(h1, w2_ref[...], preferred_element_type=jnp.float32)
    h2 = jnp.maximum(h2 + b2_ref[...], 0.0).astype(jnp.bfloat16)

    # Layer 3: Linear(1024 -> tar), no activation.  Keep f32 for the output.
    out = jnp.dot(h2, w3_ref[...], preferred_element_type=jnp.float32) + b3_ref[...]
    o_ref[...] = out.astype(o_ref.dtype)


@functools.partial(jax.jit, static_argnames=("block_b",))
def custom_network_forward(x, params, *, block_b=None):
    """Fused 3-layer MLP forward pass.  Returns f32 (B, tar)."""
    w1, b1, w2, b2, w3, b3 = params
    B, inp = x.shape
    h1 = w1.shape[1]          # 2048
    h2 = w2.shape[1]          # 1024
    tar = w3.shape[1]

    # bf16 MXU inputs; biases stay f32 (added onto the f32 accumulator).
    x_bf = x.astype(jnp.bfloat16)
    w1_bf = w1.astype(jnp.bfloat16)
    w2_bf = w2.astype(jnp.bfloat16)
    w3_bf = w3.astype(jnp.bfloat16)
    b1r = b1.astype(jnp.float32).reshape(1, h1)
    b2r = b2.astype(jnp.float32).reshape(1, h2)
    b3r = b3.astype(jnp.float32).reshape(1, tar)

    # Batch tile: use the whole batch when small (a full-dim block is always
    # layout-legal); otherwise a 256-row tile (multiple of 8 sublanes).
    if block_b is None:
        block_b = B if B <= 256 else 256
    num_tiles = pl.cdiv(B, block_b)

    # Weights/biases have a constant index_map -> resident across the grid;
    # single-buffer them to free VMEM (double-buffering W2 alone cost 2x4 MB).
    def weight_spec(shape):
        return pl.BlockSpec(shape, lambda i: (0, 0), pipeline_mode=pl.Buffered(1))

    grid_spec = pl.GridSpec(
        grid=(num_tiles,),
        in_specs=[
            pl.BlockSpec((block_b, inp), lambda i: (i, 0)),  # x tile
            weight_spec((inp, h1)),                          # W1 (resident)
            weight_spec((1, h1)),                            # b1
            weight_spec((h1, h2)),                           # W2
            weight_spec((1, h2)),                            # b2
            weight_spec((h2, tar)),                          # W3
            weight_spec((1, tar)),                           # b3
        ],
        # TODO(synk): if num_tar grows and the batch is large, pad the output
        # last dim to a multiple of 128 (lane-dense, unmasked stores) and
        # slice in the wrapper; at tar=16 the masked store cost is negligible
        # next to the weight DMA.
        out_specs=pl.BlockSpec((block_b, tar), lambda i: (i, 0)),
    )

    # Only shard the batch axis across TensorCores when there is more than one
    # tile; otherwise megacore sharding just duplicates the weight DMA.
    semantics = ("parallel",) if num_tiles > 1 else ("arbitrary",)

    flops = 2 * B * (inp * h1 + h1 * h2 + h2 * tar)
    bytes_accessed = (
        x_bf.size * 2
        + (w1_bf.size + w2_bf.size + w3_bf.size) * 2
        + (b1r.size + b2r.size + b3r.size) * 4
        + B * tar * 4
    )

    return pl.pallas_call(
        mlp_kernel,
        out_shape=jax.ShapeDtypeStruct((B, tar), jnp.float32),
        grid_spec=grid_spec,
        compiler_params=pltpu.CompilerParams(dimension_semantics=semantics),
        cost_estimate=pl.CostEstimate(
            flops=flops, transcendentals=0, bytes_accessed=bytes_accessed
        ),
    )(x_bf, w1_bf, b1r, w2_bf, b2r, w3_bf, b3r)


def init_params(key, inp_size, tar_size, dtype=jnp.float32):
    """Deterministic init mimicking nn.Linear's uniform(-1/sqrt(fan_in), 1/sqrt(fan_in)).

    Weights are stored as (in_features, out_features), i.e. PyTorch W.T.
    """
    dims = [(inp_size, 2048), (2048, 1024), (1024, tar_size)]
    params = []
    for (fan_in, fan_out) in dims:
        key, kw, kb = jax.random.split(key, 3)
        bound = 1.0 / (fan_in ** 0.5)
        w = jax.random.uniform(kw, (fan_in, fan_out), dtype, -bound, bound)
        b = jax.random.uniform(kb, (fan_out,), dtype, -bound, bound)
        params += [w, b]
    return tuple(params)


if __name__ == "__main__":
    key = jax.random.PRNGKey(0)

    batch = 8
    num_inp = 32   # options.num_inp
    num_tar = 16   # options.num_tar

    kx, kp = jax.random.split(key)
    x = jax.random.normal(kx, (batch, num_inp), jnp.float32)
    params = init_params(kp, num_inp, num_tar)

    out = custom_network_forward(x, params)
    out = jax.block_until_ready(out)

    # Pure-JAX reference mirroring the kernel's bf16-input / f32-accumulate math.
    w1, b1, w2, b2, w3, b3 = params
    xb = x.astype(jnp.bfloat16)
    r1 = jnp.maximum(
        jnp.dot(xb, w1.astype(jnp.bfloat16), preferred_element_type=jnp.float32) + b1, 0.0
    ).astype(jnp.bfloat16)
    r2 = jnp.maximum(
        jnp.dot(r1, w2.astype(jnp.bfloat16), preferred_element_type=jnp.float32) + b2, 0.0
    ).astype(jnp.bfloat16)
    ref = jnp.dot(r2, w3.astype(jnp.bfloat16), preferred_element_type=jnp.float32) + b3

    # Also sanity-check against full-f32 math with a bf16-appropriate tolerance.
    f1 = jnp.maximum(x @ w1 + b1, 0.0)
    f2 = jnp.maximum(f1 @ w2 + b2, 0.0)
    ref_f32 = f2 @ w3 + b3

    assert out.shape == (batch, num_tar)
    assert jnp.allclose(out, ref, atol=2e-2, rtol=2e-2)
    assert jnp.allclose(out, ref_f32, atol=1e-1, rtol=5e-2)

    print("KERNEL_OK")
</pallas_src>

<mosaic_0001>
module attributes {stable_mosaic.version = 11 : i64} {
  func.func @mlp_kernel(%arg0: i32, %arg1: memref<8x32xbf16, #tpu.memory_space<vmem>>, %arg2: memref<32x2048xbf16, #tpu.memory_space<vmem>>, %arg3: memref<1x2048xf32, #tpu.memory_space<vmem>>, %arg4: memref<2048x1024xbf16, #tpu.memory_space<vmem>>, %arg5: memref<1x1024xf32, #tpu.memory_space<vmem>>, %arg6: memref<1024x16xbf16, #tpu.memory_space<vmem>>, %arg7: memref<1x16xf32, #tpu.memory_space<vmem>>, %arg8: memref<8x16xf32, #tpu.memory_space<vmem>>) attributes {dimension_semantics = [#tpu.dimension_semantics<arbitrary>], iteration_bounds = array<i64: 1>, scalar_prefetch = 0 : i64, scratch_operands = 0 : i64, tpu.core_type = #tpu.core_type<tc>, window_params = [{transform_indices = @transform_0, window_bounds = array<i64: 8, 32>}, {pipeline_mode = #tpu.pipeline_mode<synchronous>, transform_indices = @transform_1, window_bounds = array<i64: 32, 2048>}, {pipeline_mode = #tpu.pipeline_mode<synchronous>, transform_indices = @transform_2, window_bounds = array<i64: 1, 2048>}, {pipeline_mode = #tpu.pipeline_mode<synchronous>, transform_indices = @transform_3, window_bounds = array<i64: 2048, 1024>}, {pipeline_mode = #tpu.pipeline_mode<synchronous>, transform_indices = @transform_4, window_bounds = array<i64: 1, 1024>}, {pipeline_mode = #tpu.pipeline_mode<synchronous>, transform_indices = @transform_5, window_bounds = array<i64: 1024, 16>}, {pipeline_mode = #tpu.pipeline_mode<synchronous>, transform_indices = @transform_6, window_bounds = array<i64: 1, 16>}, {transform_indices = @transform_7, window_bounds = array<i64: 8, 16>}]} {
    %c0 = arith.constant 0 : index
    %c0_0 = arith.constant 0 : index
    %0 = vector.load %arg1[%c0, %c0_0] : memref<8x32xbf16, #tpu.memory_space<vmem>>, vector<8x32xbf16>
    %c0_1 = arith.constant 0 : index
    %c0_2 = arith.constant 0 : index
    %1 = vector.load %arg2[%c0_1, %c0_2] : memref<32x2048xbf16, #tpu.memory_space<vmem>>, vector<32x2048xbf16>
    %cst = arith.constant dense<0.000000e+00> : vector<8x2048xf32>
    %2 = tpu.matmul %0, %1, %cst {dimension_numbers = #tpu.dot_dimension_numbers<[1], [0], [0], [1], [0, 0, 1, 1], [], []>} : vector<8x32xbf16>, vector<32x2048xbf16>, vector<8x2048xf32> -> vector<8x2048xf32>
    %c0_3 = arith.constant 0 : index
    %c0_4 = arith.constant 0 : index
    %3 = vector.load %arg3[%c0_3, %c0_4] : memref<1x2048xf32, #tpu.memory_space<vmem>>, vector<1x2048xf32>
    %4 = vector.broadcast %3 : vector<1x2048xf32> to vector<8x2048xf32>
    %5 = arith.addf %2, %4 : vector<8x2048xf32>
    %cst_5 = arith.constant 0.000000e+00 : f32
    %6 = vector.broadcast %cst_5 : f32 to vector<8x2048xf32>
    %7 = arith.maximumf %5, %6 : vector<8x2048xf32>
    %8 = arith.truncf %7 : vector<8x2048xf32> to vector<8x2048xbf16>
    %c0_6 = arith.constant 0 : index
    %c0_7 = arith.constant 0 : index
    %9 = vector.load %arg4[%c0_6, %c0_7] : memref<2048x1024xbf16, #tpu.memory_space<vmem>>, vector<2048x1024xbf16>
    %cst_8 = arith.constant dense<0.000000e+00> : vector<8x1024xf32>
    %10 = tpu.matmul %8, %9, %cst_8 {dimension_numbers = #tpu.dot_dimension_numbers<[1], [0], [0], [1], [0, 0, 1, 1], [], []>} : vector<8x2048xbf16>, vector<2048x1024xbf16>, vector<8x1024xf32> -> vector<8x1024xf32>
    %c0_9 = arith.constant 0 : index
    %c0_10 = arith.constant 0 : index
    %11 = vector.load %arg5[%c0_9, %c0_10] : memref<1x1024xf32, #tpu.memory_space<vmem>>, vector<1x1024xf32>
    %12 = vector.broadcast %11 : vector<1x1024xf32> to vector<8x1024xf32>
    %13 = arith.addf %10, %12 : vector<8x1024xf32>
    %cst_11 = arith.constant 0.000000e+00 : f32
    %14 = vector.broadcast %cst_11 : f32 to vector<8x1024xf32>
    %15 = arith.maximumf %13, %14 : vector<8x1024xf32>
    %16 = arith.truncf %15 : vector<8x1024xf32> to vector<8x1024xbf16>
    %c0_12 = arith.constant 0 : index
    %c0_13 = arith.constant 0 : index
    %17 = vector.load %arg6[%c0_12, %c0_13] : memref<1024x16xbf16, #tpu.memory_space<vmem>>, vector<1024x16xbf16>
    %cst_14 = arith.constant dense<0.000000e+00> : vector<8x16xf32>
    %18 = tpu.matmul %16, %17, %cst_14 {dimension_numbers = #tpu.dot_dimension_numbers<[1], [0], [0], [1], [0, 0, 1, 1], [], []>} : vector<8x1024xbf16>, vector<1024x16xbf16>, vector<8x16xf32> -> vector<8x16xf32>
    %c0_15 = arith.constant 0 : index
    %c0_16 = arith.constant 0 : index
    %19 = vector.load %arg7[%c0_15, %c0_16] : memref<1x16xf32, #tpu.memory_space<vmem>>, vector<1x16xf32>
    %20 = vector.broadcast %19 : vector<1x16xf32> to vector<8x16xf32>
    %21 = arith.addf %18, %20 : vector<8x16xf32>
    %c0_17 = arith.constant 0 : index
    %c0_18 = arith.constant 0 : index
    %22 = vector.load %arg8[%c0_17, %c0_18] : memref<8x16xf32, #tpu.memory_space<vmem>>, vector<8x16xf32>
    tpu.vector_store %arg8[%c0_17, %c0_18], %21 {strides = array<i32>} : memref<8x16xf32, #tpu.memory_space<vmem>>, vector<8x16xf32>,
    return
  }
  func.func @transform_0(%arg0: i32) -> (i32, i32) {
    %c0_i32 = arith.constant 0 : i32
    %c0_i32_0 = arith.constant 0 : i32
    return %arg0, %c0_i32 : i32, i32
  }
  func.func @transform_1(%arg0: i32) -> (i32, i32) {
    %c0_i32 = arith.constant 0 : i32
    %c0_i32_0 = arith.constant 0 : i32
    %c0_i32_1 = arith.constant 0 : i32
    return %c0_i32, %c0_i32_0 : i32, i32
  }
  func.func @transform_2(%arg0: i32) -> (i32, i32) {
    %c0_i32 = arith.constant 0 : i32
    %c0_i32_0 = arith.constant 0 : i32
    %c0_i32_1 = arith.constant 0 : i32
    return %c0_i32, %c0_i32_0 : i32, i32
  }
  func.func @transform_3(%arg0: i32) -> (i32, i32) {
    %c0_i32 = arith.constant 0 : i32
    %c0_i32_0 = arith.constant 0 : i32
    %c0_i32_1 = arith.constant 0 : i32
    return %c0_i32, %c0_i32_0 : i32, i32
  }
  func.func @transform_4(%arg0: i32) -> (i32, i32) {
    %c0_i32 = arith.constant 0 : i32
    %c0_i32_0 = arith.constant 0 : i32
    %c0_i32_1 = arith.constant 0 : i32
    return %c0_i32, %c0_i32_0 : i32, i32
  }
  func.func @transform_5(%arg0: i32) -> (i32, i32) {
    %c0_i32 = arith.constant 0 : i32
    %c0_i32_0 = arith.constant 0 : i32
    %c0_i32_1 = arith.constant 0 : i32
    return %c0_i32, %c0_i32_0 : i32, i32
  }
  func.func @transform_6(%arg0: i32) -> (i32, i32) {
    %c0_i32 = arith.constant 0 : i32
    %c0_i32_0 = arith.constant 0 : i32
    %c0_i32_1 = arith.constant 0 : i32
    return %c0_i32, %c0_i32_0 : i32, i32
  }
  func.func @transform_7(%arg0: i32) -> (i32, i32) {
    %c0_i32 = arith.constant 0 : i32
    %c0_i32_0 = arith.constant 0 : i32
    return %arg0, %c0_i32 : i32, i32
  }
}

</mosaic_0001>

<llo_original>
// kernel: custom_network_forward.1
$region0: #{custom_network_forward.1}
  #allocation0 [shape = 'u32[]', space=smem, size = 0x4, offset = 0x4, fixed_abs, tag = 'smem constant byte address 0x4 - core index']
  #allocation1 [shape = 'u32[72,128]{1,0:T(1,128)}', space=vmem, size = 0x9000, scoped, tag = 'internal scratch']
  %s0 = inlined_call_operand.vmem [shape: bf16[8,32], index: 0, kind: input, shape index: {}]
  %s1 = inlined_call_operand.vmem [shape: bf16[32,2048], index: 1, kind: input, shape index: {}]
  %s2 = inlined_call_operand.vmem [shape: f32[1,2048], index: 2, kind: input, shape index: {}]
  %s3 = inlined_call_operand.vmem [shape: bf16[2048,1024], index: 3, kind: input, shape index: {}]
  %s4 = inlined_call_operand.vmem [shape: f32[1,1024], index: 4, kind: input, shape index: {}]
  %s5 = inlined_call_operand.vmem [shape: bf16[1024,16], index: 5, kind: input, shape index: {}]
  %s6 = inlined_call_operand.vmem [shape: f32[1,16], index: 6, kind: input, shape index: {}]
  %s7 = inlined_call_operand.hbm [shape: f32[8,16], index: 7, kind: output, shape index: {}]
  %s8 = sld [smem:[#allocation0]]
  $region38: #{custom_network_forward.1} parent=0
    _
  %s10 = ssub.s32 1, %s8
  %s11 = scalar_select 0, %s10, %s8
  $region1: #{custom_network_forward.1} parent=0
    #allocation2 [shape = 'u8[4096]{0}', space=vmem, size = 0x1000, scoped, tag = 'output window, operand 0, single buffered']
    #allocation3 [shape = 's32[1]{0}', space=sflag, size = 0x4, scoped, tag = 'scoped memory for custom_network_forward.1']
    %12 = vsyncpa [#allocation3], 0
    // Predicated region
    $region2: #{custom_network_forward.1} parent=1 // pred_check
      _
    $region3: #{custom_network_forward.1} parent=1 // pred_check_branch
      %14 = sbr.rel (0) target = $region5
    $region4: #{custom_network_forward.1} parent=1 // pred_region
      _
    $region5: #{custom_network_forward.1} parent=1 // pred_fallthru
      _
    // Predicated region
    $region6: #{custom_network_forward.1} parent=1 // pred_check
      _
    $region7: #{custom_network_forward.1} parent=1 // pred_check_branch
      %16 = sbr.rel (0) target = $region9
    $region8: #{custom_network_forward.1} parent=1 // pred_region
      _
    $region9: #{custom_network_forward.1} parent=1 // pred_fallthru
      _
    // Predicated region
    $region10: #{custom_network_forward.1} parent=1 // pred_check
      _
    $region11: #{custom_network_forward.1} parent=1 // pred_check_branch
      %18 = sbr.rel (0) target = $region13
    $region12: #{custom_network_forward.1} parent=1 // pred_region
      _
    $region13: #{custom_network_forward.1} parent=1 // pred_fallthru
      _
    // Predicated region
    $region14: #{custom_network_forward.1} parent=1 // pred_check
      _
    $region15: #{custom_network_forward.1} parent=1 // pred_check_branch
      %20 = sbr.rel (0) target = $region17
    $region16: #{custom_network_forward.1} parent=1 // pred_region
      _
    $region17: #{custom_network_forward.1} parent=1 // pred_fallthru
      _
    // Predicated region
    $region18: #{custom_network_forward.1} parent=1 // pred_check
      _
    $region19: #{custom_network_forward.1} parent=1 // pred_check_branch
      %22 = sbr.rel (0) target = $region21
    $region20: #{custom_network_forward.1} parent=1 // pred_region
      _
    $region21: #{custom_network_forward.1} parent=1 // pred_fallthru
      _
    // Predicated region
    $region22: #{custom_network_forward.1} parent=1 // pred_check
      _
    $region23: #{custom_network_forward.1} parent=1 // pred_check_branch
      %24 = sbr.rel (0) target = $region25
    $region24: #{custom_network_forward.1} parent=1 // pred_region
      _
    $region25: #{custom_network_forward.1} parent=1 // pred_fallthru
      _
    // Predicated region
    $region26: #{custom_network_forward.1} parent=1 // pred_check
      _
    $region27: #{custom_network_forward.1} parent=1 // pred_check_branch
      %26 = sbr.rel (0) target = $region29
    $region28: #{custom_network_forward.1} parent=1 // pred_region
      _
    $region29: #{custom_network_forward.1} parent=1 // pred_fallthru
      _
    %v28 = vld [vmem:[%s0] sm:$0xf]
    %v29 = vld [vmem:[%s1] sm:$0xff]
    %v30 = vld [vmem:[%s1 + $0x8] sm:$0xff]
    %v31 = vld [vmem:[%s1 + $0x10] sm:$0xff]
    %v32 = vld [vmem:[%s1 + $0x18] sm:$0xff]
    %v33 = vld [vmem:[%s1 + $0x20] sm:$0xff]
    %v34 = vld [vmem:[%s1 + $0x28] sm:$0xff]
    %v35 = vld [vmem:[%s1 + $0x30] sm:$0xff]
    %v36 = vld [vmem:[%s1 + $0x38] sm:$0xff]
    %v37 = vld [vmem:[%s1 + $0x40] sm:$0xff]
    %v38 = vld [vmem:[%s1 + $0x48] sm:$0xff]
    %v39 = vld [vmem:[%s1 + $0x50] sm:$0xff]
    %v40 = vld [vmem:[%s1 + $0x58] sm:$0xff]
    %v41 = vld [vmem:[%s1 + $0x60] sm:$0xff]
    %v42 = vld [vmem:[%s1 + $0x68] sm:$0xff]
    %v43 = vld [vmem:[%s1 + $0x70] sm:$0xff]
    %v44 = vld [vmem:[%s1 + $0x78] sm:$0xff]
    %v45 = vld [vmem:[%s1 + $0x80] sm:$0xff]
    %v46 = vld [vmem:[%s1 + $0x88] sm:$0xff]
    %v47 = vld [vmem:[%s1 + $0x90] sm:$0xff]
    %v48 = vld [vmem:[%s1 + $0x98] sm:$0xff]
    %v49 = vld [vmem:[%s1 + $0xa0] sm:$0xff]
    %v50 = vld [vmem:[%s1 + $0xa8] sm:$0xff]
    %v51 = vld [vmem:[%s1 + $0xb0] sm:$0xff]
    %v52 = vld [vmem:[%s1 + $0xb8] sm:$0xff]
    %v53 = vld [vmem:[%s1 + $0xc0] sm:$0xff]
    %v54 = vld [vmem:[%s1 + $0xc8] sm:$0xff]
    %v55 = vld [vmem:[%s1 + $0xd0] sm:$0xff]
    %v56 = vld [vmem:[%s1 + $0xd8] sm:$0xff]
    %v57 = vld [vmem:[%s1 + $0xe0] sm:$0xff]
    %v58 = vld [vmem:[%s1 + $0xe8] sm:$0xff]
    %v59 = vld [vmem:[%s1 + $0xf0] sm:$0xff]
    %v60 = vld [vmem:[%s1 + $0xf8] sm:$0xff]
    %v61 = vld [vmem:[%s2] sm:$0xff]
    %v62 = vld [vmem:[%s2 + $0x8] sm:$0xff]
    %v65 = vperm.slane %v61, 0
    %v66 = vperm.slane %v61, 1
    %v67 = vperm.slane %v61, 2
    %v68 = vperm.slane %v61, 3
    %v69 = vperm.slane %v61, 4
    %v70 = vperm.slane %v61, 5
    %v71 = vperm.slane %v61, 6
    %v72 = vperm.slane %v61, 7
    %v73 = vperm.slane %v62, 0
    %v74 = vperm.slane %v62, 1
    %v75 = vperm.slane %v62, 2
    %v76 = vperm.slane %v62, 3
    %v77 = vperm.slane %v62, 4
    %v78 = vperm.slane %v62, 5
    %v79 = vperm.slane %v62, 6
    %v80 = vperm.slane %v62, 7
    %v129 = vunpack.c.l.b16 %v29
    %v130 = vunpack.c.h.b16 %v29
    %v131 = vunpack.c.l.b16 %v30
    %v132 = vunpack.c.h.b16 %v30
    %v133 = vunpack.c.l.b16 %v31
    %v134 = vunpack.c.h.b16 %v31
    %v135 = vunpack.c.l.b16 %v32
    %v136 = vunpack.c.h.b16 %v32
    %v137 = vunpack.c.l.b16 %v33
    %v138 = vunpack.c.h.b16 %v33
    %v139 = vunpack.c.l.b16 %v34
    %v140 = vunpack.c.h.b16 %v34
    %v141 = vunpack.c.l.b16 %v35
    %v142 = vunpack.c.h.b16 %v35
    %v143 = vunpack.c.l.b16 %v36
    %v144 = vunpack.c.h.b16 %v36
    %v145 = vunpack.c.l.b16 %v37
    %v146 = vunpack.c.h.b16 %v37
    %v147 = vunpack.c.l.b16 %v38
    %v148 = vunpack.c.h.b16 %v38
    %v149 = vunpack.c.l.b16 %v39
    %v150 = vunpack.c.h.b16 %v39
    %v151 = vunpack.c.l.b16 %v40
    %v152 = vunpack.c.h.b16 %v40
    %v153 = vunpack.c.l.b16 %v41
    %v154 = vunpack.c.h.b16 %v41
    %v155 = vunpack.c.l.b16 %v42
    %v156 = vunpack.c.h.b16 %v42
    %v157 = vunpack.c.l.b16 %v43
    %v158 = vunpack.c.h.b16 %v43
    %v159 = vunpack.c.l.b16 %v44
    %v160 = vunpack.c.h.b16 %v44
    %v161 = vunpack.c.l.b16 %v45
    %v162 = vunpack.c.h.b16 %v45
    %v163 = vunpack.c.l.b16 %v46
    %v164 = vunpack.c.h.b16 %v46
    %v165 = vunpack.c.l.b16 %v47
    %v166 = vunpack.c.h.b16 %v47
    %v167 = vunpack.c.l.b16 %v48
    %v168 = vunpack.c.h.b16 %v48
    %v169 = vunpack.c.l.b16 %v49
    %v170 = vunpack.c.h.b16 %v49
    %v171 = vunpack.c.l.b16 %v50
    %v172 = vunpack.c.h.b16 %v50
    %v173 = vunpack.c.l.b16 %v51
    %v174 = vunpack.c.h.b16 %v51
    %v175 = vunpack.c.l.b16 %v52
    %v176 = vunpack.c.h.b16 %v52
    %v177 = vunpack.c.l.b16 %v53
    %v178 = vunpack.c.h.b16 %v53
    %v179 = vunpack.c.l.b16 %v54
    %v180 = vunpack.c.h.b16 %v54
    %v181 = vunpack.c.l.b16 %v55
    %v182 = vunpack.c.h.b16 %v55
    %v183 = vunpack.c.l.b16 %v56
    %v184 = vunpack.c.h.b16 %v56
    %v185 = vunpack.c.l.b16 %v57
    %v186 = vunpack.c.h.b16 %v57
    %v187 = vunpack.c.l.b16 %v58
    %v188 = vunpack.c.h.b16 %v58
    %v189 = vunpack.c.l.b16 %v59
    %v190 = vunpack.c.h.b16 %v59
    %v191 = vunpack.c.l.b16 %v60
    %v192 = vunpack.c.h.b16 %v60
    %v193 = vpack.c.b16 %v145, %v129
    %v194 = vpack.c.b16 %v146, %v130
    %v195 = vpack.c.b16 %v147, %v131
    %v196 = vpack.c.b16 %v148, %v132
    %v197 = vpack.c.b16 %v149, %v133
    %v198 = vpack.c.b16 %v150, %v134
    %v199 = vpack.c.b16 %v151, %v135
    %v200 = vpack.c.b16 %v152, %v136
    %v201 = vpack.c.b16 %v153, %v137
    %v202 = vpack.c.b16 %v154, %v138
    %v203 = vpack.c.b16 %v155, %v139
    %v204 = vpack.c.b16 %v156, %v140
    %v205 = vpack.c.b16 %v157, %v141
    %v206 = vpack.c.b16 %v158, %v142
    %v207 = vpack.c.b16 %v159, %v143
    %v208 = vpack.c.b16 %v160, %v144
    %v209 = vpack.c.b16 %v177, %v161
    %v210 = vpack.c.b16 %v178, %v162
    %v211 = vpack.c.b16 %v179, %v163
    %v212 = vpack.c.b16 %v180, %v164
    %v213 = vpack.c.b16 %v181, %v165
    %v214 = vpack.c.b16 %v182, %v166
    %v215 = vpack.c.b16 %v183, %v167
    %v216 = vpack.c.b16 %v184, %v168
    %v217 = vpack.c.b16 %v185, %v169
    %v218 = vpack.c.b16 %v186, %v170
    %v219 = vpack.c.b16 %v187, %v171
    %v220 = vpack.c.b16 %v188, %v172
    %v221 = vpack.c.b16 %v189, %v173
    %v222 = vpack.c.b16 %v190, %v174
    %v223 = vpack.c.b16 %v191, %v175
    %v224 = vpack.c.b16 %v192, %v176
    %vm257 = vcmask 261120
    %v259 = vsel %vm257, %v28, 0
    %261 = vmatpush.bf16.msra.mxu0 0
    %262 = vmatpush.bf16.msra.mxu0 0
    %263 = vmatpush.bf16.msra.mxu0 0
    %264 = vmatpush.bf16.msra.mxu0 0
    %265 = vmatpush.bf16.msra.mxu0 0
    %266 = vmatpush.bf16.msra.mxu0 0
    %267 = vmatpush.bf16.msra.mxu0 %v209
    %268 = vmatpush.bf16.msra.mxu0 %v193
    %269 = vmatmul.bf16.gmra.mxu0 %v259
    %v270 = vpop.f32.mrf.mxu0
    %v271 = vadd.f32 %v65, %v270
    %v272 = vpop.f32.mrf.mxu0
    %273 = vdwg.mxu0
    %274 = vmatpush.bf16.msra.mxu0 0
    %275 = vmatpush.bf16.msra.mxu0 0
    %276 = vmatpush.bf16.msra.mxu0 0
    %277 = vmatpush.bf16.msra.mxu0 0
    %278 = vmatpush.bf16.msra.mxu0 0
    %279 = vmatpush.bf16.msra.mxu0 0
    %280 = vmatpush.bf16.msra.mxu0 %v210
    %281 = vmatpush.bf16.msra.mxu0 %v194
    %282 = vmatmul.bf16.gmra.mxu0 %v259
    %v283 = vpop.f32.mrf.mxu0
    %v284 = vadd.f32 %v66, %v283
    %v285 = vpop.f32.mrf.mxu0
    %286 = vdwg.mxu0
    %287 = vmatpush.bf16.msra.mxu0 0
    %288 = vmatpush.bf16.msra.mxu0 0
    %289 = vmatpush.bf16.msra.mxu0 0
    %290 = vmatpush.bf16.msra.mxu0 0
    %291 = vmatpush.bf16.msra.mxu0 0
    %292 = vmatpush.bf16.msra.mxu0 0
    %293 = vmatpush.bf16.msra.mxu0 %v211
    %294 = vmatpush.bf16.msra.mxu0 %v195
    %295 = vmatmul.bf16.gmra.mxu0 %v259
    %v296 = vpop.f32.mrf.mxu0
    %v297 = vadd.f32 %v67, %v296
    %v298 = vpop.f32.mrf.mxu0
    %299 = vdwg.mxu0
    %300 = vmatpush.bf16.msra.mxu0 0
    %301 = vmatpush.bf16.msra.mxu0 0
    %302 = vmatpush.bf16.msra.mxu0 0
    %303 = vmatpush.bf16.msra.mxu0 0
    %304 = vmatpush.bf16.msra.mxu0 0
    %305 = vmatpush.bf16.msra.mxu0 0
    %306 = vmatpush.bf16.msra.mxu0 %v212
    %307 = vmatpush.bf16.msra.mxu0 %v196
    %308 = vmatmul.bf16.gmra.mxu0 %v259
    %v309 = vpop.f32.mrf.mxu0
    %v310 = vadd.f32 %v68, %v309
    %v311 = vpop.f32.mrf.mxu0
    %312 = vdwg.mxu0
    %313 = vmatpush.bf16.msra.mxu0 0
    %314 = vmatpush.bf16.msra.mxu0 0
    %315 = vmatpush.bf16.msra.mxu0 0
    %316 = vmatpush.bf16.msra.mxu0 0
    %317 = vmatpush.bf16.msra.mxu0 0
    %318 = vmatpush.bf16.msra.mxu0 0
    %319 = vmatpush.bf16.msra.mxu0 %v213
    %320 = vmatpush.bf16.msra.mxu0 %v197
    %321 = vmatmul.bf16.gmra.mxu0 %v259
    %v322 = vpop.f32.mrf.mxu0
    %v323 = vadd.f32 %v69, %v322
    %v324 = vpop.f32.mrf.mxu0
    %325 = vdwg.mxu0
    %326 = vmatpush.bf16.msra.mxu0 0
    %327 = vmatpush.bf16.msra.mxu0 0
    %328 = vmatpush.bf16.msra.mxu0 0
    %329 = vmatpush.bf16.msra.mxu0 0
    %330 = vmatpush.bf16.msra.mxu0 0
    %331 = vmatpush.bf16.msra.mxu0 0
    %332 = vmatpush.bf16.msra.mxu0 %v214
    %333 = vmatpush.bf16.msra.mxu0 %v198
    %334 = vmatmul.bf16.gmra.mxu0 %v259
    %v335 = vpop.f32.mrf.mxu0
    %v336 = vadd.f32 %v70, %v335
    %v337 = vpop.f32.mrf.mxu0
    %338 = vdwg.mxu0
    %339 = vmatpush.bf16.msra.mxu0 0
    %340 = vmatpush.bf16.msra.mxu0 0
    %341 = vmatpush.bf16.msra.mxu0 0
    %342 = vmatpush.bf16.msra.mxu0 0
    %343 = vmatpush.bf16.msra.mxu0 0
    %344 = vmatpush.bf16.msra.mxu0 0
    %345 = vmatpush.bf16.msra.mxu0 %v215
    %346 = vmatpush.bf16.msra.mxu0 %v199
    %347 = vmatmul.bf16.gmra.mxu0 %v259
    %v348 = vpop.f32.mrf.mxu0
    %v349 = vadd.f32 %v71, %v348
    %v350 = vpop.f32.mrf.mxu0
    %351 = vdwg.mxu0
    %352 = vmatpush.bf16.msra.mxu0 0
    %353 = vmatpush.bf16.msra.mxu0 0
    %354 = vmatpush.bf16.msra.mxu0 0
    %355 = vmatpush.bf16.msra.mxu0 0
    %356 = vmatpush.bf16.msra.mxu0 0
    %357 = vmatpush.bf16.msra.mxu0 0
    %358 = vmatpush.bf16.msra.mxu0 %v216
    %359 = vmatpush.bf16.msra.mxu0 %v200
    %360 = vmatmul.bf16.gmra.mxu0 %v259
    %v361 = vpop.f32.mrf.mxu0
    %v362 = vadd.f32 %v72, %v361
    %v363 = vpop.f32.mrf.mxu0
    %364 = vdwg.mxu0
    %365 = vmatpush.bf16.msra.mxu0 0
    %366 = vmatpush.bf16.msra.mxu0 0
    %367 = vmatpush.bf16.msra.mxu0 0
    %368 = vmatpush.bf16.msra.mxu0 0
    %369 = vmatpush.bf16.msra.mxu0 0
    %370 = vmatpush.bf16.msra.mxu0 0
    %371 = vmatpush.bf16.msra.mxu0 %v217
    %372 = vmatpush.bf16.msra.mxu0 %v201
    %373 = vmatmul.bf16.gmra.mxu0 %v259
    %v374 = vpop.f32.mrf.mxu0
    %v375 = vadd.f32 %v73, %v374
    %v376 = vpop.f32.mrf.mxu0
    %377 = vdwg.mxu0
    %378 = vmatpush.bf16.msra.mxu0 0
    %379 = vmatpush.bf16.msra.mxu0 0
    %380 = vmatpush.bf16.msra.mxu0 0
    %381 = vmatpush.bf16.msra.mxu0 0
    %382 = vmatpush.bf16.msra.mxu0 0
    %383 = vmatpush.bf16.msra.mxu0 0
    %384 = vmatpush.bf16.msra.mxu0 %v218
    %385 = vmatpush.bf16.msra.mxu0 %v202
    %386 = vmatmul.bf16.gmra.mxu0 %v259
    %v387 = vpop.f32.mrf.mxu0
    %v388 = vadd.f32 %v74, %v387
    %v389 = vpop.f32.mrf.mxu0
    %390 = vdwg.mxu0
    %391 = vmatpush.bf16.msra.mxu0 0
    %392 = vmatpush.bf16.msra.mxu0 0
    %393 = vmatpush.bf16.msra.mxu0 0
    %394 = vmatpush.bf16.msra.mxu0 0
    %395 = vmatpush.bf16.msra.mxu0 0
    %396 = vmatpush.bf16.msra.mxu0 0
    %397 = vmatpush.bf16.msra.mxu0 %v219
    %398 = vmatpush.bf16.msra.mxu0 %v203
    %399 = vmatmul.bf16.gmra.mxu0 %v259
    %v400 = vpop.f32.mrf.mxu0
    %v401 = vadd.f32 %v75, %v400
    %v402 = vpop.f32.mrf.mxu0
    %403 = vdwg.mxu0
    %404 = vmatpush.bf16.msra.mxu0 0
    %405 = vmatpush.bf16.msra.mxu0 0
    %406 = vmatpush.bf16.msra.mxu0 0
    %407 = vmatpush.bf16.msra.mxu0 0
    %408 = vmatpush.bf16.msra.mxu0 0
    %409 = vmatpush.bf16.msra.mxu0 0
    %410 = vmatpush.bf16.msra.mxu0 %v220
    %411 = vmatpush.bf16.msra.mxu0 %v204
    %412 = vmatmul.bf16.gmra.mxu0 %v259
    %v413 = vpop.f32.mrf.mxu0
    %v414 = vadd.f32 %v76, %v413
    %v415 = vpop.f32.mrf.mxu0
    %416 = vdwg.mxu0
    %417 = vmatpush.bf16.msra.mxu0 0
    %418 = vmatpush.bf16.msra.mxu0 0
    %419 = vmatpush.bf16.msra.mxu0 0
    %420 = vmatpush.bf16.msra.mxu0 0
    %421 = vmatpush.bf16.msra.mxu0 0
    %422 = vmatpush.bf16.msra.mxu0 0
    %423 = vmatpush.bf16.msra.mxu0 %v221
    %424 = vmatpush.bf16.msra.mxu0 %v205
    %425 = vmatmul.bf16.gmra.mxu0 %v259
    %v426 = vpop.f32.mrf.mxu0
    %v427 = vadd.f32 %v77, %v426
    %v428 = vpop.f32.mrf.mxu0
    %429 = vdwg.mxu0
    %430 = vmatpush.bf16.msra.mxu0 0
    %431 = vmatpush.bf16.msra.mxu0 0
    %432 = vmatpush.bf16.msra.mxu0 0
    %433 = vmatpush.bf16.msra.mxu0 0
    %434 = vmatpush.bf16.msra.mxu0 0
    %435 = vmatpush.bf16.msra.mxu0 0
    %436 = vmatpush.bf16.msra.mxu0 %v222
    %437 = vmatpush.bf16.msra.mxu0 %v206
    %438 = vmatmul.bf16.gmra.mxu0 %v259
    %v439 = vpop.f32.mrf.mxu0
    %v440 = vadd.f32 %v78, %v439
    %v441 = vpop.f32.mrf.mxu0
    %442 = vdwg.mxu0
    %443 = vmatpush.bf16.msra.mxu0 0
    %444 = vmatpush.bf16.msra.mxu0 0
    %445 = vmatpush.bf16.msra.mxu0 0
    %446 = vmatpush.bf16.msra.mxu0 0
    %447 = vmatpush.bf16.msra.mxu0 0
    %448 = vmatpush.bf16.msra.mxu0 0
    %449 = vmatpush.bf16.msra.mxu0 %v223
    %450 = vmatpush.bf16.msra.mxu0 %v207
    %451 = vmatmul.bf16.gmra.mxu0 %v259
    %v452 = vpop.f32.mrf.mxu0
    %v453 = vadd.f32 %v79, %v452
    %v454 = vpop.f32.mrf.mxu0
    %455 = vdwg.mxu0
    %456 = vmatpush.bf16.msra.mxu0 0
    %457 = vmatpush.bf16.msra.mxu0 0
    %458 = vmatpush.bf16.msra.mxu0 0
    %459 = vmatpush.bf16.msra.mxu0 0
    %460 = vmatpush.bf16.msra.mxu0 0
    %461 = vmatpush.bf16.msra.mxu0 0
    %462 = vmatpush.bf16.msra.mxu0 %v224
    %463 = vmatpush.bf16.msra.mxu0 %v208
    %464 = vmatmul.bf16.gmra.mxu0 %v259
    %v465 = vpop.f32.mrf.mxu0
    %v466 = vadd.f32 %v80, %v465
    %v467 = vpop.f32.mrf.mxu0
    %468 = vdwg.mxu0
    %v469 = vmax.f32 %v271, 0.0
    %v470 = vmax.f32 %v284, 0.0
    %v471 = vmax.f32 %v297, 0.0
    %v472 = vmax.f32 %v310, 0.0
    %v473 = vmax.f32 %v323, 0.0
    %v474 = vmax.f32 %v336, 0.0
    %v475 = vmax.f32 %v349, 0.0
    %v476 = vmax.f32 %v362, 0.0
    %v477 = vmax.f32 %v375, 0.0
    %v478 = vmax.f32 %v388, 0.0
    %v479 = vmax.f32 %v401, 0.0
    %v480 = vmax.f32 %v414, 0.0
    %v481 = vmax.f32 %v427, 0.0
    %v482 = vmax.f32 %v440, 0.0
    %v483 = vmax.f32 %v453, 0.0
    %v484 = vmax.f32 %v466, 0.0
    %v485 = vpack.c.bf16 %v469, %v469
    %v486 = vpack.c.bf16 %v470, %v470
    %v487 = vpack.c.bf16 %v471, %v471
    %v488 = vpack.c.bf16 %v472, %v472
    %v489 = vpack.c.bf16 %v473, %v473
    %v490 = vpack.c.bf16 %v474, %v474
    %v491 = vpack.c.bf16 %v475, %v475
    %v492 = vpack.c.bf16 %v476, %v476
    %v493 = vpack.c.bf16 %v477, %v477
    %v494 = vpack.c.bf16 %v478, %v478
    %v495 = vpack.c.bf16 %v479, %v479
    %v496 = vpack.c.bf16 %v480, %v480
    %v497 = vpack.c.bf16 %v481, %v481
    %v498 = vpack.c.bf16 %v482, %v482
    %v499 = vpack.c.bf16 %v483, %v483
    %v500 = vpack.c.bf16 %v484, %v484
    %v501 = vld [vmem:[%s3] sm:$0xff]
    %v502 = vld [vmem:[%s3 + $0x8] sm:$0xff]
    %v503 = vld [vmem:[%s3 + $0x10] sm:$0xff]
    %v504 = vld [vmem:[%s3 + $0x18] sm:$0xff]
    %v505 = vld [vmem:[%s3 + $0x20] sm:$0xff]
    %v506 = vld [vmem:[%s3 + $0x28] sm:$0xff]
    %v507 = vld [vmem:[%s3 + $0x30] sm:$0xff]
    %v508 = vld [vmem:[%s3 + $0x38] sm:$0xff]
    %v509 = vld [vmem:[%s3 + $0x40] sm:$0xff]
    %v510 = vld [vmem:[%s3 + $0x48] sm:$0xff]
    %v511 = vld [vmem:[%s3 + $0x50] sm:$0xff]
    %v512 = vld [vmem:[%s3 + $0x58] sm:$0xff]
    %v513 = vld [vmem:[%s3 + $0x60] sm:$0xff]
    %v514 = vld [vmem:[%s3 + $0x68] sm:$0xff]
    %v515 = vld [vmem:[%s3 + $0x70] sm:$0xff]
    %v516 = vld [vmem:[%s3 + $0x78] sm:$0xff]
    %v517 = vld [vmem:[%s3 + $0x80] sm:$0xff]
    %v518 = vld [vmem:[%s3 + $0x88] sm:$0xff]
    %v519 = vld [vmem:[%s3 + $0x90] sm:$0xff]
    %v520 = vld [vmem:[%s3 + $0x98] sm:$0xff]
    %v521 = vld [vmem:[%s3 + $0xa0] sm:$0xff]
    %v522 = vld [vmem:[%s3 + $0xa8] sm:$0xff]
    %v523 = vld [vmem:[%s3 + $0xb0] sm:$0xff]
    %v524 = vld [vmem:[%s3 + $0xb8] sm:$0xff]
    %v525 = vld [vmem:[%s3 + $0xc0] sm:$0xff]
    %v526 = vld [vmem:[%s3 + $0xc8] sm:$0xff]
    %v527 = vld [vmem:[%s3 + $0xd0] sm:$0xff]
    %v528 = vld [vmem:[%s3 + $0xd8] sm:$0xff]
    %v529 = vld [vmem:[%s3 + $0xe0] sm:$0xff]
    %v530 = vld [vmem:[%s3 + $0xe8] sm:$0xff]
    %v531 = vld [vmem:[%s3 + $0xf0] sm:$0xff]
    %v532 = vld [vmem:[%s3 + $0xf8] sm:$0xff]
    %v533 = vld [vmem:[%s3 + $0x100] sm:$0xff]
    %v534 = vld [vmem:[%s3 + $0x108] sm:$0xff]
    %v535 = vld [vmem:[%s3 + $0x110] sm:$0xff]
    %v536 = vld [vmem:[%s3 + $0x118] sm:$0xff]
    %v537 = vld [vmem:[%s3 + $0x120] sm:$0xff]
    %v538 = vld [vmem:[%s3 + $0x128] sm:$0xff]
    %v539 = vld [vmem:[%s3 + $0x130] sm:$0xff]
    %v540 = vld [vmem:[%s3 + $0x138] sm:$0xff]
    %v541 = vld [vmem:[%s3 + $0x140] sm:$0xff]
    %v542 = vld [vmem:[%s3 + $0x148] sm:$0xff]
    %v543 = vld [vmem:[%s3 + $0x150] sm:$0xff]
    %v544 = vld [vmem:[%s3 + $0x158] sm:$0xff]
    %v545 = vld [vmem:[%s3 + $0x160] sm:$0xff]
    %v546 = vld [vmem:[%s3 + $0x168] sm:$0xff]
    %v547 = vld [vmem:[%s3 + $0x170] sm:$0xff]
    %v548 = vld [vmem:[%s3 + $0x178] sm:$0xff]
    %v549 = vld [vmem:[%s3 + $0x180] sm:$0xff]
    %v550 = vld [vmem:[%s3 + $0x188] sm:$0xff]
    %v551 = vld [vmem:[%s3 + $0x190] sm:$0xff]
    %v552 = vld [vmem:[%s3 + $0x198] sm:$0xff]
    %v553 = vld [vmem:[%s3 + $0x1a0] sm:$0xff]
    %v554 = vld [vmem:[%s3 + $0x1a8] sm:$0xff]
    %v555 = vld [vmem:[%s3 + $0x1b0] sm:$0xff]
    %v556 = vld [vmem:[%s3 + $0x1b8] sm:$0xff]
    %v557 = vld [vmem:[%s3 + $0x1c0] sm:$0xff]
    %v558 = vld [vmem:[%s3 + $0x1c8] sm:$0xff]
    %v559 = vld [vmem:[%s3 + $0x1d0] sm:$0xff]
    %v560 = vld [vmem:[%s3 + $0x1d8] sm:$0xff]
    %v561 = vld [vmem:[%s3 + $0x1e0] sm:$0xff]
    %v562 = vld [vmem:[%s3 + $0x1e8] sm:$0xff]
    %v563 = vld [vmem:[%s3 + $0x1f0] sm:$0xff]
    %v564 = vld [vmem:[%s3 + $0x1f8] sm:$0xff]
    %v565 = vld [vmem:[%s3 + $0x200] sm:$0xff]
    %v566 = vld [vmem:[%s3 + $0x208] sm:$0xff]
    %v567 = vld [vmem:[%s3 + $0x210] sm:$0xff]
    %v568 = vld [vmem:[%s3 + $0x218] sm:$0xff]
    %v569 = vld [vmem:[%s3 + $0x220] sm:$0xff]
    %v570 = vld [vmem:[%s3 + $0x228] sm:$0xff]
    %v571 = vld [vmem:[%s3 + $0x230] sm:$0xff]
    %v572 = vld [vmem:[%s3 + $0x238] sm:$0xff]
    %v573 = vld [vmem:[%s3 + $0x240] sm:$0xff]
    %v574 = vld [vmem:[%s3 + $0x248] sm:$0xff]
    %v575 = vld [vmem:[%s3 + $0x250] sm:$0xff]
    %v576 = vld [vmem:[%s3 + $0x258] sm:$0xff]
    %v577 = vld [vmem:[%s3 + $0x260] sm:$0xff]
    %v578 = vld [vmem:[%s3 + $0x268] sm:$0xff]
    %v579 = vld [vmem:[%s3 + $0x270] sm:$0xff]
    %v580 = vld [vmem:[%s3 + $0x278] sm:$0xff]
    %v581 = vld [vmem:[%s3 + $0x280] sm:$0xff]
    %v582 = vld [vmem:[%s3 + $0x288] sm:$0xff]
    %v583 = vld [vmem:[%s3 + $0x290] sm:$0xff]
    %v584 = vld [vmem:[%s3 + $0x298] sm:$0xff]
    %v585 = vld [vmem:[%s3 + $0x2a0] sm:$0xff]
    %v586 = vld [vmem:[%s3 + $0x2a8] sm:$0xff]
    %v587 = vld [vmem:[%s3 + $0x2b0] sm:$0xff]
    %v588 = vld [vmem:[%s3 + $0x2b8] sm:$0xff]
    %v589 = vld [vmem:[%s3 + $0x2c0] sm:$0xff]
    %v590 = vld [vmem:[%s3 + $0x2c8] sm:$0xff]
    %v591 = vld [vmem:[%s3 + $0x2d0] sm:$0xff]
    %v592 = vld [vmem:[%s3 + $0x2d8] sm:$0xff]
    %v593 = vld [vmem:[%s3 + $0x2e0] sm:$0xff]
    %v594 = vld [vmem:[%s3 + $0x2e8] sm:$0xff]
    %v595 = vld [vmem:[%s3 + $0x2f0] sm:$0xff]
    %v596 = vld [vmem:[%s3 + $0x2f8] sm:$0xff]
    %v597 = vld [vmem:[%s3 + $0x300] sm:$0xff]
    %v598 = vld [vmem:[%s3 + $0x308] sm:$0xff]
    %v599 = vld [vmem:[%s3 + $0x310] sm:$0xff]
    %v600 = vld [vmem:[%s3 + $0x318] sm:$0xff]
    %v601 = vld [vmem:[%s3 + $0x320] sm:$0xff]
    %v602 = vld [vmem:[%s3 + $0x328] sm:$0xff]
    %v603 = vld [vmem:[%s3 + $0x330] sm:$0xff]
    %v604 = vld [vmem:[%s3 + $0x338] sm:$0xff]
    %v605 = vld [vmem:[%s3 + $0x340] sm:$0xff]
    %v606 = vld [vmem:[%s3 + $0x348] sm:$0xff]
    %v607 = vld [vmem:[%s3 + $0x350] sm:$0xff]
    %v608 = vld [vmem:[%s3 + $0x358] sm:$0xff]
    %v609 = vld [vmem:[%s3 + $0x360] sm:$0xff]
    %v610 = vld [vmem:[%s3 + $0x368] sm:$0xff]
    %v611 = vld [vmem:[%s3 + $0x370] sm:$0xff]
    %v612 = vld [vmem:[%s3 + $0x378] sm:$0xff]
    %v613 = vld [vmem:[%s3 + $0x380] sm:$0xff]
    %v614 = vld [vmem:[%s3 + $0x388] sm:$0xff]
    %v615 = vld [vmem:[%s3 + $0x390] sm:$0xff]
    %v616 = vld [vmem:[%s3 + $0x398] sm:$0xff]
    %v617 = vld [vmem:[%s3 + $0x3a0] sm:$0xff]
    %v618 = vld [vmem:[%s3 + $0x3a8] sm:$0xff]
    %v619 = vld [vmem:[%s3 + $0x3b0] sm:$0xff]
    %v620 = vld [vmem:[%s3 + $0x3b8] sm:$0xff]
    %v621 = vld [vmem:[%s3 + $0x3c0] sm:$0xff]
    %v622 = vld [vmem:[%s3 + $0x3c8] sm:$0xff]
    %v623 = vld [vmem:[%s3 + $0x3d0] sm:$0xff]
    %v624 = vld [vmem:[%s3 + $0x3d8] sm:$0xff]
    %v625 = vld [vmem:[%s3 + $0x3e0] sm:$0xff]
    %v626 = vld [vmem:[%s3 + $0x3e8] sm:$0xff]
    %v627 = vld [vmem:[%s3 + $0x3f0] sm:$0xff]
    %v628 = vld [vmem:[%s3 + $0x3f8] sm:$0xff]
    %v629 = vld [vmem:[%s3 + $0x400] sm:$0xff]
    %v630 = vld [vmem:[%s3 + $0x408] sm:$0xff]
    %v631 = vld [vmem:[%s3 + $0x410] sm:$0xff]
    %v632 = vld [vmem:[%s3 + $0x418] sm:$0xff]
    %v633 = vld [vmem:[%s3 + $0x420] sm:$0xff]
    %v634 = vld [vmem:[%s3 + $0x428] sm:$0xff]
    %v635 = vld [vmem:[%s3 + $0x430] sm:$0xff]
    %v636 = vld [vmem:[%s3 + $0x438] sm:$0xff]
    %v637 = vld [vmem:[%s3 + $0x440] sm:$0xff]
    %v638 = vld [vmem:[%s3 + $0x448] sm:$0xff]
    %v639 = vld [vmem:[%s3 + $0x450] sm:$0xff]
    %v640 = vld [vmem:[%s3 + $0x458] sm:$0xff]
    %v641 = vld [vmem:[%s3 + $0x460] sm:$0xff]
    %v642 = vld [vmem:[%s3 + $0x468] sm:$0xff]
    %v643 = vld [vmem:[%s3 + $0x470] sm:$0xff]
    %v644 = vld [vmem:[%s3 + $0x478] sm:$0xff]
    %v645 = vld [vmem:[%s3 + $0x480] sm:$0xff]
    %v646 = vld [vmem:[%s3 + $0x488] sm:$0xff]
    %v647 = vld [vmem:[%s3 + $0x490] sm:$0xff]
    %v648 = vld [vmem:[%s3 + $0x498] sm:$0xff]
    %v649 = vld [vmem:[%s3 + $0x4a0] sm:$0xff]
    %v650 = vld [vmem:[%s3 + $0x4a8] sm:$0xff]
    %v651 = vld [vmem:[%s3 + $0x4b0] sm:$0xff]
    %v652 = vld [vmem:[%s3 + $0x4b8] sm:$0xff]
    %v653 = vld [vmem:[%s3 + $0x4c0] sm:$0xff]
    %v654 = vld [vmem:[%s3 + $0x4c8] sm:$0xff]
    %v655 = vld [vmem:[%s3 + $0x4d0] sm:$0xff]
    %v656 = vld [vmem:[%s3 + $0x4d8] sm:$0xff]
    %v657 = vld [vmem:[%s3 + $0x4e0] sm:$0xff]
    %v658 = vld [vmem:[%s3 + $0x4e8] sm:$0xff]
    %v659 = vld [vmem:[%s3 + $0x4f0] sm:$0xff]
    %v660 = vld [vmem:[%s3 + $0x4f8] sm:$0xff]
    %v661 = vld [vmem:[%s3 + $0x500] sm:$0xff]
    %v662 = vld [vmem:[%s3 + $0x508] sm:$0xff]
    %v663 = vld [vmem:[%s3 + $0x510] sm:$0xff]
    %v664 = vld [vmem:[%s3 + $0x518] sm:$0xff]
    %v665 = vld [vmem:[%s3 + $0x520] sm:$0xff]
    %v666 = vld [vmem:[%s3 + $0x528] sm:$0xff]
    %v667 = vld [vmem:[%s3 + $0x530] sm:$0xff]
    %v668 = vld [vmem:[%s3 + $0x538] sm:$0xff]
    %v669 = vld [vmem:[%s3 + $0x540] sm:$0xff]
    %v670 = vld [vmem:[%s3 + $0x548] sm:$0xff]
    %v671 = vld [vmem:[%s3 + $0x550] sm:$0xff]
    %v672 = vld [vmem:[%s3 + $0x558] sm:$0xff]
    %v673 = vld [vmem:[%s3 + $0x560] sm:$0xff]
    %v674 = vld [vmem:[%s3 + $0x568] sm:$0xff]
    %v675 = vld [vmem:[%s3 + $0x570] sm:$0xff]
    %v676 = vld [vmem:[%s3 + $0x578] sm:$0xff]
    %v677 = vld [vmem:[%s3 + $0x580] sm:$0xff]
    %v678 = vld [vmem:[%s3 + $0x588] sm:$0xff]
    %v679 = vld [vmem:[%s3 + $0x590] sm:$0xff]
    %v680 = vld [vmem:[%s3 + $0x598] sm:$0xff]
    %v681 = vld [vmem:[%s3 + $0x5a0] sm:$0xff]
    %v682 = vld [vmem:[%s3 + $0x5a8] sm:$0xff]
    %v683 = vld [vmem:[%s3 + $0x5b0] sm:$0xff]
    %v684 = vld [vmem:[%s3 + $0x5b8] sm:$0xff]
    %v685 = vld [vmem:[%s3 + $0x5c0] sm:$0xff]
    %v686 = vld [vmem:[%s3 + $0x5c8] sm:$0xff]
    %v687 = vld [vmem:[%s3 + $0x5d0] sm:$0xff]
    %v688 = vld [vmem:[%s3 + $0x5d8] sm:$0xff]
    %v689 = vld [vmem:[%s3 + $0x5e0] sm:$0xff]
    %v690 = vld [vmem:[%s3 + $0x5e8] sm:$0xff]
    %v691 = vld [vmem:[%s3 + $0x5f0] sm:$0xff]
    %v692 = vld [vmem:[%s3 + $0x5f8] sm:$0xff]
    %v693 = vld [vmem:[%s3 + $0x600] sm:$0xff]
    %v694 = vld [vmem:[%s3 + $0x608] sm:$0xff]
    %v695 = vld [vmem:[%s3 + $0x610] sm:$0xff]
    %v696 = vld [vmem:[%s3 + $0x618] sm:$0xff]
    %v697 = vld [vmem:[%s3 + $0x620] sm:$0xff]
    %v698 = vld [vmem:[%s3 + $0x628] sm:$0xff]
    %v699 = vld [vmem:[%s3 + $0x630] sm:$0xff]
    %v700 = vld [vmem:[%s3 + $0x638] sm:$0xff]
    %v701 = vld [vmem:[%s3 + $0x640] sm:$0xff]
    %v702 = vld [vmem:[%s3 + $0x648] sm:$0xff]
    %v703 = vld [vmem:[%s3 + $0x650] sm:$0xff]
    %v704 = vld [vmem:[%s3 + $0x658] sm:$0xff]
    %v705 = vld [vmem:[%s3 + $0x660] sm:$0xff]
    %v706 = vld [vmem:[%s3 + $0x668] sm:$0xff]
    %v707 = vld [vmem:[%s3 + $0x670] sm:$0xff]
    %v708 = vld [vmem:[%s3 + $0x678] sm:$0xff]
    %v709 = vld [vmem:[%s3 + $0x680] sm:$0xff]
    %v710 = vld [vmem:[%s3 + $0x688] sm:$0xff]
    %v711 = vld [vmem:[%s3 + $0x690] sm:$0xff]
    %v712 = vld [vmem:[%s3 + $0x698] sm:$0xff]
    %v713 = vld [vmem:[%s3 + $0x6a0] sm:$0xff]
    %v714 = vld [vmem:[%s3 + $0x6a8] sm:$0xff]
    %v715 = vld [vmem:[%s3 + $0x6b0] sm:$0xff]
    %v716 = vld [vmem:[%s3 + $0x6b8] sm:$0xff]
    %v717 = vld [vmem:[%s3 + $0x6c0] sm:$0xff]
    %v718 = vld [vmem:[%s3 + $0x6c8] sm:$0xff]
    %v719 = vld [vmem:[%s3 + $0x6d0] sm:$0xff]
    %v720 = vld [vmem:[%s3 + $0x6d8] sm:$0xff]
    %v721 = vld [vmem:[%s3 + $0x6e0] sm:$0xff]
    %v722 = vld [vmem:[%s3 + $0x6e8] sm:$0xff]
    %v723 = vld [vmem:[%s3 + $0x6f0] sm:$0xff]
    %v724 = vld [vmem:[%s3 + $0x6f8] sm:$0xff]
    %v725 = vld [vmem:[%s3 + $0x700] sm:$0xff]
    %v726 = vld [vmem:[%s3 + $0x708] sm:$0xff]
    %v727 = vld [vmem:[%s3 + $0x710] sm:$0xff]
    %v728 = vld [vmem:[%s3 + $0x718] sm:$0xff]
    %v729 = vld [vmem:[%s3 + $0x720] sm:$0xff]
    %v730 = vld [vmem:[%s3 + $0x728] sm:$0xff]
    %v731 = vld [vmem:[%s3 + $0x730] sm:$0xff]
    %v732 = vld [vmem:[%s3 + $0x738] sm:$0xff]
    %v733 = vld [vmem:[%s3 + $0x740] sm:$0xff]
    %v734 = vld [vmem:[%s3 + $0x748] sm:$0xff]
    %v735 = vld [vmem:[%s3 + $0x750] sm:$0xff]
    %v736 = vld [vmem:[%s3 + $0x758] sm:$0xff]
    %v737 = vld [vmem:[%s3 + $0x760] sm:$0xff]
    %v738 = vld [vmem:[%s3 + $0x768] sm:$0xff]
    %v739 = vld [vmem:[%s3 + $0x770] sm:$0xff]
    %v740 = vld [vmem:[%s3 + $0x778] sm:$0xff]
    %v741 = vld [vmem:[%s3 + $0x780] sm:$0xff]
    %v742 = vld [vmem:[%s3 + $0x788] sm:$0xff]
    %v743 = vld [vmem:[%s3 + $0x790] sm:$0xff]
    %v744 = vld [vmem:[%s3 + $0x798] sm:$0xff]
    %v745 = vld [vmem:[%s3 + $0x7a0] sm:$0xff]
    %v746 = vld [vmem:[%s3 + $0x7a8] sm:$0xff]
    %v747 = vld [vmem:[%s3 + $0x7b0] sm:$0xff]
    %v748 = vld [vmem:[%s3 + $0x7b8] sm:$0xff]
    %v749 = vld [vmem:[%s3 + $0x7c0] sm:$0xff]
    %v750 = vld [vmem:[%s3 + $0x7c8] sm:$0xff]
    %v751 = vld [vmem:[%s3 + $0x7d0] sm:$0xff]
    %v752 = vld [vmem:[%s3 + $0x7d8] sm:$0xff]
    %v753 = vld [vmem:[%s3 + $0x7e0] sm:$0xff]
    %v754 = vld [vmem:[%s3 + $0x7e8] sm:$0xff]
    %v755 = vld [vmem:[%s3 + $0x7f0] sm:$0xff]
    %v756 = vld [vmem:[%s3 + $0x7f8] sm:$0xff]
    %v757 = vld [vmem:[%s3 + $0x800] sm:$0xff]
    %v758 = vld [vmem:[%s3 + $0x808] sm:$0xff]
    %v759 = vld [vmem:[%s3 + $0x810] sm:$0xff]
    %v760 = vld [vmem:[%s3 + $0x818] sm:$0xff]
    %v761 = vld [vmem:[%s3 + $0x820] sm:$0xff]
    %v762 = vld [vmem:[%s3 + $0x828] sm:$0xff]
    %v763 = vld [vmem:[%s3 + $0x830] sm:$0xff]
    %v764 = vld [vmem:[%s3 + $0x838] sm:$0xff]
    %v765 = vld [vmem:[%s3 + $0x840] sm:$0xff]
    %v766 = vld [vmem:[%s3 + $0x848] sm:$0xff]
    %v767 = vld [vmem:[%s3 + $0x850] sm:$0xff]
    %v768 = vld [vmem:[%s3 + $0x858] sm:$0xff]
    %v769 = vld [vmem:[%s3 + $0x860] sm:$0xff]
    %v770 = vld [vmem:[%s3 + $0x868] sm:$0xff]
    %v771 = vld [vmem:[%s3 + $0x870] sm:$0xff]
    %v772 = vld [vmem:[%s3 + $0x878] sm:$0xff]
    %v773 = vld [vmem:[%s3 + $0x880] sm:$0xff]
    %v774 = vld [vmem:[%s3 + $0x888] sm:$0xff]
    %v775 = vld [vmem:[%s3 + $0x890] sm:$0xff]
    %v776 = vld [vmem:[%s3 + $0x898] sm:$0xff]
    %v777 = vld [vmem:[%s3 + $0x8a0] sm:$0xff]
    %v778 = vld [vmem:[%s3 + $0x8a8] sm:$0xff]
    %v779 = vld [vmem:[%s3 + $0x8b0] sm:$0xff]
    %v780 = vld [vmem:[%s3 + $0x8b8] sm:$0xff]
    %v781 = vld [vmem:[%s3 + $0x8c0] sm:$0xff]
    %v782 = vld [vmem:[%s3 + $0x8c8] sm:$0xff]
    %v783 = vld [vmem:[%s3 + $0x8d0] sm:$0xff]
    %v784 = vld [vmem:[%s3 + $0x8d8] sm:$0xff]
    %v785 = vld [vmem:[%s3 + $0x8e0] sm:$0xff]
    %v786 = vld [vmem:[%s3 + $0x8e8] sm:$0xff]
    %v787 = vld [vmem:[%s3 + $0x8f0] sm:$0xff]
    %v788 = vld [vmem:[%s3 + $0x8f8] sm:$0xff]
    %v789 = vld [vmem:[%s3 + $0x900] sm:$0xff]
    %v790 = vld [vmem:[%s3 + $0x908] sm:$0xff]
    %v791 = vld [vmem:[%s3 + $0x910] sm:$0xff]
    %v792 = vld [vmem:[%s3 + $0x918] sm:$0xff]
    %v793 = vld [vmem:[%s3 + $0x920] sm:$0xff]
    %v794 = vld [vmem:[%s3 + $0x928] sm:$0xff]
    %v795 = vld [vmem:[%s3 + $0x930] sm:$0xff]
    %v796 = vld [vmem:[%s3 + $0x938] sm:$0xff]
    %v797 = vld [vmem:[%s3 + $0x940] sm:$0xff]
    %v798 = vld [vmem:[%s3 + $0x948] sm:$0xff]
    %v799 = vld [vmem:[%s3 + $0x950] sm:$0xff]
    %v800 = vld [vmem:[%s3 + $0x958] sm:$0xff]
    %v801 = vld [vmem:[%s3 + $0x960] sm:$0xff]
    %v802 = vld [vmem:[%s3 + $0x968] sm:$0xff]
    %v803 = vld [vmem:[%s3 + $0x970] sm:$0xff]
    %v804 = vld [vmem:[%s3 + $0x978] sm:$0xff]
    %v805 = vld [vmem:[%s3 + $0x980] sm:$0xff]
    %v806 = vld [vmem:[%s3 + $0x988] sm:$0xff]
    %v807 = vld [vmem:[%s3 + $0x990] sm:$0xff]
    %v808 = vld [vmem:[%s3 + $0x998] sm:$0xff]
    %v809 = vld [vmem:[%s3 + $0x9a0] sm:$0xff]
    %v810 = vld [vmem:[%s3 + $0x9a8] sm:$0xff]
    %v811 = vld [vmem:[%s3 + $0x9b0] sm:$0xff]
    %v812 = vld [vmem:[%s3 + $0x9b8] sm:$0xff]
    %v813 = vld [vmem:[%s3 + $0x9c0] sm:$0xff]
    %v814 = vld [vmem:[%s3 + $0x9c8] sm:$0xff]
    %v815 = vld [vmem:[%s3 + $0x9d0] sm:$0xff]
    %v816 = vld [vmem:[%s3 + $0x9d8] sm:$0xff]
    %v817 = vld [vmem:[%s3 + $0x9e0] sm:$0xff]
    %v818 = vld [vmem:[%s3 + $0x9e8] sm:$0xff]
    %v819 = vld [vmem:[%s3 + $0x9f0] sm:$0xff]
    %v820 = vld [vmem:[%s3 + $0x9f8] sm:$0xff]
    %v821 = vld [vmem:[%s3 + $0xa00] sm:$0xff]
    %v822 = vld [vmem:[%s3 + $0xa08] sm:$0xff]
    %v823 = vld [vmem:[%s3 + $0xa10] sm:$0xff]
    %v824 = vld [vmem:[%s3 + $0xa18] sm:$0xff]
    %v825 = vld [vmem:[%s3 + $0xa20] sm:$0xff]
    %v826 = vld [vmem:[%s3 + $0xa28] sm:$0xff]
    %v827 = vld [vmem:[%s3 + $0xa30] sm:$0xff]
    %v828 = vld [vmem:[%s3 + $0xa38] sm:$0xff]
    %v829 = vld [vmem:[%s3 + $0xa40] sm:$0xff]
    %v830 = vld [vmem:[%s3 + $0xa48] sm:$0xff]
    %v831 = vld [vmem:[%s3 + $0xa50] sm:$0xff]
    %v832 = vld [vmem:[%s3 + $0xa58] sm:$0xff]
    %v833 = vld [vmem:[%s3 + $0xa60] sm:$0xff]
    %v834 = vld [vmem:[%s3 + $0xa68] sm:$0xff]
    %v835 = vld [vmem:[%s3 + $0xa70] sm:$0xff]
    %v836 = vld [vmem:[%s3 + $0xa78] sm:$0xff]
    %v837 = vld [vmem:[%s3 + $0xa80] sm:$0xff]
    %v838 = vld [vmem:[%s3 + $0xa88] sm:$0xff]
    %v839 = vld [vmem:[%s3 + $0xa90] sm:$0xff]
    %v840 = vld [vmem:[%s3 + $0xa98] sm:$0xff]
    %v841 = vld [vmem:[%s3 + $0xaa0] sm:$0xff]
    %v842 = vld [vmem:[%s3 + $0xaa8] sm:$0xff]
    %v843 = vld [vmem:[%s3 + $0xab0] sm:$0xff]
    %v844 = vld [vmem:[%s3 + $0xab8] sm:$0xff]
    %v845 = vld [vmem:[%s3 + $0xac0] sm:$0xff]
    %v846 = vld [vmem:[%s3 + $0xac8] sm:$0xff]
    %v847 = vld [vmem:[%s3 + $0xad0] sm:$0xff]
    %v848 = vld [vmem:[%s3 + $0xad8] sm:$0xff]
    %v849 = vld [vmem:[%s3 + $0xae0] sm:$0xff]
    %v850 = vld [vmem:[%s3 + $0xae8] sm:$0xff]
    %v851 = vld [vmem:[%s3 + $0xaf0] sm:$0xff]
    %v852 = vld [vmem:[%s3 + $0xaf8] sm:$0xff]
    %v853 = vld [vmem:[%s3 + $0xb00] sm:$0xff]
    %v854 = vld [vmem:[%s3 + $0xb08] sm:$0xff]
    %v855 = vld [vmem:[%s3 + $0xb10] sm:$0xff]
    %v856 = vld [vmem:[%s3 + $0xb18] sm:$0xff]
    %v857 = vld [vmem:[%s3 + $0xb20] sm:$0xff]
    %v858 = vld [vmem:[%s3 + $0xb28] sm:$0xff]
    %v859 = vld [vmem:[%s3 + $0xb30] sm:$0xff]
    %v860 = vld [vmem:[%s3 + $0xb38] sm:$0xff]
    %v861 = vld [vmem:[%s3 + $0xb40] sm:$0xff]
    %v862 = vld [vmem:[%s3 + $0xb48] sm:$0xff]
    %v863 = vld [vmem:[%s3 + $0xb50] sm:$0xff]
    %v864 = vld [vmem:[%s3 + $0xb58] sm:$0xff]
    %v865 = vld [vmem:[%s3 + $0xb60] sm:$0xff]
    %v866 = vld [vmem:[%s3 + $0xb68] sm:$0xff]
    %v867 = vld [vmem:[%s3 + $0xb70] sm:$0xff]
    %v868 = vld [vmem:[%s3 + $0xb78] sm:$0xff]
    %v869 = vld [vmem:[%s3 + $0xb80] sm:$0xff]
    %v870 = vld [vmem:[%s3 + $0xb88] sm:$0xff]
    %v871 = vld [vmem:[%s3 + $0xb90] sm:$0xff]
    %v872 = vld [vmem:[%s3 + $0xb98] sm:$0xff]
    %v873 = vld [vmem:[%s3 + $0xba0] sm:$0xff]
    %v874 = vld [vmem:[%s3 + $0xba8] sm:$0xff]
    %v875 = vld [vmem:[%s3 + $0xbb0] sm:$0xff]
    %v876 = vld [vmem:[%s3 + $0xbb8] sm:$0xff]
    %v877 = vld [vmem:[%s3 + $0xbc0] sm:$0xff]
    %v878 = vld [vmem:[%s3 + $0xbc8] sm:$0xff]
    %v879 = vld [vmem:[%s3 + $0xbd0] sm:$0xff]
    %v880 = vld [vmem:[%s3 + $0xbd8] sm:$0xff]
    %v881 = vld [vmem:[%s3 + $0xbe0] sm:$0xff]
    %v882 = vld [vmem:[%s3 + $0xbe8] sm:$0xff]
    %v883 = vld [vmem:[%s3 + $0xbf0] sm:$0xff]
    %v884 = vld [vmem:[%s3 + $0xbf8] sm:$0xff]
    %v885 = vld [vmem:[%s3 + $0xc00] sm:$0xff]
    %v886 = vld [vmem:[%s3 + $0xc08] sm:$0xff]
    %v887 = vld [vmem:[%s3 + $0xc10] sm:$0xff]
    %v888 = vld [vmem:[%s3 + $0xc18] sm:$0xff]
    %v889 = vld [vmem:[%s3 + $0xc20] sm:$0xff]
    %v890 = vld [vmem:[%s3 + $0xc28] sm:$0xff]
    %v891 = vld [vmem:[%s3 + $0xc30] sm:$0xff]
    %v892 = vld [vmem:[%s3 + $0xc38] sm:$0xff]
    %v893 = vld [vmem:[%s3 + $0xc40] sm:$0xff]
    %v894 = vld [vmem:[%s3 + $0xc48] sm:$0xff]
    %v895 = vld [vmem:[%s3 + $0xc50] sm:$0xff]
    %v896 = vld [vmem:[%s3 + $0xc58] sm:$0xff]
    %v897 = vld [vmem:[%s3 + $0xc60] sm:$0xff]
    %v898 = vld [vmem:[%s3 + $0xc68] sm:$0xff]
    %v899 = vld [vmem:[%s3 + $0xc70] sm:$0xff]
    %v900 = vld [vmem:[%s3 + $0xc78] sm:$0xff]
    %v901 = vld [vmem:[%s3 + $0xc80] sm:$0xff]
    %v902 = vld [vmem:[%s3 + $0xc88] sm:$0xff]
    %v903 = vld [vmem:[%s3 + $0xc90] sm:$0xff]
    %v904 = vld [vmem:[%s3 + $0xc98] sm:$0xff]
    %v905 = vld [vmem:[%s3 + $0xca0] sm:$0xff]
    %v906 = vld [vmem:[%s3 + $0xca8] sm:$0xff]
    %v907 = vld [vmem:[%s3 + $0xcb0] sm:$0xff]
    %v908 = vld [vmem:[%s3 + $0xcb8] sm:$0xff]
    %v909 = vld [vmem:[%s3 + $0xcc0] sm:$0xff]
    %v910 = vld [vmem:[%s3 + $0xcc8] sm:$0xff]
    %v911 = vld [vmem:[%s3 + $0xcd0] sm:$0xff]
    %v912 = vld [vmem:[%s3 + $0xcd8] sm:$0xff]
    %v913 = vld [vmem:[%s3 + $0xce0] sm:$0xff]
    %v914 = vld [vmem:[%s3 + $0xce8] sm:$0xff]
    %v915 = vld [vmem:[%s3 + $0xcf0] sm:$0xff]
    %v916 = vld [vmem:[%s3 + $0xcf8] sm:$0xff]
    %v917 = vld [vmem:[%s3 + $0xd00] sm:$0xff]
    %v918 = vld [vmem:[%s3 + $0xd08] sm:$0xff]
    %v919 = vld [vmem:[%s3 + $0xd10] sm:$0xff]
    %v920 = vld [vmem:[%s3 + $0xd18] sm:$0xff]
    %v921 = vld [vmem:[%s3 + $0xd20] sm:$0xff]
    %v922 = vld [vmem:[%s3 + $0xd28] sm:$0xff]
    %v923 = vld [vmem:[%s3 + $0xd30] sm:$0xff]
    %v924 = vld [vmem:[%s3 + $0xd38] sm:$0xff]
    %v925 = vld [vmem:[%s3 + $0xd40] sm:$0xff]
    %v926 = vld [vmem:[%s3 + $0xd48] sm:$0xff]
    %v927 = vld [vmem:[%s3 + $0xd50] sm:$0xff]
    %v928 = vld [vmem:[%s3 + $0xd58] sm:$0xff]
    %v929 = vld [vmem:[%s3 + $0xd60] sm:$0xff]
    %v930 = vld [vmem:[%s3 + $0xd68] sm:$0xff]
    %v931 = vld [vmem:[%s3 + $0xd70] sm:$0xff]
    %v932 = vld [vmem:[%s3 + $0xd78] sm:$0xff]
    %v933 = vld [vmem:[%s3 + $0xd80] sm:$0xff]
    %v934 = vld [vmem:[%s3 + $0xd88] sm:$0xff]
    %v935 = vld [vmem:[%s3 + $0xd90] sm:$0xff]
    %v936 = vld [vmem:[%s3 + $0xd98] sm:$0xff]
    %v937 = vld [vmem:[%s3 + $0xda0] sm:$0xff]
    %v938 = vld [vmem:[%s3 + $0xda8] sm:$0xff]
    %v939 = vld [vmem:[%s3 + $0xdb0] sm:$0xff]
    %v940 = vld [vmem:[%s3 + $0xdb8] sm:$0xff]
    %v941 = vld [vmem:[%s3 + $0xdc0] sm:$0xff]
    %v942 = vld [vmem:[%s3 + $0xdc8] sm:$0xff]
    %v943 = vld [vmem:[%s3 + $0xdd0] sm:$0xff]
    %v944 = vld [vmem:[%s3 + $0xdd8] sm:$0xff]
    %v945 = vld [vmem:[%s3 + $0xde0] sm:$0xff]
    %v946 = vld [vmem:[%s3 + $0xde8] sm:$0xff]
    %v947 = vld [vmem:[%s3 + $0xdf0] sm:$0xff]
    %v948 = vld [vmem:[%s3 + $0xdf8] sm:$0xff]
    %v949 = vld [vmem:[%s3 + $0xe00] sm:$0xff]
    %v950 = vld [vmem:[%s3 + $0xe08] sm:$0xff]
    %v951 = vld [vmem:[%s3 + $0xe10] sm:$0xff]
    %v952 = vld [vmem:[%s3 + $0xe18] sm:$0xff]
    %v953 = vld [vmem:[%s3 + $0xe20] sm:$0xff]
    %v954 = vld [vmem:[%s3 + $0xe28] sm:$0xff]
    %v955 = vld [vmem:[%s3 + $0xe30] sm:$0xff]
    %v956 = vld [vmem:[%s3 + $0xe38] sm:$0xff]
    %v957 = vld [vmem:[%s3 + $0xe40] sm:$0xff]
    %v958 = vld [vmem:[%s3 + $0xe48] sm:$0xff]
    %v959 = vld [vmem:[%s3 + $0xe50] sm:$0xff]
    %v960 = vld [vmem:[%s3 + $0xe58] sm:$0xff]
    %v961 = vld [vmem:[%s3 + $0xe60] sm:$0xff]
    %v962 = vld [vmem:[%s3 + $0xe68] sm:$0xff]
    %v963 = vld [vmem:[%s3 + $0xe70] sm:$0xff]
    %v964 = vld [vmem:[%s3 + $0xe78] sm:$0xff]
    %v965 = vld [vmem:[%s3 + $0xe80] sm:$0xff]
    %v966 = vld [vmem:[%s3 + $0xe88] sm:$0xff]
    %v967 = vld [vmem:[%s3 + $0xe90] sm:$0xff]
    %v968 = vld [vmem:[%s3 + $0xe98] sm:$0xff]
    %v969 = vld [vmem:[%s3 + $0xea0] sm:$0xff]
    %v970 = vld [vmem:[%s3 + $0xea8] sm:$0xff]
    %v971 = vld [vmem:[%s3 + $0xeb0] sm:$0xff]
    %v972 = vld [vmem:[%s3 + $0xeb8] sm:$0xff]
    %v973 = vld [vmem:[%s3 + $0xec0] sm:$0xff]
    %v974 = vld [vmem:[%s3 + $0xec8] sm:$0xff]
    %v975 = vld [vmem:[%s3 + $0xed0] sm:$0xff]
    %v976 = vld [vmem:[%s3 + $0xed8] sm:$0xff]
    %v977 = vld [vmem:[%s3 + $0xee0] sm:$0xff]
    %v978 = vld [vmem:[%s3 + $0xee8] sm:$0xff]
    %v979 = vld [vmem:[%s3 + $0xef0] sm:$0xff]
    %v980 = vld [vmem:[%s3 + $0xef8] sm:$0xff]
    %v981 = vld [vmem:[%s3 + $0xf00] sm:$0xff]
    %v982 = vld [vmem:[%s3 + $0xf08] sm:$0xff]
    %v983 = vld [vmem:[%s3 + $0xf10] sm:$0xff]
    %v984 = vld [vmem:[%s3 + $0xf18] sm:$0xff]
    %v985 = vld [vmem:[%s3 + $0xf20] sm:$0xff]
    %v986 = vld [vmem:[%s3 + $0xf28] sm:$0xff]
    %v987 = vld [vmem:[%s3 + $0xf30] sm:$0xff]
    %v988 = vld [vmem:[%s3 + $0xf38] sm:$0xff]
    %v989 = vld [vmem:[%s3 + $0xf40] sm:$0xff]
    %v990 = vld [vmem:[%s3 + $0xf48] sm:$0xff]
    %v991 = vld [vmem:[%s3 + $0xf50] sm:$0xff]
    %v992 = vld [vmem:[%s3 + $0xf58] sm:$0xff]
    %v993 = vld [vmem:[%s3 + $0xf60] sm:$0xff]
    %v994 = vld [vmem:[%s3 + $0xf68] sm:$0xff]
    %v995 = vld [vmem:[%s3 + $0xf70] sm:$0xff]
    %v996 = vld [vmem:[%s3 + $0xf78] sm:$0xff]
    %v997 = vld [vmem:[%s3 + $0xf80] sm:$0xff]
    %v998 = vld [vmem:[%s3 + $0xf88] sm:$0xff]
    %v999 = vld [vmem:[%s3 + $0xf90] sm:$0xff]
    %v1000 = vld [vmem:[%s3 + $0xf98] sm:$0xff]
    %v1001 = vld [vmem:[%s3 + $0xfa0] sm:$0xff]
    %v1002 = vld [vmem:[%s3 + $0xfa8] sm:$0xff]
    %v1003 = vld [vmem:[%s3 + $0xfb0] sm:$0xff]
    %v1004 = vld [vmem:[%s3 + $0xfb8] sm:$0xff]
    %v1005 = vld [vmem:[%s3 + $0xfc0] sm:$0xff]
    %v1006 = vld [vmem:[%s3 + $0xfc8] sm:$0xff]
    %v1007 = vld [vmem:[%s3 + $0xfd0] sm:$0xff]
    %v1008 = vld [vmem:[%s3 + $0xfd8] sm:$0xff]
    %v1009 = vld [vmem:[%s3 + $0xfe0] sm:$0xff]
    %v1010 = vld [vmem:[%s3 + $0xfe8] sm:$0xff]
    %v1011 = vld [vmem:[%s3 + $0xff0] sm:$0xff]
    %v1012 = vld [vmem:[%s3 + $0xff8] sm:$0xff]
    %v1013 = vld [vmem:[%s3 + $0x1000] sm:$0xff]
    %v1014 = vld [vmem:[%s3 + $0x1008] sm:$0xff]
    %v1015 = vld [vmem:[%s3 + $0x1010] sm:$0xff]
    %v1016 = vld [vmem:[%s3 + $0x1018] sm:$0xff]
    %v1017 = vld [vmem:[%s3 + $0x1020] sm:$0xff]
    %v1018 = vld [vmem:[%s3 + $0x1028] sm:$0xff]
    %v1019 = vld [vmem:[%s3 + $0x1030] sm:$0xff]
    %v1020 = vld [vmem:[%s3 + $0x1038] sm:$0xff]
    %v1021 = vld [vmem:[%s3 + $0x1040] sm:$0xff]
    %v1022 = vld [vmem:[%s3 + $0x1048] sm:$0xff]
    %v1023 = vld [vmem:[%s3 + $0x1050] sm:$0xff]
    %v1024 = vld [vmem:[%s3 + $0x1058] sm:$0xff]
    %v1025 = vld [vmem:[%s3 + $0x1060] sm:$0xff]
    %v1026 = vld [vmem:[%s3 + $0x1068] sm:$0xff]
    %v1027 = vld [vmem:[%s3 + $0x1070] sm:$0xff]
    %v1028 = vld [vmem:[%s3 + $0x1078] sm:$0xff]
    %v1029 = vld [vmem:[%s3 + $0x1080] sm:$0xff]
    %v1030 = vld [vmem:[%s3 + $0x1088] sm:$0xff]
    %v1031 = vld [vmem:[%s3 + $0x1090] sm:$0xff]
    %v1032 = vld [vmem:[%s3 + $0x1098] sm:$0xff]
    %v1033 = vld [vmem:[%s3 + $0x10a0] sm:$0xff]
    %v1034 = vld [vmem:[%s3 + $0x10a8] sm:$0xff]
    %v1035 = vld [vmem:[%s3 + $0x10b0] sm:$0xff]
    %v1036 = vld [vmem:[%s3 + $0x10b8] sm:$0xff]
    %v1037 = vld [vmem:[%s3 + $0x10c0] sm:$0xff]
    %v1038 = vld [vmem:[%s3 + $0x10c8] sm:$0xff]
    %v1039 = vld [vmem:[%s3 + $0x10d0] sm:$0xff]
    %v1040 = vld [vmem:[%s3 + $0x10d8] sm:$0xff]
    %v1041 = vld [vmem:[%s3 + $0x10e0] sm:$0xff]
    %v1042 = vld [vmem:[%s3 + $0x10e8] sm:$0xff]
    %v1043 = vld [vmem:[%s3 + $0x10f0] sm:$0xff]
    %v1044 = vld [vmem:[%s3 + $0x10f8] sm:$0xff]
    %v1045 = vld [vmem:[%s3 + $0x1100] sm:$0xff]
    %v1046 = vld [vmem:[%s3 + $0x1108] sm:$0xff]
    %v1047 = vld [vmem:[%s3 + $0x1110] sm:$0xff]
    %v1048 = vld [vmem:[%s3 + $0x1118] sm:$0xff]
    %v1049 = vld [vmem:[%s3 + $0x1120] sm:$0xff]
    %v1050 = vld [vmem:[%s3 + $0x1128] sm:$0xff]
    %v1051 = vld [vmem:[%s3 + $0x1130] sm:$0xff]
    %v1052 = vld [vmem:[%s3 + $0x1138] sm:$0xff]
    %v1053 = vld [vmem:[%s3 + $0x1140] sm:$0xff]
    %v1054 = vld [vmem:[%s3 + $0x1148] sm:$0xff]
    %v1055 = vld [vmem:[%s3 + $0x1150] sm:$0xff]
    %v1056 = vld [vmem:[%s3 + $0x1158] sm:$0xff]
    %v1057 = vld [vmem:[%s3 + $0x1160] sm:$0xff]
    %v1058 = vld [vmem:[%s3 + $0x1168] sm:$0xff]
    %v1059 = vld [vmem:[%s3 + $0x1170] sm:$0xff]
    %v1060 = vld [vmem:[%s3 + $0x1178] sm:$0xff]
    %v1061 = vld [vmem:[%s3 + $0x1180] sm:$0xff]
    %v1062 = vld [vmem:[%s3 + $0x1188] sm:$0xff]
    %v1063 = vld [vmem:[%s3 + $0x1190] sm:$0xff]
    %v1064 = vld [vmem:[%s3 + $0x1198] sm:$0xff]
    %v1065 = vld [vmem:[%s3 + $0x11a0] sm:$0xff]
    %v1066 = vld [vmem:[%s3 + $0x11a8] sm:$0xff]
    %v1067 = vld [vmem:[%s3 + $0x11b0] sm:$0xff]
    %v1068 = vld [vmem:[%s3 + $0x11b8] sm:$0xff]
    %v1069 = vld [vmem:[%s3 + $0x11c0] sm:$0xff]
    %v1070 = vld [vmem:[%s3 + $0x11c8] sm:$0xff]
    %v1071 = vld [vmem:[%s3 + $0x11d0] sm:$0xff]
    %v1072 = vld [vmem:[%s3 + $0x11d8] sm:$0xff]
    %v1073 = vld [vmem:[%s3 + $0x11e0] sm:$0xff]
    %v1074 = vld [vmem:[%s3 + $0x11e8] sm:$0xff]
    %v1075 = vld [vmem:[%s3 + $0x11f0] sm:$0xff]
    %v1076 = vld [vmem:[%s3 + $0x11f8] sm:$0xff]
    %v1077 = vld [vmem:[%s3 + $0x1200] sm:$0xff]
    %v1078 = vld [vmem:[%s3 + $0x1208] sm:$0xff]
    %v1079 = vld [vmem:[%s3 + $0x1210] sm:$0xff]
    %v1080 = vld [vmem:[%s3 + $0x1218] sm:$0xff]
    %v1081 = vld [vmem:[%s3 + $0x1220] sm:$0xff]
    %v1082 = vld [vmem:[%s3 + $0x1228] sm:$0xff]
    %v1083 = vld [vmem:[%s3 + $0x1230] sm:$0xff]
    %v1084 = vld [vmem:[%s3 + $0x1238] sm:$0xff]
    %v1085 = vld [vmem:[%s3 + $0x1240] sm:$0xff]
    %v1086 = vld [vmem:[%s3 + $0x1248] sm:$0xff]
    %v1087 = vld [vmem:[%s3 + $0x1250] sm:$0xff]
    %v1088 = vld [vmem:[%s3 + $0x1258] sm:$0xff]
    %v1089 = vld [vmem:[%s3 + $0x1260] sm:$0xff]
    %v1090 = vld [vmem:[%s3 + $0x1268] sm:$0xff]
    %v1091 = vld [vmem:[%s3 + $0x1270] sm:$0xff]
    %v1092 = vld [vmem:[%s3 + $0x1278] sm:$0xff]
    %v1093 = vld [vmem:[%s3 + $0x1280] sm:$0xff]
    %v1094 = vld [vmem:[%s3 + $0x1288] sm:$0xff]
    %v1095 = vld [vmem:[%s3 + $0x1290] sm:$0xff]
    %v1096 = vld [vmem:[%s3 + $0x1298] sm:$0xff]
    %v1097 = vld [vmem:[%s3 + $0x12a0] sm:$0xff]
    %v1098 = vld [vmem:[%s3 + $0x12a8] sm:$0xff]
    %v1099 = vld [vmem:[%s3 + $0x12b0] sm:$0xff]
    %v1100 = vld [vmem:[%s3 + $0x12b8] sm:$0xff]
    %v1101 = vld [vmem:[%s3 + $0x12c0] sm:$0xff]
    %v1102 = vld [vmem:[%s3 + $0x12c8] sm:$0xff]
    %v1103 = vld [vmem:[%s3 + $0x12d0] sm:$0xff]
    %v1104 = vld [vmem:[%s3 + $0x12d8] sm:$0xff]
    %v1105 = vld [vmem:[%s3 + $0x12e0] sm:$0xff]
    %v1106 = vld [vmem:[%s3 + $0x12e8] sm:$0xff]
    %v1107 = vld [vmem:[%s3 + $0x12f0] sm:$0xff]
    %v1108 = vld [vmem:[%s3 + $0x12f8] sm:$0xff]
    %v1109 = vld [vmem:[%s3 + $0x1300] sm:$0xff]
    %v1110 = vld [vmem:[%s3 + $0x1308] sm:$0xff]
    %v1111 = vld [vmem:[%s3 + $0x1310] sm:$0xff]
    %v1112 = vld [vmem:[%s3 + $0x1318] sm:$0xff]
    %v1113 = vld [vmem:[%s3 + $0x1320] sm:$0xff]
    %v1114 = vld [vmem:[%s3 + $0x1328] sm:$0xff]
    %v1115 = vld [vmem:[%s3 + $0x1330] sm:$0xff]
    %v1116 = vld [vmem:[%s3 + $0x1338] sm:$0xff]
    %v1117 = vld [vmem:[%s3 + $0x1340] sm:$0xff]
    %v1118 = vld [vmem:[%s3 + $0x1348] sm:$0xff]
    %v1119 = vld [vmem:[%s3 + $0x1350] sm:$0xff]
    %v1120 = vld [vmem:[%s3 + $0x1358] sm:$0xff]
    %v1121 = vld [vmem:[%s3 + $0x1360] sm:$0xff]
    %v1122 = vld [vmem:[%s3 + $0x1368] sm:$0xff]
    %v1123 = vld [vmem:[%s3 + $0x1370] sm:$0xff]
    %v1124 = vld [vmem:[%s3 + $0x1378] sm:$0xff]
    %v1125 = vld [vmem:[%s3 + $0x1380] sm:$0xff]
    %v1126 = vld [vmem:[%s3 + $0x1388] sm:$0xff]
    %v1127 = vld [vmem:[%s3 + $0x1390] sm:$0xff]
    %v1128 = vld [vmem:[%s3 + $0x1398] sm:$0xff]
    %v1129 = vld [vmem:[%s3 + $0x13a0] sm:$0xff]
    %v1130 = vld [vmem:[%s3 + $0x13a8] sm:$0xff]
    %v1131 = vld [vmem:[%s3 + $0x13b0] sm:$0xff]
    %v1132 = vld [vmem:[%s3 + $0x13b8] sm:$0xff]
    %v1133 = vld [vmem:[%s3 + $0x13c0] sm:$0xff]
    %v1134 = vld [vmem:[%s3 + $0x13c8] sm:$0xff]
    %v1135 = vld [vmem:[%s3 + $0x13d0] sm:$0xff]
    %v1136 = vld [vmem:[%s3 + $0x13d8] sm:$0xff]
    %v1137 = vld [vmem:[%s3 + $0x13e0] sm:$0xff]
    %v1138 = vld [vmem:[%s3 + $0x13e8] sm:$0xff]
    %v1139 = vld [vmem:[%s3 + $0x13f0] sm:$0xff]
    %v1140 = vld [vmem:[%s3 + $0x13f8] sm:$0xff]
    %v1141 = vld [vmem:[%s3 + $0x1400] sm:$0xff]
    %v1142 = vld [vmem:[%s3 + $0x1408] sm:$0xff]
    %v1143 = vld [vmem:[%s3 + $0x1410] sm:$0xff]
    %v1144 = vld [vmem:[%s3 + $0x1418] sm:$0xff]
    %v1145 = vld [vmem:[%s3 + $0x1420] sm:$0xff]
    %v1146 = vld [vmem:[%s3 + $0x1428] sm:$0xff]
    %v1147 = vld [vmem:[%s3 + $0x1430] sm:$0xff]
    %v1148 = vld [vmem:[%s3 + $0x1438] sm:$0xff]
    %v1149 = vld [vmem:[%s3 + $0x1440] sm:$0xff]
    %v1150 = vld [vmem:[%s3 + $0x1448] sm:$0xff]
    %v1151 = vld [vmem:[%s3 + $0x1450] sm:$0xff]
    %v1152 = vld [vmem:[%s3 + $0x1458] sm:$0xff]
    %v1153 = vld [vmem:[%s3 + $0x1460] sm:$0xff]
    %v1154 = vld [vmem:[%s3 + $0x1468] sm:$0xff]
    %v1155 = vld [vmem:[%s3 + $0x1470] sm:$0xff]
    %v1156 = vld [vmem:[%s3 + $0x1478] sm:$0xff]
    %v1157 = vld [vmem:[%s3 + $0x1480] sm:$0xff]
    %v1158 = vld [vmem:[%s3 + $0x1488] sm:$0xff]
    %v1159 = vld [vmem:[%s3 + $0x1490] sm:$0xff]
    %v1160 = vld [vmem:[%s3 + $0x1498] sm:$0xff]
    %v1161 = vld [vmem:[%s3 + $0x14a0] sm:$0xff]
    %v1162 = vld [vmem:[%s3 + $0x14a8] sm:$0xff]
    %v1163 = vld [vmem:[%s3 + $0x14b0] sm:$0xff]
    %v1164 = vld [vmem:[%s3 + $0x14b8] sm:$0xff]
    %v1165 = vld [vmem:[%s3 + $0x14c0] sm:$0xff]
    %v1166 = vld [vmem:[%s3 + $0x14c8] sm:$0xff]
    %v1167 = vld [vmem:[%s3 + $0x14d0] sm:$0xff]
    %v1168 = vld [vmem:[%s3 + $0x14d8] sm:$0xff]
    %v1169 = vld [vmem:[%s3 + $0x14e0] sm:$0xff]
    %v1170 = vld [vmem:[%s3 + $0x14e8] sm:$0xff]
    %v1171 = vld [vmem:[%s3 + $0x14f0] sm:$0xff]
    %v1172 = vld [vmem:[%s3 + $0x14f8] sm:$0xff]
    %v1173 = vld [vmem:[%s3 + $0x1500] sm:$0xff]
    %v1174 = vld [vmem:[%s3 + $0x1508] sm:$0xff]
    %v1175 = vld [vmem:[%s3 + $0x1510] sm:$0xff]
    %v1176 = vld [vmem:[%s3 + $0x1518] sm:$0xff]
    %v1177 = vld [vmem:[%s3 + $0x1520] sm:$0xff]
    %v1178 = vld [vmem:[%s3 + $0x1528] sm:$0xff]
    %v1179 = vld [vmem:[%s3 + $0x1530] sm:$0xff]
    %v1180 = vld [vmem:[%s3 + $0x1538] sm:$0xff]
    %v1181 = vld [vmem:[%s3 + $0x1540] sm:$0xff]
    %v1182 = vld [vmem:[%s3 + $0x1548] sm:$0xff]
    %v1183 = vld [vmem:[%s3 + $0x1550] sm:$0xff]
    %v1184 = vld [vmem:[%s3 + $0x1558] sm:$0xff]
    %v1185 = vld [vmem:[%s3 + $0x1560] sm:$0xff]
    %v1186 = vld [vmem:[%s3 + $0x1568] sm:$0xff]
    %v1187 = vld [vmem:[%s3 + $0x1570] sm:$0xff]
    %v1188 = vld [vmem:[%s3 + $0x1578] sm:$0xff]
    %v1189 = vld [vmem:[%s3 + $0x1580] sm:$0xff]
    %v1190 = vld [vmem:[%s3 + $0x1588] sm:$0xff]
    %v1191 = vld [vmem:[%s3 + $0x1590] sm:$0xff]
    %v1192 = vld [vmem:[%s3 + $0x1598] sm:$0xff]
    %v1193 = vld [vmem:[%s3 + $0x15a0] sm:$0xff]
    %v1194 = vld [vmem:[%s3 + $0x15a8] sm:$0xff]
    %v1195 = vld [vmem:[%s3 + $0x15b0] sm:$0xff]
    %v1196 = vld [vmem:[%s3 + $0x15b8] sm:$0xff]
    %v1197 = vld [vmem:[%s3 + $0x15c0] sm:$0xff]
    %v1198 = vld [vmem:[%s3 + $0x15c8] sm:$0xff]
    %v1199 = vld [vmem:[%s3 + $0x15d0] sm:$0xff]
    %v1200 = vld [vmem:[%s3 + $0x15d8] sm:$0xff]
    %v1201 = vld [vmem:[%s3 + $0x15e0] sm:$0xff]
    %v1202 = vld [vmem:[%s3 + $0x15e8] sm:$0xff]
    %v1203 = vld [vmem:[%s3 + $0x15f0] sm:$0xff]
    %v1204 = vld [vmem:[%s3 + $0x15f8] sm:$0xff]
    %v1205 = vld [vmem:[%s3 + $0x1600] sm:$0xff]
    %v1206 = vld [vmem:[%s3 + $0x1608] sm:$0xff]
    %v1207 = vld [vmem:[%s3 + $0x1610] sm:$0xff]
    %v1208 = vld [vmem:[%s3 + $0x1618] sm:$0xff]
    %v1209 = vld [vmem:[%s3 + $0x1620] sm:$0xff]
    %v1210 = vld [vmem:[%s3 + $0x1628] sm:$0xff]
    %v1211 = vld [vmem:[%s3 + $0x1630] sm:$0xff]
    %v1212 = vld [vmem:[%s3 + $0x1638] sm:$0xff]
    %v1213 = vld [vmem:[%s3 + $0x1640] sm:$0xff]
    %v1214 = vld [vmem:[%s3 + $0x1648] sm:$0xff]
    %v1215 = vld [vmem:[%s3 + $0x1650] sm:$0xff]
    %v1216 = vld [vmem:[%s3 + $0x1658] sm:$0xff]
    %v1217 = vld [vmem:[%s3 + $0x1660] sm:$0xff]
    %v1218 = vld [vmem:[%s3 + $0x1668] sm:$0xff]
    %v1219 = vld [vmem:[%s3 + $0x1670] sm:$0xff]
    %v1220 = vld [vmem:[%s3 + $0x1678] sm:$0xff]
    %v1221 = vld [vmem:[%s3 + $0x1680] sm:$0xff]
    %v1222 = vld [vmem:[%s3 + $0x1688] sm:$0xff]
    %v1223 = vld [vmem:[%s3 + $0x1690] sm:$0xff]
    %v1224 = vld [vmem:[%s3 + $0x1698] sm:$0xff]
    %v1225 = vld [vmem:[%s3 + $0x16a0] sm:$0xff]
    %v1226 = vld [vmem:[%s3 + $0x16a8] sm:$0xff]
    %v1227 = vld [vmem:[%s3 + $0x16b0] sm:$0xff]
    %v1228 = vld [vmem:[%s3 + $0x16b8] sm:$0xff]
    %v1229 = vld [vmem:[%s3 + $0x16c0] sm:$0xff]
    %v1230 = vld [vmem:[%s3 + $0x16c8] sm:$0xff]
    %v1231 = vld [vmem:[%s3 + $0x16d0] sm:$0xff]
    %v1232 = vld [vmem:[%s3 + $0x16d8] sm:$0xff]
    %v1233 = vld [vmem:[%s3 + $0x16e0] sm:$0xff]
    %v1234 = vld [vmem:[%s3 + $0x16e8] sm:$0xff]
    %v1235 = vld [vmem:[%s3 + $0x16f0] sm:$0xff]
    %v1236 = vld [vmem:[%s3 + $0x16f8] sm:$0xff]
    %v1237 = vld [vmem:[%s3 + $0x1700] sm:$0xff]
    %v1238 = vld [vmem:[%s3 + $0x1708] sm:$0xff]
    %v1239 = vld [vmem:[%s3 + $0x1710] sm:$0xff]
    %v1240 = vld [vmem:[%s3 + $0x1718] sm:$0xff]
    %v1241 = vld [vmem:[%s3 + $0x1720] sm:$0xff]
    %v1242 = vld [vmem:[%s3 + $0x1728] sm:$0xff]
    %v1243 = vld [vmem:[%s3 + $0x1730] sm:$0xff]
    %v1244 = vld [vmem:[%s3 + $0x1738] sm:$0xff]
    %v1245 = vld [vmem:[%s3 + $0x1740] sm:$0xff]
    %v1246 = vld [vmem:[%s3 + $0x1748] sm:$0xff]
    %v1247 = vld [vmem:[%s3 + $0x1750] sm:$0xff]
    %v1248 = vld [vmem:[%s3 + $0x1758] sm:$0xff]
    %v1249 = vld [vmem:[%s3 + $0x1760] sm:$0xff]
    %v1250 = vld [vmem:[%s3 + $0x1768] sm:$0xff]
    %v1251 = vld [vmem:[%s3 + $0x1770] sm:$0xff]
    %v1252 = vld [vmem:[%s3 + $0x1778] sm:$0xff]
    %v1253 = vld [vmem:[%s3 + $0x1780] sm:$0xff]
    %v1254 = vld [vmem:[%s3 + $0x1788] sm:$0xff]
    %v1255 = vld [vmem:[%s3 + $0x1790] sm:$0xff]
    %v1256 = vld [vmem:[%s3 + $0x1798] sm:$0xff]
    %v1257 = vld [vmem:[%s3 + $0x17a0] sm:$0xff]
    %v1258 = vld [vmem:[%s3 + $0x17a8] sm:$0xff]
    %v1259 = vld [vmem:[%s3 + $0x17b0] sm:$0xff]
    %v1260 = vld [vmem:[%s3 + $0x17b8] sm:$0xff]
    %v1261 = vld [vmem:[%s3 + $0x17c0] sm:$0xff]
    %v1262 = vld [vmem:[%s3 + $0x17c8] sm:$0xff]
    %v1263 = vld [vmem:[%s3 + $0x17d0] sm:$0xff]
    %v1264 = vld [vmem:[%s3 + $0x17d8] sm:$0xff]
    %v1265 = vld [vmem:[%s3 + $0x17e0] sm:$0xff]
    %v1266 = vld [vmem:[%s3 + $0x17e8] sm:$0xff]
    %v1267 = vld [vmem:[%s3 + $0x17f0] sm:$0xff]
    %v1268 = vld [vmem:[%s3 + $0x17f8] sm:$0xff]
    %v1269 = vld [vmem:[%s3 + $0x1800] sm:$0xff]
    %v1270 = vld [vmem:[%s3 + $0x1808] sm:$0xff]
    %v1271 = vld [vmem:[%s3 + $0x1810] sm:$0xff]
    %v1272 = vld [vmem:[%s3 + $0x1818] sm:$0xff]
    %v1273 = vld [vmem:[%s3 + $0x1820] sm:$0xff]
    %v1274 = vld [vmem:[%s3 + $0x1828] sm:$0xff]
    %v1275 = vld [vmem:[%s3 + $0x1830] sm:$0xff]
    %v1276 = vld [vmem:[%s3 + $0x1838] sm:$0xff]
    %v1277 = vld [vmem:[%s3 + $0x1840] sm:$0xff]
    %v1278 = vld [vmem:[%s3 + $0x1848] sm:$0xff]
    %v1279 = vld [vmem:[%s3 + $0x1850] sm:$0xff]
    %v1280 = vld [vmem:[%s3 + $0x1858] sm:$0xff]
    %v1281 = vld [vmem:[%s3 + $0x1860] sm:$0xff]
    %v1282 = vld [vmem:[%s3 + $0x1868] sm:$0xff]
    %v1283 = vld [vmem:[%s3 + $0x1870] sm:$0xff]
    %v1284 = vld [vmem:[%s3 + $0x1878] sm:$0xff]
    %v1285 = vld [vmem:[%s3 + $0x1880] sm:$0xff]
    %v1286 = vld [vmem:[%s3 + $0x1888] sm:$0xff]
    %v1287 = vld [vmem:[%s3 + $0x1890] sm:$0xff]
    %v1288 = vld [vmem:[%s3 + $0x1898] sm:$0xff]
    %v1289 = vld [vmem:[%s3 + $0x18a0] sm:$0xff]
    %v1290 = vld [vmem:[%s3 + $0x18a8] sm:$0xff]
    %v1291 = vld [vmem:[%s3 + $0x18b0] sm:$0xff]
    %v1292 = vld [vmem:[%s3 + $0x18b8] sm:$0xff]
    %v1293 = vld [vmem:[%s3 + $0x18c0] sm:$0xff]
    %v1294 = vld [vmem:[%s3 + $0x18c8] sm:$0xff]
    %v1295 = vld [vmem:[%s3 + $0x18d0] sm:$0xff]
    %v1296 = vld [vmem:[%s3 + $0x18d8] sm:$0xff]
    %v1297 = vld [vmem:[%s3 + $0x18e0] sm:$0xff]
    %v1298 = vld [vmem:[%s3 + $0x18e8] sm:$0xff]
    %v1299 = vld [vmem:[%s3 + $0x18f0] sm:$0xff]
    %v1300 = vld [vmem:[%s3 + $0x18f8] sm:$0xff]
    %v1301 = vld [vmem:[%s3 + $0x1900] sm:$0xff]
    %v1302 = vld [vmem:[%s3 + $0x1908] sm:$0xff]
    %v1303 = vld [vmem:[%s3 + $0x1910] sm:$0xff]
    %v1304 = vld [vmem:[%s3 + $0x1918] sm:$0xff]
    %v1305 = vld [vmem:[%s3 + $0x1920] sm:$0xff]
    %v1306 = vld [vmem:[%s3 + $0x1928] sm:$0xff]
    %v1307 = vld [vmem:[%s3 + $0x1930] sm:$0xff]
    %v1308 = vld [vmem:[%s3 + $0x1938] sm:$0xff]
    %v1309 = vld [vmem:[%s3 + $0x1940] sm:$0xff]
    %v1310 = vld [vmem:[%s3 + $0x1948] sm:$0xff]
    %v1311 = vld [vmem:[%s3 + $0x1950] sm:$0xff]
    %v1312 = vld [vmem:[%s3 + $0x1958] sm:$0xff]
    %v1313 = vld [vmem:[%s3 + $0x1960] sm:$0xff]
    %v1314 = vld [vmem:[%s3 + $0x1968] sm:$0xff]
    %v1315 = vld [vmem:[%s3 + $0x1970] sm:$0xff]
    %v1316 = vld [vmem:[%s3 + $0x1978] sm:$0xff]
    %v1317 = vld [vmem:[%s3 + $0x1980] sm:$0xff]
    %v1318 = vld [vmem:[%s3 + $0x1988] sm:$0xff]
    %v1319 = vld [vmem:[%s3 + $0x1990] sm:$0xff]
    %v1320 = vld [vmem:[%s3 + $0x1998] sm:$0xff]
    %v1321 = vld [vmem:[%s3 + $0x19a0] sm:$0xff]
    %v1322 = vld [vmem:[%s3 + $0x19a8] sm:$0xff]
    %v1323 = vld [vmem:[%s3 + $0x19b0] sm:$0xff]
    %v1324 = vld [vmem:[%s3 + $0x19b8] sm:$0xff]
    %v1325 = vld [vmem:[%s3 + $0x19c0] sm:$0xff]
    %v1326 = vld [vmem:[%s3 + $0x19c8] sm:$0xff]
    %v1327 = vld [vmem:[%s3 + $0x19d0] sm:$0xff]
    %v1328 = vld [vmem:[%s3 + $0x19d8] sm:$0xff]
    %v1329 = vld [vmem:[%s3 + $0x19e0] sm:$0xff]
    %v1330 = vld [vmem:[%s3 + $0x19e8] sm:$0xff]
    %v1331 = vld [vmem:[%s3 + $0x19f0] sm:$0xff]
    %v1332 = vld [vmem:[%s3 + $0x19f8] sm:$0xff]
    %v1333 = vld [vmem:[%s3 + $0x1a00] sm:$0xff]
    %v1334 = vld [vmem:[%s3 + $0x1a08] sm:$0xff]
    %v1335 = vld [vmem:[%s3 + $0x1a10] sm:$0xff]
    %v1336 = vld [vmem:[%s3 + $0x1a18] sm:$0xff]
    %v1337 = vld [vmem:[%s3 + $0x1a20] sm:$0xff]
    %v1338 = vld [vmem:[%s3 + $0x1a28] sm:$0xff]
    %v1339 = vld [vmem:[%s3 + $0x1a30] sm:$0xff]
    %v1340 = vld [vmem:[%s3 + $0x1a38] sm:$0xff]
    %v1341 = vld [vmem:[%s3 + $0x1a40] sm:$0xff]
    %v1342 = vld [vmem:[%s3 + $0x1a48] sm:$0xff]
    %v1343 = vld [vmem:[%s3 + $0x1a50] sm:$0xff]
    %v1344 = vld [vmem:[%s3 + $0x1a58] sm:$0xff]
    %v1345 = vld [vmem:[%s3 + $0x1a60] sm:$0xff]
    %v1346 = vld [vmem:[%s3 + $0x1a68] sm:$0xff]
    %v1347 = vld [vmem:[%s3 + $0x1a70] sm:$0xff]
    %v1348 = vld [vmem:[%s3 + $0x1a78] sm:$0xff]
    %v1349 = vld [vmem:[%s3 + $0x1a80] sm:$0xff]
    %v1350 = vld [vmem:[%s3 + $0x1a88] sm:$0xff]
    %v1351 = vld [vmem:[%s3 + $0x1a90] sm:$0xff]
    %v1352 = vld [vmem:[%s3 + $0x1a98] sm:$0xff]
    %v1353 = vld [vmem:[%s3 + $0x1aa0] sm:$0xff]
    %v1354 = vld [vmem:[%s3 + $0x1aa8] sm:$0xff]
    %v1355 = vld [vmem:[%s3 + $0x1ab0] sm:$0xff]
    %v1356 = vld [vmem:[%s3 + $0x1ab8] sm:$0xff]
    %v1357 = vld [vmem:[%s3 + $0x1ac0] sm:$0xff]
    %v1358 = vld [vmem:[%s3 + $0x1ac8] sm:$0xff]
    %v1359 = vld [vmem:[%s3 + $0x1ad0] sm:$0xff]
    %v1360 = vld [vmem:[%s3 + $0x1ad8] sm:$0xff]
    %v1361 = vld [vmem:[%s3 + $0x1ae0] sm:$0xff]
    %v1362 = vld [vmem:[%s3 + $0x1ae8] sm:$0xff]
    %v1363 = vld [vmem:[%s3 + $0x1af0] sm:$0xff]
    %v1364 = vld [vmem:[%s3 + $0x1af8] sm:$0xff]
    %v1365 = vld [vmem:[%s3 + $0x1b00] sm:$0xff]
    %v1366 = vld [vmem:[%s3 + $0x1b08] sm:$0xff]
    %v1367 = vld [vmem:[%s3 + $0x1b10] sm:$0xff]
    %v1368 = vld [vmem:[%s3 + $0x1b18] sm:$0xff]
    %v1369 = vld [vmem:[%s3 + $0x1b20] sm:$0xff]
    %v1370 = vld [vmem:[%s3 + $0x1b28] sm:$0xff]
    %v1371 = vld [vmem:[%s3 + $0x1b30] sm:$0xff]
    %v1372 = vld [vmem:[%s3 + $0x1b38] sm:$0xff]
    %v1373 = vld [vmem:[%s3 + $0x1b40] sm:$0xff]
    %v1374 = vld [vmem:[%s3 + $0x1b48] sm:$0xff]
    %v1375 = vld [vmem:[%s3 + $0x1b50] sm:$0xff]
    %v1376 = vld [vmem:[%s3 + $0x1b58] sm:$0xff]
    %v1377 = vld [vmem:[%s3 + $0x1b60] sm:$0xff]
    %v1378 = vld [vmem:[%s3 + $0x1b68] sm:$0xff]
    %v1379 = vld [vmem:[%s3 + $0x1b70] sm:$0xff]
    %v1380 = vld [vmem:[%s3 + $0x1b78] sm:$0xff]
    %v1381 = vld [vmem:[%s3 + $0x1b80] sm:$0xff]
    %v1382 = vld [vmem:[%s3 + $0x1b88] sm:$0xff]
    %v1383 = vld [vmem:[%s3 + $0x1b90] sm:$0xff]
    %v1384 = vld [vmem:[%s3 + $0x1b98] sm:$0xff]
    %v1385 = vld [vmem:[%s3 + $0x1ba0] sm:$0xff]
    %v1386 = vld [vmem:[%s3 + $0x1ba8] sm:$0xff]
    %v1387 = vld [vmem:[%s3 + $0x1bb0] sm:$0xff]
    %v1388 = vld [vmem:[%s3 + $0x1bb8] sm:$0xff]
    %v1389 = vld [vmem:[%s3 + $0x1bc0] sm:$0xff]
    %v1390 = vld [vmem:[%s3 + $0x1bc8] sm:$0xff]
    %v1391 = vld [vmem:[%s3 + $0x1bd0] sm:$0xff]
    %v1392 = vld [vmem:[%s3 + $0x1bd8] sm:$0xff]
    %v1393 = vld [vmem:[%s3 + $0x1be0] sm:$0xff]
    %v1394 = vld [vmem:[%s3 + $0x1be8] sm:$0xff]
    %v1395 = vld [vmem:[%s3 + $0x1bf0] sm:$0xff]
    %v1396 = vld [vmem:[%s3 + $0x1bf8] sm:$0xff]
    %v1397 = vld [vmem:[%s3 + $0x1c00] sm:$0xff]
    %v1398 = vld [vmem:[%s3 + $0x1c08] sm:$0xff]
    %v1399 = vld [vmem:[%s3 + $0x1c10] sm:$0xff]
    %v1400 = vld [vmem:[%s3 + $0x1c18] sm:$0xff]
    %v1401 = vld [vmem:[%s3 + $0x1c20] sm:$0xff]
    %v1402 = vld [vmem:[%s3 + $0x1c28] sm:$0xff]
    %v1403 = vld [vmem:[%s3 + $0x1c30] sm:$0xff]
    %v1404 = vld [vmem:[%s3 + $0x1c38] sm:$0xff]
    %v1405 = vld [vmem:[%s3 + $0x1c40] sm:$0xff]
    %v1406 = vld [vmem:[%s3 + $0x1c48] sm:$0xff]
    %v1407 = vld [vmem:[%s3 + $0x1c50] sm:$0xff]
    %v1408 = vld [vmem:[%s3 + $0x1c58] sm:$0xff]
    %v1409 = vld [vmem:[%s3 + $0x1c60] sm:$0xff]
    %v1410 = vld [vmem:[%s3 + $0x1c68] sm:$0xff]
    %v1411 = vld [vmem:[%s3 + $0x1c70] sm:$0xff]
    %v1412 = vld [vmem:[%s3 + $0x1c78] sm:$0xff]
    %v1413 = vld [vmem:[%s3 + $0x1c80] sm:$0xff]
    %v1414 = vld [vmem:[%s3 + $0x1c88] sm:$0xff]
    %v1415 = vld [vmem:[%s3 + $0x1c90] sm:$0xff]
    %v1416 = vld [vmem:[%s3 + $0x1c98] sm:$0xff]
    %v1417 = vld [vmem:[%s3 + $0x1ca0] sm:$0xff]
    %v1418 = vld [vmem:[%s3 + $0x1ca8] sm:$0xff]
    %v1419 = vld [vmem:[%s3 + $0x1cb0] sm:$0xff]
    %v1420 = vld [vmem:[%s3 + $0x1cb8] sm:$0xff]
    %v1421 = vld [vmem:[%s3 + $0x1cc0] sm:$0xff]
    %v1422 = vld [vmem:[%s3 + $0x1cc8] sm:$0xff]
    %v1423 = vld [vmem:[%s3 + $0x1cd0] sm:$0xff]
    %v1424 = vld [vmem:[%s3 + $0x1cd8] sm:$0xff]
    %v1425 = vld [vmem:[%s3 + $0x1ce0] sm:$0xff]
    %v1426 = vld [vmem:[%s3 + $0x1ce8] sm:$0xff]
    %v1427 = vld [vmem:[%s3 + $0x1cf0] sm:$0xff]
    %v1428 = vld [vmem:[%s3 + $0x1cf8] sm:$0xff]
    %v1429 = vld [vmem:[%s3 + $0x1d00] sm:$0xff]
    %v1430 = vld [vmem:[%s3 + $0x1d08] sm:$0xff]
    %v1431 = vld [vmem:[%s3 + $0x1d10] sm:$0xff]
    %v1432 = vld [vmem:[%s3 + $0x1d18] sm:$0xff]
    %v1433 = vld [vmem:[%s3 + $0x1d20] sm:$0xff]
    %v1434 = vld [vmem:[%s3 + $0x1d28] sm:$0xff]
    %v1435 = vld [vmem:[%s3 + $0x1d30] sm:$0xff]
    %v1436 = vld [vmem:[%s3 + $0x1d38] sm:$0xff]
    %v1437 = vld [vmem:[%s3 + $0x1d40] sm:$0xff]
    %v1438 = vld [vmem:[%s3 + $0x1d48] sm:$0xff]
    %v1439 = vld [vmem:[%s3 + $0x1d50] sm:$0xff]
    %v1440 = vld [vmem:[%s3 + $0x1d58] sm:$0xff]
    %v1441 = vld [vmem:[%s3 + $0x1d60] sm:$0xff]
    %v1442 = vld [vmem:[%s3 + $0x1d68] sm:$0xff]
    %v1443 = vld [vmem:[%s3 + $0x1d70] sm:$0xff]
    %v1444 = vld [vmem:[%s3 + $0x1d78] sm:$0xff]
    %v1445 = vld [vmem:[%s3 + $0x1d80] sm:$0xff]
    %v1446 = vld [vmem:[%s3 + $0x1d88] sm:$0xff]
    %v1447 = vld [vmem:[%s3 + $0x1d90] sm:$0xff]
    %v1448 = vld [vmem:[%s3 + $0x1d98] sm:$0xff]
    %v1449 = vld [vmem:[%s3 + $0x1da0] sm:$0xff]
    %v1450 = vld [vmem:[%s3 + $0x1da8] sm:$0xff]
    %v1451 = vld [vmem:[%s3 + $0x1db0] sm:$0xff]
    %v1452 = vld [vmem:[%s3 + $0x1db8] sm:$0xff]
    %v1453 = vld [vmem:[%s3 + $0x1dc0] sm:$0xff]
    %v1454 = vld [vmem:[%s3 + $0x1dc8] sm:$0xff]
    %v1455 = vld [vmem:[%s3 + $0x1dd0] sm:$0xff]
    %v1456 = vld [vmem:[%s3 + $0x1dd8] sm:$0xff]
    %v1457 = vld [vmem:[%s3 + $0x1de0] sm:$0xff]
    %v1458 = vld [vmem:[%s3 + $0x1de8] sm:$0xff]
    %v1459 = vld [vmem:[%s3 + $0x1df0] sm:$0xff]
    %v1460 = vld [vmem:[%s3 + $0x1df8] sm:$0xff]
    %v1461 = vld [vmem:[%s3 + $0x1e00] sm:$0xff]
    %v1462 = vld [vmem:[%s3 + $0x1e08] sm:$0xff]
    %v1463 = vld [vmem:[%s3 + $0x1e10] sm:$0xff]
    %v1464 = vld [vmem:[%s3 + $0x1e18] sm:$0xff]
    %v1465 = vld [vmem:[%s3 + $0x1e20] sm:$0xff]
    %v1466 = vld [vmem:[%s3 + $0x1e28] sm:$0xff]
    %v1467 = vld [vmem:[%s3 + $0x1e30] sm:$0xff]
    %v1468 = vld [vmem:[%s3 + $0x1e38] sm:$0xff]
    %v1469 = vld [vmem:[%s3 + $0x1e40] sm:$0xff]
    %v1470 = vld [vmem:[%s3 + $0x1e48] sm:$0xff]
    %v1471 = vld [vmem:[%s3 + $0x1e50] sm:$0xff]
    %v1472 = vld [vmem:[%s3 + $0x1e58] sm:$0xff]
    %v1473 = vld [vmem:[%s3 + $0x1e60] sm:$0xff]
    %v1474 = vld [vmem:[%s3 + $0x1e68] sm:$0xff]
    %v1475 = vld [vmem:[%s3 + $0x1e70] sm:$0xff]
    %v1476 = vld [vmem:[%s3 + $0x1e78] sm:$0xff]
    %v1477 = vld [vmem:[%s3 + $0x1e80] sm:$0xff]
    %v1478 = vld [vmem:[%s3 + $0x1e88] sm:$0xff]
    %v1479 = vld [vmem:[%s3 + $0x1e90] sm:$0xff]
    %v1480 = vld [vmem:[%s3 + $0x1e98] sm:$0xff]
    %v1481 = vld [vmem:[%s3 + $0x1ea0] sm:$0xff]
    %v1482 = vld [vmem:[%s3 + $0x1ea8] sm:$0xff]
    %v1483 = vld [vmem:[%s3 + $0x1eb0] sm:$0xff]
    %v1484 = vld [vmem:[%s3 + $0x1eb8] sm:$0xff]
    %v1485 = vld [vmem:[%s3 + $0x1ec0] sm:$0xff]
    %v1486 = vld [vmem:[%s3 + $0x1ec8] sm:$0xff]
    %v1487 = vld [vmem:[%s3 + $0x1ed0] sm:$0xff]
    %v1488 = vld [vmem:[%s3 + $0x1ed8] sm:$0xff]
    %v1489 = vld [vmem:[%s3 + $0x1ee0] sm:$0xff]
    %v1490 = vld [vmem:[%s3 + $0x1ee8] sm:$0xff]
    %v1491 = vld [vmem:[%s3 + $0x1ef0] sm:$0xff]
    %v1492 = vld [vmem:[%s3 + $0x1ef8] sm:$0xff]
    %v1493 = vld [vmem:[%s3 + $0x1f00] sm:$0xff]
    %v1494 = vld [vmem:[%s3 + $0x1f08] sm:$0xff]
    %v1495 = vld [vmem:[%s3 + $0x1f10] sm:$0xff]
    %v1496 = vld [vmem:[%s3 + $0x1f18] sm:$0xff]
    %v1497 = vld [vmem:[%s3 + $0x1f20] sm:$0xff]
    %v1498 = vld [vmem:[%s3 + $0x1f28] sm:$0xff]
    %v1499 = vld [vmem:[%s3 + $0x1f30] sm:$0xff]
    %v1500 = vld [vmem:[%s3 + $0x1f38] sm:$0xff]
    %v1501 = vld [vmem:[%s3 + $0x1f40] sm:$0xff]
    %v1502 = vld [vmem:[%s3 + $0x1f48] sm:$0xff]
    %v1503 = vld [vmem:[%s3 + $0x1f50] sm:$0xff]
    %v1504 = vld [vmem:[%s3 + $0x1f58] sm:$0xff]
    %v1505 = vld [vmem:[%s3 + $0x1f60] sm:$0xff]
    %v1506 = vld [vmem:[%s3 + $0x1f68] sm:$0xff]
    %v1507 = vld [vmem:[%s3 + $0x1f70] sm:$0xff]
    %v1508 = vld [vmem:[%s3 + $0x1f78] sm:$0xff]
    %v1509 = vld [vmem:[%s3 + $0x1f80] sm:$0xff]
    %v1510 = vld [vmem:[%s3 + $0x1f88] sm:$0xff]
    %v1511 = vld [vmem:[%s3 + $0x1f90] sm:$0xff]
    %v1512 = vld [vmem:[%s3 + $0x1f98] sm:$0xff]
    %v1513 = vld [vmem:[%s3 + $0x1fa0] sm:$0xff]
    %v1514 = vld [vmem:[%s3 + $0x1fa8] sm:$0xff]
    %v1515 = vld [vmem:[%s3 + $0x1fb0] sm:$0xff]
    %v1516 = vld [vmem:[%s3 + $0x1fb8] sm:$0xff]
    %v1517 = vld [vmem:[%s3 + $0x1fc0] sm:$0xff]
    %v1518 = vld [vmem:[%s3 + $0x1fc8] sm:$0xff]
    %v1519 = vld [vmem:[%s3 + $0x1fd0] sm:$0xff]
    %v1520 = vld [vmem:[%s3 + $0x1fd8] sm:$0xff]
    %v1521 = vld [vmem:[%s3 + $0x1fe0] sm:$0xff]
    %v1522 = vld [vmem:[%s3 + $0x1fe8] sm:$0xff]
    %v1523 = vld [vmem:[%s3 + $0x1ff0] sm:$0xff]
    %v1524 = vld [vmem:[%s3 + $0x1ff8] sm:$0xff]
    %v1525 = vld [vmem:[%s4] sm:$0xff]
    %v1527 = vperm.slane %v1525, 0
    %v1528 = vperm.slane %v1525, 1
    %v1529 = vperm.slane %v1525, 2
    %v1530 = vperm.slane %v1525, 3
    %v1531 = vperm.slane %v1525, 4
    %v1532 = vperm.slane %v1525, 5
    %v1533 = vperm.slane %v1525, 6
    %v1534 = vperm.slane %v1525, 7
    %v2567 = vunpack.c.l.b16 %v501
    %v2568 = vunpack.c.h.b16 %v501
    %v2569 = vunpack.c.l.b16 %v502
    %v2570 = vunpack.c.h.b16 %v502
    %v2571 = vunpack.c.l.b16 %v503
    %v2572 = vunpack.c.h.b16 %v503
    %v2573 = vunpack.c.l.b16 %v504
    %v2574 = vunpack.c.h.b16 %v504
    %v2575 = vunpack.c.l.b16 %v505
    %v2576 = vunpack.c.h.b16 %v505
    %v2577 = vunpack.c.l.b16 %v506
    %v2578 = vunpack.c.h.b16 %v506
    %v2579 = vunpack.c.l.b16 %v507
    %v2580 = vunpack.c.h.b16 %v507
    %v2581 = vunpack.c.l.b16 %v508
    %v2582 = vunpack.c.h.b16 %v508
    %v2583 = vunpack.c.l.b16 %v509
    %v2584 = vunpack.c.h.b16 %v509
    %v2585 = vunpack.c.l.b16 %v510
    %v2586 = vunpack.c.h.b16 %v510
    %v2587 = vunpack.c.l.b16 %v511
    %v2588 = vunpack.c.h.b16 %v511
    %v2589 = vunpack.c.l.b16 %v512
    %v2590 = vunpack.c.h.b16 %v512
    %v2591 = vunpack.c.l.b16 %v513
    %v2592 = vunpack.c.h.b16 %v513
    %v2593 = vunpack.c.l.b16 %v514
    %v2594 = vunpack.c.h.b16 %v514
    %v2595 = vunpack.c.l.b16 %v515
    %v2596 = vunpack.c.h.b16 %v515
    %v2597 = vunpack.c.l.b16 %v516
    %v2598 = vunpack.c.h.b16 %v516
    %v2599 = vunpack.c.l.b16 %v517
    %v2600 = vunpack.c.h.b16 %v517
    %v2601 = vunpack.c.l.b16 %v518
    %v2602 = vunpack.c.h.b16 %v518
    %v2603 = vunpack.c.l.b16 %v519
    %v2604 = vunpack.c.h.b16 %v519
    %v2605 = vunpack.c.l.b16 %v520
    %v2606 = vunpack.c.h.b16 %v520
    %v2607 = vunpack.c.l.b16 %v521
    %v2608 = vunpack.c.h.b16 %v521
    %v2609 = vunpack.c.l.b16 %v522
    %v2610 = vunpack.c.h.b16 %v522
    %v2611 = vunpack.c.l.b16 %v523
    %v2612 = vunpack.c.h.b16 %v523
    %v2613 = vunpack.c.l.b16 %v524
    %v2614 = vunpack.c.h.b16 %v524
    %v2615 = vunpack.c.l.b16 %v525
    %v2616 = vunpack.c.h.b16 %v525
    %v2617 = vunpack.c.l.b16 %v526
    %v2618 = vunpack.c.h.b16 %v526
    %v2619 = vunpack.c.l.b16 %v527
    %v2620 = vunpack.c.h.b16 %v527
    %v2621 = vunpack.c.l.b16 %v528
    %v2622 = vunpack.c.h.b16 %v528
    %v2623 = vunpack.c.l.b16 %v529
    %v2624 = vunpack.c.h.b16 %v529
    %v2625 = vunpack.c.l.b16 %v530
    %v2626 = vunpack.c.h.b16 %v530
    %v2627 = vunpack.c.l.b16 %v531
    %v2628 = vunpack.c.h.b16 %v531
    %v2629 = vunpack.c.l.b16 %v532
    %v2630 = vunpack.c.h.b16 %v532
    %v2631 = vunpack.c.l.b16 %v533
    %v2632 = vunpack.c.h.b16 %v533
    %v2633 = vunpack.c.l.b16 %v534
    %v2634 = vunpack.c.h.b16 %v534
    %v2635 = vunpack.c.l.b16 %v535
    %v2636 = vunpack.c.h.b16 %v535
    %v2637 = vunpack.c.l.b16 %v536
    %v2638 = vunpack.c.h.b16 %v536
    %v2639 = vunpack.c.l.b16 %v537
    %v2640 = vunpack.c.h.b16 %v537
    %v2641 = vunpack.c.l.b16 %v538
    %v2642 = vunpack.c.h.b16 %v538
    %v2643 = vunpack.c.l.b16 %v539
    %v2644 = vunpack.c.h.b16 %v539
    %v2645 = vunpack.c.l.b16 %v540
    %v2646 = vunpack.c.h.b16 %v540
    %v2647 = vunpack.c.l.b16 %v541
    %v2648 = vunpack.c.h.b16 %v541
    %v2649 = vunpack.c.l.b16 %v542
    %v2650 = vunpack.c.h.b16 %v542
    %v2651 = vunpack.c.l.b16 %v543
    %v2652 = vunpack.c.h.b16 %v543
    %v2653 = vunpack.c.l.b16 %v544
    %v2654 = vunpack.c.h.b16 %v544
    %v2655 = vunpack.c.l.b16 %v545
    %v2656 = vunpack.c.h.b16 %v545
    %v2657 = vunpack.c.l.b16 %v546
    %v2658 = vunpack.c.h.b16 %v546
    %v2659 = vunpack.c.l.b16 %v547
    %v2660 = vunpack.c.h.b16 %v547
    %v2661 = vunpack.c.l.b16 %v548
    %v2662 = vunpack.c.h.b16 %v548
    %v2663 = vunpack.c.l.b16 %v549
    %v2664 = vunpack.c.h.b16 %v549
    %v2665 = vunpack.c.l.b16 %v550
    %v2666 = vunpack.c.h.b16 %v550
    %v2667 = vunpack.c.l.b16 %v551
    %v2668 = vunpack.c.h.b16 %v551
    %v2669 = vunpack.c.l.b16 %v552
    %v2670 = vunpack.c.h.b16 %v552
    %v2671 = vunpack.c.l.b16 %v553
    %v2672 = vunpack.c.h.b16 %v553
    %v2673 = vunpack.c.l.b16 %v554
    %v2674 = vunpack.c.h.b16 %v554
    %v2675 = vunpack.c.l.b16 %v555
    %v2676 = vunpack.c.h.b16 %v555
    %v2677 = vunpack.c.l.b16 %v556
    %v2678 = vunpack.c.h.b16 %v556
    %v2679 = vunpack.c.l.b16 %v557
    %v2680 = vunpack.c.h.b16 %v557
    %v2681 = vunpack.c.l.b16 %v558
    %v2682 = vunpack.c.h.b16 %v558
    %v2683 = vunpack.c.l.b16 %v559
    %v2684 = vunpack.c.h.b16 %v559
    %v2685 = vunpack.c.l.b16 %v560
    %v2686 = vunpack.c.h.b16 %v560
    %v2687 = vunpack.c.l.b16 %v561
    %v2688 = vunpack.c.h.b16 %v561
    %v2689 = vunpack.c.l.b16 %v562
    %v2690 = vunpack.c.h.b16 %v562
    %v2691 = vunpack.c.l.b16 %v563
    %v2692 = vunpack.c.h.b16 %v563
    %v2693 = vunpack.c.l.b16 %v564
    %v2694 = vunpack.c.h.b16 %v564
    %v2695 = vunpack.c.l.b16 %v565
    %v2696 = vunpack.c.h.b16 %v565
    %v2697 = vunpack.c.l.b16 %v566
    %v2698 = vunpack.c.h.b16 %v566
    %v2699 = vunpack.c.l.b16 %v567
    %v2700 = vunpack.c.h.b16 %v567
    %v2701 = vunpack.c.l.b16 %v568
    %v2702 = vunpack.c.h.b16 %v568
    %v2703 = vunpack.c.l.b16 %v569
    %v2704 = vunpack.c.h.b16 %v569
    %v2705 = vunpack.c.l.b16 %v570
    %v2706 = vunpack.c.h.b16 %v570
    %v2707 = vunpack.c.l.b16 %v571
    %v2708 = vunpack.c.h.b16 %v571
    %v2709 = vunpack.c.l.b16 %v572
    %v2710 = vunpack.c.h.b16 %v572
    %v2711 = vunpack.c.l.b16 %v573
    %v2712 = vunpack.c.h.b16 %v573
    %v2713 = vunpack.c.l.b16 %v574
    %v2714 = vunpack.c.h.b16 %v574
    %v2715 = vunpack.c.l.b16 %v575
    %v2716 = vunpack.c.h.b16 %v575
    %v2717 = vunpack.c.l.b16 %v576
    %v2718 = vunpack.c.h.b16 %v576
    %v2719 = vunpack.c.l.b16 %v577
    %v2720 = vunpack.c.h.b16 %v577
    %v2721 = vunpack.c.l.b16 %v578
    %v2722 = vunpack.c.h.b16 %v578
    %v2723 = vunpack.c.l.b16 %v579
    %v2724 = vunpack.c.h.b16 %v579
    %v2725 = vunpack.c.l.b16 %v580
    %v2726 = vunpack.c.h.b16 %v580
    %v2727 = vunpack.c.l.b16 %v581
    %v2728 = vunpack.c.h.b16 %v581
    %v2729 = vunpack.c.l.b16 %v582
    %v2730 = vunpack.c.h.b16 %v582
    %v2731 = vunpack.c.l.b16 %v583
    %v2732 = vunpack.c.h.b16 %v583
    %v2733 = vunpack.c.l.b16 %v584
    %v2734 = vunpack.c.h.b16 %v584
    %v2735 = vunpack.c.l.b16 %v585
    %v2736 = vunpack.c.h.b16 %v585
    %v2737 = vunpack.c.l.b16 %v586
    %v2738 = vunpack.c.h.b16 %v586
    %v2739 = vunpack.c.l.b16 %v587
    %v2740 = vunpack.c.h.b16 %v587
    %v2741 = vunpack.c.l.b16 %v588
    %v2742 = vunpack.c.h.b16 %v588
    %v2743 = vunpack.c.l.b16 %v589
    %v2744 = vunpack.c.h.b16 %v589
    %v2745 = vunpack.c.l.b16 %v590
    %v2746 = vunpack.c.h.b16 %v590
    %v2747 = vunpack.c.l.b16 %v591
    %v2748 = vunpack.c.h.b16 %v591
    %v2749 = vunpack.c.l.b16 %v592
    %v2750 = vunpack.c.h.b16 %v592
    %v2751 = vunpack.c.l.b16 %v593
    %v2752 = vunpack.c.h.b16 %v593
    %v2753 = vunpack.c.l.b16 %v594
    %v2754 = vunpack.c.h.b16 %v594
    %v2755 = vunpack.c.l.b16 %v595
    %v2756 = vunpack.c.h.b16 %v595
    %v2757 = vunpack.c.l.b16 %v596
    %v2758 = vunpack.c.h.b16 %v596
    %v2759 = vunpack.c.l.b16 %v597
    %v2760 = vunpack.c.h.b16 %v597
    %v2761 = vunpack.c.l.b16 %v598
    %v2762 = vunpack.c.h.b16 %v598
    %v2763 = vunpack.c.l.b16 %v599
    %v2764 = vunpack.c.h.b16 %v599
    %v2765 = vunpack.c.l.b16 %v600
    %v2766 = vunpack.c.h.b16 %v600
    %v2767 = vunpack.c.l.b16 %v601
    %v2768 = vunpack.c.h.b16 %v601
    %v2769 = vunpack.c.l.b16 %v602
    %v2770 = vunpack.c.h.b16 %v602
    %v2771 = vunpack.c.l.b16 %v603
    %v2772 = vunpack.c.h.b16 %v603
    %v2773 = vunpack.c.l.b16 %v604
    %v2774 = vunpack.c.h.b16 %v604
    %v2775 = vunpack.c.l.b16 %v605
    %v2776 = vunpack.c.h.b16 %v605
    %v2777 = vunpack.c.l.b16 %v606
    %v2778 = vunpack.c.h.b16 %v606
    %v2779 = vunpack.c.l.b16 %v607
    %v2780 = vunpack.c.h.b16 %v607
    %v2781 = vunpack.c.l.b16 %v608
    %v2782 = vunpack.c.h.b16 %v608
    %v2783 = vunpack.c.l.b16 %v609
    %v2784 = vunpack.c.h.b16 %v609
    %v2785 = vunpack.c.l.b16 %v610
    %v2786 = vunpack.c.h.b16 %v610
    %v2787 = vunpack.c.l.b16 %v611
    %v2788 = vunpack.c.h.b16 %v611
    %v2789 = vunpack.c.l.b16 %v612
    %v2790 = vunpack.c.h.b16 %v612
    %v2791 = vunpack.c.l.b16 %v613
    %v2792 = vunpack.c.h.b16 %v613
    %v2793 = vunpack.c.l.b16 %v614
    %v2794 = vunpack.c.h.b16 %v614
    %v2795 = vunpack.c.l.b16 %v615
    %v2796 = vunpack.c.h.b16 %v615
    %v2797 = vunpack.c.l.b16 %v616
    %v2798 = vunpack.c.h.b16 %v616
    %v2799 = vunpack.c.l.b16 %v617
    %v2800 = vunpack.c.h.b16 %v617
    %v2801 = vunpack.c.l.b16 %v618
    %v2802 = vunpack.c.h.b16 %v618
    %v2803 = vunpack.c.l.b16 %v619
    %v2804 = vunpack.c.h.b16 %v619
    %v2805 = vunpack.c.l.b16 %v620
    %v2806 = vunpack.c.h.b16 %v620
    %v2807 = vunpack.c.l.b16 %v621
    %v2808 = vunpack.c.h.b16 %v621
    %v2809 = vunpack.c.l.b16 %v622
    %v2810 = vunpack.c.h.b16 %v622
    %v2811 = vunpack.c.l.b16 %v623
    %v2812 = vunpack.c.h.b16 %v623
    %v2813 = vunpack.c.l.b16 %v624
    %v2814 = vunpack.c.h.b16 %v624
    %v2815 = vunpack.c.l.b16 %v625
    %v2816 = vunpack.c.h.b16 %v625
    %v2817 = vunpack.c.l.b16 %v626
    %v2818 = vunpack.c.h.b16 %v626
    %v2819 = vunpack.c.l.b16 %v627
    %v2820 = vunpack.c.h.b16 %v627
    %v2821 = vunpack.c.l.b16 %v628
    %v2822 = vunpack.c.h.b16 %v628
    %v2823 = vunpack.c.l.b16 %v629
    %v2824 = vunpack.c.h.b16 %v629
    %v2825 = vunpack.c.l.b16 %v630
    %v2826 = vunpack.c.h.b16 %v630
    %v2827 = vunpack.c.l.b16 %v631
    %v2828 = vunpack.c.h.b16 %v631
    %v2829 = vunpack.c.l.b16 %v632
    %v2830 = vunpack.c.h.b16 %v632
    %v2831 = vunpack.c.l.b16 %v633
    %v2832 = vunpack.c.h.b16 %v633
    %v2833 = vunpack.c.l.b16 %v634
    %v2834 = vunpack.c.h.b16 %v634
    %v2835 = vunpack.c.l.b16 %v635
    %v2836 = vunpack.c.h.b16 %v635
    %v2837 = vunpack.c.l.b16 %v636
    %v2838 = vunpack.c.h.b16 %v636
    %v2839 = vunpack.c.l.b16 %v637
    %v2840 = vunpack.c.h.b16 %v637
    %v2841 = vunpack.c.l.b16 %v638
    %v2842 = vunpack.c.h.b16 %v638
    %v2843 = vunpack.c.l.b16 %v639
    %v2844 = vunpack.c.h.b16 %v639
    %v2845 = vunpack.c.l.b16 %v640
    %v2846 = vunpack.c.h.b16 %v640
    %v2847 = vunpack.c.l.b16 %v641
    %v2848 = vunpack.c.h.b16 %v641
    %v2849 = vunpack.c.l.b16 %v642
    %v2850 = vunpack.c.h.b16 %v642
    %v2851 = vunpack.c.l.b16 %v643
    %v2852 = vunpack.c.h.b16 %v643
    %v2853 = vunpack.c.l.b16 %v644
    %v2854 = vunpack.c.h.b16 %v644
    %v2855 = vunpack.c.l.b16 %v645
    %v2856 = vunpack.c.h.b16 %v645
    %v2857 = vunpack.c.l.b16 %v646
    %v2858 = vunpack.c.h.b16 %v646
    %v2859 = vunpack.c.l.b16 %v647
    %v2860 = vunpack.c.h.b16 %v647
    %v2861 = vunpack.c.l.b16 %v648
    %v2862 = vunpack.c.h.b16 %v648
    %v2863 = vunpack.c.l.b16 %v649
    %v2864 = vunpack.c.h.b16 %v649
    %v2865 = vunpack.c.l.b16 %v650
    %v2866 = vunpack.c.h.b16 %v650
    %v2867 = vunpack.c.l.b16 %v651
    %v2868 = vunpack.c.h.b16 %v651
    %v2869 = vunpack.c.l.b16 %v652
    %v2870 = vunpack.c.h.b16 %v652
    %v2871 = vunpack.c.l.b16 %v653
    %v2872 = vunpack.c.h.b16 %v653
    %v2873 = vunpack.c.l.b16 %v654
    %v2874 = vunpack.c.h.b16 %v654
    %v2875 = vunpack.c.l.b16 %v655
    %v2876 = vunpack.c.h.b16 %v655
    %v2877 = vunpack.c.l.b16 %v656
    %v2878 = vunpack.c.h.b16 %v656
    %v2879 = vunpack.c.l.b16 %v657
    %v2880 = vunpack.c.h.b16 %v657
    %v2881 = vunpack.c.l.b16 %v658
    %v2882 = vunpack.c.h.b16 %v658
    %v2883 = vunpack.c.l.b16 %v659
    %v2884 = vunpack.c.h.b16 %v659
    %v2885 = vunpack.c.l.b16 %v660
    %v2886 = vunpack.c.h.b16 %v660
    %v2887 = vunpack.c.l.b16 %v661
    %v2888 = vunpack.c.h.b16 %v661
    %v2889 = vunpack.c.l.b16 %v662
    %v2890 = vunpack.c.h.b16 %v662
    %v2891 = vunpack.c.l.b16 %v663
    %v2892 = vunpack.c.h.b16 %v663
    %v2893 = vunpack.c.l.b16 %v664
    %v2894 = vunpack.c.h.b16 %v664
    %v2895 = vunpack.c.l.b16 %v665
    %v2896 = vunpack.c.h.b16 %v665
    %v2897 = vunpack.c.l.b16 %v666
    %v2898 = vunpack.c.h.b16 %v666
    %v2899 = vunpack.c.l.b16 %v667
    %v2900 = vunpack.c.h.b16 %v667
    %v2901 = vunpack.c.l.b16 %v668
    %v2902 = vunpack.c.h.b16 %v668
    %v2903 = vunpack.c.l.b16 %v669
    %v2904 = vunpack.c.h.b16 %v669
    %v2905 = vunpack.c.l.b16 %v670
    %v2906 = vunpack.c.h.b16 %v670
    %v2907 = vunpack.c.l.b16 %v671
    %v2908 = vunpack.c.h.b16 %v671
    %v2909 = vunpack.c.l.b16 %v672
    %v2910 = vunpack.c.h.b16 %v672
    %v2911 = vunpack.c.l.b16 %v673
    %v2912 = vunpack.c.h.b16 %v673
    %v2913 = vunpack.c.l.b16 %v674
    %v2914 = vunpack.c.h.b16 %v674
    %v2915 = vunpack.c.l.b16 %v675
    %v2916 = vunpack.c.h.b16 %v675
    %v2917 = vunpack.c.l.b16 %v676
    %v2918 = vunpack.c.h.b16 %v676
    %v2919 = vunpack.c.l.b16 %v677
    %v2920 = vunpack.c.h.b16 %v677
    %v2921 = vunpack.c.l.b16 %v678
    %v2922 = vunpack.c.h.b16 %v678
    %v2923 = vunpack.c.l.b16 %v679
    %v2924 = vunpack.c.h.b16 %v679
    %v2925 = vunpack.c.l.b16 %v680
    %v2926 = vunpack.c.h.b16 %v680
    %v2927 = vunpack.c.l.b16 %v681
    %v2928 = vunpack.c.h.b16 %v681
    %v2929 = vunpack.c.l.b16 %v682
    %v2930 = vunpack.c.h.b16 %v682
    %v2931 = vunpack.c.l.b16 %v683
    %v2932 = vunpack.c.h.b16 %v683
    %v2933 = vunpack.c.l.b16 %v684
    %v2934 = vunpack.c.h.b16 %v684
    %v2935 = vunpack.c.l.b16 %v685
    %v2936 = vunpack.c.h.b16 %v685
    %v2937 = vunpack.c.l.b16 %v686
    %v2938 = vunpack.c.h.b16 %v686
    %v2939 = vunpack.c.l.b16 %v687
    %v2940 = vunpack.c.h.b16 %v687
    %v2941 = vunpack.c.l.b16 %v688
    %v2942 = vunpack.c.h.b16 %v688
    %v2943 = vunpack.c.l.b16 %v689
    %v2944 = vunpack.c.h.b16 %v689
    %v2945 = vunpack.c.l.b16 %v690
    %v2946 = vunpack.c.h.b16 %v690
    %v2947 = vunpack.c.l.b16 %v691
    %v2948 = vunpack.c.h.b16 %v691
    %v2949 = vunpack.c.l.b16 %v692
    %v2950 = vunpack.c.h.b16 %v692
    %v2951 = vunpack.c.l.b16 %v693
    %v2952 = vunpack.c.h.b16 %v693
    %v2953 = vunpack.c.l.b16 %v694
    %v2954 = vunpack.c.h.b16 %v694
    %v2955 = vunpack.c.l.b16 %v695
    %v2956 = vunpack.c.h.b16 %v695
    %v2957 = vunpack.c.l.b16 %v696
    %v2958 = vunpack.c.h.b16 %v696
    %v2959 = vunpack.c.l.b16 %v697
    %v2960 = vunpack.c.h.b16 %v697
    %v2961 = vunpack.c.l.b16 %v698
    %v2962 = vunpack.c.h.b16 %v698
    %v2963 = vunpack.c.l.b16 %v699
    %v2964 = vunpack.c.h.b16 %v699
    %v2965 = vunpack.c.l.b16 %v700
    %v2966 = vunpack.c.h.b16 %v700
    %v2967 = vunpack.c.l.b16 %v701
    %v2968 = vunpack.c.h.b16 %v701
    %v2969 = vunpack.c.l.b16 %v702
    %v2970 = vunpack.c.h.b16 %v702
    %v2971 = vunpack.c.l.b16 %v703
    %v2972 = vunpack.c.h.b16 %v703
    %v2973 = vunpack.c.l.b16 %v704
    %v2974 = vunpack.c.h.b16 %v704
    %v2975 = vunpack.c.l.b16 %v705
    %v2976 = vunpack.c.h.b16 %v705
    %v2977 = vunpack.c.l.b16 %v706
    %v2978 = vunpack.c.h.b16 %v706
    %v2979 = vunpack.c.l.b16 %v707
    %v2980 = vunpack.c.h.b16 %v707
    %v2981 = vunpack.c.l.b16 %v708
    %v2982 = vunpack.c.h.b16 %v708
    %v2983 = vunpack.c.l.b16 %v709
    %v2984 = vunpack.c.h.b16 %v709
    %v2985 = vunpack.c.l.b16 %v710
    %v2986 = vunpack.c.h.b16 %v710
    %v2987 = vunpack.c.l.b16 %v711
    %v2988 = vunpack.c.h.b16 %v711
    %v2989 = vunpack.c.l.b16 %v712
    %v2990 = vunpack.c.h.b16 %v712
    %v2991 = vunpack.c.l.b16 %v713
    %v2992 = vunpack.c.h.b16 %v713
    %v2993 = vunpack.c.l.b16 %v714
    %v2994 = vunpack.c.h.b16 %v714
    %v2995 = vunpack.c.l.b16 %v715
    %v2996 = vunpack.c.h.b16 %v715
    %v2997 = vunpack.c.l.b16 %v716
    %v2998 = vunpack.c.h.b16 %v716
    %v2999 = vunpack.c.l.b16 %v717
    %v3000 = vunpack.c.h.b16 %v717
    %v3001 = vunpack.c.l.b16 %v718
    %v3002 = vunpack.c.h.b16 %v718
    %v3003 = vunpack.c.l.b16 %v719
    %v3004 = vunpack.c.h.b16 %v719
    %v3005 = vunpack.c.l.b16 %v720
    %v3006 = vunpack.c.h.b16 %v720
    %v3007 = vunpack.c.l.b16 %v721
    %v3008 = vunpack.c.h.b16 %v721
    %v3009 = vunpack.c.l.b16 %v722
    %v3010 = vunpack.c.h.b16 %v722
    %v3011 = vunpack.c.l.b16 %v723
    %v3012 = vunpack.c.h.b16 %v723
    %v3013 = vunpack.c.l.b16 %v724
    %v3014 = vunpack.c.h.b16 %v724
    %v3015 = vunpack.c.l.b16 %v725
    %v3016 = vunpack.c.h.b16 %v725
    %v3017 = vunpack.c.l.b16 %v726
    %v3018 = vunpack.c.h.b16 %v726
    %v3019 = vunpack.c.l.b16 %v727
    %v3020 = vunpack.c.h.b16 %v727
    %v3021 = vunpack.c.l.b16 %v728
    %v3022 = vunpack.c.h.b16 %v728
    %v3023 = vunpack.c.l.b16 %v729
    %v3024 = vunpack.c.h.b16 %v729
    %v3025 = vunpack.c.l.b16 %v730
    %v3026 = vunpack.c.h.b16 %v730
    %v3027 = vunpack.c.l.b16 %v731
    %v3028 = vunpack.c.h.b16 %v731
    %v3029 = vunpack.c.l.b16 %v732
    %v3030 = vunpack.c.h.b16 %v732
    %v3031 = vunpack.c.l.b16 %v733
    %v3032 = vunpack.c.h.b16 %v733
    %v3033 = vunpack.c.l.b16 %v734
    %v3034 = vunpack.c.h.b16 %v734
    %v3035 = vunpack.c.l.b16 %v735
    %v3036 = vunpack.c.h.b16 %v735
    %v3037 = vunpack.c.l.b16 %v736
    %v3038 = vunpack.c.h.b16 %v736
    %v3039 = vunpack.c.l.b16 %v737
    %v3040 = vunpack.c.h.b16 %v737
    %v3041 = vunpack.c.l.b16 %v738
    %v3042 = vunpack.c.h.b16 %v738
    %v3043 = vunpack.c.l.b16 %v739
    %v3044 = vunpack.c.h.b16 %v739
    %v3045 = vunpack.c.l.b16 %v740
    %v3046 = vunpack.c.h.b16 %v740
    %v3047 = vunpack.c.l.b16 %v741
    %v3048 = vunpack.c.h.b16 %v741
    %v3049 = vunpack.c.l.b16 %v742
    %v3050 = vunpack.c.h.b16 %v742
    %v3051 = vunpack.c.l.b16 %v743
    %v3052 = vunpack.c.h.b16 %v743
    %v3053 = vunpack.c.l.b16 %v744
    %v3054 = vunpack.c.h.b16 %v744
    %v3055 = vunpack.c.l.b16 %v745
    %v3056 = vunpack.c.h.b16 %v745
    %v3057 = vunpack.c.l.b16 %v746
    %v3058 = vunpack.c.h.b16 %v746
    %v3059 = vunpack.c.l.b16 %v747
    %v3060 = vunpack.c.h.b16 %v747
    %v3061 = vunpack.c.l.b16 %v748
    %v3062 = vunpack.c.h.b16 %v748
    %v3063 = vunpack.c.l.b16 %v749
    %v3064 = vunpack.c.h.b16 %v749
    %v3065 = vunpack.c.l.b16 %v750
    %v3066 = vunpack.c.h.b16 %v750
    %v3067 = vunpack.c.l.b16 %v751
    %v3068 = vunpack.c.h.b16 %v751
    %v3069 = vunpack.c.l.b16 %v752
    %v3070 = vunpack.c.h.b16 %v752
    %v3071 = vunpack.c.l.b16 %v753
    %v3072 = vunpack.c.h.b16 %v753
    %v3073 = vunpack.c.l.b16 %v754
    %v3074 = vunpack.c.h.b16 %v754
    %v3075 = vunpack.c.l.b16 %v755
    %v3076 = vunpack.c.h.b16 %v755
    %v3077 = vunpack.c.l.b16 %v756
    %v3078 = vunpack.c.h.b16 %v756
    %v3079 = vunpack.c.l.b16 %v757
    %v3080 = vunpack.c.h.b16 %v757
    %v3081 = vunpack.c.l.b16 %v758
    %v3082 = vunpack.c.h.b16 %v758
    %v3083 = vunpack.c.l.b16 %v759
    %v3084 = vunpack.c.h.b16 %v759
    %v3085 = vunpack.c.l.b16 %v760
    %v3086 = vunpack.c.h.b16 %v760
    %v3087 = vunpack.c.l.b16 %v761
    %v3088 = vunpack.c.h.b16 %v761
    %v3089 = vunpack.c.l.b16 %v762
    %v3090 = vunpack.c.h.b16 %v762
    %v3091 = vunpack.c.l.b16 %v763
    %v3092 = vunpack.c.h.b16 %v763
    %v3093 = vunpack.c.l.b16 %v764
    %v3094 = vunpack.c.h.b16 %v764
    %v3095 = vunpack.c.l.b16 %v765
    %v3096 = vunpack.c.h.b16 %v765
    %v3097 = vunpack.c.l.b16 %v766
    %v3098 = vunpack.c.h.b16 %v766
    %v3099 = vunpack.c.l.b16 %v767
    %v3100 = vunpack.c.h.b16 %v767
    %v3101 = vunpack.c.l.b16 %v768
    %v3102 = vunpack.c.h.b16 %v768
    %v3103 = vunpack.c.l.b16 %v769
    %v3104 = vunpack.c.h.b16 %v769
    %v3105 = vunpack.c.l.b16 %v770
    %v3106 = vunpack.c.h.b16 %v770
    %v3107 = vunpack.c.l.b16 %v771
    %v3108 = vunpack.c.h.b16 %v771
    %v3109 = vunpack.c.l.b16 %v772
    %v3110 = vunpack.c.h.b16 %v772
    %v3111 = vunpack.c.l.b16 %v773
    %v3112 = vunpack.c.h.b16 %v773
    %v3113 = vunpack.c.l.b16 %v774
    %v3114 = vunpack.c.h.b16 %v774
    %v3115 = vunpack.c.l.b16 %v775
    %v3116 = vunpack.c.h.b16 %v775
    %v3117 = vunpack.c.l.b16 %v776
    %v3118 = vunpack.c.h.b16 %v776
    %v3119 = vunpack.c.l.b16 %v777
    %v3120 = vunpack.c.h.b16 %v777
    %v3121 = vunpack.c.l.b16 %v778
    %v3122 = vunpack.c.h.b16 %v778
    %v3123 = vunpack.c.l.b16 %v779
    %v3124 = vunpack.c.h.b16 %v779
    %v3125 = vunpack.c.l.b16 %v780
    %v3126 = vunpack.c.h.b16 %v780
    %v3127 = vunpack.c.l.b16 %v781
    %v3128 = vunpack.c.h.b16 %v781
    %v3129 = vunpack.c.l.b16 %v782
    %v3130 = vunpack.c.h.b16 %v782
    %v3131 = vunpack.c.l.b16 %v783
    %v3132 = vunpack.c.h.b16 %v783
    %v3133 = vunpack.c.l.b16 %v784
    %v3134 = vunpack.c.h.b16 %v784
    %v3135 = vunpack.c.l.b16 %v785
    %v3136 = vunpack.c.h.b16 %v785
    %v3137 = vunpack.c.l.b16 %v786
    %v3138 = vunpack.c.h.b16 %v786
    %v3139 = vunpack.c.l.b16 %v787
    %v3140 = vunpack.c.h.b16 %v787
    %v3141 = vunpack.c.l.b16 %v788
    %v3142 = vunpack.c.h.b16 %v788
    %v3143 = vunpack.c.l.b16 %v789
    %v3144 = vunpack.c.h.b16 %v789
    %v3145 = vunpack.c.l.b16 %v790
    %v3146 = vunpack.c.h.b16 %v790
    %v3147 = vunpack.c.l.b16 %v791
    %v3148 = vunpack.c.h.b16 %v791
    %v3149 = vunpack.c.l.b16 %v792
    %v3150 = vunpack.c.h.b16 %v792
    %v3151 = vunpack.c.l.b16 %v793
    %v3152 = vunpack.c.h.b16 %v793
    %v3153 = vunpack.c.l.b16 %v794
    %v3154 = vunpack.c.h.b16 %v794
    %v3155 = vunpack.c.l.b16 %v795
    %v3156 = vunpack.c.h.b16 %v795
    %v3157 = vunpack.c.l.b16 %v796
    %v3158 = vunpack.c.h.b16 %v796
    %v3159 = vunpack.c.l.b16 %v797
    %v3160 = vunpack.c.h.b16 %v797
    %v3161 = vunpack.c.l.b16 %v798
    %v3162 = vunpack.c.h.b16 %v798
    %v3163 = vunpack.c.l.b16 %v799
    %v3164 = vunpack.c.h.b16 %v799
    %v3165 = vunpack.c.l.b16 %v800
    %v3166 = vunpack.c.h.b16 %v800
    %v3167 = vunpack.c.l.b16 %v801
    %v3168 = vunpack.c.h.b16 %v801
    %v3169 = vunpack.c.l.b16 %v802
    %v3170 = vunpack.c.h.b16 %v802
    %v3171 = vunpack.c.l.b16 %v803
    %v3172 = vunpack.c.h.b16 %v803
    %v3173 = vunpack.c.l.b16 %v804
    %v3174 = vunpack.c.h.b16 %v804
    %v3175 = vunpack.c.l.b16 %v805
    %v3176 = vunpack.c.h.b16 %v805
    %v3177 = vunpack.c.l.b16 %v806
    %v3178 = vunpack.c.h.b16 %v806
    %v3179 = vunpack.c.l.b16 %v807
    %v3180 = vunpack.c.h.b16 %v807
    %v3181 = vunpack.c.l.b16 %v808
    %v3182 = vunpack.c.h.b16 %v808
    %v3183 = vunpack.c.l.b16 %v809
    %v3184 = vunpack.c.h.b16 %v809
    %v3185 = vunpack.c.l.b16 %v810
    %v3186 = vunpack.c.h.b16 %v810
    %v3187 = vunpack.c.l.b16 %v811
    %v3188 = vunpack.c.h.b16 %v811
    %v3189 = vunpack.c.l.b16 %v812
    %v3190 = vunpack.c.h.b16 %v812
    %v3191 = vunpack.c.l.b16 %v813
    %v3192 = vunpack.c.h.b16 %v813
    %v3193 = vunpack.c.l.b16 %v814
    %v3194 = vunpack.c.h.b16 %v814
    %v3195 = vunpack.c.l.b16 %v815
    %v3196 = vunpack.c.h.b16 %v815
    %v3197 = vunpack.c.l.b16 %v816
    %v3198 = vunpack.c.h.b16 %v816
    %v3199 = vunpack.c.l.b16 %v817
    %v3200 = vunpack.c.h.b16 %v817
    %v3201 = vunpack.c.l.b16 %v818
    %v3202 = vunpack.c.h.b16 %v818
    %v3203 = vunpack.c.l.b16 %v819
    %v3204 = vunpack.c.h.b16 %v819
    %v3205 = vunpack.c.l.b16 %v820
    %v3206 = vunpack.c.h.b16 %v820
    %v3207 = vunpack.c.l.b16 %v821
    %v3208 = vunpack.c.h.b16 %v821
    %v3209 = vunpack.c.l.b16 %v822
    %v3210 = vunpack.c.h.b16 %v822
    %v3211 = vunpack.c.l.b16 %v823
    %v3212 = vunpack.c.h.b16 %v823
    %v3213 = vunpack.c.l.b16 %v824
    %v3214 = vunpack.c.h.b16 %v824
    %v3215 = vunpack.c.l.b16 %v825
    %v3216 = vunpack.c.h.b16 %v825
    %v3217 = vunpack.c.l.b16 %v826
    %v3218 = vunpack.c.h.b16 %v826
    %v3219 = vunpack.c.l.b16 %v827
    %v3220 = vunpack.c.h.b16 %v827
    %v3221 = vunpack.c.l.b16 %v828
    %v3222 = vunpack.c.h.b16 %v828
    %v3223 = vunpack.c.l.b16 %v829
    %v3224 = vunpack.c.h.b16 %v829
    %v3225 = vunpack.c.l.b16 %v830
    %v3226 = vunpack.c.h.b16 %v830
    %v3227 = vunpack.c.l.b16 %v831
    %v3228 = vunpack.c.h.b16 %v831
    %v3229 = vunpack.c.l.b16 %v832
    %v3230 = vunpack.c.h.b16 %v832
    %v3231 = vunpack.c.l.b16 %v833
    %v3232 = vunpack.c.h.b16 %v833
    %v3233 = vunpack.c.l.b16 %v834
    %v3234 = vunpack.c.h.b16 %v834
    %v3235 = vunpack.c.l.b16 %v835
    %v3236 = vunpack.c.h.b16 %v835
    %v3237 = vunpack.c.l.b16 %v836
    %v3238 = vunpack.c.h.b16 %v836
    %v3239 = vunpack.c.l.b16 %v837
    %v3240 = vunpack.c.h.b16 %v837
    %v3241 = vunpack.c.l.b16 %v838
    %v3242 = vunpack.c.h.b16 %v838
    %v3243 = vunpack.c.l.b16 %v839
    %v3244 = vunpack.c.h.b16 %v839
    %v3245 = vunpack.c.l.b16 %v840
    %v3246 = vunpack.c.h.b16 %v840
    %v3247 = vunpack.c.l.b16 %v841
    %v3248 = vunpack.c.h.b16 %v841
    %v3249 = vunpack.c.l.b16 %v842
    %v3250 = vunpack.c.h.b16 %v842
    %v3251 = vunpack.c.l.b16 %v843
    %v3252 = vunpack.c.h.b16 %v843
    %v3253 = vunpack.c.l.b16 %v844
    %v3254 = vunpack.c.h.b16 %v844
    %v3255 = vunpack.c.l.b16 %v845
    %v3256 = vunpack.c.h.b16 %v845
    %v3257 = vunpack.c.l.b16 %v846
    %v3258 = vunpack.c.h.b16 %v846
    %v3259 = vunpack.c.l.b16 %v847
    %v3260 = vunpack.c.h.b16 %v847
    %v3261 = vunpack.c.l.b16 %v848
    %v3262 = vunpack.c.h.b16 %v848
    %v3263 = vunpack.c.l.b16 %v849
    %v3264 = vunpack.c.h.b16 %v849
    %v3265 = vunpack.c.l.b16 %v850
    %v3266 = vunpack.c.h.b16 %v850
    %v3267 = vunpack.c.l.b16 %v851
    %v3268 = vunpack.c.h.b16 %v851
    %v3269 = vunpack.c.l.b16 %v852
    %v3270 = vunpack.c.h.b16 %v852
    %v3271 = vunpack.c.l.b16 %v853
    %v3272 = vunpack.c.h.b16 %v853
    %v3273 = vunpack.c.l.b16 %v854
    %v3274 = vunpack.c.h.b16 %v854
    %v3275 = vunpack.c.l.b16 %v855
    %v3276 = vunpack.c.h.b16 %v855
    %v3277 = vunpack.c.l.b16 %v856
    %v3278 = vunpack.c.h.b16 %v856
    %v3279 = vunpack.c.l.b16 %v857
    %v3280 = vunpack.c.h.b16 %v857
    %v3281 = vunpack.c.l.b16 %v858
    %v3282 = vunpack.c.h.b16 %v858
    %v3283 = vunpack.c.l.b16 %v859
    %v3284 = vunpack.c.h.b16 %v859
    %v3285 = vunpack.c.l.b16 %v860
    %v3286 = vunpack.c.h.b16 %v860
    %v3287 = vunpack.c.l.b16 %v861
    %v3288 = vunpack.c.h.b16 %v861
    %v3289 = vunpack.c.l.b16 %v862
    %v3290 = vunpack.c.h.b16 %v862
    %v3291 = vunpack.c.l.b16 %v863
    %v3292 = vunpack.c.h.b16 %v863
    %v3293 = vunpack.c.l.b16 %v864
    %v3294 = vunpack.c.h.b16 %v864
    %v3295 = vunpack.c.l.b16 %v865
    %v3296 = vunpack.c.h.b16 %v865
    %v3297 = vunpack.c.l.b16 %v866
    %v3298 = vunpack.c.h.b16 %v866
    %v3299 = vunpack.c.l.b16 %v867
    %v3300 = vunpack.c.h.b16 %v867
    %v3301 = vunpack.c.l.b16 %v868
    %v3302 = vunpack.c.h.b16 %v868
    %v3303 = vunpack.c.l.b16 %v869
    %v3304 = vunpack.c.h.b16 %v869
    %v3305 = vunpack.c.l.b16 %v870
    %v3306 = vunpack.c.h.b16 %v870
    %v3307 = vunpack.c.l.b16 %v871
    %v3308 = vunpack.c.h.b16 %v871
    %v3309 = vunpack.c.l.b16 %v872
    %v3310 = vunpack.c.h.b16 %v872
    %v3311 = vunpack.c.l.b16 %v873
    %v3312 = vunpack.c.h.b16 %v873
    %v3313 = vunpack.c.l.b16 %v874
    %v3314 = vunpack.c.h.b16 %v874
    %v3315 = vunpack.c.l.b16 %v875
    %v3316 = vunpack.c.h.b16 %v875
    %v3317 = vunpack.c.l.b16 %v876
    %v3318 = vunpack.c.h.b16 %v876
    %v3319 = vunpack.c.l.b16 %v877
    %v3320 = vunpack.c.h.b16 %v877
    %v3321 = vunpack.c.l.b16 %v878
    %v3322 = vunpack.c.h.b16 %v878
    %v3323 = vunpack.c.l.b16 %v879
    %v3324 = vunpack.c.h.b16 %v879
    %v3325 = vunpack.c.l.b16 %v880
    %v3326 = vunpack.c.h.b16 %v880
    %v3327 = vunpack.c.l.b16 %v881
    %v3328 = vunpack.c.h.b16 %v881
    %v3329 = vunpack.c.l.b16 %v882
    %v3330 = vunpack.c.h.b16 %v882
    %v3331 = vunpack.c.l.b16 %v883
    %v3332 = vunpack.c.h.b16 %v883
    %v3333 = vunpack.c.l.b16 %v884
    %v3334 = vunpack.c.h.b16 %v884
    %v3335 = vunpack.c.l.b16 %v885
    %v3336 = vunpack.c.h.b16 %v885
    %v3337 = vunpack.c.l.b16 %v886
    %v3338 = vunpack.c.h.b16 %v886
    %v3339 = vunpack.c.l.b16 %v887
    %v3340 = vunpack.c.h.b16 %v887
    %v3341 = vunpack.c.l.b16 %v888
    %v3342 = vunpack.c.h.b16 %v888
    %v3343 = vunpack.c.l.b16 %v889
    %v3344 = vunpack.c.h.b16 %v889
    %v3345 = vunpack.c.l.b16 %v890
    %v3346 = vunpack.c.h.b16 %v890
    %v3347 = vunpack.c.l.b16 %v891
    %v3348 = vunpack.c.h.b16 %v891
    %v3349 = vunpack.c.l.b16 %v892
    %v3350 = vunpack.c.h.b16 %v892
    %v3351 = vunpack.c.l.b16 %v893
    %v3352 = vunpack.c.h.b16 %v893
    %v3353 = vunpack.c.l.b16 %v894
    %v3354 = vunpack.c.h.b16 %v894
    %v3355 = vunpack.c.l.b16 %v895
    %v3356 = vunpack.c.h.b16 %v895
    %v3357 = vunpack.c.l.b16 %v896
    %v3358 = vunpack.c.h.b16 %v896
    %v3359 = vunpack.c.l.b16 %v897
    %v3360 = vunpack.c.h.b16 %v897
    %v3361 = vunpack.c.l.b16 %v898
    %v3362 = vunpack.c.h.b16 %v898
    %v3363 = vunpack.c.l.b16 %v899
    %v3364 = vunpack.c.h.b16 %v899
    %v3365 = vunpack.c.l.b16 %v900
    %v3366 = vunpack.c.h.b16 %v900
    %v3367 = vunpack.c.l.b16 %v901
    %v3368 = vunpack.c.h.b16 %v901
    %v3369 = vunpack.c.l.b16 %v902
    %v3370 = vunpack.c.h.b16 %v902
    %v3371 = vunpack.c.l.b16 %v903
    %v3372 = vunpack.c.h.b16 %v903
    %v3373 = vunpack.c.l.b16 %v904
    %v3374 = vunpack.c.h.b16 %v904
    %v3375 = vunpack.c.l.b16 %v905
    %v3376 = vunpack.c.h.b16 %v905
    %v3377 = vunpack.c.l.b16 %v906
    %v3378 = vunpack.c.h.b16 %v906
    %v3379 = vunpack.c.l.b16 %v907
    %v3380 = vunpack.c.h.b16 %v907
    %v3381 = vunpack.c.l.b16 %v908
    %v3382 = vunpack.c.h.b16 %v908
    %v3383 = vunpack.c.l.b16 %v909
    %v3384 = vunpack.c.h.b16 %v909
    %v3385 = vunpack.c.l.b16 %v910
    %v3386 = vunpack.c.h.b16 %v910
    %v3387 = vunpack.c.l.b16 %v911
    %v3388 = vunpack.c.h.b16 %v911
    %v3389 = vunpack.c.l.b16 %v912
    %v3390 = vunpack.c.h.b16 %v912
    %v3391 = vunpack.c.l.b16 %v913
    %v3392 = vunpack.c.h.b16 %v913
    %v3393 = vunpack.c.l.b16 %v914
    %v3394 = vunpack.c.h.b16 %v914
    %v3395 = vunpack.c.l.b16 %v915
    %v3396 = vunpack.c.h.b16 %v915
    %v3397 = vunpack.c.l.b16 %v916
    %v3398 = vunpack.c.h.b16 %v916
    %v3399 = vunpack.c.l.b16 %v917
    %v3400 = vunpack.c.h.b16 %v917
    %v3401 = vunpack.c.l.b16 %v918
    %v3402 = vunpack.c.h.b16 %v918
    %v3403 = vunpack.c.l.b16 %v919
    %v3404 = vunpack.c.h.b16 %v919
    %v3405 = vunpack.c.l.b16 %v920
    %v3406 = vunpack.c.h.b16 %v920
    %v3407 = vunpack.c.l.b16 %v921
    %v3408 = vunpack.c.h.b16 %v921
    %v3409 = vunpack.c.l.b16 %v922
    %v3410 = vunpack.c.h.b16 %v922
    %v3411 = vunpack.c.l.b16 %v923
    %v3412 = vunpack.c.h.b16 %v923
    %v3413 = vunpack.c.l.b16 %v924
    %v3414 = vunpack.c.h.b16 %v924
    %v3415 = vunpack.c.l.b16 %v925
    %v3416 = vunpack.c.h.b16 %v925
    %v3417 = vunpack.c.l.b16 %v926
    %v3418 = vunpack.c.h.b16 %v926
    %v3419 = vunpack.c.l.b16 %v927
    %v3420 = vunpack.c.h.b16 %v927
    %v3421 = vunpack.c.l.b16 %v928
    %v3422 = vunpack.c.h.b16 %v928
    %v3423 = vunpack.c.l.b16 %v929
    %v3424 = vunpack.c.h.b16 %v929
    %v3425 = vunpack.c.l.b16 %v930
    %v3426 = vunpack.c.h.b16 %v930
    %v3427 = vunpack.c.l.b16 %v931
    %v3428 = vunpack.c.h.b16 %v931
    %v3429 = vunpack.c.l.b16 %v932
    %v3430 = vunpack.c.h.b16 %v932
    %v3431 = vunpack.c.l.b16 %v933
    %v3432 = vunpack.c.h.b16 %v933
    %v3433 = vunpack.c.l.b16 %v934
    %v3434 = vunpack.c.h.b16 %v934
    %v3435 = vunpack.c.l.b16 %v935
    %v3436 = vunpack.c.h.b16 %v935
    %v3437 = vunpack.c.l.b16 %v936
    %v3438 = vunpack.c.h.b16 %v936
    %v3439 = vunpack.c.l.b16 %v937
    %v3440 = vunpack.c.h.b16 %v937
    %v3441 = vunpack.c.l.b16 %v938
    %v3442 = vunpack.c.h.b16 %v938
    %v3443 = vunpack.c.l.b16 %v939
    %v3444 = vunpack.c.h.b16 %v939
    %v3445 = vunpack.c.l.b16 %v940
    %v3446 = vunpack.c.h.b16 %v940
    %v3447 = vunpack.c.l.b16 %v941
    %v3448 = vunpack.c.h.b16 %v941
    %v3449 = vunpack.c.l.b16 %v942
    %v3450 = vunpack.c.h.b16 %v942
    %v3451 = vunpack.c.l.b16 %v943
    %v3452 = vunpack.c.h.b16 %v943
    %v3453 = vunpack.c.l.b16 %v944
    %v3454 = vunpack.c.h.b16 %v944
    %v3455 = vunpack.c.l.b16 %v945
    %v3456 = vunpack.c.h.b16 %v945
    %v3457 = vunpack.c.l.b16 %v946
    %v3458 = vunpack.c.h.b16 %v946
    %v3459 = vunpack.c.l.b16 %v947
    %v3460 = vunpack.c.h.b16 %v947
    %v3461 = vunpack.c.l.b16 %v948
    %v3462 = vunpack.c.h.b16 %v948
    %v3463 = vunpack.c.l.b16 %v949
    %v3464 = vunpack.c.h.b16 %v949
    %v3465 = vunpack.c.l.b16 %v950
    %v3466 = vunpack.c.h.b16 %v950
    %v3467 = vunpack.c.l.b16 %v951
    %v3468 = vunpack.c.h.b16 %v951
    %v3469 = vunpack.c.l.b16 %v952
    %v3470 = vunpack.c.h.b16 %v952
    %v3471 = vunpack.c.l.b16 %v953
    %v3472 = vunpack.c.h.b16 %v953
    %v3473 = vunpack.c.l.b16 %v954
    %v3474 = vunpack.c.h.b16 %v954
    %v3475 = vunpack.c.l.b16 %v955
    %v3476 = vunpack.c.h.b16 %v955
    %v3477 = vunpack.c.l.b16 %v956
    %v3478 = vunpack.c.h.b16 %v956
    %v3479 = vunpack.c.l.b16 %v957
    %v3480 = vunpack.c.h.b16 %v957
    %v3481 = vunpack.c.l.b16 %v958
    %v3482 = vunpack.c.h.b16 %v958
    %v3483 = vunpack.c.l.b16 %v959
    %v3484 = vunpack.c.h.b16 %v959
    %v3485 = vunpack.c.l.b16 %v960
    %v3486 = vunpack.c.h.b16 %v960
    %v3487 = vunpack.c.l.b16 %v961
    %v3488 = vunpack.c.h.b16 %v961
    %v3489 = vunpack.c.l.b16 %v962
    %v3490 = vunpack.c.h.b16 %v962
    %v3491 = vunpack.c.l.b16 %v963
    %v3492 = vunpack.c.h.b16 %v963
    %v3493 = vunpack.c.l.b16 %v964
    %v3494 = vunpack.c.h.b16 %v964
    %v3495 = vunpack.c.l.b16 %v965
    %v3496 = vunpack.c.h.b16 %v965
    %v3497 = vunpack.c.l.b16 %v966
    %v3498 = vunpack.c.h.b16 %v966
    %v3499 = vunpack.c.l.b16 %v967
    %v3500 = vunpack.c.h.b16 %v967
    %v3501 = vunpack.c.l.b16 %v968
    %v3502 = vunpack.c.h.b16 %v968
    %v3503 = vunpack.c.l.b16 %v969
    %v3504 = vunpack.c.h.b16 %v969
    %v3505 = vunpack.c.l.b16 %v970
    %v3506 = vunpack.c.h.b16 %v970
    %v3507 = vunpack.c.l.b16 %v971
    %v3508 = vunpack.c.h.b16 %v971
    %v3509 = vunpack.c.l.b16 %v972
    %v3510 = vunpack.c.h.b16 %v972
    %v3511 = vunpack.c.l.b16 %v973
    %v3512 = vunpack.c.h.b16 %v973
    %v3513 = vunpack.c.l.b16 %v974
    %v3514 = vunpack.c.h.b16 %v974
    %v3515 = vunpack.c.l.b16 %v975
    %v3516 = vunpack.c.h.b16 %v975
    %v3517 = vunpack.c.l.b16 %v976
    %v3518 = vunpack.c.h.b16 %v976
    %v3519 = vunpack.c.l.b16 %v977
    %v3520 = vunpack.c.h.b16 %v977
    %v3521 = vunpack.c.l.b16 %v978
    %v3522 = vunpack.c.h.b16 %v978
    %v3523 = vunpack.c.l.b16 %v979
    %v3524 = vunpack.c.h.b16 %v979
    %v3525 = vunpack.c.l.b16 %v980
    %v3526 = vunpack.c.h.b16 %v980
    %v3527 = vunpack.c.l.b16 %v981
    %v3528 = vunpack.c.h.b16 %v981
    %v3529 = vunpack.c.l.b16 %v982
    %v3530 = vunpack.c.h.b16 %v982
    %v3531 = vunpack.c.l.b16 %v983
    %v3532 = vunpack.c.h.b16 %v983
    %v3533 = vunpack.c.l.b16 %v984
    %v3534 = vunpack.c.h.b16 %v984
    %v3535 = vunpack.c.l.b16 %v985
    %v3536 = vunpack.c.h.b16 %v985
    %v3537 = vunpack.c.l.b16 %v986
    %v3538 = vunpack.c.h.b16 %v986
    %v3539 = vunpack.c.l.b16 %v987
    %v3540 = vunpack.c.h.b16 %v987
    %v3541 = vunpack.c.l.b16 %v988
    %v3542 = vunpack.c.h.b16 %v988
    %v3543 = vunpack.c.l.b16 %v989
    %v3544 = vunpack.c.h.b16 %v989
    %v3545 = vunpack.c.l.b16 %v990
    %v3546 = vunpack.c.h.b16 %v990
    %v3547 = vunpack.c.l.b16 %v991
    %v3548 = vunpack.c.h.b16 %v991
    %v3549 = vunpack.c.l.b16 %v992
    %v3550 = vunpack.c.h.b16 %v992
    %v3551 = vunpack.c.l.b16 %v993
    %v3552 = vunpack.c.h.b16 %v993
    %v3553 = vunpack.c.l.b16 %v994
    %v3554 = vunpack.c.h.b16 %v994
    %v3555 = vunpack.c.l.b16 %v995
    %v3556 = vunpack.c.h.b16 %v995
    %v3557 = vunpack.c.l.b16 %v996
    %v3558 = vunpack.c.h.b16 %v996
    %v3559 = vunpack.c.l.b16 %v997
    %v3560 = vunpack.c.h.b16 %v997
    %v3561 = vunpack.c.l.b16 %v998
    %v3562 = vunpack.c.h.b16 %v998
    %v3563 = vunpack.c.l.b16 %v999
    %v3564 = vunpack.c.h.b16 %v999
    %v3565 = vunpack.c.l.b16 %v1000
    %v3566 = vunpack.c.h.b16 %v1000
    %v3567 = vunpack.c.l.b16 %v1001
    %v3568 = vunpack.c.h.b16 %v1001
    %v3569 = vunpack.c.l.b16 %v1002
    %v3570 = vunpack.c.h.b16 %v1002
    %v3571 = vunpack.c.l.b16 %v1003
    %v3572 = vunpack.c.h.b16 %v1003
    %v3573 = vunpack.c.l.b16 %v1004
    %v3574 = vunpack.c.h.b16 %v1004
    %v3575 = vunpack.c.l.b16 %v1005
    %v3576 = vunpack.c.h.b16 %v1005
    %v3577 = vunpack.c.l.b16 %v1006
    %v3578 = vunpack.c.h.b16 %v1006
    %v3579 = vunpack.c.l.b16 %v1007
    %v3580 = vunpack.c.h.b16 %v1007
    %v3581 = vunpack.c.l.b16 %v1008
    %v3582 = vunpack.c.h.b16 %v1008
    %v3583 = vunpack.c.l.b16 %v1009
    %v3584 = vunpack.c.h.b16 %v1009
    %v3585 = vunpack.c.l.b16 %v1010
    %v3586 = vunpack.c.h.b16 %v1010
    %v3587 = vunpack.c.l.b16 %v1011
    %v3588 = vunpack.c.h.b16 %v1011
    %v3589 = vunpack.c.l.b16 %v1012
    %v3590 = vunpack.c.h.b16 %v1012
    %v3591 = vunpack.c.l.b16 %v1013
    %v3592 = vunpack.c.h.b16 %v1013
    %v3593 = vunpack.c.l.b16 %v1014
    %v3594 = vunpack.c.h.b16 %v1014
    %v3595 = vunpack.c.l.b16 %v1015
    %v3596 = vunpack.c.h.b16 %v1015
    %v3597 = vunpack.c.l.b16 %v1016
    %v3598 = vunpack.c.h.b16 %v1016
    %v3599 = vunpack.c.l.b16 %v1017
    %v3600 = vunpack.c.h.b16 %v1017
    %v3601 = vunpack.c.l.b16 %v1018
    %v3602 = vunpack.c.h.b16 %v1018
    %v3603 = vunpack.c.l.b16 %v1019
    %v3604 = vunpack.c.h.b16 %v1019
    %v3605 = vunpack.c.l.b16 %v1020
    %v3606 = vunpack.c.h.b16 %v1020
    %v3607 = vunpack.c.l.b16 %v1021
    %v3608 = vunpack.c.h.b16 %v1021
    %v3609 = vunpack.c.l.b16 %v1022
    %v3610 = vunpack.c.h.b16 %v1022
    %v3611 = vunpack.c.l.b16 %v1023
    %v3612 = vunpack.c.h.b16 %v1023
    %v3613 = vunpack.c.l.b16 %v1024
    %v3614 = vunpack.c.h.b16 %v1024
    %v3615 = vunpack.c.l.b16 %v1025
    %v3616 = vunpack.c.h.b16 %v1025
    %v3617 = vunpack.c.l.b16 %v1026
    %v3618 = vunpack.c.h.b16 %v1026
    %v3619 = vunpack.c.l.b16 %v1027
    %v3620 = vunpack.c.h.b16 %v1027
    %v3621 = vunpack.c.l.b16 %v1028
    %v3622 = vunpack.c.h.b16 %v1028
    %v3623 = vunpack.c.l.b16 %v1029
    %v3624 = vunpack.c.h.b16 %v1029
    %v3625 = vunpack.c.l.b16 %v1030
    %v3626 = vunpack.c.h.b16 %v1030
    %v3627 = vunpack.c.l.b16 %v1031
    %v3628 = vunpack.c.h.b16 %v1031
    %v3629 = vunpack.c.l.b16 %v1032
    %v3630 = vunpack.c.h.b16 %v1032
    %v3631 = vunpack.c.l.b16 %v1033
    %v3632 = vunpack.c.h.b16 %v1033
    %v3633 = vunpack.c.l.b16 %v1034
    %v3634 = vunpack.c.h.b16 %v1034
    %v3635 = vunpack.c.l.b16 %v1035
    %v3636 = vunpack.c.h.b16 %v1035
    %v3637 = vunpack.c.l.b16 %v1036
    %v3638 = vunpack.c.h.b16 %v1036
    %v3639 = vunpack.c.l.b16 %v1037
    %v3640 = vunpack.c.h.b16 %v1037
    %v3641 = vunpack.c.l.b16 %v1038
    %v3642 = vunpack.c.h.b16 %v1038
    %v3643 = vunpack.c.l.b16 %v1039
    %v3644 = vunpack.c.h.b16 %v1039
    %v3645 = vunpack.c.l.b16 %v1040
    %v3646 = vunpack.c.h.b16 %v1040
    %v3647 = vunpack.c.l.b16 %v1041
    %v3648 = vunpack.c.h.b16 %v1041
    %v3649 = vunpack.c.l.b16 %v1042
    %v3650 = vunpack.c.h.b16 %v1042
    %v3651 = vunpack.c.l.b16 %v1043
    %v3652 = vunpack.c.h.b16 %v1043
    %v3653 = vunpack.c.l.b16 %v1044
    %v3654 = vunpack.c.h.b16 %v1044
    %v3655 = vunpack.c.l.b16 %v1045
    %v3656 = vunpack.c.h.b16 %v1045
    %v3657 = vunpack.c.l.b16 %v1046
    %v3658 = vunpack.c.h.b16 %v1046
    %v3659 = vunpack.c.l.b16 %v1047
    %v3660 = vunpack.c.h.b16 %v1047
    %v3661 = vunpack.c.l.b16 %v1048
    %v3662 = vunpack.c.h.b16 %v1048
    %v3663 = vunpack.c.l.b16 %v1049
    %v3664 = vunpack.c.h.b16 %v1049
    %v3665 = vunpack.c.l.b16 %v1050
    %v3666 = vunpack.c.h.b16 %v1050
    %v3667 = vunpack.c.l.b16 %v1051
    %v3668 = vunpack.c.h.b16 %v1051
    %v3669 = vunpack.c.l.b16 %v1052
    %v3670 = vunpack.c.h.b16 %v1052
    %v3671 = vunpack.c.l.b16 %v1053
    %v3672 = vunpack.c.h.b16 %v1053
    %v3673 = vunpack.c.l.b16 %v1054
    %v3674 = vunpack.c.h.b16 %v1054
    %v3675 = vunpack.c.l.b16 %v1055
    %v3676 = vunpack.c.h.b16 %v1055
    %v3677 = vunpack.c.l.b16 %v1056
    %v3678 = vunpack.c.h.b16 %v1056
    %v3679 = vunpack.c.l.b16 %v1057
    %v3680 = vunpack.c.h.b16 %v1057
    %v3681 = vunpack.c.l.b16 %v1058
    %v3682 = vunpack.c.h.b16 %v1058
    %v3683 = vunpack.c.l.b16 %v1059
    %v3684 = vunpack.c.h.b16 %v1059
    %v3685 = vunpack.c.l.b16 %v1060
    %v3686 = vunpack.c.h.b16 %v1060
    %v3687 = vunpack.c.l.b16 %v1061
    %v3688 = vunpack.c.h.b16 %v1061
    %v3689 = vunpack.c.l.b16 %v1062
    %v3690 = vunpack.c.h.b16 %v1062
    %v3691 = vunpack.c.l.b16 %v1063
    %v3692 = vunpack.c.h.b16 %v1063
    %v3693 = vunpack.c.l.b16 %v1064
    %v3694 = vunpack.c.h.b16 %v1064
    %v3695 = vunpack.c.l.b16 %v1065
    %v3696 = vunpack.c.h.b16 %v1065
    %v3697 = vunpack.c.l.b16 %v1066
    %v3698 = vunpack.c.h.b16 %v1066
    %v3699 = vunpack.c.l.b16 %v1067
    %v3700 = vunpack.c.h.b16 %v1067
    %v3701 = vunpack.c.l.b16 %v1068
    %v3702 = vunpack.c.h.b16 %v1068
    %v3703 = vunpack.c.l.b16 %v1069
    %v3704 = vunpack.c.h.b16 %v1069
    %v3705 = vunpack.c.l.b16 %v1070
    %v3706 = vunpack.c.h.b16 %v1070
    %v3707 = vunpack.c.l.b16 %v1071
    %v3708 = vunpack.c.h.b16 %v1071
    %v3709 = vunpack.c.l.b16 %v1072
    %v3710 = vunpack.c.h.b16 %v1072
    %v3711 = vunpack.c.l.b16 %v1073
    %v3712 = vunpack.c.h.b16 %v1073
    %v3713 = vunpack.c.l.b16 %v1074
    %v3714 = vunpack.c.h.b16 %v1074
    %v3715 = vunpack.c.l.b16 %v1075
    %v3716 = vunpack.c.h.b16 %v1075
    %v3717 = vunpack.c.l.b16 %v1076
    %v3718 = vunpack.c.h.b16 %v1076
    %v3719 = vunpack.c.l.b16 %v1077
    %v3720 = vunpack.c.h.b16 %v1077
    %v3721 = vunpack.c.l.b16 %v1078
    %v3722 = vunpack.c.h.b16 %v1078
    %v3723 = vunpack.c.l.b16 %v1079
    %v3724 = vunpack.c.h.b16 %v1079
    %v3725 = vunpack.c.l.b16 %v1080
    %v3726 = vunpack.c.h.b16 %v1080
    %v3727 = vunpack.c.l.b16 %v1081
    %v3728 = vunpack.c.h.b16 %v1081
    %v3729 = vunpack.c.l.b16 %v1082
    %v3730 = vunpack.c.h.b16 %v1082
    %v3731 = vunpack.c.l.b16 %v1083
    %v3732 = vunpack.c.h.b16 %v1083
    %v3733 = vunpack.c.l.b16 %v1084
    %v3734 = vunpack.c.h.b16 %v1084
    %v3735 = vunpack.c.l.b16 %v1085
    %v3736 = vunpack.c.h.b16 %v1085
    %v3737 = vunpack.c.l.b16 %v1086
    %v3738 = vunpack.c.h.b16 %v1086
    %v3739 = vunpack.c.l.b16 %v1087
    %v3740 = vunpack.c.h.b16 %v1087
    %v3741 = vunpack.c.l.b16 %v1088
    %v3742 = vunpack.c.h.b16 %v1088
    %v3743 = vunpack.c.l.b16 %v1089
    %v3744 = vunpack.c.h.b16 %v1089
    %v3745 = vunpack.c.l.b16 %v1090
    %v3746 = vunpack.c.h.b16 %v1090
    %v3747 = vunpack.c.l.b16 %v1091
    %v3748 = vunpack.c.h.b16 %v1091
    %v3749 = vunpack.c.l.b16 %v1092
    %v3750 = vunpack.c.h.b16 %v1092
    %v3751 = vunpack.c.l.b16 %v1093
    %v3752 = vunpack.c.h.b16 %v1093
    %v3753 = vunpack.c.l.b16 %v1094
    %v3754 = vunpack.c.h.b16 %v1094
    %v3755 = vunpack.c.l.b16 %v1095
    %v3756 = vunpack.c.h.b16 %v1095
    %v3757 = vunpack.c.l.b16 %v1096
    %v3758 = vunpack.c.h.b16 %v1096
    %v3759 = vunpack.c.l.b16 %v1097
    %v3760 = vunpack.c.h.b16 %v1097
    %v3761 = vunpack.c.l.b16 %v1098
    %v3762 = vunpack.c.h.b16 %v1098
    %v3763 = vunpack.c.l.b16 %v1099
    %v3764 = vunpack.c.h.b16 %v1099
    %v3765 = vunpack.c.l.b16 %v1100
    %v3766 = vunpack.c.h.b16 %v1100
    %v3767 = vunpack.c.l.b16 %v1101
    %v3768 = vunpack.c.h.b16 %v1101
    %v3769 = vunpack.c.l.b16 %v1102
    %v3770 = vunpack.c.h.b16 %v1102
    %v3771 = vunpack.c.l.b16 %v1103
    %v3772 = vunpack.c.h.b16 %v1103
    %v3773 = vunpack.c.l.b16 %v1104
    %v3774 = vunpack.c.h.b16 %v1104
    %v3775 = vunpack.c.l.b16 %v1105
    %v3776 = vunpack.c.h.b16 %v1105
    %v3777 = vunpack.c.l.b16 %v1106
    %v3778 = vunpack.c.h.b16 %v1106
    %v3779 = vunpack.c.l.b16 %v1107
    %v3780 = vunpack.c.h.b16 %v1107
    %v3781 = vunpack.c.l.b16 %v1108
    %v3782 = vunpack.c.h.b16 %v1108
    %v3783 = vunpack.c.l.b16 %v1109
    %v3784 = vunpack.c.h.b16 %v1109
    %v3785 = vunpack.c.l.b16 %v1110
    %v3786 = vunpack.c.h.b16 %v1110
    %v3787 = vunpack.c.l.b16 %v1111
    %v3788 = vunpack.c.h.b16 %v1111
    %v3789 = vunpack.c.l.b16 %v1112
    %v3790 = vunpack.c.h.b16 %v1112
    %v3791 = vunpack.c.l.b16 %v1113
    %v3792 = vunpack.c.h.b16 %v1113
    %v3793 = vunpack.c.l.b16 %v1114
    %v3794 = vunpack.c.h.b16 %v1114
    %v3795 = vunpack.c.l.b16 %v1115
    %v3796 = vunpack.c.h.b16 %v1115
    %v3797 = vunpack.c.l.b16 %v1116
    %v3798 = vunpack.c.h.b16 %v1116
    %v3799 = vunpack.c.l.b16 %v1117
    %v3800 = vunpack.c.h.b16 %v1117
    %v3801 = vunpack.c.l.b16 %v1118
    %v3802 = vunpack.c.h.b16 %v1118
    %v3803 = vunpack.c.l.b16 %v1119
    %v3804 = vunpack.c.h.b16 %v1119
    %v3805 = vunpack.c.l.b16 %v1120
    %v3806 = vunpack.c.h.b16 %v1120
    %v3807 = vunpack.c.l.b16 %v1121
    %v3808 = vunpack.c.h.b16 %v1121
    %v3809 = vunpack.c.l.b16 %v1122
    %v3810 = vunpack.c.h.b16 %v1122
    %v3811 = vunpack.c.l.b16 %v1123
    %v3812 = vunpack.c.h.b16 %v1123
    %v3813 = vunpack.c.l.b16 %v1124
    %v3814 = vunpack.c.h.b16 %v1124
    %v3815 = vunpack.c.l.b16 %v1125
    %v3816 = vunpack.c.h.b16 %v1125
    %v3817 = vunpack.c.l.b16 %v1126
    %v3818 = vunpack.c.h.b16 %v1126
    %v3819 = vunpack.c.l.b16 %v1127
    %v3820 = vunpack.c.h.b16 %v1127
    %v3821 = vunpack.c.l.b16 %v1128
    %v3822 = vunpack.c.h.b16 %v1128
    %v3823 = vunpack.c.l.b16 %v1129
    %v3824 = vunpack.c.h.b16 %v1129
    %v3825 = vunpack.c.l.b16 %v1130
    %v3826 = vunpack.c.h.b16 %v1130
    %v3827 = vunpack.c.l.b16 %v1131
    %v3828 = vunpack.c.h.b16 %v1131
    %v3829 = vunpack.c.l.b16 %v1132
    %v3830 = vunpack.c.h.b16 %v1132
    %v3831 = vunpack.c.l.b16 %v1133
    %v3832 = vunpack.c.h.b16 %v1133
    %v3833 = vunpack.c.l.b16 %v1134
    %v3834 = vunpack.c.h.b16 %v1134
    %v3835 = vunpack.c.l.b16 %v1135
    %v3836 = vunpack.c.h.b16 %v1135
    %v3837 = vunpack.c.l.b16 %v1136
    %v3838 = vunpack.c.h.b16 %v1136
    %v3839 = vunpack.c.l.b16 %v1137
    %v3840 = vunpack.c.h.b16 %v1137
    %v3841 = vunpack.c.l.b16 %v1138
    %v3842 = vunpack.c.h.b16 %v1138
    %v3843 = vunpack.c.l.b16 %v1139
    %v3844 = vunpack.c.h.b16 %v1139
    %v3845 = vunpack.c.l.b16 %v1140
    %v3846 = vunpack.c.h.b16 %v1140
    %v3847 = vunpack.c.l.b16 %v1141
    %v3848 = vunpack.c.h.b16 %v1141
    %v3849 = vunpack.c.l.b16 %v1142
    %v3850 = vunpack.c.h.b16 %v1142
    %v3851 = vunpack.c.l.b16 %v1143
    %v3852 = vunpack.c.h.b16 %v1143
    %v3853 = vunpack.c.l.b16 %v1144
    %v3854 = vunpack.c.h.b16 %v1144
    %v3855 = vunpack.c.l.b16 %v1145
    %v3856 = vunpack.c.h.b16 %v1145
    %v3857 = vunpack.c.l.b16 %v1146
    %v3858 = vunpack.c.h.b16 %v1146
    %v3859 = vunpack.c.l.b16 %v1147
    %v3860 = vunpack.c.h.b16 %v1147
    %v3861 = vunpack.c.l.b16 %v1148
    %v3862 = vunpack.c.h.b16 %v1148
    %v3863 = vunpack.c.l.b16 %v1149
    %v3864 = vunpack.c.h.b16 %v1149
    %v3865 = vunpack.c.l.b16 %v1150
    %v3866 = vunpack.c.h.b16 %v1150
    %v3867 = vunpack.c.l.b16 %v1151
    %v3868 = vunpack.c.h.b16 %v1151
    %v3869 = vunpack.c.l.b16 %v1152
    %v3870 = vunpack.c.h.b16 %v1152
    %v3871 = vunpack.c.l.b16 %v1153
    %v3872 = vunpack.c.h.b16 %v1153
    %v3873 = vunpack.c.l.b16 %v1154
    %v3874 = vunpack.c.h.b16 %v1154
    %v3875 = vunpack.c.l.b16 %v1155
    %v3876 = vunpack.c.h.b16 %v1155
    %v3877 = vunpack.c.l.b16 %v1156
    %v3878 = vunpack.c.h.b16 %v1156
    %v3879 = vunpack.c.l.b16 %v1157
    %v3880 = vunpack.c.h.b16 %v1157
    %v3881 = vunpack.c.l.b16 %v1158
    %v3882 = vunpack.c.h.b16 %v1158
    %v3883 = vunpack.c.l.b16 %v1159
    %v3884 = vunpack.c.h.b16 %v1159
    %v3885 = vunpack.c.l.b16 %v1160
    %v3886 = vunpack.c.h.b16 %v1160
    %v3887 = vunpack.c.l.b16 %v1161
    %v3888 = vunpack.c.h.b16 %v1161
    %v3889 = vunpack.c.l.b16 %v1162
    %v3890 = vunpack.c.h.b16 %v1162
    %v3891 = vunpack.c.l.b16 %v1163
    %v3892 = vunpack.c.h.b16 %v1163
    %v3893 = vunpack.c.l.b16 %v1164
    %v3894 = vunpack.c.h.b16 %v1164
    %v3895 = vunpack.c.l.b16 %v1165
    %v3896 = vunpack.c.h.b16 %v1165
    %v3897 = vunpack.c.l.b16 %v1166
    %v3898 = vunpack.c.h.b16 %v1166
    %v3899 = vunpack.c.l.b16 %v1167
    %v3900 = vunpack.c.h.b16 %v1167
    %v3901 = vunpack.c.l.b16 %v1168
    %v3902 = vunpack.c.h.b16 %v1168
    %v3903 = vunpack.c.l.b16 %v1169
    %v3904 = vunpack.c.h.b16 %v1169
    %v3905 = vunpack.c.l.b16 %v1170
    %v3906 = vunpack.c.h.b16 %v1170
    %v3907 = vunpack.c.l.b16 %v1171
    %v3908 = vunpack.c.h.b16 %v1171
    %v3909 = vunpack.c.l.b16 %v1172
    %v3910 = vunpack.c.h.b16 %v1172
    %v3911 = vunpack.c.l.b16 %v1173
    %v3912 = vunpack.c.h.b16 %v1173
    %v3913 = vunpack.c.l.b16 %v1174
    %v3914 = vunpack.c.h.b16 %v1174
    %v3915 = vunpack.c.l.b16 %v1175
    %v3916 = vunpack.c.h.b16 %v1175
    %v3917 = vunpack.c.l.b16 %v1176
    %v3918 = vunpack.c.h.b16 %v1176
    %v3919 = vunpack.c.l.b16 %v1177
    %v3920 = vunpack.c.h.b16 %v1177
    %v3921 = vunpack.c.l.b16 %v1178
    %v3922 = vunpack.c.h.b16 %v1178
    %v3923 = vunpack.c.l.b16 %v1179
    %v3924 = vunpack.c.h.b16 %v1179
    %v3925 = vunpack.c.l.b16 %v1180
    %v3926 = vunpack.c.h.b16 %v1180
    %v3927 = vunpack.c.l.b16 %v1181
    %v3928 = vunpack.c.h.b16 %v1181
    %v3929 = vunpack.c.l.b16 %v1182
    %v3930 = vunpack.c.h.b16 %v1182
    %v3931 = vunpack.c.l.b16 %v1183
    %v3932 = vunpack.c.h.b16 %v1183
    %v3933 = vunpack.c.l.b16 %v1184
    %v3934 = vunpack.c.h.b16 %v1184
    %v3935 = vunpack.c.l.b16 %v1185
    %v3936 = vunpack.c.h.b16 %v1185
    %v3937 = vunpack.c.l.b16 %v1186
    %v3938 = vunpack.c.h.b16 %v1186
    %v3939 = vunpack.c.l.b16 %v1187
    %v3940 = vunpack.c.h.b16 %v1187
    %v3941 = vunpack.c.l.b16 %v1188
    %v3942 = vunpack.c.h.b16 %v1188
    %v3943 = vunpack.c.l.b16 %v1189
    %v3944 = vunpack.c.h.b16 %v1189
    %v3945 = vunpack.c.l.b16 %v1190
    %v3946 = vunpack.c.h.b16 %v1190
    %v3947 = vunpack.c.l.b16 %v1191
    %v3948 = vunpack.c.h.b16 %v1191
    %v3949 = vunpack.c.l.b16 %v1192
    %v3950 = vunpack.c.h.b16 %v1192
    %v3951 = vunpack.c.l.b16 %v1193
    %v3952 = vunpack.c.h.b16 %v1193
    %v3953 = vunpack.c.l.b16 %v1194
    %v3954 = vunpack.c.h.b16 %v1194
    %v3955 = vunpack.c.l.b16 %v1195
    %v3956 = vunpack.c.h.b16 %v1195
    %v3957 = vunpack.c.l.b16 %v1196
    %v3958 = vunpack.c.h.b16 %v1196
    %v3959 = vunpack.c.l.b16 %v1197
    %v3960 = vunpack.c.h.b16 %v1197
    %v3961 = vunpack.c.l.b16 %v1198
    %v3962 = vunpack.c.h.b16 %v1198
    %v3963 = vunpack.c.l.b16 %v1199
    %v3964 = vunpack.c.h.b16 %v1199
    %v3965 = vunpack.c.l.b16 %v1200
    %v3966 = vunpack.c.h.b16 %v1200
    %v3967 = vunpack.c.l.b16 %v1201
    %v3968 = vunpack.c.h.b16 %v1201
    %v3969 = vunpack.c.l.b16 %v1202
    %v3970 = vunpack.c.h.b16 %v1202
    %v3971 = vunpack.c.l.b16 %v1203
    %v3972 = vunpack.c.h.b16 %v1203
    %v3973 = vunpack.c.l.b16 %v1204
    %v3974 = vunpack.c.h.b16 %v1204
    %v3975 = vunpack.c.l.b16 %v1205
    %v3976 = vunpack.c.h.b16 %v1205
    %v3977 = vunpack.c.l.b16 %v1206
    %v3978 = vunpack.c.h.b16 %v1206
    %v3979 = vunpack.c.l.b16 %v1207
    %v3980 = vunpack.c.h.b16 %v1207
    %v3981 = vunpack.c.l.b16 %v1208
    %v3982 = vunpack.c.h.b16 %v1208
    %v3983 = vunpack.c.l.b16 %v1209
    %v3984 = vunpack.c.h.b16 %v1209
    %v3985 = vunpack.c.l.b16 %v1210
    %v3986 = vunpack.c.h.b16 %v1210
    %v3987 = vunpack.c.l.b16 %v1211
    %v3988 = vunpack.c.h.b16 %v1211
    %v3989 = vunpack.c.l.b16 %v1212
    %v3990 = vunpack.c.h.b16 %v1212
    %v3991 = vunpack.c.l.b16 %v1213
    %v3992 = vunpack.c.h.b16 %v1213
    %v3993 = vunpack.c.l.b16 %v1214
    %v3994 = vunpack.c.h.b16 %v1214
    %v3995 = vunpack.c.l.b16 %v1215
    %v3996 = vunpack.c.h.b16 %v1215
    %v3997 = vunpack.c.l.b16 %v1216
    %v3998 = vunpack.c.h.b16 %v1216
    %v3999 = vunpack.c.l.b16 %v1217
    %v4000 = vunpack.c.h.b16 %v1217
    %v4001 = vunpack.c.l.b16 %v1218
    %v4002 = vunpack.c.h.b16 %v1218
    %v4003 = vunpack.c.l.b16 %v1219
    %v4004 = vunpack.c.h.b16 %v1219
    %v4005 = vunpack.c.l.b16 %v1220
    %v4006 = vunpack.c.h.b16 %v1220
    %v4007 = vunpack.c.l.b16 %v1221
    %v4008 = vunpack.c.h.b16 %v1221
    %v4009 = vunpack.c.l.b16 %v1222
    %v4010 = vunpack.c.h.b16 %v1222
    %v4011 = vunpack.c.l.b16 %v1223
    %v4012 = vunpack.c.h.b16 %v1223
    %v4013 = vunpack.c.l.b16 %v1224
    %v4014 = vunpack.c.h.b16 %v1224
    %v4015 = vunpack.c.l.b16 %v1225
    %v4016 = vunpack.c.h.b16 %v1225
    %v4017 = vunpack.c.l.b16 %v1226
    %v4018 = vunpack.c.h.b16 %v1226
    %v4019 = vunpack.c.l.b16 %v1227
    %v4020 = vunpack.c.h.b16 %v1227
    %v4021 = vunpack.c.l.b16 %v1228
    %v4022 = vunpack.c.h.b16 %v1228
    %v4023 = vunpack.c.l.b16 %v1229
    %v4024 = vunpack.c.h.b16 %v1229
    %v4025 = vunpack.c.l.b16 %v1230
    %v4026 = vunpack.c.h.b16 %v1230
    %v4027 = vunpack.c.l.b16 %v1231
    %v4028 = vunpack.c.h.b16 %v1231
    %v4029 = vunpack.c.l.b16 %v1232
    %v4030 = vunpack.c.h.b16 %v1232
    %v4031 = vunpack.c.l.b16 %v1233
    %v4032 = vunpack.c.h.b16 %v1233
    %v4033 = vunpack.c.l.b16 %v1234
    %v4034 = vunpack.c.h.b16 %v1234
    %v4035 = vunpack.c.l.b16 %v1235
    %v4036 = vunpack.c.h.b16 %v1235
    %v4037 = vunpack.c.l.b16 %v1236
    %v4038 = vunpack.c.h.b16 %v1236
    %v4039 = vunpack.c.l.b16 %v1237
    %v4040 = vunpack.c.h.b16 %v1237
    %v4041 = vunpack.c.l.b16 %v1238
    %v4042 = vunpack.c.h.b16 %v1238
    %v4043 = vunpack.c.l.b16 %v1239
    %v4044 = vunpack.c.h.b16 %v1239
    %v4045 = vunpack.c.l.b16 %v1240
    %v4046 = vunpack.c.h.b16 %v1240
    %v4047 = vunpack.c.l.b16 %v1241
    %v4048 = vunpack.c.h.b16 %v1241
    %v4049 = vunpack.c.l.b16 %v1242
    %v4050 = vunpack.c.h.b16 %v1242
    %v4051 = vunpack.c.l.b16 %v1243
    %v4052 = vunpack.c.h.b16 %v1243
    %v4053 = vunpack.c.l.b16 %v1244
    %v4054 = vunpack.c.h.b16 %v1244
    %v4055 = vunpack.c.l.b16 %v1245
    %v4056 = vunpack.c.h.b16 %v1245
    %v4057 = vunpack.c.l.b16 %v1246
    %v4058 = vunpack.c.h.b16 %v1246
    %v4059 = vunpack.c.l.b16 %v1247
    %v4060 = vunpack.c.h.b16 %v1247
    %v4061 = vunpack.c.l.b16 %v1248
    %v4062 = vunpack.c.h.b16 %v1248
    %v4063 = vunpack.c.l.b16 %v1249
    %v4064 = vunpack.c.h.b16 %v1249
    %v4065 = vunpack.c.l.b16 %v1250
    %v4066 = vunpack.c.h.b16 %v1250
    %v4067 = vunpack.c.l.b16 %v1251
    %v4068 = vunpack.c.h.b16 %v1251
    %v4069 = vunpack.c.l.b16 %v1252
    %v4070 = vunpack.c.h.b16 %v1252
    %v4071 = vunpack.c.l.b16 %v1253
    %v4072 = vunpack.c.h.b16 %v1253
    %v4073 = vunpack.c.l.b16 %v1254
    %v4074 = vunpack.c.h.b16 %v1254
    %v4075 = vunpack.c.l.b16 %v1255
    %v4076 = vunpack.c.h.b16 %v1255
    %v4077 = vunpack.c.l.b16 %v1256
    %v4078 = vunpack.c.h.b16 %v1256
    %v4079 = vunpack.c.l.b16 %v1257
    %v4080 = vunpack.c.h.b16 %v1257
    %v4081 = vunpack.c.l.b16 %v1258
    %v4082 = vunpack.c.h.b16 %v1258
    %v4083 = vunpack.c.l.b16 %v1259
    %v4084 = vunpack.c.h.b16 %v1259
    %v4085 = vunpack.c.l.b16 %v1260
    %v4086 = vunpack.c.h.b16 %v1260
    %v4087 = vunpack.c.l.b16 %v1261
    %v4088 = vunpack.c.h.b16 %v1261
    %v4089 = vunpack.c.l.b16 %v1262
    %v4090 = vunpack.c.h.b16 %v1262
    %v4091 = vunpack.c.l.b16 %v1263
    %v4092 = vunpack.c.h.b16 %v1263
    %v4093 = vunpack.c.l.b16 %v1264
    %v4094 = vunpack.c.h.b16 %v1264
    %v4095 = vunpack.c.l.b16 %v1265
    %v4096 = vunpack.c.h.b16 %v1265
    %v4097 = vunpack.c.l.b16 %v1266
    %v4098 = vunpack.c.h.b16 %v1266
    %v4099 = vunpack.c.l.b16 %v1267
    %v4100 = vunpack.c.h.b16 %v1267
    %v4101 = vunpack.c.l.b16 %v1268
    %v4102 = vunpack.c.h.b16 %v1268
    %v4103 = vunpack.c.l.b16 %v1269
    %v4104 = vunpack.c.h.b16 %v1269
    %v4105 = vunpack.c.l.b16 %v1270
    %v4106 = vunpack.c.h.b16 %v1270
    %v4107 = vunpack.c.l.b16 %v1271
    %v4108 = vunpack.c.h.b16 %v1271
    %v4109 = vunpack.c.l.b16 %v1272
    %v4110 = vunpack.c.h.b16 %v1272
    %v4111 = vunpack.c.l.b16 %v1273
    %v4112 = vunpack.c.h.b16 %v1273
    %v4113 = vunpack.c.l.b16 %v1274
    %v4114 = vunpack.c.h.b16 %v1274
    %v4115 = vunpack.c.l.b16 %v1275
    %v4116 = vunpack.c.h.b16 %v1275
    %v4117 = vunpack.c.l.b16 %v1276
    %v4118 = vunpack.c.h.b16 %v1276
    %v4119 = vunpack.c.l.b16 %v1277
    %v4120 = vunpack.c.h.b16 %v1277
    %v4121 = vunpack.c.l.b16 %v1278
    %v4122 = vunpack.c.h.b16 %v1278
    %v4123 = vunpack.c.l.b16 %v1279
    %v4124 = vunpack.c.h.b16 %v1279
    %v4125 = vunpack.c.l.b16 %v1280
    %v4126 = vunpack.c.h.b16 %v1280
    %v4127 = vunpack.c.l.b16 %v1281
    %v4128 = vunpack.c.h.b16 %v1281
    %v4129 = vunpack.c.l.b16 %v1282
    %v4130 = vunpack.c.h.b16 %v1282
    %v4131 = vunpack.c.l.b16 %v1283
    %v4132 = vunpack.c.h.b16 %v1283
    %v4133 = vunpack.c.l.b16 %v1284
    %v4134 = vunpack.c.h.b16 %v1284
    %v4135 = vunpack.c.l.b16 %v1285
    %v4136 = vunpack.c.h.b16 %v1285
    %v4137 = vunpack.c.l.b16 %v1286
    %v4138 = vunpack.c.h.b16 %v1286
    %v4139 = vunpack.c.l.b16 %v1287
    %v4140 = vunpack.c.h.b16 %v1287
    %v4141 = vunpack.c.l.b16 %v1288
    %v4142 = vunpack.c.h.b16 %v1288
    %v4143 = vunpack.c.l.b16 %v1289
    %v4144 = vunpack.c.h.b16 %v1289
    %v4145 = vunpack.c.l.b16 %v1290
    %v4146 = vunpack.c.h.b16 %v1290
    %v4147 = vunpack.c.l.b16 %v1291
    %v4148 = vunpack.c.h.b16 %v1291
    %v4149 = vunpack.c.l.b16 %v1292
    %v4150 = vunpack.c.h.b16 %v1292
    %v4151 = vunpack.c.l.b16 %v1293
    %v4152 = vunpack.c.h.b16 %v1293
    %v4153 = vunpack.c.l.b16 %v1294
    %v4154 = vunpack.c.h.b16 %v1294
    %v4155 = vunpack.c.l.b16 %v1295
    %v4156 = vunpack.c.h.b16 %v1295
    %v4157 = vunpack.c.l.b16 %v1296
    %v4158 = vunpack.c.h.b16 %v1296
    %v4159 = vunpack.c.l.b16 %v1297
    %v4160 = vunpack.c.h.b16 %v1297
    %v4161 = vunpack.c.l.b16 %v1298
    %v4162 = vunpack.c.h.b16 %v1298
    %v4163 = vunpack.c.l.b16 %v1299
    %v4164 = vunpack.c.h.b16 %v1299
    %v4165 = vunpack.c.l.b16 %v1300
    %v4166 = vunpack.c.h.b16 %v1300
    %v4167 = vunpack.c.l.b16 %v1301
    %v4168 = vunpack.c.h.b16 %v1301
    %v4169 = vunpack.c.l.b16 %v1302
    %v4170 = vunpack.c.h.b16 %v1302
    %v4171 = vunpack.c.l.b16 %v1303
    %v4172 = vunpack.c.h.b16 %v1303
    %v4173 = vunpack.c.l.b16 %v1304
    %v4174 = vunpack.c.h.b16 %v1304
    %v4175 = vunpack.c.l.b16 %v1305
    %v4176 = vunpack.c.h.b16 %v1305
    %v4177 = vunpack.c.l.b16 %v1306
    %v4178 = vunpack.c.h.b16 %v1306
    %v4179 = vunpack.c.l.b16 %v1307
    %v4180 = vunpack.c.h.b16 %v1307
    %v4181 = vunpack.c.l.b16 %v1308
    %v4182 = vunpack.c.h.b16 %v1308
    %v4183 = vunpack.c.l.b16 %v1309
    %v4184 = vunpack.c.h.b16 %v1309
    %v4185 = vunpack.c.l.b16 %v1310
    %v4186 = vunpack.c.h.b16 %v1310
    %v4187 = vunpack.c.l.b16 %v1311
    %v4188 = vunpack.c.h.b16 %v1311
    %v4189 = vunpack.c.l.b16 %v1312
    %v4190 = vunpack.c.h.b16 %v1312
    %v4191 = vunpack.c.l.b16 %v1313
    %v4192 = vunpack.c.h.b16 %v1313
    %v4193 = vunpack.c.l.b16 %v1314
    %v4194 = vunpack.c.h.b16 %v1314
    %v4195 = vunpack.c.l.b16 %v1315
    %v4196 = vunpack.c.h.b16 %v1315
    %v4197 = vunpack.c.l.b16 %v1316
    %v4198 = vunpack.c.h.b16 %v1316
    %v4199 = vunpack.c.l.b16 %v1317
    %v4200 = vunpack.c.h.b16 %v1317
    %v4201 = vunpack.c.l.b16 %v1318
    %v4202 = vunpack.c.h.b16 %v1318
    %v4203 = vunpack.c.l.b16 %v1319
    %v4204 = vunpack.c.h.b16 %v1319
    %v4205 = vunpack.c.l.b16 %v1320
    %v4206 = vunpack.c.h.b16 %v1320
    %v4207 = vunpack.c.l.b16 %v1321
    %v4208 = vunpack.c.h.b16 %v1321
    %v4209 = vunpack.c.l.b16 %v1322
    %v4210 = vunpack.c.h.b16 %v1322
    %v4211 = vunpack.c.l.b16 %v1323
    %v4212 = vunpack.c.h.b16 %v1323
    %v4213 = vunpack.c.l.b16 %v1324
    %v4214 = vunpack.c.h.b16 %v1324
    %v4215 = vunpack.c.l.b16 %v1325
    %v4216 = vunpack.c.h.b16 %v1325
    %v4217 = vunpack.c.l.b16 %v1326
    %v4218 = vunpack.c.h.b16 %v1326
    %v4219 = vunpack.c.l.b16 %v1327
    %v4220 = vunpack.c.h.b16 %v1327
    %v4221 = vunpack.c.l.b16 %v1328
    %v4222 = vunpack.c.h.b16 %v1328
    %v4223 = vunpack.c.l.b16 %v1329
    %v4224 = vunpack.c.h.b16 %v1329
    %v4225 = vunpack.c.l.b16 %v1330
    %v4226 = vunpack.c.h.b16 %v1330
    %v4227 = vunpack.c.l.b16 %v1331
    %v4228 = vunpack.c.h.b16 %v1331
    %v4229 = vunpack.c.l.b16 %v1332
    %v4230 = vunpack.c.h.b16 %v1332
    %v4231 = vunpack.c.l.b16 %v1333
    %v4232 = vunpack.c.h.b16 %v1333
    %v4233 = vunpack.c.l.b16 %v1334
    %v4234 = vunpack.c.h.b16 %v1334
    %v4235 = vunpack.c.l.b16 %v1335
    %v4236 = vunpack.c.h.b16 %v1335
    %v4237 = vunpack.c.l.b16 %v1336
    %v4238 = vunpack.c.h.b16 %v1336
    %v4239 = vunpack.c.l.b16 %v1337
    %v4240 = vunpack.c.h.b16 %v1337
    %v4241 = vunpack.c.l.b16 %v1338
    %v4242 = vunpack.c.h.b16 %v1338
    %v4243 = vunpack.c.l.b16 %v1339
    %v4244 = vunpack.c.h.b16 %v1339
    %v4245 = vunpack.c.l.b16 %v1340
    %v4246 = vunpack.c.h.b16 %v1340
    %v4247 = vunpack.c.l.b16 %v1341
    %v4248 = vunpack.c.h.b16 %v1341
    %v4249 = vunpack.c.l.b16 %v1342
    %v4250 = vunpack.c.h.b16 %v1342
    %v4251 = vunpack.c.l.b16 %v1343
    %v4252 = vunpack.c.h.b16 %v1343
    %v4253 = vunpack.c.l.b16 %v1344
    %v4254 = vunpack.c.h.b16 %v1344
    %v4255 = vunpack.c.l.b16 %v1345
    %v4256 = vunpack.c.h.b16 %v1345
    %v4257 = vunpack.c.l.b16 %v1346
    %v4258 = vunpack.c.h.b16 %v1346
    %v4259 = vunpack.c.l.b16 %v1347
    %v4260 = vunpack.c.h.b16 %v1347
    %v4261 = vunpack.c.l.b16 %v1348
    %v4262 = vunpack.c.h.b16 %v1348
    %v4263 = vunpack.c.l.b16 %v1349
    %v4264 = vunpack.c.h.b16 %v1349
    %v4265 = vunpack.c.l.b16 %v1350
    %v4266 = vunpack.c.h.b16 %v1350
    %v4267 = vunpack.c.l.b16 %v1351
    %v4268 = vunpack.c.h.b16 %v1351
    %v4269 = vunpack.c.l.b16 %v1352
    %v4270 = vunpack.c.h.b16 %v1352
    %v4271 = vunpack.c.l.b16 %v1353
    %v4272 = vunpack.c.h.b16 %v1353
    %v4273 = vunpack.c.l.b16 %v1354
    %v4274 = vunpack.c.h.b16 %v1354
    %v4275 = vunpack.c.l.b16 %v1355
    %v4276 = vunpack.c.h.b16 %v1355
    %v4277 = vunpack.c.l.b16 %v1356
    %v4278 = vunpack.c.h.b16 %v1356
    %v4279 = vunpack.c.l.b16 %v1357
    %v4280 = vunpack.c.h.b16 %v1357
    %v4281 = vunpack.c.l.b16 %v1358
    %v4282 = vunpack.c.h.b16 %v1358
    %v4283 = vunpack.c.l.b16 %v1359
    %v4284 = vunpack.c.h.b16 %v1359
    %v4285 = vunpack.c.l.b16 %v1360
    %v4286 = vunpack.c.h.b16 %v1360
    %v4287 = vunpack.c.l.b16 %v1361
    %v4288 = vunpack.c.h.b16 %v1361
    %v4289 = vunpack.c.l.b16 %v1362
    %v4290 = vunpack.c.h.b16 %v1362
    %v4291 = vunpack.c.l.b16 %v1363
    %v4292 = vunpack.c.h.b16 %v1363
    %v4293 = vunpack.c.l.b16 %v1364
    %v4294 = vunpack.c.h.b16 %v1364
    %v4295 = vunpack.c.l.b16 %v1365
    %v4296 = vunpack.c.h.b16 %v1365
    %v4297 = vunpack.c.l.b16 %v1366
    %v4298 = vunpack.c.h.b16 %v1366
    %v4299 = vunpack.c.l.b16 %v1367
    %v4300 = vunpack.c.h.b16 %v1367
    %v4301 = vunpack.c.l.b16 %v1368
    %v4302 = vunpack.c.h.b16 %v1368
    %v4303 = vunpack.c.l.b16 %v1369
    %v4304 = vunpack.c.h.b16 %v1369
    %v4305 = vunpack.c.l.b16 %v1370
    %v4306 = vunpack.c.h.b16 %v1370
    %v4307 = vunpack.c.l.b16 %v1371
    %v4308 = vunpack.c.h.b16 %v1371
    %v4309 = vunpack.c.l.b16 %v1372
    %v4310 = vunpack.c.h.b16 %v1372
    %v4311 = vunpack.c.l.b16 %v1373
    %v4312 = vunpack.c.h.b16 %v1373
    %v4313 = vunpack.c.l.b16 %v1374
    %v4314 = vunpack.c.h.b16 %v1374
    %v4315 = vunpack.c.l.b16 %v1375
    %v4316 = vunpack.c.h.b16 %v1375
    %v4317 = vunpack.c.l.b16 %v1376
    %v4318 = vunpack.c.h.b16 %v1376
    %v4319 = vunpack.c.l.b16 %v1377
    %v4320 = vunpack.c.h.b16 %v1377
    %v4321 = vunpack.c.l.b16 %v1378
    %v4322 = vunpack.c.h.b16 %v1378
    %v4323 = vunpack.c.l.b16 %v1379
    %v4324 = vunpack.c.h.b16 %v1379
    %v4325 = vunpack.c.l.b16 %v1380
    %v4326 = vunpack.c.h.b16 %v1380
    %v4327 = vunpack.c.l.b16 %v1381
    %v4328 = vunpack.c.h.b16 %v1381
    %v4329 = vunpack.c.l.b16 %v1382
    %v4330 = vunpack.c.h.b16 %v1382
    %v4331 = vunpack.c.l.b16 %v1383
    %v4332 = vunpack.c.h.b16 %v1383
    %v4333 = vunpack.c.l.b16 %v1384
    %v4334 = vunpack.c.h.b16 %v1384
    %v4335 = vunpack.c.l.b16 %v1385
    %v4336 = vunpack.c.h.b16 %v1385
    %v4337 = vunpack.c.l.b16 %v1386
    %v4338 = vunpack.c.h.b16 %v1386
    %v4339 = vunpack.c.l.b16 %v1387
    %v4340 = vunpack.c.h.b16 %v1387
    %v4341 = vunpack.c.l.b16 %v1388
    %v4342 = vunpack.c.h.b16 %v1388
    %v4343 = vunpack.c.l.b16 %v1389
    %v4344 = vunpack.c.h.b16 %v1389
    %v4345 = vunpack.c.l.b16 %v1390
    %v4346 = vunpack.c.h.b16 %v1390
    %v4347 = vunpack.c.l.b16 %v1391
    %v4348 = vunpack.c.h.b16 %v1391
    %v4349 = vunpack.c.l.b16 %v1392
    %v4350 = vunpack.c.h.b16 %v1392
    %v4351 = vunpack.c.l.b16 %v1393
    %v4352 = vunpack.c.h.b16 %v1393
    %v4353 = vunpack.c.l.b16 %v1394
    %v4354 = vunpack.c.h.b16 %v1394
    %v4355 = vunpack.c.l.b16 %v1395
    %v4356 = vunpack.c.h.b16 %v1395
    %v4357 = vunpack.c.l.b16 %v1396
    %v4358 = vunpack.c.h.b16 %v1396
    %v4359 = vunpack.c.l.b16 %v1397
    %v4360 = vunpack.c.h.b16 %v1397
    %v4361 = vunpack.c.l.b16 %v1398
    %v4362 = vunpack.c.h.b16 %v1398
    %v4363 = vunpack.c.l.b16 %v1399
    %v4364 = vunpack.c.h.b16 %v1399
    %v4365 = vunpack.c.l.b16 %v1400
    %v4366 = vunpack.c.h.b16 %v1400
    %v4367 = vunpack.c.l.b16 %v1401
    %v4368 = vunpack.c.h.b16 %v1401
    %v4369 = vunpack.c.l.b16 %v1402
    %v4370 = vunpack.c.h.b16 %v1402
    %v4371 = vunpack.c.l.b16 %v1403
    %v4372 = vunpack.c.h.b16 %v1403
    %v4373 = vunpack.c.l.b16 %v1404
    %v4374 = vunpack.c.h.b16 %v1404
    %v4375 = vunpack.c.l.b16 %v1405
    %v4376 = vunpack.c.h.b16 %v1405
    %v4377 = vunpack.c.l.b16 %v1406
    %v4378 = vunpack.c.h.b16 %v1406
    %v4379 = vunpack.c.l.b16 %v1407
    %v4380 = vunpack.c.h.b16 %v1407
    %v4381 = vunpack.c.l.b16 %v1408
    %v4382 = vunpack.c.h.b16 %v1408
    %v4383 = vunpack.c.l.b16 %v1409
    %v4384 = vunpack.c.h.b16 %v1409
    %v4385 = vunpack.c.l.b16 %v1410
    %v4386 = vunpack.c.h.b16 %v1410
    %v4387 = vunpack.c.l.b16 %v1411
    %v4388 = vunpack.c.h.b16 %v1411
    %v4389 = vunpack.c.l.b16 %v1412
    %v4390 = vunpack.c.h.b16 %v1412
    %v4391 = vunpack.c.l.b16 %v1413
    %v4392 = vunpack.c.h.b16 %v1413
    %v4393 = vunpack.c.l.b16 %v1414
    %v4394 = vunpack.c.h.b16 %v1414
    %v4395 = vunpack.c.l.b16 %v1415
    %v4396 = vunpack.c.h.b16 %v1415
    %v4397 = vunpack.c.l.b16 %v1416
    %v4398 = vunpack.c.h.b16 %v1416
    %v4399 = vunpack.c.l.b16 %v1417
    %v4400 = vunpack.c.h.b16 %v1417
    %v4401 = vunpack.c.l.b16 %v1418
    %v4402 = vunpack.c.h.b16 %v1418
    %v4403 = vunpack.c.l.b16 %v1419
    %v4404 = vunpack.c.h.b16 %v1419
    %v4405 = vunpack.c.l.b16 %v1420
    %v4406 = vunpack.c.h.b16 %v1420
    %v4407 = vunpack.c.l.b16 %v1421
    %v4408 = vunpack.c.h.b16 %v1421
    %v4409 = vunpack.c.l.b16 %v1422
    %v4410 = vunpack.c.h.b16 %v1422
    %v4411 = vunpack.c.l.b16 %v1423
    %v4412 = vunpack.c.h.b16 %v1423
    %v4413 = vunpack.c.l.b16 %v1424
    %v4414 = vunpack.c.h.b16 %v1424
    %v4415 = vunpack.c.l.b16 %v1425
    %v4416 = vunpack.c.h.b16 %v1425
    %v4417 = vunpack.c.l.b16 %v1426
    %v4418 = vunpack.c.h.b16 %v1426
    %v4419 = vunpack.c.l.b16 %v1427
    %v4420 = vunpack.c.h.b16 %v1427
    %v4421 = vunpack.c.l.b16 %v1428
    %v4422 = vunpack.c.h.b16 %v1428
    %v4423 = vunpack.c.l.b16 %v1429
    %v4424 = vunpack.c.h.b16 %v1429
    %v4425 = vunpack.c.l.b16 %v1430
    %v4426 = vunpack.c.h.b16 %v1430
    %v4427 = vunpack.c.l.b16 %v1431
    %v4428 = vunpack.c.h.b16 %v1431
    %v4429 = vunpack.c.l.b16 %v1432
    %v4430 = vunpack.c.h.b16 %v1432
    %v4431 = vunpack.c.l.b16 %v1433
    %v4432 = vunpack.c.h.b16 %v1433
    %v4433 = vunpack.c.l.b16 %v1434
    %v4434 = vunpack.c.h.b16 %v1434
    %v4435 = vunpack.c.l.b16 %v1435
    %v4436 = vunpack.c.h.b16 %v1435
    %v4437 = vunpack.c.l.b16 %v1436
    %v4438 = vunpack.c.h.b16 %v1436
    %v4439 = vunpack.c.l.b16 %v1437
    %v4440 = vunpack.c.h.b16 %v1437
    %v4441 = vunpack.c.l.b16 %v1438
    %v4442 = vunpack.c.h.b16 %v1438
    %v4443 = vunpack.c.l.b16 %v1439
    %v4444 = vunpack.c.h.b16 %v1439
    %v4445 = vunpack.c.l.b16 %v1440
    %v4446 = vunpack.c.h.b16 %v1440
    %v4447 = vunpack.c.l.b16 %v1441
    %v4448 = vunpack.c.h.b16 %v1441
    %v4449 = vunpack.c.l.b16 %v1442
    %v4450 = vunpack.c.h.b16 %v1442
    %v4451 = vunpack.c.l.b16 %v1443
    %v4452 = vunpack.c.h.b16 %v1443
    %v4453 = vunpack.c.l.b16 %v1444
    %v4454 = vunpack.c.h.b16 %v1444
    %v4455 = vunpack.c.l.b16 %v1445
    %v4456 = vunpack.c.h.b16 %v1445
    %v4457 = vunpack.c.l.b16 %v1446
    %v4458 = vunpack.c.h.b16 %v1446
    %v4459 = vunpack.c.l.b16 %v1447
    %v4460 = vunpack.c.h.b16 %v1447
    %v4461 = vunpack.c.l.b16 %v1448
    %v4462 = vunpack.c.h.b16 %v1448
    %v4463 = vunpack.c.l.b16 %v1449
    %v4464 = vunpack.c.h.b16 %v1449
    %v4465 = vunpack.c.l.b16 %v1450
    %v4466 = vunpack.c.h.b16 %v1450
    %v4467 = vunpack.c.l.b16 %v1451
    %v4468 = vunpack.c.h.b16 %v1451
    %v4469 = vunpack.c.l.b16 %v1452
    %v4470 = vunpack.c.h.b16 %v1452
    %v4471 = vunpack.c.l.b16 %v1453
    %v4472 = vunpack.c.h.b16 %v1453
    %v4473 = vunpack.c.l.b16 %v1454
    %v4474 = vunpack.c.h.b16 %v1454
    %v4475 = vunpack.c.l.b16 %v1455
    %v4476 = vunpack.c.h.b16 %v1455
    %v4477 = vunpack.c.l.b16 %v1456
    %v4478 = vunpack.c.h.b16 %v1456
    %v4479 = vunpack.c.l.b16 %v1457
    %v4480 = vunpack.c.h.b16 %v1457
    %v4481 = vunpack.c.l.b16 %v1458
    %v4482 = vunpack.c.h.b16 %v1458
    %v4483 = vunpack.c.l.b16 %v1459
    %v4484 = vunpack.c.h.b16 %v1459
    %v4485 = vunpack.c.l.b16 %v1460
    %v4486 = vunpack.c.h.b16 %v1460
    %v4487 = vunpack.c.l.b16 %v1461
    %v4488 = vunpack.c.h.b16 %v1461
    %v4489 = vunpack.c.l.b16 %v1462
    %v4490 = vunpack.c.h.b16 %v1462
    %v4491 = vunpack.c.l.b16 %v1463
    %v4492 = vunpack.c.h.b16 %v1463
    %v4493 = vunpack.c.l.b16 %v1464
    %v4494 = vunpack.c.h.b16 %v1464
    %v4495 = vunpack.c.l.b16 %v1465
    %v4496 = vunpack.c.h.b16 %v1465
    %v4497 = vunpack.c.l.b16 %v1466
    %v4498 = vunpack.c.h.b16 %v1466
    %v4499 = vunpack.c.l.b16 %v1467
    %v4500 = vunpack.c.h.b16 %v1467
    %v4501 = vunpack.c.l.b16 %v1468
    %v4502 = vunpack.c.h.b16 %v1468
    %v4503 = vunpack.c.l.b16 %v1469
    %v4504 = vunpack.c.h.b16 %v1469
    %v4505 = vunpack.c.l.b16 %v1470
    %v4506 = vunpack.c.h.b16 %v1470
    %v4507 = vunpack.c.l.b16 %v1471
    %v4508 = vunpack.c.h.b16 %v1471
    %v4509 = vunpack.c.l.b16 %v1472
    %v4510 = vunpack.c.h.b16 %v1472
    %v4511 = vunpack.c.l.b16 %v1473
    %v4512 = vunpack.c.h.b16 %v1473
    %v4513 = vunpack.c.l.b16 %v1474
    %v4514 = vunpack.c.h.b16 %v1474
    %v4515 = vunpack.c.l.b16 %v1475
    %v4516 = vunpack.c.h.b16 %v1475
    %v4517 = vunpack.c.l.b16 %v1476
    %v4518 = vunpack.c.h.b16 %v1476
    %v4519 = vunpack.c.l.b16 %v1477
    %v4520 = vunpack.c.h.b16 %v1477
    %v4521 = vunpack.c.l.b16 %v1478
    %v4522 = vunpack.c.h.b16 %v1478
    %v4523 = vunpack.c.l.b16 %v1479
    %v4524 = vunpack.c.h.b16 %v1479
    %v4525 = vunpack.c.l.b16 %v1480
    %v4526 = vunpack.c.h.b16 %v1480
    %v4527 = vunpack.c.l.b16 %v1481
    %v4528 = vunpack.c.h.b16 %v1481
    %v4529 = vunpack.c.l.b16 %v1482
    %v4530 = vunpack.c.h.b16 %v1482
    %v4531 = vunpack.c.l.b16 %v1483
    %v4532 = vunpack.c.h.b16 %v1483
    %v4533 = vunpack.c.l.b16 %v1484
    %v4534 = vunpack.c.h.b16 %v1484
    %v4535 = vunpack.c.l.b16 %v1485
    %v4536 = vunpack.c.h.b16 %v1485
    %v4537 = vunpack.c.l.b16 %v1486
    %v4538 = vunpack.c.h.b16 %v1486
    %v4539 = vunpack.c.l.b16 %v1487
    %v4540 = vunpack.c.h.b16 %v1487
    %v4541 = vunpack.c.l.b16 %v1488
    %v4542 = vunpack.c.h.b16 %v1488
    %v4543 = vunpack.c.l.b16 %v1489
    %v4544 = vunpack.c.h.b16 %v1489
    %v4545 = vunpack.c.l.b16 %v1490
    %v4546 = vunpack.c.h.b16 %v1490
    %v4547 = vunpack.c.l.b16 %v1491
    %v4548 = vunpack.c.h.b16 %v1491
    %v4549 = vunpack.c.l.b16 %v1492
    %v4550 = vunpack.c.h.b16 %v1492
    %v4551 = vunpack.c.l.b16 %v1493
    %v4552 = vunpack.c.h.b16 %v1493
    %v4553 = vunpack.c.l.b16 %v1494
    %v4554 = vunpack.c.h.b16 %v1494
    %v4555 = vunpack.c.l.b16 %v1495
    %v4556 = vunpack.c.h.b16 %v1495
    %v4557 = vunpack.c.l.b16 %v1496
    %v4558 = vunpack.c.h.b16 %v1496
    %v4559 = vunpack.c.l.b16 %v1497
    %v4560 = vunpack.c.h.b16 %v1497
    %v4561 = vunpack.c.l.b16 %v1498
    %v4562 = vunpack.c.h.b16 %v1498
    %v4563 = vunpack.c.l.b16 %v1499
    %v4564 = vunpack.c.h.b16 %v1499
    %v4565 = vunpack.c.l.b16 %v1500
    %v4566 = vunpack.c.h.b16 %v1500
    %v4567 = vunpack.c.l.b16 %v1501
    %v4568 = vunpack.c.h.b16 %v1501
    %v4569 = vunpack.c.l.b16 %v1502
    %v4570 = vunpack.c.h.b16 %v1502
    %v4571 = vunpack.c.l.b16 %v1503
    %v4572 = vunpack.c.h.b16 %v1503
    %v4573 = vunpack.c.l.b16 %v1504
    %v4574 = vunpack.c.h.b16 %v1504
    %v4575 = vunpack.c.l.b16 %v1505
    %v4576 = vunpack.c.h.b16 %v1505
    %v4577 = vunpack.c.l.b16 %v1506
    %v4578 = vunpack.c.h.b16 %v1506
    %v4579 = vunpack.c.l.b16 %v1507
    %v4580 = vunpack.c.h.b16 %v1507
    %v4581 = vunpack.c.l.b16 %v1508
    %v4582 = vunpack.c.h.b16 %v1508
    %v4583 = vunpack.c.l.b16 %v1509
    %v4584 = vunpack.c.h.b16 %v1509
    %v4585 = vunpack.c.l.b16 %v1510
    %v4586 = vunpack.c.h.b16 %v1510
    %v4587 = vunpack.c.l.b16 %v1511
    %v4588 = vunpack.c.h.b16 %v1511
    %v4589 = vunpack.c.l.b16 %v1512
    %v4590 = vunpack.c.h.b16 %v1512
    %v4591 = vunpack.c.l.b16 %v1513
    %v4592 = vunpack.c.h.b16 %v1513
    %v4593 = vunpack.c.l.b16 %v1514
    %v4594 = vunpack.c.h.b16 %v1514
    %v4595 = vunpack.c.l.b16 %v1515
    %v4596 = vunpack.c.h.b16 %v1515
    %v4597 = vunpack.c.l.b16 %v1516
    %v4598 = vunpack.c.h.b16 %v1516
    %v4599 = vunpack.c.l.b16 %v1517
    %v4600 = vunpack.c.h.b16 %v1517
    %v4601 = vunpack.c.l.b16 %v1518
    %v4602 = vunpack.c.h.b16 %v1518
    %v4603 = vunpack.c.l.b16 %v1519
    %v4604 = vunpack.c.h.b16 %v1519
    %v4605 = vunpack.c.l.b16 %v1520
    %v4606 = vunpack.c.h.b16 %v1520
    %v4607 = vunpack.c.l.b16 %v1521
    %v4608 = vunpack.c.h.b16 %v1521
    %v4609 = vunpack.c.l.b16 %v1522
    %v4610 = vunpack.c.h.b16 %v1522
    %v4611 = vunpack.c.l.b16 %v1523
    %v4612 = vunpack.c.h.b16 %v1523
    %v4613 = vunpack.c.l.b16 %v1524
    %v4614 = vunpack.c.h.b16 %v1524
    %v4615 = vpack.c.b16 %v2575, %v2567
    %v4616 = vpack.c.b16 %v2576, %v2568
    %v4617 = vpack.c.b16 %v2577, %v2569
    %v4618 = vpack.c.b16 %v2578, %v2570
    %v4619 = vpack.c.b16 %v2579, %v2571
    %v4620 = vpack.c.b16 %v2580, %v2572
    %v4621 = vpack.c.b16 %v2581, %v2573
    %v4622 = vpack.c.b16 %v2582, %v2574
    %v4623 = vpack.c.b16 %v2591, %v2583
    %v4624 = vpack.c.b16 %v2592, %v2584
    %v4625 = vpack.c.b16 %v2593, %v2585
    %v4626 = vpack.c.b16 %v2594, %v2586
    %v4627 = vpack.c.b16 %v2595, %v2587
    %v4628 = vpack.c.b16 %v2596, %v2588
    %v4629 = vpack.c.b16 %v2597, %v2589
    %v4630 = vpack.c.b16 %v2598, %v2590
    %v4631 = vpack.c.b16 %v2607, %v2599
    %v4632 = vpack.c.b16 %v2608, %v2600
    %v4633 = vpack.c.b16 %v2609, %v2601
    %v4634 = vpack.c.b16 %v2610, %v2602
    %v4635 = vpack.c.b16 %v2611, %v2603
    %v4636 = vpack.c.b16 %v2612, %v2604
    %v4637 = vpack.c.b16 %v2613, %v2605
    %v4638 = vpack.c.b16 %v2614, %v2606
    %v4639 = vpack.c.b16 %v2623, %v2615
    %v4640 = vpack.c.b16 %v2624, %v2616
    %v4641 = vpack.c.b16 %v2625, %v2617
    %v4642 = vpack.c.b16 %v2626, %v2618
    %v4643 = vpack.c.b16 %v2627, %v2619
    %v4644 = vpack.c.b16 %v2628, %v2620
    %v4645 = vpack.c.b16 %v2629, %v2621
    %v4646 = vpack.c.b16 %v2630, %v2622
    %v4647 = vpack.c.b16 %v2639, %v2631
    %v4648 = vpack.c.b16 %v2640, %v2632
    %v4649 = vpack.c.b16 %v2641, %v2633
    %v4650 = vpack.c.b16 %v2642, %v2634
    %v4651 = vpack.c.b16 %v2643, %v2635
    %v4652 = vpack.c.b16 %v2644, %v2636
    %v4653 = vpack.c.b16 %v2645, %v2637
    %v4654 = vpack.c.b16 %v2646, %v2638
    %v4655 = vpack.c.b16 %v2655, %v2647
    %v4656 = vpack.c.b16 %v2656, %v2648
    %v4657 = vpack.c.b16 %v2657, %v2649
    %v4658 = vpack.c.b16 %v2658, %v2650
    %v4659 = vpack.c.b16 %v2659, %v2651
    %v4660 = vpack.c.b16 %v2660, %v2652
    %v4661 = vpack.c.b16 %v2661, %v2653
    %v4662 = vpack.c.b16 %v2662, %v2654
    %v4663 = vpack.c.b16 %v2671, %v2663
    %v4664 = vpack.c.b16 %v2672, %v2664
    %v4665 = vpack.c.b16 %v2673, %v2665
    %v4666 = vpack.c.b16 %v2674, %v2666
    %v4667 = vpack.c.b16 %v2675, %v2667
    %v4668 = vpack.c.b16 %v2676, %v2668
    %v4669 = vpack.c.b16 %v2677, %v2669
    %v4670 = vpack.c.b16 %v2678, %v2670
    %v4671 = vpack.c.b16 %v2687, %v2679
    %v4672 = vpack.c.b16 %v2688, %v2680
    %v4673 = vpack.c.b16 %v2689, %v2681
    %v4674 = vpack.c.b16 %v2690, %v2682
    %v4675 = vpack.c.b16 %v2691, %v2683
    %v4676 = vpack.c.b16 %v2692, %v2684
    %v4677 = vpack.c.b16 %v2693, %v2685
    %v4678 = vpack.c.b16 %v2694, %v2686
    %v4679 = vpack.c.b16 %v2703, %v2695
    %v4680 = vpack.c.b16 %v2704, %v2696
    %v4681 = vpack.c.b16 %v2705, %v2697
    %v4682 = vpack.c.b16 %v2706, %v2698
    %v4683 = vpack.c.b16 %v2707, %v2699
    %v4684 = vpack.c.b16 %v2708, %v2700
    %v4685 = vpack.c.b16 %v2709, %v2701
    %v4686 = vpack.c.b16 %v2710, %v2702
    %v4687 = vpack.c.b16 %v2719, %v2711
    %v4688 = vpack.c.b16 %v2720, %v2712
    %v4689 = vpack.c.b16 %v2721, %v2713
    %v4690 = vpack.c.b16 %v2722, %v2714
    %v4691 = vpack.c.b16 %v2723, %v2715
    %v4692 = vpack.c.b16 %v2724, %v2716
    %v4693 = vpack.c.b16 %v2725, %v2717
    %v4694 = vpack.c.b16 %v2726, %v2718
    %v4695 = vpack.c.b16 %v2735, %v2727
    %v4696 = vpack.c.b16 %v2736, %v2728
    %v4697 = vpack.c.b16 %v2737, %v2729
    %v4698 = vpack.c.b16 %v2738, %v2730
    %v4699 = vpack.c.b16 %v2739, %v2731
    %v4700 = vpack.c.b16 %v2740, %v2732
    %v4701 = vpack.c.b16 %v2741, %v2733
    %v4702 = vpack.c.b16 %v2742, %v2734
    %v4703 = vpack.c.b16 %v2751, %v2743
    %v4704 = vpack.c.b16 %v2752, %v2744
    %v4705 = vpack.c.b16 %v2753, %v2745
    %v4706 = vpack.c.b16 %v2754, %v2746
    %v4707 = vpack.c.b16 %v2755, %v2747
    %v4708 = vpack.c.b16 %v2756, %v2748
    %v4709 = vpack.c.b16 %v2757, %v2749
    %v4710 = vpack.c.b16 %v2758, %v2750
    %v4711 = vpack.c.b16 %v2767, %v2759
    %v4712 = vpack.c.b16 %v2768, %v2760
    %v4713 = vpack.c.b16 %v2769, %v2761
    %v4714 = vpack.c.b16 %v2770, %v2762
    %v4715 = vpack.c.b16 %v2771, %v2763
    %v4716 = vpack.c.b16 %v2772, %v2764
    %v4717 = vpack.c.b16 %v2773, %v2765
    %v4718 = vpack.c.b16 %v2774, %v2766
    %v4719 = vpack.c.b16 %v2783, %v2775
    %v4720 = vpack.c.b16 %v2784, %v2776
    %v4721 = vpack.c.b16 %v2785, %v2777
    %v4722 = vpack.c.b16 %v2786, %v2778
    %v4723 = vpack.c.b16 %v2787, %v2779
    %v4724 = vpack.c.b16 %v2788, %v2780
    %v4725 = vpack.c.b16 %v2789, %v2781
    %v4726 = vpack.c.b16 %v2790, %v2782
    %v4727 = vpack.c.b16 %v2799, %v2791
    %v4728 = vpack.c.b16 %v2800, %v2792
    %v4729 = vpack.c.b16 %v2801, %v2793
    %v4730 = vpack.c.b16 %v2802, %v2794
    %v4731 = vpack.c.b16 %v2803, %v2795
    %v4732 = vpack.c.b16 %v2804, %v2796
    %v4733 = vpack.c.b16 %v2805, %v2797
    %v4734 = vpack.c.b16 %v2806, %v2798
    %v4735 = vpack.c.b16 %v2815, %v2807
    %v4736 = vpack.c.b16 %v2816, %v2808
    %v4737 = vpack.c.b16 %v2817, %v2809
    %v4738 = vpack.c.b16 %v2818, %v2810
    %v4739 = vpack.c.b16 %v2819, %v2811
    %v4740 = vpack.c.b16 %v2820, %v2812
    %v4741 = vpack.c.b16 %v2821, %v2813
    %v4742 = vpack.c.b16 %v2822, %v2814
    %v4743 = vpack.c.b16 %v2831, %v2823
    %v4744 = vpack.c.b16 %v2832, %v2824
    %v4745 = vpack.c.b16 %v2833, %v2825
    %v4746 = vpack.c.b16 %v2834, %v2826
    %v4747 = vpack.c.b16 %v2835, %v2827
    %v4748 = vpack.c.b16 %v2836, %v2828
    %v4749 = vpack.c.b16 %v2837, %v2829
    %v4750 = vpack.c.b16 %v2838, %v2830
    %v4751 = vpack.c.b16 %v2847, %v2839
    %v4752 = vpack.c.b16 %v2848, %v2840
    %v4753 = vpack.c.b16 %v2849, %v2841
    %v4754 = vpack.c.b16 %v2850, %v2842
    %v4755 = vpack.c.b16 %v2851, %v2843
    %v4756 = vpack.c.b16 %v2852, %v2844
    %v4757 = vpack.c.b16 %v2853, %v2845
    %v4758 = vpack.c.b16 %v2854, %v2846
    %v4759 = vpack.c.b16 %v2863, %v2855
    %v4760 = vpack.c.b16 %v2864, %v2856
    %v4761 = vpack.c.b16 %v2865, %v2857
    %v4762 = vpack.c.b16 %v2866, %v2858
    %v4763 = vpack.c.b16 %v2867, %v2859
    %v4764 = vpack.c.b16 %v2868, %v2860
    %v4765 = vpack.c.b16 %v2869, %v2861
    %v4766 = vpack.c.b16 %v2870, %v2862
    %v4767 = vpack.c.b16 %v2879, %v2871
    %v4768 = vpack.c.b16 %v2880, %v2872
    %v4769 = vpack.c.b16 %v2881, %v2873
    %v4770 = vpack.c.b16 %v2882, %v2874
    %v4771 = vpack.c.b16 %v2883, %v2875
    %v4772 = vpack.c.b16 %v2884, %v2876
    %v4773 = vpack.c.b16 %v2885, %v2877
    %v4774 = vpack.c.b16 %v2886, %v2878
    %v4775 = vpack.c.b16 %v2895, %v2887
    %v4776 = vpack.c.b16 %v2896, %v2888
    %v4777 = vpack.c.b16 %v2897, %v2889
    %v4778 = vpack.c.b16 %v2898, %v2890
    %v4779 = vpack.c.b16 %v2899, %v2891
    %v4780 = vpack.c.b16 %v2900, %v2892
    %v4781 = vpack.c.b16 %v2901, %v2893
    %v4782 = vpack.c.b16 %v2902, %v2894
    %v4783 = vpack.c.b16 %v2911, %v2903
    %v4784 = vpack.c.b16 %v2912, %v2904
    %v4785 = vpack.c.b16 %v2913, %v2905
    %v4786 = vpack.c.b16 %v2914, %v2906
    %v4787 = vpack.c.b16 %v2915, %v2907
    %v4788 = vpack.c.b16 %v2916, %v2908
    %v4789 = vpack.c.b16 %v2917, %v2909
    %v4790 = vpack.c.b16 %v2918, %v2910
    %v4791 = vpack.c.b16 %v2927, %v2919
    %v4792 = vpack.c.b16 %v2928, %v2920
    %v4793 = vpack.c.b16 %v2929, %v2921
    %v4794 = vpack.c.b16 %v2930, %v2922
    %v4795 = vpack.c.b16 %v2931, %v2923
    %v4796 = vpack.c.b16 %v2932, %v2924
    %v4797 = vpack.c.b16 %v2933, %v2925
    %v4798 = vpack.c.b16 %v2934, %v2926
    %v4799 = vpack.c.b16 %v2943, %v2935
    %v4800 = vpack.c.b16 %v2944, %v2936
    %v4801 = vpack.c.b16 %v2945, %v2937
    %v4802 = vpack.c.b16 %v2946, %v2938
    %v4803 = vpack.c.b16 %v2947, %v2939
    %v4804 = vpack.c.b16 %v2948, %v2940
    %v4805 = vpack.c.b16 %v2949, %v2941
    %v4806 = vpack.c.b16 %v2950, %v2942
    %v4807 = vpack.c.b16 %v2959, %v2951
    %v4808 = vpack.c.b16 %v2960, %v2952
    %v4809 = vpack.c.b16 %v2961, %v2953
    %v4810 = vpack.c.b16 %v2962, %v2954
    %v4811 = vpack.c.b16 %v2963, %v2955
    %v4812 = vpack.c.b16 %v2964, %v2956
    %v4813 = vpack.c.b16 %v2965, %v2957
    %v4814 = vpack.c.b16 %v2966, %v2958
    %v4815 = vpack.c.b16 %v2975, %v2967
    %v4816 = vpack.c.b16 %v2976, %v2968
    %v4817 = vpack.c.b16 %v2977, %v2969
    %v4818 = vpack.c.b16 %v2978, %v2970
    %v4819 = vpack.c.b16 %v2979, %v2971
    %v4820 = vpack.c.b16 %v2980, %v2972
    %v4821 = vpack.c.b16 %v2981, %v2973
    %v4822 = vpack.c.b16 %v2982, %v2974
    %v4823 = vpack.c.b16 %v2991, %v2983
    %v4824 = vpack.c.b16 %v2992, %v2984
    %v4825 = vpack.c.b16 %v2993, %v2985
    %v4826 = vpack.c.b16 %v2994, %v2986
    %v4827 = vpack.c.b16 %v2995, %v2987
    %v4828 = vpack.c.b16 %v2996, %v2988
    %v4829 = vpack.c.b16 %v2997, %v2989
    %v4830 = vpack.c.b16 %v2998, %v2990
    %v4831 = vpack.c.b16 %v3007, %v2999
    %v4832 = vpack.c.b16 %v3008, %v3000
    %v4833 = vpack.c.b16 %v3009, %v3001
    %v4834 = vpack.c.b16 %v3010, %v3002
    %v4835 = vpack.c.b16 %v3011, %v3003
    %v4836 = vpack.c.b16 %v3012, %v3004
    %v4837 = vpack.c.b16 %v3013, %v3005
    %v4838 = vpack.c.b16 %v3014, %v3006
    %v4839 = vpack.c.b16 %v3023, %v3015
    %v4840 = vpack.c.b16 %v3024, %v3016
    %v4841 = vpack.c.b16 %v3025, %v3017
    %v4842 = vpack.c.b16 %v3026, %v3018
    %v4843 = vpack.c.b16 %v3027, %v3019
    %v4844 = vpack.c.b16 %v3028, %v3020
    %v4845 = vpack.c.b16 %v3029, %v3021
    %v4846 = vpack.c.b16 %v3030, %v3022
    %v4847 = vpack.c.b16 %v3039, %v3031
    %v4848 = vpack.c.b16 %v3040, %v3032
    %v4849 = vpack.c.b16 %v3041, %v3033
    %v4850 = vpack.c.b16 %v3042, %v3034
    %v4851 = vpack.c.b16 %v3043, %v3035
    %v4852 = vpack.c.b16 %v3044, %v3036
    %v4853 = vpack.c.b16 %v3045, %v3037
    %v4854 = vpack.c.b16 %v3046, %v3038
    %v4855 = vpack.c.b16 %v3055, %v3047
    %v4856 = vpack.c.b16 %v3056, %v3048
    %v4857 = vpack.c.b16 %v3057, %v3049
    %v4858 = vpack.c.b16 %v3058, %v3050
    %v4859 = vpack.c.b16 %v3059, %v3051
    %v4860 = vpack.c.b16 %v3060, %v3052
    %v4861 = vpack.c.b16 %v3061, %v3053
    %v4862 = vpack.c.b16 %v3062, %v3054
    %v4863 = vpack.c.b16 %v3071, %v3063
    %v4864 = vpack.c.b16 %v3072, %v3064
    %v4865 = vpack.c.b16 %v3073, %v3065
    %v4866 = vpack.c.b16 %v3074, %v3066
    %v4867 = vpack.c.b16 %v3075, %v3067
    %v4868 = vpack.c.b16 %v3076, %v3068
    %v4869 = vpack.c.b16 %v3077, %v3069
    %v4870 = vpack.c.b16 %v3078, %v3070
    %v4871 = vpack.c.b16 %v3087, %v3079
    %v4872 = vpack.c.b16 %v3088, %v3080
    %v4873 = vpack.c.b16 %v3089, %v3081
    %v4874 = vpack.c.b16 %v3090, %v3082
    %v4875 = vpack.c.b16 %v3091, %v3083
    %v4876 = vpack.c.b16 %v3092, %v3084
    %v4877 = vpack.c.b16 %v3093, %v3085
    %v4878 = vpack.c.b16 %v3094, %v3086
    %v4879 = vpack.c.b16 %v3103, %v3095
    %v4880 = vpack.c.b16 %v3104, %v3096
    %v4881 = vpack.c.b16 %v3105, %v3097
    %v4882 = vpack.c.b16 %v3106, %v3098
    %v4883 = vpack.c.b16 %v3107, %v3099
    %v4884 = vpack.c.b16 %v3108, %v3100
    %v4885 = vpack.c.b16 %v3109, %v3101
    %v4886 = vpack.c.b16 %v3110, %v3102
    %v4887 = vpack.c.b16 %v3119, %v3111
    %v4888 = vpack.c.b16 %v3120, %v3112
    %v4889 = vpack.c.b16 %v3121, %v3113
    %v4890 = vpack.c.b16 %v3122, %v3114
    %v4891 = vpack.c.b16 %v3123, %v3115
    %v4892 = vpack.c.b16 %v3124, %v3116
    %v4893 = vpack.c.b16 %v3125, %v3117
    %v4894 = vpack.c.b16 %v3126, %v3118
    %v4895 = vpack.c.b16 %v3135, %v3127
    %v4896 = vpack.c.b16 %v3136, %v3128
    %v4897 = vpack.c.b16 %v3137, %v3129
    %v4898 = vpack.c.b16 %v3138, %v3130
    %v4899 = vpack.c.b16 %v3139, %v3131
    %v4900 = vpack.c.b16 %v3140, %v3132
    %v4901 = vpack.c.b16 %v3141, %v3133
    %v4902 = vpack.c.b16 %v3142, %v3134
    %v4903 = vpack.c.b16 %v3151, %v3143
    %v4904 = vpack.c.b16 %v3152, %v3144
    %v4905 = vpack.c.b16 %v3153, %v3145
    %v4906 = vpack.c.b16 %v3154, %v3146
    %v4907 = vpack.c.b16 %v3155, %v3147
    %v4908 = vpack.c.b16 %v3156, %v3148
    %v4909 = vpack.c.b16 %v3157, %v3149
    %v4910 = vpack.c.b16 %v3158, %v3150
    %v4911 = vpack.c.b16 %v3167, %v3159
    %v4912 = vpack.c.b16 %v3168, %v3160
    %v4913 = vpack.c.b16 %v3169, %v3161
    %v4914 = vpack.c.b16 %v3170, %v3162
    %v4915 = vpack.c.b16 %v3171, %v3163
    %v4916 = vpack.c.b16 %v3172, %v3164
    %v4917 = vpack.c.b16 %v3173, %v3165
    %v4918 = vpack.c.b16 %v3174, %v3166
    %v4919 = vpack.c.b16 %v3183, %v3175
    %v4920 = vpack.c.b16 %v3184, %v3176
    %v4921 = vpack.c.b16 %v3185, %v3177
    %v4922 = vpack.c.b16 %v3186, %v3178
    %v4923 = vpack.c.b16 %v3187, %v3179
    %v4924 = vpack.c.b16 %v3188, %v3180
    %v4925 = vpack.c.b16 %v3189, %v3181
    %v4926 = vpack.c.b16 %v3190, %v3182
    %v4927 = vpack.c.b16 %v3199, %v3191
    %v4928 = vpack.c.b16 %v3200, %v3192
    %v4929 = vpack.c.b16 %v3201, %v3193
    %v4930 = vpack.c.b16 %v3202, %v3194
    %v4931 = vpack.c.b16 %v3203, %v3195
    %v4932 = vpack.c.b16 %v3204, %v3196
    %v4933 = vpack.c.b16 %v3205, %v3197
    %v4934 = vpack.c.b16 %v3206, %v3198
    %v4935 = vpack.c.b16 %v3215, %v3207
    %v4936 = vpack.c.b16 %v3216, %v3208
    %v4937 = vpack.c.b16 %v3217, %v3209
    %v4938 = vpack.c.b16 %v3218, %v3210
    %v4939 = vpack.c.b16 %v3219, %v3211
    %v4940 = vpack.c.b16 %v3220, %v3212
    %v4941 = vpack.c.b16 %v3221, %v3213
    %v4942 = vpack.c.b16 %v3222, %v3214
    %v4943 = vpack.c.b16 %v3231, %v3223
    %v4944 = vpack.c.b16 %v3232, %v3224
    %v4945 = vpack.c.b16 %v3233, %v3225
    %v4946 = vpack.c.b16 %v3234, %v3226
    %v4947 = vpack.c.b16 %v3235, %v3227
    %v4948 = vpack.c.b16 %v3236, %v3228
    %v4949 = vpack.c.b16 %v3237, %v3229
    %v4950 = vpack.c.b16 %v3238, %v3230
    %v4951 = vpack.c.b16 %v3247, %v3239
    %v4952 = vpack.c.b16 %v3248, %v3240
    %v4953 = vpack.c.b16 %v3249, %v3241
    %v4954 = vpack.c.b16 %v3250, %v3242
    %v4955 = vpack.c.b16 %v3251, %v3243
    %v4956 = vpack.c.b16 %v3252, %v3244
    %v4957 = vpack.c.b16 %v3253, %v3245
    %v4958 = vpack.c.b16 %v3254, %v3246
    %v4959 = vpack.c.b16 %v3263, %v3255
    %v4960 = vpack.c.b16 %v3264, %v3256
    %v4961 = vpack.c.b16 %v3265, %v3257
    %v4962 = vpack.c.b16 %v3266, %v3258
    %v4963 = vpack.c.b16 %v3267, %v3259
    %v4964 = vpack.c.b16 %v3268, %v3260
    %v4965 = vpack.c.b16 %v3269, %v3261
    %v4966 = vpack.c.b16 %v3270, %v3262
    %v4967 = vpack.c.b16 %v3279, %v3271
    %v4968 = vpack.c.b16 %v3280, %v3272
    %v4969 = vpack.c.b16 %v3281, %v3273
    %v4970 = vpack.c.b16 %v3282, %v3274
    %v4971 = vpack.c.b16 %v3283, %v3275
    %v4972 = vpack.c.b16 %v3284, %v3276
    %v4973 = vpack.c.b16 %v3285, %v3277
    %v4974 = vpack.c.b16 %v3286, %v3278
    %v4975 = vpack.c.b16 %v3295, %v3287
    %v4976 = vpack.c.b16 %v3296, %v3288
    %v4977 = vpack.c.b16 %v3297, %v3289
    %v4978 = vpack.c.b16 %v3298, %v3290
    %v4979 = vpack.c.b16 %v3299, %v3291
    %v4980 = vpack.c.b16 %v3300, %v3292
    %v4981 = vpack.c.b16 %v3301, %v3293
    %v4982 = vpack.c.b16 %v3302, %v3294
    %v4983 = vpack.c.b16 %v3311, %v3303
    %v4984 = vpack.c.b16 %v3312, %v3304
    %v4985 = vpack.c.b16 %v3313, %v3305
    %v4986 = vpack.c.b16 %v3314, %v3306
    %v4987 = vpack.c.b16 %v3315, %v3307
    %v4988 = vpack.c.b16 %v3316, %v3308
    %v4989 = vpack.c.b16 %v3317, %v3309
    %v4990 = vpack.c.b16 %v3318, %v3310
    %v4991 = vpack.c.b16 %v3327, %v3319
    %v4992 = vpack.c.b16 %v3328, %v3320
    %v4993 = vpack.c.b16 %v3329, %v3321
    %v4994 = vpack.c.b16 %v3330, %v3322
    %v4995 = vpack.c.b16 %v3331, %v3323
    %v4996 = vpack.c.b16 %v3332, %v3324
    %v4997 = vpack.c.b16 %v3333, %v3325
    %v4998 = vpack.c.b16 %v3334, %v3326
    %v4999 = vpack.c.b16 %v3343, %v3335
    %v5000 = vpack.c.b16 %v3344, %v3336
    %v5001 = vpack.c.b16 %v3345, %v3337
    %v5002 = vpack.c.b16 %v3346, %v3338
    %v5003 = vpack.c.b16 %v3347, %v3339
    %v5004 = vpack.c.b16 %v3348, %v3340
    %v5005 = vpack.c.b16 %v3349, %v3341
    %v5006 = vpack.c.b16 %v3350, %v3342
    %v5007 = vpack.c.b16 %v3359, %v3351
    %v5008 = vpack.c.b16 %v3360, %v3352
    %v5009 = vpack.c.b16 %v3361, %v3353
    %v5010 = vpack.c.b16 %v3362, %v3354
    %v5011 = vpack.c.b16 %v3363, %v3355
    %v5012 = vpack.c.b16 %v3364, %v3356
    %v5013 = vpack.c.b16 %v3365, %v3357
    %v5014 = vpack.c.b16 %v3366, %v3358
    %v5015 = vpack.c.b16 %v3375, %v3367
    %v5016 = vpack.c.b16 %v3376, %v3368
    %v5017 = vpack.c.b16 %v3377, %v3369
    %v5018 = vpack.c.b16 %v3378, %v3370
    %v5019 = vpack.c.b16 %v3379, %v3371
    %v5020 = vpack.c.b16 %v3380, %v3372
    %v5021 = vpack.c.b16 %v3381, %v3373
    %v5022 = vpack.c.b16 %v3382, %v3374
    %v5023 = vpack.c.b16 %v3391, %v3383
    %v5024 = vpack.c.b16 %v3392, %v3384
    %v5025 = vpack.c.b16 %v3393, %v3385
    %v5026 = vpack.c.b16 %v3394, %v3386
    %v5027 = vpack.c.b16 %v3395, %v3387
    %v5028 = vpack.c.b16 %v3396, %v3388
    %v5029 = vpack.c.b16 %v3397, %v3389
    %v5030 = vpack.c.b16 %v3398, %v3390
    %v5031 = vpack.c.b16 %v3407, %v3399
    %v5032 = vpack.c.b16 %v3408, %v3400
    %v5033 = vpack.c.b16 %v3409, %v3401
    %v5034 = vpack.c.b16 %v3410, %v3402
    %v5035 = vpack.c.b16 %v3411, %v3403
    %v5036 = vpack.c.b16 %v3412, %v3404
    %v5037 = vpack.c.b16 %v3413, %v3405
    %v5038 = vpack.c.b16 %v3414, %v3406
    %v5039 = vpack.c.b16 %v3423, %v3415
    %v5040 = vpack.c.b16 %v3424, %v3416
    %v5041 = vpack.c.b16 %v3425, %v3417
    %v5042 = vpack.c.b16 %v3426, %v3418
    %v5043 = vpack.c.b16 %v3427, %v3419
    %v5044 = vpack.c.b16 %v3428, %v3420
    %v5045 = vpack.c.b16 %v3429, %v3421
    %v5046 = vpack.c.b16 %v3430, %v3422
    %v5047 = vpack.c.b16 %v3439, %v3431
    %v5048 = vpack.c.b16 %v3440, %v3432
    %v5049 = vpack.c.b16 %v3441, %v3433
    %v5050 = vpack.c.b16 %v3442, %v3434
    %v5051 = vpack.c.b16 %v3443, %v3435
    %v5052 = vpack.c.b16 %v3444, %v3436
    %v5053 = vpack.c.b16 %v3445, %v3437
    %v5054 = vpack.c.b16 %v3446, %v3438
    %v5055 = vpack.c.b16 %v3455, %v3447
    %v5056 = vpack.c.b16 %v3456, %v3448
    %v5057 = vpack.c.b16 %v3457, %v3449
    %v5058 = vpack.c.b16 %v3458, %v3450
    %v5059 = vpack.c.b16 %v3459, %v3451
    %v5060 = vpack.c.b16 %v3460, %v3452
    %v5061 = vpack.c.b16 %v3461, %v3453
    %v5062 = vpack.c.b16 %v3462, %v3454
    %v5063 = vpack.c.b16 %v3471, %v3463
    %v5064 = vpack.c.b16 %v3472, %v3464
    %v5065 = vpack.c.b16 %v3473, %v3465
    %v5066 = vpack.c.b16 %v3474, %v3466
    %v5067 = vpack.c.b16 %v3475, %v3467
    %v5068 = vpack.c.b16 %v3476, %v3468
    %v5069 = vpack.c.b16 %v3477, %v3469
    %v5070 = vpack.c.b16 %v3478, %v3470
    %v5071 = vpack.c.b16 %v3487, %v3479
    %v5072 = vpack.c.b16 %v3488, %v3480
    %v5073 = vpack.c.b16 %v3489, %v3481
    %v5074 = vpack.c.b16 %v3490, %v3482
    %v5075 = vpack.c.b16 %v3491, %v3483
    %v5076 = vpack.c.b16 %v3492, %v3484
    %v5077 = vpack.c.b16 %v3493, %v3485
    %v5078 = vpack.c.b16 %v3494, %v3486
    %v5079 = vpack.c.b16 %v3503, %v3495
    %v5080 = vpack.c.b16 %v3504, %v3496
    %v5081 = vpack.c.b16 %v3505, %v3497
    %v5082 = vpack.c.b16 %v3506, %v3498
    %v5083 = vpack.c.b16 %v3507, %v3499
    %v5084 = vpack.c.b16 %v3508, %v3500
    %v5085 = vpack.c.b16 %v3509, %v3501
    %v5086 = vpack.c.b16 %v3510, %v3502
    %v5087 = vpack.c.b16 %v3519, %v3511
    %v5088 = vpack.c.b16 %v3520, %v3512
    %v5089 = vpack.c.b16 %v3521, %v3513
    %v5090 = vpack.c.b16 %v3522, %v3514
    %v5091 = vpack.c.b16 %v3523, %v3515
    %v5092 = vpack.c.b16 %v3524, %v3516
    %v5093 = vpack.c.b16 %v3525, %v3517
    %v5094 = vpack.c.b16 %v3526, %v3518
    %v5095 = vpack.c.b16 %v3535, %v3527
    %v5096 = vpack.c.b16 %v3536, %v3528
    %v5097 = vpack.c.b16 %v3537, %v3529
    %v5098 = vpack.c.b16 %v3538, %v3530
    %v5099 = vpack.c.b16 %v3539, %v3531
    %v5100 = vpack.c.b16 %v3540, %v3532
    %v5101 = vpack.c.b16 %v3541, %v3533
    %v5102 = vpack.c.b16 %v3542, %v3534
    %v5103 = vpack.c.b16 %v3551, %v3543
    %v5104 = vpack.c.b16 %v3552, %v3544
    %v5105 = vpack.c.b16 %v3553, %v3545
    %v5106 = vpack.c.b16 %v3554, %v3546
    %v5107 = vpack.c.b16 %v3555, %v3547
    %v5108 = vpack.c.b16 %v3556, %v3548
    %v5109 = vpack.c.b16 %v3557, %v3549
    %v5110 = vpack.c.b16 %v3558, %v3550
    %v5111 = vpack.c.b16 %v3567, %v3559
    %v5112 = vpack.c.b16 %v3568, %v3560
    %v5113 = vpack.c.b16 %v3569, %v3561
    %v5114 = vpack.c.b16 %v3570, %v3562
    %v5115 = vpack.c.b16 %v3571, %v3563
    %v5116 = vpack.c.b16 %v3572, %v3564
    %v5117 = vpack.c.b16 %v3573, %v3565
    %v5118 = vpack.c.b16 %v3574, %v3566
    %v5119 = vpack.c.b16 %v3583, %v3575
    %v5120 = vpack.c.b16 %v3584, %v3576
    %v5121 = vpack.c.b16 %v3585, %v3577
    %v5122 = vpack.c.b16 %v3586, %v3578
    %v5123 = vpack.c.b16 %v3587, %v3579
    %v5124 = vpack.c.b16 %v3588, %v3580
    %v5125 = vpack.c.b16 %v3589, %v3581
    %v5126 = vpack.c.b16 %v3590, %v3582
    %v5127 = vpack.c.b16 %v3599, %v3591
    %v5128 = vpack.c.b16 %v3600, %v3592
    %v5129 = vpack.c.b16 %v3601, %v3593
    %v5130 = vpack.c.b16 %v3602, %v3594
    %v5131 = vpack.c.b16 %v3603, %v3595
    %v5132 = vpack.c.b16 %v3604, %v3596
    %v5133 = vpack.c.b16 %v3605, %v3597
    %v5134 = vpack.c.b16 %v3606, %v3598
    %v5135 = vpack.c.b16 %v3615, %v3607
    %v5136 = vpack.c.b16 %v3616, %v3608
    %v5137 = vpack.c.b16 %v3617, %v3609
    %v5138 = vpack.c.b16 %v3618, %v3610
    %v5139 = vpack.c.b16 %v3619, %v3611
    %v5140 = vpack.c.b16 %v3620, %v3612
    %v5141 = vpack.c.b16 %v3621, %v3613
    %v5142 = vpack.c.b16 %v3622, %v3614
    %v5143 = vpack.c.b16 %v3631, %v3623
    %v5144 = vpack.c.b16 %v3632, %v3624
    %v5145 = vpack.c.b16 %v3633, %v3625
    %v5146 = vpack.c.b16 %v3634, %v3626
    %v5147 = vpack.c.b16 %v3635, %v3627
    %v5148 = vpack.c.b16 %v3636, %v3628
    %v5149 = vpack.c.b16 %v3637, %v3629
    %v5150 = vpack.c.b16 %v3638, %v3630
    %v5151 = vpack.c.b16 %v3647, %v3639
    %v5152 = vpack.c.b16 %v3648, %v3640
    %v5153 = vpack.c.b16 %v3649, %v3641
    %v5154 = vpack.c.b16 %v3650, %v3642
    %v5155 = vpack.c.b16 %v3651, %v3643
    %v5156 = vpack.c.b16 %v3652, %v3644
    %v5157 = vpack.c.b16 %v3653, %v3645
    %v5158 = vpack.c.b16 %v3654, %v3646
    %v5159 = vpack.c.b16 %v3663, %v3655
    %v5160 = vpack.c.b16 %v3664, %v3656
    %v5161 = vpack.c.b16 %v3665, %v3657
    %v5162 = vpack.c.b16 %v3666, %v3658
    %v5163 = vpack.c.b16 %v3667, %v3659
    %v5164 = vpack.c.b16 %v3668, %v3660
    %v5165 = vpack.c.b16 %v3669, %v3661
    %v5166 = vpack.c.b16 %v3670, %v3662
    %v5167 = vpack.c.b16 %v3679, %v3671
    %v5168 = vpack.c.b16 %v3680, %v3672
    %v5169 = vpack.c.b16 %v3681, %v3673
    %v5170 = vpack.c.b16 %v3682, %v3674
    %v5171 = vpack.c.b16 %v3683, %v3675
    %v5172 = vpack.c.b16 %v3684, %v3676
    %v5173 = vpack.c.b16 %v3685, %v3677
    %v5174 = vpack.c.b16 %v3686, %v3678
    %v5175 = vpack.c.b16 %v3695, %v3687
    %v5176 = vpack.c.b16 %v3696, %v3688
    %v5177 = vpack.c.b16 %v3697, %v3689
    %v5178 = vpack.c.b16 %v3698, %v3690
    %v5179 = vpack.c.b16 %v3699, %v3691
    %v5180 = vpack.c.b16 %v3700, %v3692
    %v5181 = vpack.c.b16 %v3701, %v3693
    %v5182 = vpack.c.b16 %v3702, %v3694
    %v5183 = vpack.c.b16 %v3711, %v3703
    %v5184 = vpack.c.b16 %v3712, %v3704
    %v5185 = vpack.c.b16 %v3713, %v3705
    %v5186 = vpack.c.b16 %v3714, %v3706
    %v5187 = vpack.c.b16 %v3715, %v3707
    %v5188 = vpack.c.b16 %v3716, %v3708
    %v5189 = vpack.c.b16 %v3717, %v3709
    %v5190 = vpack.c.b16 %v3718, %v3710
    %v5191 = vpack.c.b16 %v3727, %v3719
    %v5192 = vpack.c.b16 %v3728, %v3720
    %v5193 = vpack.c.b16 %v3729, %v3721
    %v5194 = vpack.c.b16 %v3730, %v3722
    %v5195 = vpack.c.b16 %v3731, %v3723
    %v5196 = vpack.c.b16 %v3732, %v3724
    %v5197 = vpack.c.b16 %v3733, %v3725
    %v5198 = vpack.c.b16 %v3734, %v3726
    %v5199 = vpack.c.b16 %v3743, %v3735
    %v5200 = vpack.c.b16 %v3744, %v3736
    %v5201 = vpack.c.b16 %v3745, %v3737
    %v5202 = vpack.c.b16 %v3746, %v3738
    %v5203 = vpack.c.b16 %v3747, %v3739
    %v5204 = vpack.c.b16 %v3748, %v3740
    %v5205 = vpack.c.b16 %v3749, %v3741
    %v5206 = vpack.c.b16 %v3750, %v3742
    %v5207 = vpack.c.b16 %v3759, %v3751
    %v5208 = vpack.c.b16 %v3760, %v3752
    %v5209 = vpack.c.b16 %v3761, %v3753
    %v5210 = vpack.c.b16 %v3762, %v3754
    %v5211 = vpack.c.b16 %v3763, %v3755
    %v5212 = vpack.c.b16 %v3764, %v3756
    %v5213 = vpack.c.b16 %v3765, %v3757
    %v5214 = vpack.c.b16 %v3766, %v3758
    %v5215 = vpack.c.b16 %v3775, %v3767
    %v5216 = vpack.c.b16 %v3776, %v3768
    %v5217 = vpack.c.b16 %v3777, %v3769
    %v5218 = vpack.c.b16 %v3778, %v3770
    %v5219 = vpack.c.b16 %v3779, %v3771
    %v5220 = vpack.c.b16 %v3780, %v3772
    %v5221 = vpack.c.b16 %v3781, %v3773
    %v5222 = vpack.c.b16 %v3782, %v3774
    %v5223 = vpack.c.b16 %v3791, %v3783
    %v5224 = vpack.c.b16 %v3792, %v3784
    %v5225 = vpack.c.b16 %v3793, %v3785
    %v5226 = vpack.c.b16 %v3794, %v3786
    %v5227 = vpack.c.b16 %v3795, %v3787
    %v5228 = vpack.c.b16 %v3796, %v3788
    %v5229 = vpack.c.b16 %v3797, %v3789
    %v5230 = vpack.c.b16 %v3798, %v3790
    %v5231 = vpack.c.b16 %v3807, %v3799
    %v5232 = vpack.c.b16 %v3808, %v3800
    %v5233 = vpack.c.b16 %v3809, %v3801
    %v5234 = vpack.c.b16 %v3810, %v3802
    %v5235 = vpack.c.b16 %v3811, %v3803
    %v5236 = vpack.c.b16 %v3812, %v3804
    %v5237 = vpack.c.b16 %v3813, %v3805
    %v5238 = vpack.c.b16 %v3814, %v3806
    %v5239 = vpack.c.b16 %v3823, %v3815
    %v5240 = vpack.c.b16 %v3824, %v3816
    %v5241 = vpack.c.b16 %v3825, %v3817
    %v5242 = vpack.c.b16 %v3826, %v3818
    %v5243 = vpack.c.b16 %v3827, %v3819
    %v5244 = vpack.c.b16 %v3828, %v3820
    %v5245 = vpack.c.b16 %v3829, %v3821
    %v5246 = vpack.c.b16 %v3830, %v3822
    %v5247 = vpack.c.b16 %v3839, %v3831
    %v5248 = vpack.c.b16 %v3840, %v3832
    %v5249 = vpack.c.b16 %v3841, %v3833
    %v5250 = vpack.c.b16 %v3842, %v3834
    %v5251 = vpack.c.b16 %v3843, %v3835
    %v5252 = vpack.c.b16 %v3844, %v3836
    %v5253 = vpack.c.b16 %v3845, %v3837
    %v5254 = vpack.c.b16 %v3846, %v3838
    %v5255 = vpack.c.b16 %v3855, %v3847
    %v5256 = vpack.c.b16 %v3856, %v3848
    %v5257 = vpack.c.b16 %v3857, %v3849
    %v5258 = vpack.c.b16 %v3858, %v3850
    %v5259 = vpack.c.b16 %v3859, %v3851
    %v5260 = vpack.c.b16 %v3860, %v3852
    %v5261 = vpack.c.b16 %v3861, %v3853
    %v5262 = vpack.c.b16 %v3862, %v3854
    %v5263 = vpack.c.b16 %v3871, %v3863
    %v5264 = vpack.c.b16 %v3872, %v3864
    %v5265 = vpack.c.b16 %v3873, %v3865
    %v5266 = vpack.c.b16 %v3874, %v3866
    %v5267 = vpack.c.b16 %v3875, %v3867
    %v5268 = vpack.c.b16 %v3876, %v3868
    %v5269 = vpack.c.b16 %v3877, %v3869
    %v5270 = vpack.c.b16 %v3878, %v3870
    %v5271 = vpack.c.b16 %v3887, %v3879
    %v5272 = vpack.c.b16 %v3888, %v3880
    %v5273 = vpack.c.b16 %v3889, %v3881
    %v5274 = vpack.c.b16 %v3890, %v3882
    %v5275 = vpack.c.b16 %v3891, %v3883
    %v5276 = vpack.c.b16 %v3892, %v3884
    %v5277 = vpack.c.b16 %v3893, %v3885
    %v5278 = vpack.c.b16 %v3894, %v3886
    %v5279 = vpack.c.b16 %v3903, %v3895
    %v5280 = vpack.c.b16 %v3904, %v3896
    %v5281 = vpack.c.b16 %v3905, %v3897
    %v5282 = vpack.c.b16 %v3906, %v3898
    %v5283 = vpack.c.b16 %v3907, %v3899
    %v5284 = vpack.c.b16 %v3908, %v3900
    %v5285 = vpack.c.b16 %v3909, %v3901
    %v5286 = vpack.c.b16 %v3910, %v3902
    %v5287 = vpack.c.b16 %v3919, %v3911
    %v5288 = vpack.c.b16 %v3920, %v3912
    %v5289 = vpack.c.b16 %v3921, %v3913
    %v5290 = vpack.c.b16 %v3922, %v3914
    %v5291 = vpack.c.b16 %v3923, %v3915
    %v5292 = vpack.c.b16 %v3924, %v3916
    %v5293 = vpack.c.b16 %v3925, %v3917
    %v5294 = vpack.c.b16 %v3926, %v3918
    %v5295 = vpack.c.b16 %v3935, %v3927
    %v5296 = vpack.c.b16 %v3936, %v3928
    %v5297 = vpack.c.b16 %v3937, %v3929
    %v5298 = vpack.c.b16 %v3938, %v3930
    %v5299 = vpack.c.b16 %v3939, %v3931
    %v5300 = vpack.c.b16 %v3940, %v3932
    %v5301 = vpack.c.b16 %v3941, %v3933
    %v5302 = vpack.c.b16 %v3942, %v3934
    %v5303 = vpack.c.b16 %v3951, %v3943
    %v5304 = vpack.c.b16 %v3952, %v3944
    %v5305 = vpack.c.b16 %v3953, %v3945
    %v5306 = vpack.c.b16 %v3954, %v3946
    %v5307 = vpack.c.b16 %v3955, %v3947
    %v5308 = vpack.c.b16 %v3956, %v3948
    %v5309 = vpack.c.b16 %v3957, %v3949
    %v5310 = vpack.c.b16 %v3958, %v3950
    %v5311 = vpack.c.b16 %v3967, %v3959
    %v5312 = vpack.c.b16 %v3968, %v3960
    %v5313 = vpack.c.b16 %v3969, %v3961
    %v5314 = vpack.c.b16 %v3970, %v3962
    %v5315 = vpack.c.b16 %v3971, %v3963
    %v5316 = vpack.c.b16 %v3972, %v3964
    %v5317 = vpack.c.b16 %v3973, %v3965
    %v5318 = vpack.c.b16 %v3974, %v3966
    %v5319 = vpack.c.b16 %v3983, %v3975
    %v5320 = vpack.c.b16 %v3984, %v3976
    %v5321 = vpack.c.b16 %v3985, %v3977
    %v5322 = vpack.c.b16 %v3986, %v3978
    %v5323 = vpack.c.b16 %v3987, %v3979
    %v5324 = vpack.c.b16 %v3988, %v3980
    %v5325 = vpack.c.b16 %v3989, %v3981
    %v5326 = vpack.c.b16 %v3990, %v3982
    %v5327 = vpack.c.b16 %v3999, %v3991
    %v5328 = vpack.c.b16 %v4000, %v3992
    %v5329 = vpack.c.b16 %v4001, %v3993
    %v5330 = vpack.c.b16 %v4002, %v3994
    %v5331 = vpack.c.b16 %v4003, %v3995
    %v5332 = vpack.c.b16 %v4004, %v3996
    %v5333 = vpack.c.b16 %v4005, %v3997
    %v5334 = vpack.c.b16 %v4006, %v3998
    %v5335 = vpack.c.b16 %v4015, %v4007
    %v5336 = vpack.c.b16 %v4016, %v4008
    %v5337 = vpack.c.b16 %v4017, %v4009
    %v5338 = vpack.c.b16 %v4018, %v4010
    %v5339 = vpack.c.b16 %v4019, %v4011
    %v5340 = vpack.c.b16 %v4020, %v4012
    %v5341 = vpack.c.b16 %v4021, %v4013
    %v5342 = vpack.c.b16 %v4022, %v4014
    %v5343 = vpack.c.b16 %v4031, %v4023
    %v5344 = vpack.c.b16 %v4032, %v4024
    %v5345 = vpack.c.b16 %v4033, %v4025
    %v5346 = vpack.c.b16 %v4034, %v4026
    %v5347 = vpack.c.b16 %v4035, %v4027
    %v5348 = vpack.c.b16 %v4036, %v4028
    %v5349 = vpack.c.b16 %v4037, %v4029
    %v5350 = vpack.c.b16 %v4038, %v4030
    %v5351 = vpack.c.b16 %v4047, %v4039
    %v5352 = vpack.c.b16 %v4048, %v4040
    %v5353 = vpack.c.b16 %v4049, %v4041
    %v5354 = vpack.c.b16 %v4050, %v4042
    %v5355 = vpack.c.b16 %v4051, %v4043
    %v5356 = vpack.c.b16 %v4052, %v4044
    %v5357 = vpack.c.b16 %v4053, %v4045
    %v5358 = vpack.c.b16 %v4054, %v4046
    %v5359 = vpack.c.b16 %v4063, %v4055
    %v5360 = vpack.c.b16 %v4064, %v4056
    %v5361 = vpack.c.b16 %v4065, %v4057
    %v5362 = vpack.c.b16 %v4066, %v4058
    %v5363 = vpack.c.b16 %v4067, %v4059
    %v5364 = vpack.c.b16 %v4068, %v4060
    %v5365 = vpack.c.b16 %v4069, %v4061
    %v5366 = vpack.c.b16 %v4070, %v4062
    %v5367 = vpack.c.b16 %v4079, %v4071
    %v5368 = vpack.c.b16 %v4080, %v4072
    %v5369 = vpack.c.b16 %v4081, %v4073
    %v5370 = vpack.c.b16 %v4082, %v4074
    %v5371 = vpack.c.b16 %v4083, %v4075
    %v5372 = vpack.c.b16 %v4084, %v4076
    %v5373 = vpack.c.b16 %v4085, %v4077
    %v5374 = vpack.c.b16 %v4086, %v4078
    %v5375 = vpack.c.b16 %v4095, %v4087
    %v5376 = vpack.c.b16 %v4096, %v4088
    %v5377 = vpack.c.b16 %v4097, %v4089
    %v5378 = vpack.c.b16 %v4098, %v4090
    %v5379 = vpack.c.b16 %v4099, %v4091
    %v5380 = vpack.c.b16 %v4100, %v4092
    %v5381 = vpack.c.b16 %v4101, %v4093
    %v5382 = vpack.c.b16 %v4102, %v4094
    %v5383 = vpack.c.b16 %v4111, %v4103
    %v5384 = vpack.c.b16 %v4112, %v4104
    %v5385 = vpack.c.b16 %v4113, %v4105
    %v5386 = vpack.c.b16 %v4114, %v4106
    %v5387 = vpack.c.b16 %v4115, %v4107
    %v5388 = vpack.c.b16 %v4116, %v4108
    %v5389 = vpack.c.b16 %v4117, %v4109
    %v5390 = vpack.c.b16 %v4118, %v4110
    %v5391 = vpack.c.b16 %v4127, %v4119
    %v5392 = vpack.c.b16 %v4128, %v4120
    %v5393 = vpack.c.b16 %v4129, %v4121
    %v5394 = vpack.c.b16 %v4130, %v4122
    %v5395 = vpack.c.b16 %v4131, %v4123
    %v5396 = vpack.c.b16 %v4132, %v4124
    %v5397 = vpack.c.b16 %v4133, %v4125
    %v5398 = vpack.c.b16 %v4134, %v4126
    %v5399 = vpack.c.b16 %v4143, %v4135
    %v5400 = vpack.c.b16 %v4144, %v4136
    %v5401 = vpack.c.b16 %v4145, %v4137
    %v5402 = vpack.c.b16 %v4146, %v4138
    %v5403 = vpack.c.b16 %v4147, %v4139
    %v5404 = vpack.c.b16 %v4148, %v4140
    %v5405 = vpack.c.b16 %v4149, %v4141
    %v5406 = vpack.c.b16 %v4150, %v4142
    %v5407 = vpack.c.b16 %v4159, %v4151
    %v5408 = vpack.c.b16 %v4160, %v4152
    %v5409 = vpack.c.b16 %v4161, %v4153
    %v5410 = vpack.c.b16 %v4162, %v4154
    %v5411 = vpack.c.b16 %v4163, %v4155
    %v5412 = vpack.c.b16 %v4164, %v4156
    %v5413 = vpack.c.b16 %v4165, %v4157
    %v5414 = vpack.c.b16 %v4166, %v4158
    %v5415 = vpack.c.b16 %v4175, %v4167
    %v5416 = vpack.c.b16 %v4176, %v4168
    %v5417 = vpack.c.b16 %v4177, %v4169
    %v5418 = vpack.c.b16 %v4178, %v4170
    %v5419 = vpack.c.b16 %v4179, %v4171
    %v5420 = vpack.c.b16 %v4180, %v4172
    %v5421 = vpack.c.b16 %v4181, %v4173
    %v5422 = vpack.c.b16 %v4182, %v4174
    %v5423 = vpack.c.b16 %v4191, %v4183
    %v5424 = vpack.c.b16 %v4192, %v4184
    %v5425 = vpack.c.b16 %v4193, %v4185
    %v5426 = vpack.c.b16 %v4194, %v4186
    %v5427 = vpack.c.b16 %v4195, %v4187
    %v5428 = vpack.c.b16 %v4196, %v4188
    %v5429 = vpack.c.b16 %v4197, %v4189
    %v5430 = vpack.c.b16 %v4198, %v4190
    %v5431 = vpack.c.b16 %v4207, %v4199
    %v5432 = vpack.c.b16 %v4208, %v4200
    %v5433 = vpack.c.b16 %v4209, %v4201
    %v5434 = vpack.c.b16 %v4210, %v4202
    %v5435 = vpack.c.b16 %v4211, %v4203
    %v5436 = vpack.c.b16 %v4212, %v4204
    %v5437 = vpack.c.b16 %v4213, %v4205
    %v5438 = vpack.c.b16 %v4214, %v4206
    %v5439 = vpack.c.b16 %v4223, %v4215
    %v5440 = vpack.c.b16 %v4224, %v4216
    %v5441 = vpack.c.b16 %v4225, %v4217
    %v5442 = vpack.c.b16 %v4226, %v4218
    %v5443 = vpack.c.b16 %v4227, %v4219
    %v5444 = vpack.c.b16 %v4228, %v4220
    %v5445 = vpack.c.b16 %v4229, %v4221
    %v5446 = vpack.c.b16 %v4230, %v4222
    %v5447 = vpack.c.b16 %v4239, %v4231
    %v5448 = vpack.c.b16 %v4240, %v4232
    %v5449 = vpack.c.b16 %v4241, %v4233
    %v5450 = vpack.c.b16 %v4242, %v4234
    %v5451 = vpack.c.b16 %v4243, %v4235
    %v5452 = vpack.c.b16 %v4244, %v4236
    %v5453 = vpack.c.b16 %v4245, %v4237
    %v5454 = vpack.c.b16 %v4246, %v4238
    %v5455 = vpack.c.b16 %v4255, %v4247
    %v5456 = vpack.c.b16 %v4256, %v4248
    %v5457 = vpack.c.b16 %v4257, %v4249
    %v5458 = vpack.c.b16 %v4258, %v4250
    %v5459 = vpack.c.b16 %v4259, %v4251
    %v5460 = vpack.c.b16 %v4260, %v4252
    %v5461 = vpack.c.b16 %v4261, %v4253
    %v5462 = vpack.c.b16 %v4262, %v4254
    %v5463 = vpack.c.b16 %v4271, %v4263
    %v5464 = vpack.c.b16 %v4272, %v4264
    %v5465 = vpack.c.b16 %v4273, %v4265
    %v5466 = vpack.c.b16 %v4274, %v4266
    %v5467 = vpack.c.b16 %v4275, %v4267
    %v5468 = vpack.c.b16 %v4276, %v4268
    %v5469 = vpack.c.b16 %v4277, %v4269
    %v5470 = vpack.c.b16 %v4278, %v4270
    %v5471 = vpack.c.b16 %v4287, %v4279
    %v5472 = vpack.c.b16 %v4288, %v4280
    %v5473 = vpack.c.b16 %v4289, %v4281
    %v5474 = vpack.c.b16 %v4290, %v4282
    %v5475 = vpack.c.b16 %v4291, %v4283
    %v5476 = vpack.c.b16 %v4292, %v4284
    %v5477 = vpack.c.b16 %v4293, %v4285
    %v5478 = vpack.c.b16 %v4294, %v4286
    %v5479 = vpack.c.b16 %v4303, %v4295
    %v5480 = vpack.c.b16 %v4304, %v4296
    %v5481 = vpack.c.b16 %v4305, %v4297
    %v5482 = vpack.c.b16 %v4306, %v4298
    %v5483 = vpack.c.b16 %v4307, %v4299
    %v5484 = vpack.c.b16 %v4308, %v4300
    %v5485 = vpack.c.b16 %v4309, %v4301
    %v5486 = vpack.c.b16 %v4310, %v4302
    %v5487 = vpack.c.b16 %v4319, %v4311
    %v5488 = vpack.c.b16 %v4320, %v4312
    %v5489 = vpack.c.b16 %v4321, %v4313
    %v5490 = vpack.c.b16 %v4322, %v4314
    %v5491 = vpack.c.b16 %v4323, %v4315
    %v5492 = vpack.c.b16 %v4324, %v4316
    %v5493 = vpack.c.b16 %v4325, %v4317
    %v5494 = vpack.c.b16 %v4326, %v4318
    %v5495 = vpack.c.b16 %v4335, %v4327
    %v5496 = vpack.c.b16 %v4336, %v4328
    %v5497 = vpack.c.b16 %v4337, %v4329
    %v5498 = vpack.c.b16 %v4338, %v4330
    %v5499 = vpack.c.b16 %v4339, %v4331
    %v5500 = vpack.c.b16 %v4340, %v4332
    %v5501 = vpack.c.b16 %v4341, %v4333
    %v5502 = vpack.c.b16 %v4342, %v4334
    %v5503 = vpack.c.b16 %v4351, %v4343
    %v5504 = vpack.c.b16 %v4352, %v4344
    %v5505 = vpack.c.b16 %v4353, %v4345
    %v5506 = vpack.c.b16 %v4354, %v4346
    %v5507 = vpack.c.b16 %v4355, %v4347
    %v5508 = vpack.c.b16 %v4356, %v4348
    %v5509 = vpack.c.b16 %v4357, %v4349
    %v5510 = vpack.c.b16 %v4358, %v4350
    %v5511 = vpack.c.b16 %v4367, %v4359
    %v5512 = vpack.c.b16 %v4368, %v4360
    %v5513 = vpack.c.b16 %v4369, %v4361
    %v5514 = vpack.c.b16 %v4370, %v4362
    %v5515 = vpack.c.b16 %v4371, %v4363
    %v5516 = vpack.c.b16 %v4372, %v4364
    %v5517 = vpack.c.b16 %v4373, %v4365
    %v5518 = vpack.c.b16 %v4374, %v4366
    %v5519 = vpack.c.b16 %v4383, %v4375
    %v5520 = vpack.c.b16 %v4384, %v4376
    %v5521 = vpack.c.b16 %v4385, %v4377
    %v5522 = vpack.c.b16 %v4386, %v4378
    %v5523 = vpack.c.b16 %v4387, %v4379
    %v5524 = vpack.c.b16 %v4388, %v4380
    %v5525 = vpack.c.b16 %v4389, %v4381
    %v5526 = vpack.c.b16 %v4390, %v4382
    %v5527 = vpack.c.b16 %v4399, %v4391
    %v5528 = vpack.c.b16 %v4400, %v4392
    %v5529 = vpack.c.b16 %v4401, %v4393
    %v5530 = vpack.c.b16 %v4402, %v4394
    %v5531 = vpack.c.b16 %v4403, %v4395
    %v5532 = vpack.c.b16 %v4404, %v4396
    %v5533 = vpack.c.b16 %v4405, %v4397
    %v5534 = vpack.c.b16 %v4406, %v4398
    %v5535 = vpack.c.b16 %v4415, %v4407
    %v5536 = vpack.c.b16 %v4416, %v4408
    %v5537 = vpack.c.b16 %v4417, %v4409
    %v5538 = vpack.c.b16 %v4418, %v4410
    %v5539 = vpack.c.b16 %v4419, %v4411
    %v5540 = vpack.c.b16 %v4420, %v4412
    %v5541 = vpack.c.b16 %v4421, %v4413
    %v5542 = vpack.c.b16 %v4422, %v4414
    %v5543 = vpack.c.b16 %v4431, %v4423
    %v5544 = vpack.c.b16 %v4432, %v4424
    %v5545 = vpack.c.b16 %v4433, %v4425
    %v5546 = vpack.c.b16 %v4434, %v4426
    %v5547 = vpack.c.b16 %v4435, %v4427
    %v5548 = vpack.c.b16 %v4436, %v4428
    %v5549 = vpack.c.b16 %v4437, %v4429
    %v5550 = vpack.c.b16 %v4438, %v4430
    %v5551 = vpack.c.b16 %v4447, %v4439
    %v5552 = vpack.c.b16 %v4448, %v4440
    %v5553 = vpack.c.b16 %v4449, %v4441
    %v5554 = vpack.c.b16 %v4450, %v4442
    %v5555 = vpack.c.b16 %v4451, %v4443
    %v5556 = vpack.c.b16 %v4452, %v4444
    %v5557 = vpack.c.b16 %v4453, %v4445
    %v5558 = vpack.c.b16 %v4454, %v4446
    %v5559 = vpack.c.b16 %v4463, %v4455
    %v5560 = vpack.c.b16 %v4464, %v4456
    %v5561 = vpack.c.b16 %v4465, %v4457
    %v5562 = vpack.c.b16 %v4466, %v4458
    %v5563 = vpack.c.b16 %v4467, %v4459
    %v5564 = vpack.c.b16 %v4468, %v4460
    %v5565 = vpack.c.b16 %v4469, %v4461
    %v5566 = vpack.c.b16 %v4470, %v4462
    %v5567 = vpack.c.b16 %v4479, %v4471
    %v5568 = vpack.c.b16 %v4480, %v4472
    %v5569 = vpack.c.b16 %v4481, %v4473
    %v5570 = vpack.c.b16 %v4482, %v4474
    %v5571 = vpack.c.b16 %v4483, %v4475
    %v5572 = vpack.c.b16 %v4484, %v4476
    %v5573 = vpack.c.b16 %v4485, %v4477
    %v5574 = vpack.c.b16 %v4486, %v4478
    %v5575 = vpack.c.b16 %v4495, %v4487
    %v5576 = vpack.c.b16 %v4496, %v4488
    %v5577 = vpack.c.b16 %v4497, %v4489
    %v5578 = vpack.c.b16 %v4498, %v4490
    %v5579 = vpack.c.b16 %v4499, %v4491
    %v5580 = vpack.c.b16 %v4500, %v4492
    %v5581 = vpack.c.b16 %v4501, %v4493
    %v5582 = vpack.c.b16 %v4502, %v4494
    %v5583 = vpack.c.b16 %v4511, %v4503
    %v5584 = vpack.c.b16 %v4512, %v4504
    %v5585 = vpack.c.b16 %v4513, %v4505
    %v5586 = vpack.c.b16 %v4514, %v4506
    %v5587 = vpack.c.b16 %v4515, %v4507
    %v5588 = vpack.c.b16 %v4516, %v4508
    %v5589 = vpack.c.b16 %v4517, %v4509
    %v5590 = vpack.c.b16 %v4518, %v4510
    %v5591 = vpack.c.b16 %v4527, %v4519
    %v5592 = vpack.c.b16 %v4528, %v4520
    %v5593 = vpack.c.b16 %v4529, %v4521
    %v5594 = vpack.c.b16 %v4530, %v4522
    %v5595 = vpack.c.b16 %v4531, %v4523
    %v5596 = vpack.c.b16 %v4532, %v4524
    %v5597 = vpack.c.b16 %v4533, %v4525
    %v5598 = vpack.c.b16 %v4534, %v4526
    %v5599 = vpack.c.b16 %v4543, %v4535
    %v5600 = vpack.c.b16 %v4544, %v4536
    %v5601 = vpack.c.b16 %v4545, %v4537
    %v5602 = vpack.c.b16 %v4546, %v4538
    %v5603 = vpack.c.b16 %v4547, %v4539
    %v5604 = vpack.c.b16 %v4548, %v4540
    %v5605 = vpack.c.b16 %v4549, %v4541
    %v5606 = vpack.c.b16 %v4550, %v4542
    %v5607 = vpack.c.b16 %v4559, %v4551
    %v5608 = vpack.c.b16 %v4560, %v4552
    %v5609 = vpack.c.b16 %v4561, %v4553
    %v5610 = vpack.c.b16 %v4562, %v4554
    %v5611 = vpack.c.b16 %v4563, %v4555
    %v5612 = vpack.c.b16 %v4564, %v4556
    %v5613 = vpack.c.b16 %v4565, %v4557
    %v5614 = vpack.c.b16 %v4566, %v4558
    %v5615 = vpack.c.b16 %v4575, %v4567
    %v5616 = vpack.c.b16 %v4576, %v4568
    %v5617 = vpack.c.b16 %v4577, %v4569
    %v5618 = vpack.c.b16 %v4578, %v4570
    %v5619 = vpack.c.b16 %v4579, %v4571
    %v5620 = vpack.c.b16 %v4580, %v4572
    %v5621 = vpack.c.b16 %v4581, %v4573
    %v5622 = vpack.c.b16 %v4582, %v4574
    %v5623 = vpack.c.b16 %v4591, %v4583
    %v5624 = vpack.c.b16 %v4592, %v4584
    %v5625 = vpack.c.b16 %v4593, %v4585
    %v5626 = vpack.c.b16 %v4594, %v4586
    %v5627 = vpack.c.b16 %v4595, %v4587
    %v5628 = vpack.c.b16 %v4596, %v4588
    %v5629 = vpack.c.b16 %v4597, %v4589
    %v5630 = vpack.c.b16 %v4598, %v4590
    %v5631 = vpack.c.b16 %v4607, %v4599
    %v5632 = vpack.c.b16 %v4608, %v4600
    %v5633 = vpack.c.b16 %v4609, %v4601
    %v5634 = vpack.c.b16 %v4610, %v4602
    %v5635 = vpack.c.b16 %v4611, %v4603
    %v5636 = vpack.c.b16 %v4612, %v4604
    %v5637 = vpack.c.b16 %v4613, %v4605
    %v5638 = vpack.c.b16 %v4614, %v4606
    %6663 = vmatpush.bf16.msra.mxu0 %v4671
    %6664 = vmatpush.bf16.msra.mxu0 %v4663
    %6665 = vmatpush.bf16.msra.mxu0 %v4655
    %6666 = vmatpush.bf16.msra.mxu0 %v4647
    %6667 = vmatpush.bf16.msra.mxu0 %v4639
    %6668 = vmatpush.bf16.msra.mxu0 %v4631
    %6669 = vmatpush.bf16.msra.mxu0 %v4623
    %6670 = vmatpush.bf16.msra.mxu0 %v4615
    %6671 = vmatmul.bf16.gmra.mxu0 %v485
    %v6672 = vpop.f32.mrf.mxu0
    %v6673 = vadd.f32 %v1527, %v6672
    %v6674 = vpop.f32.mrf.mxu0
    %6675 = vdwg.mxu0
    %6676 = vmatpush.bf16.msra.mxu0 %v4735
    %6677 = vmatpush.bf16.msra.mxu0 %v4727
    %6678 = vmatpush.bf16.msra.mxu0 %v4719
    %6679 = vmatpush.bf16.msra.mxu0 %v4711
    %6680 = vmatpush.bf16.msra.mxu0 %v4703
    %6681 = vmatpush.bf16.msra.mxu0 %v4695
    %6682 = vmatpush.bf16.msra.mxu0 %v4687
    %6683 = vmatpush.bf16.msra.mxu0 %v4679
    %6684 = vmatmul.bf16.gmra.mxu0 %v486
    %v6685 = vpop.f32.mrf.mxu0
    %v6686 = vadd.f32 %v6673, %v6685
    %v6687 = vpop.f32.mrf.mxu0
    %6688 = vdwg.mxu0
    %6689 = vmatpush.bf16.msra.mxu0 %v4799
    %6690 = vmatpush.bf16.msra.mxu0 %v4791
    %6691 = vmatpush.bf16.msra.mxu0 %v4783
    %6692 = vmatpush.bf16.msra.mxu0 %v4775
    %6693 = vmatpush.bf16.msra.mxu0 %v4767
    %6694 = vmatpush.bf16.msra.mxu0 %v4759
    %6695 = vmatpush.bf16.msra.mxu0 %v4751
    %6696 = vmatpush.bf16.msra.mxu0 %v4743
    %6697 = vmatmul.bf16.gmra.mxu0 %v487
    %v6698 = vpop.f32.mrf.mxu0
    %v6699 = vadd.f32 %v6686, %v6698
    %v6700 = vpop.f32.mrf.mxu0
    %6701 = vdwg.mxu0
    %6702 = vmatpush.bf16.msra.mxu0 %v4863
    %6703 = vmatpush.bf16.msra.mxu0 %v4855
    %6704 = vmatpush.bf16.msra.mxu0 %v4847
    %6705 = vmatpush.bf16.msra.mxu0 %v4839
    %6706 = vmatpush.bf16.msra.mxu0 %v4831
    %6707 = vmatpush.bf16.msra.mxu0 %v4823
    %6708 = vmatpush.bf16.msra.mxu0 %v4815
    %6709 = vmatpush.bf16.msra.mxu0 %v4807
    %6710 = vmatmul.bf16.gmra.mxu0 %v488
    %v6711 = vpop.f32.mrf.mxu0
    %v6712 = vadd.f32 %v6699, %v6711
    %v6713 = vpop.f32.mrf.mxu0
    %6714 = vdwg.mxu0
    %6715 = vmatpush.bf16.msra.mxu0 %v4927
    %6716 = vmatpush.bf16.msra.mxu0 %v4919
    %6717 = vmatpush.bf16.msra.mxu0 %v4911
    %6718 = vmatpush.bf16.msra.mxu0 %v4903
    %6719 = vmatpush.bf16.msra.mxu0 %v4895
    %6720 = vmatpush.bf16.msra.mxu0 %v4887
    %6721 = vmatpush.bf16.msra.mxu0 %v4879
    %6722 = vmatpush.bf16.msra.mxu0 %v4871
    %6723 = vmatmul.bf16.gmra.mxu0 %v489
    %v6724 = vpop.f32.mrf.mxu0
    %v6725 = vadd.f32 %v6712, %v6724
    %v6726 = vpop.f32.mrf.mxu0
    %6727 = vdwg.mxu0
    %6728 = vmatpush.bf16.msra.mxu0 %v4991
    %6729 = vmatpush.bf16.msra.mxu0 %v4983
    %6730 = vmatpush.bf16.msra.mxu0 %v4975
    %6731 = vmatpush.bf16.msra.mxu0 %v4967
    %6732 = vmatpush.bf16.msra.mxu0 %v4959
    %6733 = vmatpush.bf16.msra.mxu0 %v4951
    %6734 = vmatpush.bf16.msra.mxu0 %v4943
    %6735 = vmatpush.bf16.msra.mxu0 %v4935
    %6736 = vmatmul.bf16.gmra.mxu0 %v490
    %v6737 = vpop.f32.mrf.mxu0
    %v6738 = vadd.f32 %v6725, %v6737
    %v6739 = vpop.f32.mrf.mxu0
    %6740 = vdwg.mxu0
    %6741 = vmatpush.bf16.msra.mxu0 %v5055
    %6742 = vmatpush.bf16.msra.mxu0 %v5047
    %6743 = vmatpush.bf16.msra.mxu0 %v5039
    %6744 = vmatpush.bf16.msra.mxu0 %v5031
    %6745 = vmatpush.bf16.msra.mxu0 %v5023
    %6746 = vmatpush.bf16.msra.mxu0 %v5015
    %6747 = vmatpush.bf16.msra.mxu0 %v5007
    %6748 = vmatpush.bf16.msra.mxu0 %v4999
    %6749 = vmatmul.bf16.gmra.mxu0 %v491
    %v6750 = vpop.f32.mrf.mxu0
    %v6751 = vadd.f32 %v6738, %v6750
    %v6752 = vpop.f32.mrf.mxu0
    %6753 = vdwg.mxu0
    %6754 = vmatpush.bf16.msra.mxu0 %v5119
    %6755 = vmatpush.bf16.msra.mxu0 %v5111
    %6756 = vmatpush.bf16.msra.mxu0 %v5103
    %6757 = vmatpush.bf16.msra.mxu0 %v5095
    %6758 = vmatpush.bf16.msra.mxu0 %v5087
    %6759 = vmatpush.bf16.msra.mxu0 %v5079
    %6760 = vmatpush.bf16.msra.mxu0 %v5071
    %6761 = vmatpush.bf16.msra.mxu0 %v5063
    %6762 = vmatmul.bf16.gmra.mxu0 %v492
    %v6763 = vpop.f32.mrf.mxu0
    %v6764 = vadd.f32 %v6751, %v6763
    %v6765 = vpop.f32.mrf.mxu0
    %6766 = vdwg.mxu0
    %6767 = vmatpush.bf16.msra.mxu0 %v5183
    %6768 = vmatpush.bf16.msra.mxu0 %v5175
    %6769 = vmatpush.bf16.msra.mxu0 %v5167
    %6770 = vmatpush.bf16.msra.mxu0 %v5159
    %6771 = vmatpush.bf16.msra.mxu0 %v5151
    %6772 = vmatpush.bf16.msra.mxu0 %v5143
    %6773 = vmatpush.bf16.msra.mxu0 %v5135
    %6774 = vmatpush.bf16.msra.mxu0 %v5127
    %6775 = vmatmul.bf16.gmra.mxu0 %v493
    %v6776 = vpop.f32.mrf.mxu0
    %v6777 = vadd.f32 %v6764, %v6776
    %v6778 = vpop.f32.mrf.mxu0
    %6779 = vdwg.mxu0
    %6780 = vmatpush.bf16.msra.mxu0 %v5247
    %6781 = vmatpush.bf16.msra.mxu0 %v5239
    %6782 = vmatpush.bf16.msra.mxu0 %v5231
    %6783 = vmatpush.bf16.msra.mxu0 %v5223
    %6784 = vmatpush.bf16.msra.mxu0 %v5215
    %6785 = vmatpush.bf16.msra.mxu0 %v5207
    %6786 = vmatpush.bf16.msra.mxu0 %v5199
    %6787 = vmatpush.bf16.msra.mxu0 %v5191
    %6788 = vmatmul.bf16.gmra.mxu0 %v494
    %v6789 = vpop.f32.mrf.mxu0
    %v6790 = vadd.f32 %v6777, %v6789
    %v6791 = vpop.f32.mrf.mxu0
    %6792 = vdwg.mxu0
    %6793 = vmatpush.bf16.msra.mxu0 %v5311
    %6794 = vmatpush.bf16.msra.mxu0 %v5303
    %6795 = vmatpush.bf16.msra.mxu0 %v5295
    %6796 = vmatpush.bf16.msra.mxu0 %v5287
    %6797 = vmatpush.bf16.msra.mxu0 %v5279
    %6798 = vmatpush.bf16.msra.mxu0 %v5271
    %6799 = vmatpush.bf16.msra.mxu0 %v5263
    %6800 = vmatpush.bf16.msra.mxu0 %v5255
    %6801 = vmatmul.bf16.gmra.mxu0 %v495
    %v6802 = vpop.f32.mrf.mxu0
    %v6803 = vadd.f32 %v6790, %v6802
    %v6804 = vpop.f32.mrf.mxu0
    %6805 = vdwg.mxu0
    %6806 = vmatpush.bf16.msra.mxu0 %v5375
    %6807 = vmatpush.bf16.msra.mxu0 %v5367
    %6808 = vmatpush.bf16.msra.mxu0 %v5359
    %6809 = vmatpush.bf16.msra.mxu0 %v5351
    %6810 = vmatpush.bf16.msra.mxu0 %v5343
    %6811 = vmatpush.bf16.msra.mxu0 %v5335
    %6812 = vmatpush.bf16.msra.mxu0 %v5327
    %6813 = vmatpush.bf16.msra.mxu0 %v5319
    %6814 = vmatmul.bf16.gmra.mxu0 %v496
    %v6815 = vpop.f32.mrf.mxu0
    %v6816 = vadd.f32 %v6803, %v6815
    %v6817 = vpop.f32.mrf.mxu0
    %6818 = vdwg.mxu0
    %6819 = vmatpush.bf16.msra.mxu0 %v5439
    %6820 = vmatpush.bf16.msra.mxu0 %v5431
    %6821 = vmatpush.bf16.msra.mxu0 %v5423
    %6822 = vmatpush.bf16.msra.mxu0 %v5415
    %6823 = vmatpush.bf16.msra.mxu0 %v5407
    %6824 = vmatpush.bf16.msra.mxu0 %v5399
    %6825 = vmatpush.bf16.msra.mxu0 %v5391
    %6826 = vmatpush.bf16.msra.mxu0 %v5383
    %6827 = vmatmul.bf16.gmra.mxu0 %v497
    %v6828 = vpop.f32.mrf.mxu0
    %v6829 = vadd.f32 %v6816, %v6828
    %v6830 = vpop.f32.mrf.mxu0
    %6831 = vdwg.mxu0
    %6832 = vmatpush.bf16.msra.mxu0 %v5503
    %6833 = vmatpush.bf16.msra.mxu0 %v5495
    %6834 = vmatpush.bf16.msra.mxu0 %v5487
    %6835 = vmatpush.bf16.msra.mxu0 %v5479
    %6836 = vmatpush.bf16.msra.mxu0 %v5471
    %6837 = vmatpush.bf16.msra.mxu0 %v5463
    %6838 = vmatpush.bf16.msra.mxu0 %v5455
    %6839 = vmatpush.bf16.msra.mxu0 %v5447
    %6840 = vmatmul.bf16.gmra.mxu0 %v498
    %v6841 = vpop.f32.mrf.mxu0
    %v6842 = vadd.f32 %v6829, %v6841
    %v6843 = vpop.f32.mrf.mxu0
    %6844 = vdwg.mxu0
    %6845 = vmatpush.bf16.msra.mxu0 %v5567
    %6846 = vmatpush.bf16.msra.mxu0 %v5559
    %6847 = vmatpush.bf16.msra.mxu0 %v5551
    %6848 = vmatpush.bf16.msra.mxu0 %v5543
    %6849 = vmatpush.bf16.msra.mxu0 %v5535
    %6850 = vmatpush.bf16.msra.mxu0 %v5527
    %6851 = vmatpush.bf16.msra.mxu0 %v5519
    %6852 = vmatpush.bf16.msra.mxu0 %v5511
    %6853 = vmatmul.bf16.gmra.mxu0 %v499
    %v6854 = vpop.f32.mrf.mxu0
    %v6855 = vadd.f32 %v6842, %v6854
    %v6856 = vpop.f32.mrf.mxu0
    %6857 = vdwg.mxu0
    %6858 = vmatpush.bf16.msra.mxu0 %v5631
    %6859 = vmatpush.bf16.msra.mxu0 %v5623
    %6860 = vmatpush.bf16.msra.mxu0 %v5615
    %6861 = vmatpush.bf16.msra.mxu0 %v5607
    %6862 = vmatpush.bf16.msra.mxu0 %v5599
    %6863 = vmatpush.bf16.msra.mxu0 %v5591
    %6864 = vmatpush.bf16.msra.mxu0 %v5583
    %6865 = vmatpush.bf16.msra.mxu0 %v5575
    %6866 = vmatmul.bf16.gmra.mxu0 %v500
    %v6867 = vpop.f32.mrf.mxu0
    %v6868 = vadd.f32 %v6855, %v6867
    %v6869 = vpop.f32.mrf.mxu0
    %6870 = vdwg.mxu0
    %6871 = vmatpush.bf16.msra.mxu0 %v4672
    %6872 = vmatpush.bf16.msra.mxu0 %v4664
    %6873 = vmatpush.bf16.msra.mxu0 %v4656
    %6874 = vmatpush.bf16.msra.mxu0 %v4648
    %6875 = vmatpush.bf16.msra.mxu0 %v4640
    %6876 = vmatpush.bf16.msra.mxu0 %v4632
    %6877 = vmatpush.bf16.msra.mxu0 %v4624
    %6878 = vmatpush.bf16.msra.mxu0 %v4616
    %6879 = vmatmul.bf16.gmra.mxu0 %v485
    %v6880 = vpop.f32.mrf.mxu0
    %v6881 = vadd.f32 %v1528, %v6880
    %v6882 = vpop.f32.mrf.mxu0
    %6883 = vdwg.mxu0
    %6884 = vmatpush.bf16.msra.mxu0 %v4736
    %6885 = vmatpush.bf16.msra.mxu0 %v4728
    %6886 = vmatpush.bf16.msra.mxu0 %v4720
    %6887 = vmatpush.bf16.msra.mxu0 %v4712
    %6888 = vmatpush.bf16.msra.mxu0 %v4704
    %6889 = vmatpush.bf16.msra.mxu0 %v4696
    %6890 = vmatpush.bf16.msra.mxu0 %v4688
    %6891 = vmatpush.bf16.msra.mxu0 %v4680
    %6892 = vmatmul.bf16.gmra.mxu0 %v486
    %v6893 = vpop.f32.mrf.mxu0
    %v6894 = vadd.f32 %v6881, %v6893
    %v6895 = vpop.f32.mrf.mxu0
    %6896 = vdwg.mxu0
    %6897 = vmatpush.bf16.msra.mxu0 %v4800
    %6898 = vmatpush.bf16.msra.mxu0 %v4792
    %6899 = vmatpush.bf16.msra.mxu0 %v4784
    %6900 = vmatpush.bf16.msra.mxu0 %v4776
    %6901 = vmatpush.bf16.msra.mxu0 %v4768
    %6902 = vmatpush.bf16.msra.mxu0 %v4760
    %6903 = vmatpush.bf16.msra.mxu0 %v4752
    %6904 = vmatpush.bf16.msra.mxu0 %v4744
    %6905 = vmatmul.bf16.gmra.mxu0 %v487
    %v6906 = vpop.f32.mrf.mxu0
    %v6907 = vadd.f32 %v6894, %v6906
    %v6908 = vpop.f32.mrf.mxu0
    %6909 = vdwg.mxu0
    %6910 = vmatpush.bf16.msra.mxu0 %v4864
    %6911 = vmatpush.bf16.msra.mxu0 %v4856
    %6912 = vmatpush.bf16.msra.mxu0 %v4848
    %6913 = vmatpush.bf16.msra.mxu0 %v4840
    %6914 = vmatpush.bf16.msra.mxu0 %v4832
    %6915 = vmatpush.bf16.msra.mxu0 %v4824
    %6916 = vmatpush.bf16.msra.mxu0 %v4816
    %6917 = vmatpush.bf16.msra.mxu0 %v4808
    %6918 = vmatmul.bf16.gmra.mxu0 %v488
    %v6919 = vpop.f32.mrf.mxu0
    %v6920 = vadd.f32 %v6907, %v6919
    %v6921 = vpop.f32.mrf.mxu0
    %6922 = vdwg.mxu0
    %6923 = vmatpush.bf16.msra.mxu0 %v4928
    %6924 = vmatpush.bf16.msra.mxu0 %v4920
    %6925 = vmatpush.bf16.msra.mxu0 %v4912
    %6926 = vmatpush.bf16.msra.mxu0 %v4904
    %6927 = vmatpush.bf16.msra.mxu0 %v4896
    %6928 = vmatpush.bf16.msra.mxu0 %v4888
    %6929 = vmatpush.bf16.msra.mxu0 %v4880
    %6930 = vmatpush.bf16.msra.mxu0 %v4872
    %6931 = vmatmul.bf16.gmra.mxu0 %v489
    %v6932 = vpop.f32.mrf.mxu0
    %v6933 = vadd.f32 %v6920, %v6932
    %v6934 = vpop.f32.mrf.mxu0
    %6935 = vdwg.mxu0
    %6936 = vmatpush.bf16.msra.mxu0 %v4992
    %6937 = vmatpush.bf16.msra.mxu0 %v4984
    %6938 = vmatpush.bf16.msra.mxu0 %v4976
    %6939 = vmatpush.bf16.msra.mxu0 %v4968
    %6940 = vmatpush.bf16.msra.mxu0 %v4960
    %6941 = vmatpush.bf16.msra.mxu0 %v4952
    %6942 = vmatpush.bf16.msra.mxu0 %v4944
    %6943 = vmatpush.bf16.msra.mxu0 %v4936
    %6944 = vmatmul.bf16.gmra.mxu0 %v490
    %v6945 = vpop.f32.mrf.mxu0
    %v6946 = vadd.f32 %v6933, %v6945
    %v6947 = vpop.f32.mrf.mxu0
    %6948 = vdwg.mxu0
    %6949 = vmatpush.bf16.msra.mxu0 %v5056
    %6950 = vmatpush.bf16.msra.mxu0 %v5048
    %6951 = vmatpush.bf16.msra.mxu0 %v5040
    %6952 = vmatpush.bf16.msra.mxu0 %v5032
    %6953 = vmatpush.bf16.msra.mxu0 %v5024
    %6954 = vmatpush.bf16.msra.mxu0 %v5016
    %6955 = vmatpush.bf16.msra.mxu0 %v5008
    %6956 = vmatpush.bf16.msra.mxu0 %v5000
    %6957 = vmatmul.bf16.gmra.mxu0 %v491
    %v6958 = vpop.f32.mrf.mxu0
    %v6959 = vadd.f32 %v6946, %v6958
    %v6960 = vpop.f32.mrf.mxu0
    %6961 = vdwg.mxu0
    %6962 = vmatpush.bf16.msra.mxu0 %v5120
    %6963 = vmatpush.bf16.msra.mxu0 %v5112
    %6964 = vmatpush.bf16.msra.mxu0 %v5104
    %6965 = vmatpush.bf16.msra.mxu0 %v5096
    %6966 = vmatpush.bf16.msra.mxu0 %v5088
    %6967 = vmatpush.bf16.msra.mxu0 %v5080
    %6968 = vmatpush.bf16.msra.mxu0 %v5072
    %6969 = vmatpush.bf16.msra.mxu0 %v5064
    %6970 = vmatmul.bf16.gmra.mxu0 %v492
    %v6971 = vpop.f32.mrf.mxu0
    %v6972 = vadd.f32 %v6959, %v6971
    %v6973 = vpop.f32.mrf.mxu0
    %6974 = vdwg.mxu0
    %6975 = vmatpush.bf16.msra.mxu0 %v5184
    %6976 = vmatpush.bf16.msra.mxu0 %v5176
    %6977 = vmatpush.bf16.msra.mxu0 %v5168
    %6978 = vmatpush.bf16.msra.mxu0 %v5160
    %6979 = vmatpush.bf16.msra.mxu0 %v5152
    %6980 = vmatpush.bf16.msra.mxu0 %v5144
    %6981 = vmatpush.bf16.msra.mxu0 %v5136
    %6982 = vmatpush.bf16.msra.mxu0 %v5128
    %6983 = vmatmul.bf16.gmra.mxu0 %v493
    %v6984 = vpop.f32.mrf.mxu0
    %v6985 = vadd.f32 %v6972, %v6984
    %v6986 = vpop.f32.mrf.mxu0
    %6987 = vdwg.mxu0
    %6988 = vmatpush.bf16.msra.mxu0 %v5248
    %6989 = vmatpush.bf16.msra.mxu0 %v5240
    %6990 = vmatpush.bf16.msra.mxu0 %v5232
    %6991 = vmatpush.bf16.msra.mxu0 %v5224
    %6992 = vmatpush.bf16.msra.mxu0 %v5216
    %6993 = vmatpush.bf16.msra.mxu0 %v5208
    %6994 = vmatpush.bf16.msra.mxu0 %v5200
    %6995 = vmatpush.bf16.msra.mxu0 %v5192
    %6996 = vmatmul.bf16.gmra.mxu0 %v494
    %v6997 = vpop.f32.mrf.mxu0
    %v6998 = vadd.f32 %v6985, %v6997
    %v6999 = vpop.f32.mrf.mxu0
    %7000 = vdwg.mxu0
    %7001 = vmatpush.bf16.msra.mxu0 %v5312
    %7002 = vmatpush.bf16.msra.mxu0 %v5304
    %7003 = vmatpush.bf16.msra.mxu0 %v5296
    %7004 = vmatpush.bf16.msra.mxu0 %v5288
    %7005 = vmatpush.bf16.msra.mxu0 %v5280
    %7006 = vmatpush.bf16.msra.mxu0 %v5272
    %7007 = vmatpush.bf16.msra.mxu0 %v5264
    %7008 = vmatpush.bf16.msra.mxu0 %v5256
    %7009 = vmatmul.bf16.gmra.mxu0 %v495
    %v7010 = vpop.f32.mrf.mxu0
    %v7011 = vadd.f32 %v6998, %v7010
    %v7012 = vpop.f32.mrf.mxu0
    %7013 = vdwg.mxu0
    %7014 = vmatpush.bf16.msra.mxu0 %v5376
    %7015 = vmatpush.bf16.msra.mxu0 %v5368
    %7016 = vmatpush.bf16.msra.mxu0 %v5360
    %7017 = vmatpush.bf16.msra.mxu0 %v5352
    %7018 = vmatpush.bf16.msra.mxu0 %v5344
    %7019 = vmatpush.bf16.msra.mxu0 %v5336
    %7020 = vmatpush.bf16.msra.mxu0 %v5328
    %7021 = vmatpush.bf16.msra.mxu0 %v5320
    %7022 = vmatmul.bf16.gmra.mxu0 %v496
    %v7023 = vpop.f32.mrf.mxu0
    %v7024 = vadd.f32 %v7011, %v7023
    %v7025 = vpop.f32.mrf.mxu0
    %7026 = vdwg.mxu0
    %7027 = vmatpush.bf16.msra.mxu0 %v5440
    %7028 = vmatpush.bf16.msra.mxu0 %v5432
    %7029 = vmatpush.bf16.msra.mxu0 %v5424
    %7030 = vmatpush.bf16.msra.mxu0 %v5416
    %7031 = vmatpush.bf16.msra.mxu0 %v5408
    %7032 = vmatpush.bf16.msra.mxu0 %v5400
    %7033 = vmatpush.bf16.msra.mxu0 %v5392
    %7034 = vmatpush.bf16.msra.mxu0 %v5384
    %7035 = vmatmul.bf16.gmra.mxu0 %v497
    %v7036 = vpop.f32.mrf.mxu0
    %v7037 = vadd.f32 %v7024, %v7036
    %v7038 = vpop.f32.mrf.mxu0
    %7039 = vdwg.mxu0
    %7040 = vmatpush.bf16.msra.mxu0 %v5504
    %7041 = vmatpush.bf16.msra.mxu0 %v5496
    %7042 = vmatpush.bf16.msra.mxu0 %v5488
    %7043 = vmatpush.bf16.msra.mxu0 %v5480
    %7044 = vmatpush.bf16.msra.mxu0 %v5472
    %7045 = vmatpush.bf16.msra.mxu0 %v5464
    %7046 = vmatpush.bf16.msra.mxu0 %v5456
    %7047 = vmatpush.bf16.msra.mxu0 %v5448
    %7048 = vmatmul.bf16.gmra.mxu0 %v498
    %v7049 = vpop.f32.mrf.mxu0
    %v7050 = vadd.f32 %v7037, %v7049
    %v7051 = vpop.f32.mrf.mxu0
    %7052 = vdwg.mxu0
    %7053 = vmatpush.bf16.msra.mxu0 %v5568
    %7054 = vmatpush.bf16.msra.mxu0 %v5560
    %7055 = vmatpush.bf16.msra.mxu0 %v5552
    %7056 = vmatpush.bf16.msra.mxu0 %v5544
    %7057 = vmatpush.bf16.msra.mxu0 %v5536
    %7058 = vmatpush.bf16.msra.mxu0 %v5528
    %7059 = vmatpush.bf16.msra.mxu0 %v5520
    %7060 = vmatpush.bf16.msra.mxu0 %v5512
    %7061 = vmatmul.bf16.gmra.mxu0 %v499
    %v7062 = vpop.f32.mrf.mxu0
    %v7063 = vadd.f32 %v7050, %v7062
    %v7064 = vpop.f32.mrf.mxu0
    %7065 = vdwg.mxu0
    %7066 = vmatpush.bf16.msra.mxu0 %v5632
    %7067 = vmatpush.bf16.msra.mxu0 %v5624
    %7068 = vmatpush.bf16.msra.mxu0 %v5616
    %7069 = vmatpush.bf16.msra.mxu0 %v5608
    %7070 = vmatpush.bf16.msra.mxu0 %v5600
    %7071 = vmatpush.bf16.msra.mxu0 %v5592
    %7072 = vmatpush.bf16.msra.mxu0 %v5584
    %7073 = vmatpush.bf16.msra.mxu0 %v5576
    %7074 = vmatmul.bf16.gmra.mxu0 %v500
    %v7075 = vpop.f32.mrf.mxu0
    %v7076 = vadd.f32 %v7063, %v7075
    %v7077 = vpop.f32.mrf.mxu0
    %7078 = vdwg.mxu0
    %7079 = vmatpush.bf16.msra.mxu0 %v4673
    %7080 = vmatpush.bf16.msra.mxu0 %v4665
    %7081 = vmatpush.bf16.msra.mxu0 %v4657
    %7082 = vmatpush.bf16.msra.mxu0 %v4649
    %7083 = vmatpush.bf16.msra.mxu0 %v4641
    %7084 = vmatpush.bf16.msra.mxu0 %v4633
    %7085 = vmatpush.bf16.msra.mxu0 %v4625
    %7086 = vmatpush.bf16.msra.mxu0 %v4617
    %7087 = vmatmul.bf16.gmra.mxu0 %v485
    %v7088 = vpop.f32.mrf.mxu0
    %v7089 = vadd.f32 %v1529, %v7088
    %v7090 = vpop.f32.mrf.mxu0
    %7091 = vdwg.mxu0
    %7092 = vmatpush.bf16.msra.mxu0 %v4737
    %7093 = vmatpush.bf16.msra.mxu0 %v4729
    %7094 = vmatpush.bf16.msra.mxu0 %v4721
    %7095 = vmatpush.bf16.msra.mxu0 %v4713
    %7096 = vmatpush.bf16.msra.mxu0 %v4705
    %7097 = vmatpush.bf16.msra.mxu0 %v4697
    %7098 = vmatpush.bf16.msra.mxu0 %v4689
    %7099 = vmatpush.bf16.msra.mxu0 %v4681
    %7100 = vmatmul.bf16.gmra.mxu0 %v486
    %v7101 = vpop.f32.mrf.mxu0
    %v7102 = vadd.f32 %v7089, %v7101
    %v7103 = vpop.f32.mrf.mxu0
    %7104 = vdwg.mxu0
    %7105 = vmatpush.bf16.msra.mxu0 %v4801
    %7106 = vmatpush.bf16.msra.mxu0 %v4793
    %7107 = vmatpush.bf16.msra.mxu0 %v4785
    %7108 = vmatpush.bf16.msra.mxu0 %v4777
    %7109 = vmatpush.bf16.msra.mxu0 %v4769
    %7110 = vmatpush.bf16.msra.mxu0 %v4761
    %7111 = vmatpush.bf16.msra.mxu0 %v4753
    %7112 = vmatpush.bf16.msra.mxu0 %v4745
    %7113 = vmatmul.bf16.gmra.mxu0 %v487
    %v7114 = vpop.f32.mrf.mxu0
    %v7115 = vadd.f32 %v7102, %v7114
    %v7116 = vpop.f32.mrf.mxu0
    %7117 = vdwg.mxu0
    %7118 = vmatpush.bf16.msra.mxu0 %v4865
    %7119 = vmatpush.bf16.msra.mxu0 %v4857
    %7120 = vmatpush.bf16.msra.mxu0 %v4849
    %7121 = vmatpush.bf16.msra.mxu0 %v4841
    %7122 = vmatpush.bf16.msra.mxu0 %v4833
    %7123 = vmatpush.bf16.msra.mxu0 %v4825
    %7124 = vmatpush.bf16.msra.mxu0 %v4817
    %7125 = vmatpush.bf16.msra.mxu0 %v4809
    %7126 = vmatmul.bf16.gmra.mxu0 %v488
    %v7127 = vpop.f32.mrf.mxu0
    %v7128 = vadd.f32 %v7115, %v7127
    %v7129 = vpop.f32.mrf.mxu0
    %7130 = vdwg.mxu0
    %7131 = vmatpush.bf16.msra.mxu0 %v4929
    %7132 = vmatpush.bf16.msra.mxu0 %v4921
    %7133 = vmatpush.bf16.msra.mxu0 %v4913
    %7134 = vmatpush.bf16.msra.mxu0 %v4905
    %7135 = vmatpush.bf16.msra.mxu0 %v4897
    %7136 = vmatpush.bf16.msra.mxu0 %v4889
    %7137 = vmatpush.bf16.msra.mxu0 %v4881
    %7138 = vmatpush.bf16.msra.mxu0 %v4873
    %7139 = vmatmul.bf16.gmra.mxu0 %v489
    %v7140 = vpop.f32.mrf.mxu0
    %v7141 = vadd.f32 %v7128, %v7140
    %v7142 = vpop.f32.mrf.mxu0
    %7143 = vdwg.mxu0
    %7144 = vmatpush.bf16.msra.mxu0 %v4993
    %7145 = vmatpush.bf16.msra.mxu0 %v4985
    %7146 = vmatpush.bf16.msra.mxu0 %v4977
    %7147 = vmatpush.bf16.msra.mxu0 %v4969
    %7148 = vmatpush.bf16.msra.mxu0 %v4961
    %7149 = vmatpush.bf16.msra.mxu0 %v4953
    %7150 = vmatpush.bf16.msra.mxu0 %v4945
    %7151 = vmatpush.bf16.msra.mxu0 %v4937
    %7152 = vmatmul.bf16.gmra.mxu0 %v490
    %v7153 = vpop.f32.mrf.mxu0
    %v7154 = vadd.f32 %v7141, %v7153
    %v7155 = vpop.f32.mrf.mxu0
    %7156 = vdwg.mxu0
    %7157 = vmatpush.bf16.msra.mxu0 %v5057
    %7158 = vmatpush.bf16.msra.mxu0 %v5049
    %7159 = vmatpush.bf16.msra.mxu0 %v5041
    %7160 = vmatpush.bf16.msra.mxu0 %v5033
    %7161 = vmatpush.bf16.msra.mxu0 %v5025
    %7162 = vmatpush.bf16.msra.mxu0 %v5017
    %7163 = vmatpush.bf16.msra.mxu0 %v5009
    %7164 = vmatpush.bf16.msra.mxu0 %v5001
    %7165 = vmatmul.bf16.gmra.mxu0 %v491
    %v7166 = vpop.f32.mrf.mxu0
    %v7167 = vadd.f32 %v7154, %v7166
    %v7168 = vpop.f32.mrf.mxu0
    %7169 = vdwg.mxu0
    %7170 = vmatpush.bf16.msra.mxu0 %v5121
    %7171 = vmatpush.bf16.msra.mxu0 %v5113
    %7172 = vmatpush.bf16.msra.mxu0 %v5105
    %7173 = vmatpush.bf16.msra.mxu0 %v5097
    %7174 = vmatpush.bf16.msra.mxu0 %v5089
    %7175 = vmatpush.bf16.msra.mxu0 %v5081
    %7176 = vmatpush.bf16.msra.mxu0 %v5073
    %7177 = vmatpush.bf16.msra.mxu0 %v5065
    %7178 = vmatmul.bf16.gmra.mxu0 %v492
    %v7179 = vpop.f32.mrf.mxu0
    %v7180 = vadd.f32 %v7167, %v7179
    %v7181 = vpop.f32.mrf.mxu0
    %7182 = vdwg.mxu0
    %7183 = vmatpush.bf16.msra.mxu0 %v5185
    %7184 = vmatpush.bf16.msra.mxu0 %v5177
    %7185 = vmatpush.bf16.msra.mxu0 %v5169
    %7186 = vmatpush.bf16.msra.mxu0 %v5161
    %7187 = vmatpush.bf16.msra.mxu0 %v5153
    %7188 = vmatpush.bf16.msra.mxu0 %v5145
    %7189 = vmatpush.bf16.msra.mxu0 %v5137
    %7190 = vmatpush.bf16.msra.mxu0 %v5129
    %7191 = vmatmul.bf16.gmra.mxu0 %v493
    %v7192 = vpop.f32.mrf.mxu0
    %v7193 = vadd.f32 %v7180, %v7192
    %v7194 = vpop.f32.mrf.mxu0
    %7195 = vdwg.mxu0
    %7196 = vmatpush.bf16.msra.mxu0 %v5249
    %7197 = vmatpush.bf16.msra.mxu0 %v5241
    %7198 = vmatpush.bf16.msra.mxu0 %v5233
    %7199 = vmatpush.bf16.msra.mxu0 %v5225
    %7200 = vmatpush.bf16.msra.mxu0 %v5217
    %7201 = vmatpush.bf16.msra.mxu0 %v5209
    %7202 = vmatpush.bf16.msra.mxu0 %v5201
    %7203 = vmatpush.bf16.msra.mxu0 %v5193
    %7204 = vmatmul.bf16.gmra.mxu0 %v494
    %v7205 = vpop.f32.mrf.mxu0
    %v7206 = vadd.f32 %v7193, %v7205
    %v7207 = vpop.f32.mrf.mxu0
    %7208 = vdwg.mxu0
    %7209 = vmatpush.bf16.msra.mxu0 %v5313
    %7210 = vmatpush.bf16.msra.mxu0 %v5305
    %7211 = vmatpush.bf16.msra.mxu0 %v5297
    %7212 = vmatpush.bf16.msra.mxu0 %v5289
    %7213 = vmatpush.bf16.msra.mxu0 %v5281
    %7214 = vmatpush.bf16.msra.mxu0 %v5273
    %7215 = vmatpush.bf16.msra.mxu0 %v5265
    %7216 = vmatpush.bf16.msra.mxu0 %v5257
    %7217 = vmatmul.bf16.gmra.mxu0 %v495
    %v7218 = vpop.f32.mrf.mxu0
    %v7219 = vadd.f32 %v7206, %v7218
    %v7220 = vpop.f32.mrf.mxu0
    %7221 = vdwg.mxu0
    %7222 = vmatpush.bf16.msra.mxu0 %v5377
    %7223 = vmatpush.bf16.msra.mxu0 %v5369
    %7224 = vmatpush.bf16.msra.mxu0 %v5361
    %7225 = vmatpush.bf16.msra.mxu0 %v5353
    %7226 = vmatpush.bf16.msra.mxu0 %v5345
    %7227 = vmatpush.bf16.msra.mxu0 %v5337
    %7228 = vmatpush.bf16.msra.mxu0 %v5329
    %7229 = vmatpush.bf16.msra.mxu0 %v5321
    %7230 = vmatmul.bf16.gmra.mxu0 %v496
    %v7231 = vpop.f32.mrf.mxu0
    %v7232 = vadd.f32 %v7219, %v7231
    %v7233 = vpop.f32.mrf.mxu0
    %7234 = vdwg.mxu0
    %7235 = vmatpush.bf16.msra.mxu0 %v5441
    %7236 = vmatpush.bf16.msra.mxu0 %v5433
    %7237 = vmatpush.bf16.msra.mxu0 %v5425
    %7238 = vmatpush.bf16.msra.mxu0 %v5417
    %7239 = vmatpush.bf16.msra.mxu0 %v5409
    %7240 = vmatpush.bf16.msra.mxu0 %v5401
    %7241 = vmatpush.bf16.msra.mxu0 %v5393
    %7242 = vmatpush.bf16.msra.mxu0 %v5385
    %7243 = vmatmul.bf16.gmra.mxu0 %v497
    %v7244 = vpop.f32.mrf.mxu0
    %v7245 = vadd.f32 %v7232, %v7244
    %v7246 = vpop.f32.mrf.mxu0
    %7247 = vdwg.mxu0
    %7248 = vmatpush.bf16.msra.mxu0 %v5505
    %7249 = vmatpush.bf16.msra.mxu0 %v5497
    %7250 = vmatpush.bf16.msra.mxu0 %v5489
    %7251 = vmatpush.bf16.msra.mxu0 %v5481
    %7252 = vmatpush.bf16.msra.mxu0 %v5473
    %7253 = vmatpush.bf16.msra.mxu0 %v5465
    %7254 = vmatpush.bf16.msra.mxu0 %v5457
    %7255 = vmatpush.bf16.msra.mxu0 %v5449
    %7256 = vmatmul.bf16.gmra.mxu0 %v498
    %v7257 = vpop.f32.mrf.mxu0
    %v7258 = vadd.f32 %v7245, %v7257
    %v7259 = vpop.f32.mrf.mxu0
    %7260 = vdwg.mxu0
    %7261 = vmatpush.bf16.msra.mxu0 %v5569
    %7262 = vmatpush.bf16.msra.mxu0 %v5561
    %7263 = vmatpush.bf16.msra.mxu0 %v5553
    %7264 = vmatpush.bf16.msra.mxu0 %v5545
    %7265 = vmatpush.bf16.msra.mxu0 %v5537
    %7266 = vmatpush.bf16.msra.mxu0 %v5529
    %7267 = vmatpush.bf16.msra.mxu0 %v5521
    %7268 = vmatpush.bf16.msra.mxu0 %v5513
    %7269 = vmatmul.bf16.gmra.mxu0 %v499
    %v7270 = vpop.f32.mrf.mxu0
    %v7271 = vadd.f32 %v7258, %v7270
    %v7272 = vpop.f32.mrf.mxu0
    %7273 = vdwg.mxu0
    %7274 = vmatpush.bf16.msra.mxu0 %v5633
    %7275 = vmatpush.bf16.msra.mxu0 %v5625
    %7276 = vmatpush.bf16.msra.mxu0 %v5617
    %7277 = vmatpush.bf16.msra.mxu0 %v5609
    %7278 = vmatpush.bf16.msra.mxu0 %v5601
    %7279 = vmatpush.bf16.msra.mxu0 %v5593
    %7280 = vmatpush.bf16.msra.mxu0 %v5585
    %7281 = vmatpush.bf16.msra.mxu0 %v5577
    %7282 = vmatmul.bf16.gmra.mxu0 %v500
    %v7283 = vpop.f32.mrf.mxu0
    %v7284 = vadd.f32 %v7271, %v7283
    %v7285 = vpop.f32.mrf.mxu0
    %7286 = vdwg.mxu0
    %7287 = vmatpush.bf16.msra.mxu0 %v4674
    %7288 = vmatpush.bf16.msra.mxu0 %v4666
    %7289 = vmatpush.bf16.msra.mxu0 %v4658
    %7290 = vmatpush.bf16.msra.mxu0 %v4650
    %7291 = vmatpush.bf16.msra.mxu0 %v4642
    %7292 = vmatpush.bf16.msra.mxu0 %v4634
    %7293 = vmatpush.bf16.msra.mxu0 %v4626
    %7294 = vmatpush.bf16.msra.mxu0 %v4618
    %7295 = vmatmul.bf16.gmra.mxu0 %v485
    %v7296 = vpop.f32.mrf.mxu0
    %v7297 = vadd.f32 %v1530, %v7296
    %v7298 = vpop.f32.mrf.mxu0
    %7299 = vdwg.mxu0
    %7300 = vmatpush.bf16.msra.mxu0 %v4738
    %7301 = vmatpush.bf16.msra.mxu0 %v4730
    %7302 = vmatpush.bf16.msra.mxu0 %v4722
    %7303 = vmatpush.bf16.msra.mxu0 %v4714
    %7304 = vmatpush.bf16.msra.mxu0 %v4706
    %7305 = vmatpush.bf16.msra.mxu0 %v4698
    %7306 = vmatpush.bf16.msra.mxu0 %v4690
    %7307 = vmatpush.bf16.msra.mxu0 %v4682
    %7308 = vmatmul.bf16.gmra.mxu0 %v486
    %v7309 = vpop.f32.mrf.mxu0
    %v7310 = vadd.f32 %v7297, %v7309
    %v7311 = vpop.f32.mrf.mxu0
    %7312 = vdwg.mxu0
    %7313 = vmatpush.bf16.msra.mxu0 %v4802
    %7314 = vmatpush.bf16.msra.mxu0 %v4794
    %7315 = vmatpush.bf16.msra.mxu0 %v4786
    %7316 = vmatpush.bf16.msra.mxu0 %v4778
    %7317 = vmatpush.bf16.msra.mxu0 %v4770
    %7318 = vmatpush.bf16.msra.mxu0 %v4762
    %7319 = vmatpush.bf16.msra.mxu0 %v4754
    %7320 = vmatpush.bf16.msra.mxu0 %v4746
    %7321 = vmatmul.bf16.gmra.mxu0 %v487
    %v7322 = vpop.f32.mrf.mxu0
    %v7323 = vadd.f32 %v7310, %v7322
    %v7324 = vpop.f32.mrf.mxu0
    %7325 = vdwg.mxu0
    %7326 = vmatpush.bf16.msra.mxu0 %v4866
    %7327 = vmatpush.bf16.msra.mxu0 %v4858
    %7328 = vmatpush.bf16.msra.mxu0 %v4850
    %7329 = vmatpush.bf16.msra.mxu0 %v4842
    %7330 = vmatpush.bf16.msra.mxu0 %v4834
    %7331 = vmatpush.bf16.msra.mxu0 %v4826
    %7332 = vmatpush.bf16.msra.mxu0 %v4818
    %7333 = vmatpush.bf16.msra.mxu0 %v4810
    %7334 = vmatmul.bf16.gmra.mxu0 %v488
    %v7335 = vpop.f32.mrf.mxu0
    %v7336 = vadd.f32 %v7323, %v7335
    %v7337 = vpop.f32.mrf.mxu0
    %7338 = vdwg.mxu0
    %7339 = vmatpush.bf16.msra.mxu0 %v4930
    %7340 = vmatpush.bf16.msra.mxu0 %v4922
    %7341 = vmatpush.bf16.msra.mxu0 %v4914
    %7342 = vmatpush.bf16.msra.mxu0 %v4906
    %7343 = vmatpush.bf16.msra.mxu0 %v4898
    %7344 = vmatpush.bf16.msra.mxu0 %v4890
    %7345 = vmatpush.bf16.msra.mxu0 %v4882
    %7346 = vmatpush.bf16.msra.mxu0 %v4874
    %7347 = vmatmul.bf16.gmra.mxu0 %v489
    %v7348 = vpop.f32.mrf.mxu0
    %v7349 = vadd.f32 %v7336, %v7348
    %v7350 = vpop.f32.mrf.mxu0
    %7351 = vdwg.mxu0
    %7352 = vmatpush.bf16.msra.mxu0 %v4994
    %7353 = vmatpush.bf16.msra.mxu0 %v4986
    %7354 = vmatpush.bf16.msra.mxu0 %v4978
    %7355 = vmatpush.bf16.msra.mxu0 %v4970
    %7356 = vmatpush.bf16.msra.mxu0 %v4962
    %7357 = vmatpush.bf16.msra.mxu0 %v4954
    %7358 = vmatpush.bf16.msra.mxu0 %v4946
    %7359 = vmatpush.bf16.msra.mxu0 %v4938
    %7360 = vmatmul.bf16.gmra.mxu0 %v490
    %v7361 = vpop.f32.mrf.mxu0
    %v7362 = vadd.f32 %v7349, %v7361
    %v7363 = vpop.f32.mrf.mxu0
    %7364 = vdwg.mxu0
    %7365 = vmatpush.bf16.msra.mxu0 %v5058
    %7366 = vmatpush.bf16.msra.mxu0 %v5050
    %7367 = vmatpush.bf16.msra.mxu0 %v5042
    %7368 = vmatpush.bf16.msra.mxu0 %v5034
    %7369 = vmatpush.bf16.msra.mxu0 %v5026
    %7370 = vmatpush.bf16.msra.mxu0 %v5018
    %7371 = vmatpush.bf16.msra.mxu0 %v5010
    %7372 = vmatpush.bf16.msra.mxu0 %v5002
    %7373 = vmatmul.bf16.gmra.mxu0 %v491
    %v7374 = vpop.f32.mrf.mxu0
    %v7375 = vadd.f32 %v7362, %v7374
    %v7376 = vpop.f32.mrf.mxu0
    %7377 = vdwg.mxu0
    %7378 = vmatpush.bf16.msra.mxu0 %v5122
    %7379 = vmatpush.bf16.msra.mxu0 %v5114
    %7380 = vmatpush.bf16.msra.mxu0 %v5106
    %7381 = vmatpush.bf16.msra.mxu0 %v5098
    %7382 = vmatpush.bf16.msra.mxu0 %v5090
    %7383 = vmatpush.bf16.msra.mxu0 %v5082
    %7384 = vmatpush.bf16.msra.mxu0 %v5074
    %7385 = vmatpush.bf16.msra.mxu0 %v5066
    %7386 = vmatmul.bf16.gmra.mxu0 %v492
    %v7387 = vpop.f32.mrf.mxu0
    %v7388 = vadd.f32 %v7375, %v7387
    %v7389 = vpop.f32.mrf.mxu0
    %7390 = vdwg.mxu0
    %7391 = vmatpush.bf16.msra.mxu0 %v5186
    %7392 = vmatpush.bf16.msra.mxu0 %v5178
    %7393 = vmatpush.bf16.msra.mxu0 %v5170
    %7394 = vmatpush.bf16.msra.mxu0 %v5162
    %7395 = vmatpush.bf16.msra.mxu0 %v5154
    %7396 = vmatpush.bf16.msra.mxu0 %v5146
    %7397 = vmatpush.bf16.msra.mxu0 %v5138
    %7398 = vmatpush.bf16.msra.mxu0 %v5130
    %7399 = vmatmul.bf16.gmra.mxu0 %v493
    %v7400 = vpop.f32.mrf.mxu0
    %v7401 = vadd.f32 %v7388, %v7400
    %v7402 = vpop.f32.mrf.mxu0
    %7403 = vdwg.mxu0
    %7404 = vmatpush.bf16.msra.mxu0 %v5250
    %7405 = vmatpush.bf16.msra.mxu0 %v5242
    %7406 = vmatpush.bf16.msra.mxu0 %v5234
    %7407 = vmatpush.bf16.msra.mxu0 %v5226
    %7408 = vmatpush.bf16.msra.mxu0 %v5218
    %7409 = vmatpush.bf16.msra.mxu0 %v5210
    %7410 = vmatpush.bf16.msra.mxu0 %v5202
    %7411 = vmatpush.bf16.msra.mxu0 %v5194
    %7412 = vmatmul.bf16.gmra.mxu0 %v494
    %v7413 = vpop.f32.mrf.mxu0
    %v7414 = vadd.f32 %v7401, %v7413
    %v7415 = vpop.f32.mrf.mxu0
    %7416 = vdwg.mxu0
    %7417 = vmatpush.bf16.msra.mxu0 %v5314
    %7418 = vmatpush.bf16.msra.mxu0 %v5306
    %7419 = vmatpush.bf16.msra.mxu0 %v5298
    %7420 = vmatpush.bf16.msra.mxu0 %v5290
    %7421 = vmatpush.bf16.msra.mxu0 %v5282
    %7422 = vmatpush.bf16.msra.mxu0 %v5274
    %7423 = vmatpush.bf16.msra.mxu0 %v5266
    %7424 = vmatpush.bf16.msra.mxu0 %v5258
    %7425 = vmatmul.bf16.gmra.mxu0 %v495
    %v7426 = vpop.f32.mrf.mxu0
    %v7427 = vadd.f32 %v7414, %v7426
    %v7428 = vpop.f32.mrf.mxu0
    %7429 = vdwg.mxu0
    %7430 = vmatpush.bf16.msra.mxu0 %v5378
    %7431 = vmatpush.bf16.msra.mxu0 %v5370
    %7432 = vmatpush.bf16.msra.mxu0 %v5362
    %7433 = vmatpush.bf16.msra.mxu0 %v5354
    %7434 = vmatpush.bf16.msra.mxu0 %v5346
    %7435 = vmatpush.bf16.msra.mxu0 %v5338
    %7436 = vmatpush.bf16.msra.mxu0 %v5330
    %7437 = vmatpush.bf16.msra.mxu0 %v5322
    %7438 = vmatmul.bf16.gmra.mxu0 %v496
    %v7439 = vpop.f32.mrf.mxu0
    %v7440 = vadd.f32 %v7427, %v7439
    %v7441 = vpop.f32.mrf.mxu0
    %7442 = vdwg.mxu0
    %7443 = vmatpush.bf16.msra.mxu0 %v5442
    %7444 = vmatpush.bf16.msra.mxu0 %v5434
    %7445 = vmatpush.bf16.msra.mxu0 %v5426
    %7446 = vmatpush.bf16.msra.mxu0 %v5418
    %7447 = vmatpush.bf16.msra.mxu0 %v5410
    %7448 = vmatpush.bf16.msra.mxu0 %v5402
    %7449 = vmatpush.bf16.msra.mxu0 %v5394
    %7450 = vmatpush.bf16.msra.mxu0 %v5386
    %7451 = vmatmul.bf16.gmra.mxu0 %v497
    %v7452 = vpop.f32.mrf.mxu0
    %v7453 = vadd.f32 %v7440, %v7452
    %v7454 = vpop.f32.mrf.mxu0
    %7455 = vdwg.mxu0
    %7456 = vmatpush.bf16.msra.mxu0 %v5506
    %7457 = vmatpush.bf16.msra.mxu0 %v5498
    %7458 = vmatpush.bf16.msra.mxu0 %v5490
    %7459 = vmatpush.bf16.msra.mxu0 %v5482
    %7460 = vmatpush.bf16.msra.mxu0 %v5474
    %7461 = vmatpush.bf16.msra.mxu0 %v5466
    %7462 = vmatpush.bf16.msra.mxu0 %v5458
    %7463 = vmatpush.bf16.msra.mxu0 %v5450
    %7464 = vmatmul.bf16.gmra.mxu0 %v498
    %v7465 = vpop.f32.mrf.mxu0
    %v7466 = vadd.f32 %v7453, %v7465
    %v7467 = vpop.f32.mrf.mxu0
    %7468 = vdwg.mxu0
    %7469 = vmatpush.bf16.msra.mxu0 %v5570
    %7470 = vmatpush.bf16.msra.mxu0 %v5562
    %7471 = vmatpush.bf16.msra.mxu0 %v5554
    %7472 = vmatpush.bf16.msra.mxu0 %v5546
    %7473 = vmatpush.bf16.msra.mxu0 %v5538
    %7474 = vmatpush.bf16.msra.mxu0 %v5530
    %7475 = vmatpush.bf16.msra.mxu0 %v5522
    %7476 = vmatpush.bf16.msra.mxu0 %v5514
    %7477 = vmatmul.bf16.gmra.mxu0 %v499
    %v7478 = vpop.f32.mrf.mxu0
    %v7479 = vadd.f32 %v7466, %v7478
    %v7480 = vpop.f32.mrf.mxu0
    %7481 = vdwg.mxu0
    %7482 = vmatpush.bf16.msra.mxu0 %v5634
    %7483 = vmatpush.bf16.msra.mxu0 %v5626
    %7484 = vmatpush.bf16.msra.mxu0 %v5618
    %7485 = vmatpush.bf16.msra.mxu0 %v5610
    %7486 = vmatpush.bf16.msra.mxu0 %v5602
    %7487 = vmatpush.bf16.msra.mxu0 %v5594
    %7488 = vmatpush.bf16.msra.mxu0 %v5586
    %7489 = vmatpush.bf16.msra.mxu0 %v5578
    %7490 = vmatmul.bf16.gmra.mxu0 %v500
    %v7491 = vpop.f32.mrf.mxu0
    %v7492 = vadd.f32 %v7479, %v7491
    %v7493 = vpop.f32.mrf.mxu0
    %7494 = vdwg.mxu0
    %7495 = vmatpush.bf16.msra.mxu0 %v4675
    %7496 = vmatpush.bf16.msra.mxu0 %v4667
    %7497 = vmatpush.bf16.msra.mxu0 %v4659
    %7498 = vmatpush.bf16.msra.mxu0 %v4651
    %7499 = vmatpush.bf16.msra.mxu0 %v4643
    %7500 = vmatpush.bf16.msra.mxu0 %v4635
    %7501 = vmatpush.bf16.msra.mxu0 %v4627
    %7502 = vmatpush.bf16.msra.mxu0 %v4619
    %7503 = vmatmul.bf16.gmra.mxu0 %v485
    %v7504 = vpop.f32.mrf.mxu0
    %v7505 = vadd.f32 %v1531, %v7504
    %v7506 = vpop.f32.mrf.mxu0
    %7507 = vdwg.mxu0
    %7508 = vmatpush.bf16.msra.mxu0 %v4739
    %7509 = vmatpush.bf16.msra.mxu0 %v4731
    %7510 = vmatpush.bf16.msra.mxu0 %v4723
    %7511 = vmatpush.bf16.msra.mxu0 %v4715
    %7512 = vmatpush.bf16.msra.mxu0 %v4707
    %7513 = vmatpush.bf16.msra.mxu0 %v4699
    %7514 = vmatpush.bf16.msra.mxu0 %v4691
    %7515 = vmatpush.bf16.msra.mxu0 %v4683
    %7516 = vmatmul.bf16.gmra.mxu0 %v486
    %v7517 = vpop.f32.mrf.mxu0
    %v7518 = vadd.f32 %v7505, %v7517
    %v7519 = vpop.f32.mrf.mxu0
    %7520 = vdwg.mxu0
    %7521 = vmatpush.bf16.msra.mxu0 %v4803
    %7522 = vmatpush.bf16.msra.mxu0 %v4795
    %7523 = vmatpush.bf16.msra.mxu0 %v4787
    %7524 = vmatpush.bf16.msra.mxu0 %v4779
    %7525 = vmatpush.bf16.msra.mxu0 %v4771
    %7526 = vmatpush.bf16.msra.mxu0 %v4763
    %7527 = vmatpush.bf16.msra.mxu0 %v4755
    %7528 = vmatpush.bf16.msra.mxu0 %v4747
    %7529 = vmatmul.bf16.gmra.mxu0 %v487
    %v7530 = vpop.f32.mrf.mxu0
    %v7531 = vadd.f32 %v7518, %v7530
    %v7532 = vpop.f32.mrf.mxu0
    %7533 = vdwg.mxu0
    %7534 = vmatpush.bf16.msra.mxu0 %v4867
    %7535 = vmatpush.bf16.msra.mxu0 %v4859
    %7536 = vmatpush.bf16.msra.mxu0 %v4851
    %7537 = vmatpush.bf16.msra.mxu0 %v4843
    %7538 = vmatpush.bf16.msra.mxu0 %v4835
    %7539 = vmatpush.bf16.msra.mxu0 %v4827
    %7540 = vmatpush.bf16.msra.mxu0 %v4819
    %7541 = vmatpush.bf16.msra.mxu0 %v4811
    %7542 = vmatmul.bf16.gmra.mxu0 %v488
    %v7543 = vpop.f32.mrf.mxu0
    %v7544 = vadd.f32 %v7531, %v7543
    %v7545 = vpop.f32.mrf.mxu0
    %7546 = vdwg.mxu0
    %7547 = vmatpush.bf16.msra.mxu0 %v4931
    %7548 = vmatpush.bf16.msra.mxu0 %v4923
    %7549 = vmatpush.bf16.msra.mxu0 %v4915
    %7550 = vmatpush.bf16.msra.mxu0 %v4907
    %7551 = vmatpush.bf16.msra.mxu0 %v4899
    %7552 = vmatpush.bf16.msra.mxu0 %v4891
    %7553 = vmatpush.bf16.msra.mxu0 %v4883
    %7554 = vmatpush.bf16.msra.mxu0 %v4875
    %7555 = vmatmul.bf16.gmra.mxu0 %v489
    %v7556 = vpop.f32.mrf.mxu0
    %v7557 = vadd.f32 %v7544, %v7556
    %v7558 = vpop.f32.mrf.mxu0
    %7559 = vdwg.mxu0
    %7560 = vmatpush.bf16.msra.mxu0 %v4995
    %7561 = vmatpush.bf16.msra.mxu0 %v4987
    %7562 = vmatpush.bf16.msra.mxu0 %v4979
    %7563 = vmatpush.bf16.msra.mxu0 %v4971
    %7564 = vmatpush.bf16.msra.mxu0 %v4963
    %7565 = vmatpush.bf16.msra.mxu0 %v4955
    %7566 = vmatpush.bf16.msra.mxu0 %v4947
    %7567 = vmatpush.bf16.msra.mxu0 %v4939
    %7568 = vmatmul.bf16.gmra.mxu0 %v490
    %v7569 = vpop.f32.mrf.mxu0
    %v7570 = vadd.f32 %v7557, %v7569
    %v7571 = vpop.f32.mrf.mxu0
    %7572 = vdwg.mxu0
    %7573 = vmatpush.bf16.msra.mxu0 %v5059
    %7574 = vmatpush.bf16.msra.mxu0 %v5051
    %7575 = vmatpush.bf16.msra.mxu0 %v5043
    %7576 = vmatpush.bf16.msra.mxu0 %v5035
    %7577 = vmatpush.bf16.msra.mxu0 %v5027
    %7578 = vmatpush.bf16.msra.mxu0 %v5019
    %7579 = vmatpush.bf16.msra.mxu0 %v5011
    %7580 = vmatpush.bf16.msra.mxu0 %v5003
    %7581 = vmatmul.bf16.gmra.mxu0 %v491
    %v7582 = vpop.f32.mrf.mxu0
    %v7583 = vadd.f32 %v7570, %v7582
    %v7584 = vpop.f32.mrf.mxu0
    %7585 = vdwg.mxu0
    %7586 = vmatpush.bf16.msra.mxu0 %v5123
    %7587 = vmatpush.bf16.msra.mxu0 %v5115
    %7588 = vmatpush.bf16.msra.mxu0 %v5107
    %7589 = vmatpush.bf16.msra.mxu0 %v5099
    %7590 = vmatpush.bf16.msra.mxu0 %v5091
    %7591 = vmatpush.bf16.msra.mxu0 %v5083
    %7592 = vmatpush.bf16.msra.mxu0 %v5075
    %7593 = vmatpush.bf16.msra.mxu0 %v5067
    %7594 = vmatmul.bf16.gmra.mxu0 %v492
    %v7595 = vpop.f32.mrf.mxu0
    %v7596 = vadd.f32 %v7583, %v7595
    %v7597 = vpop.f32.mrf.mxu0
    %7598 = vdwg.mxu0
    %7599 = vmatpush.bf16.msra.mxu0 %v5187
    %7600 = vmatpush.bf16.msra.mxu0 %v5179
    %7601 = vmatpush.bf16.msra.mxu0 %v5171
    %7602 = vmatpush.bf16.msra.mxu0 %v5163
    %7603 = vmatpush.bf16.msra.mxu0 %v5155
    %7604 = vmatpush.bf16.msra.mxu0 %v5147
    %7605 = vmatpush.bf16.msra.mxu0 %v5139
    %7606 = vmatpush.bf16.msra.mxu0 %v5131
    %7607 = vmatmul.bf16.gmra.mxu0 %v493
    %v7608 = vpop.f32.mrf.mxu0
    %v7609 = vadd.f32 %v7596, %v7608
    %v7610 = vpop.f32.mrf.mxu0
    %7611 = vdwg.mxu0
    %7612 = vmatpush.bf16.msra.mxu0 %v5251
    %7613 = vmatpush.bf16.msra.mxu0 %v5243
    %7614 = vmatpush.bf16.msra.mxu0 %v5235
    %7615 = vmatpush.bf16.msra.mxu0 %v5227
    %7616 = vmatpush.bf16.msra.mxu0 %v5219
    %7617 = vmatpush.bf16.msra.mxu0 %v5211
    %7618 = vmatpush.bf16.msra.mxu0 %v5203
    %7619 = vmatpush.bf16.msra.mxu0 %v5195
    %7620 = vmatmul.bf16.gmra.mxu0 %v494
    %v7621 = vpop.f32.mrf.mxu0
    %v7622 = vadd.f32 %v7609, %v7621
    %v7623 = vpop.f32.mrf.mxu0
    %7624 = vdwg.mxu0
    %7625 = vmatpush.bf16.msra.mxu0 %v5315
    %7626 = vmatpush.bf16.msra.mxu0 %v5307
    %7627 = vmatpush.bf16.msra.mxu0 %v5299
    %7628 = vmatpush.bf16.msra.mxu0 %v5291
    %7629 = vmatpush.bf16.msra.mxu0 %v5283
    %7630 = vmatpush.bf16.msra.mxu0 %v5275
    %7631 = vmatpush.bf16.msra.mxu0 %v5267
    %7632 = vmatpush.bf16.msra.mxu0 %v5259
    %7633 = vmatmul.bf16.gmra.mxu0 %v495
    %v7634 = vpop.f32.mrf.mxu0
    %v7635 = vadd.f32 %v7622, %v7634
    %v7636 = vpop.f32.mrf.mxu0
    %7637 = vdwg.mxu0
    %7638 = vmatpush.bf16.msra.mxu0 %v5379
    %7639 = vmatpush.bf16.msra.mxu0 %v5371
    %7640 = vmatpush.bf16.msra.mxu0 %v5363
    %7641 = vmatpush.bf16.msra.mxu0 %v5355
    %7642 = vmatpush.bf16.msra.mxu0 %v5347
    %7643 = vmatpush.bf16.msra.mxu0 %v5339
    %7644 = vmatpush.bf16.msra.mxu0 %v5331
    %7645 = vmatpush.bf16.msra.mxu0 %v5323
    %7646 = vmatmul.bf16.gmra.mxu0 %v496
    %v7647 = vpop.f32.mrf.mxu0
    %v7648 = vadd.f32 %v7635, %v7647
    %v7649 = vpop.f32.mrf.mxu0
    %7650 = vdwg.mxu0
    %7651 = vmatpush.bf16.msra.mxu0 %v5443
    %7652 = vmatpush.bf16.msra.mxu0 %v5435
    %7653 = vmatpush.bf16.msra.mxu0 %v5427
    %7654 = vmatpush.bf16.msra.mxu0 %v5419
    %7655 = vmatpush.bf16.msra.mxu0 %v5411
    %7656 = vmatpush.bf16.msra.mxu0 %v5403
    %7657 = vmatpush.bf16.msra.mxu0 %v5395
    %7658 = vmatpush.bf16.msra.mxu0 %v5387
    %7659 = vmatmul.bf16.gmra.mxu0 %v497
    %v7660 = vpop.f32.mrf.mxu0
    %v7661 = vadd.f32 %v7648, %v7660
    %v7662 = vpop.f32.mrf.mxu0
    %7663 = vdwg.mxu0
    %7664 = vmatpush.bf16.msra.mxu0 %v5507
    %7665 = vmatpush.bf16.msra.mxu0 %v5499
    %7666 = vmatpush.bf16.msra.mxu0 %v5491
    %7667 = vmatpush.bf16.msra.mxu0 %v5483
    %7668 = vmatpush.bf16.msra.mxu0 %v5475
    %7669 = vmatpush.bf16.msra.mxu0 %v5467
    %7670 = vmatpush.bf16.msra.mxu0 %v5459
    %7671 = vmatpush.bf16.msra.mxu0 %v5451
    %7672 = vmatmul.bf16.gmra.mxu0 %v498
    %v7673 = vpop.f32.mrf.mxu0
    %v7674 = vadd.f32 %v7661, %v7673
    %v7675 = vpop.f32.mrf.mxu0
    %7676 = vdwg.mxu0
    %7677 = vmatpush.bf16.msra.mxu0 %v5571
    %7678 = vmatpush.bf16.msra.mxu0 %v5563
    %7679 = vmatpush.bf16.msra.mxu0 %v5555
    %7680 = vmatpush.bf16.msra.mxu0 %v5547
    %7681 = vmatpush.bf16.msra.mxu0 %v5539
    %7682 = vmatpush.bf16.msra.mxu0 %v5531
    %7683 = vmatpush.bf16.msra.mxu0 %v5523
    %7684 = vmatpush.bf16.msra.mxu0 %v5515
    %7685 = vmatmul.bf16.gmra.mxu0 %v499
    %v7686 = vpop.f32.mrf.mxu0
    %v7687 = vadd.f32 %v7674, %v7686
    %v7688 = vpop.f32.mrf.mxu0
    %7689 = vdwg.mxu0
    %7690 = vmatpush.bf16.msra.mxu0 %v5635
    %7691 = vmatpush.bf16.msra.mxu0 %v5627
    %7692 = vmatpush.bf16.msra.mxu0 %v5619
    %7693 = vmatpush.bf16.msra.mxu0 %v5611
    %7694 = vmatpush.bf16.msra.mxu0 %v5603
    %7695 = vmatpush.bf16.msra.mxu0 %v5595
    %7696 = vmatpush.bf16.msra.mxu0 %v5587
    %7697 = vmatpush.bf16.msra.mxu0 %v5579
    %7698 = vmatmul.bf16.gmra.mxu0 %v500
    %v7699 = vpop.f32.mrf.mxu0
    %v7700 = vadd.f32 %v7687, %v7699
    %v7701 = vpop.f32.mrf.mxu0
    %7702 = vdwg.mxu0
    %7703 = vmatpush.bf16.msra.mxu0 %v4676
    %7704 = vmatpush.bf16.msra.mxu0 %v4668
    %7705 = vmatpush.bf16.msra.mxu0 %v4660
    %7706 = vmatpush.bf16.msra.mxu0 %v4652
    %7707 = vmatpush.bf16.msra.mxu0 %v4644
    %7708 = vmatpush.bf16.msra.mxu0 %v4636
    %7709 = vmatpush.bf16.msra.mxu0 %v4628
    %7710 = vmatpush.bf16.msra.mxu0 %v4620
    %7711 = vmatmul.bf16.gmra.mxu0 %v485
    %v7712 = vpop.f32.mrf.mxu0
    %v7713 = vadd.f32 %v1532, %v7712
    %v7714 = vpop.f32.mrf.mxu0
    %7715 = vdwg.mxu0
    %7716 = vmatpush.bf16.msra.mxu0 %v4740
    %7717 = vmatpush.bf16.msra.mxu0 %v4732
    %7718 = vmatpush.bf16.msra.mxu0 %v4724
    %7719 = vmatpush.bf16.msra.mxu0 %v4716
    %7720 = vmatpush.bf16.msra.mxu0 %v4708
    %7721 = vmatpush.bf16.msra.mxu0 %v4700
    %7722 = vmatpush.bf16.msra.mxu0 %v4692
    %7723 = vmatpush.bf16.msra.mxu0 %v4684
    %7724 = vmatmul.bf16.gmra.mxu0 %v486
    %v7725 = vpop.f32.mrf.mxu0
    %v7726 = vadd.f32 %v7713, %v7725
    %v7727 = vpop.f32.mrf.mxu0
    %7728 = vdwg.mxu0
    %7729 = vmatpush.bf16.msra.mxu0 %v4804
    %7730 = vmatpush.bf16.msra.mxu0 %v4796
    %7731 = vmatpush.bf16.msra.mxu0 %v4788
    %7732 = vmatpush.bf16.msra.mxu0 %v4780
    %7733 = vmatpush.bf16.msra.mxu0 %v4772
    %7734 = vmatpush.bf16.msra.mxu0 %v4764
    %7735 = vmatpush.bf16.msra.mxu0 %v4756
    %7736 = vmatpush.bf16.msra.mxu0 %v4748
    %7737 = vmatmul.bf16.gmra.mxu0 %v487
    %v7738 = vpop.f32.mrf.mxu0
    %v7739 = vadd.f32 %v7726, %v7738
    %v7740 = vpop.f32.mrf.mxu0
    %7741 = vdwg.mxu0
    %7742 = vmatpush.bf16.msra.mxu0 %v4868
    %7743 = vmatpush.bf16.msra.mxu0 %v4860
    %7744 = vmatpush.bf16.msra.mxu0 %v4852
    %7745 = vmatpush.bf16.msra.mxu0 %v4844
    %7746 = vmatpush.bf16.msra.mxu0 %v4836
    %7747 = vmatpush.bf16.msra.mxu0 %v4828
    %7748 = vmatpush.bf16.msra.mxu0 %v4820
    %7749 = vmatpush.bf16.msra.mxu0 %v4812
    %7750 = vmatmul.bf16.gmra.mxu0 %v488
    %v7751 = vpop.f32.mrf.mxu0
    %v7752 = vadd.f32 %v7739, %v7751
    %v7753 = vpop.f32.mrf.mxu0
    %7754 = vdwg.mxu0
    %7755 = vmatpush.bf16.msra.mxu0 %v4932
    %7756 = vmatpush.bf16.msra.mxu0 %v4924
    %7757 = vmatpush.bf16.msra.mxu0 %v4916
    %7758 = vmatpush.bf16.msra.mxu0 %v4908
    %7759 = vmatpush.bf16.msra.mxu0 %v4900
    %7760 = vmatpush.bf16.msra.mxu0 %v4892
    %7761 = vmatpush.bf16.msra.mxu0 %v4884
    %7762 = vmatpush.bf16.msra.mxu0 %v4876
    %7763 = vmatmul.bf16.gmra.mxu0 %v489
    %v7764 = vpop.f32.mrf.mxu0
    %v7765 = vadd.f32 %v7752, %v7764
    %v7766 = vpop.f32.mrf.mxu0
    %7767 = vdwg.mxu0
    %7768 = vmatpush.bf16.msra.mxu0 %v4996
    %7769 = vmatpush.bf16.msra.mxu0 %v4988
    %7770 = vmatpush.bf16.msra.mxu0 %v4980
    %7771 = vmatpush.bf16.msra.mxu0 %v4972
    %7772 = vmatpush.bf16.msra.mxu0 %v4964
    %7773 = vmatpush.bf16.msra.mxu0 %v4956
    %7774 = vmatpush.bf16.msra.mxu0 %v4948
    %7775 = vmatpush.bf16.msra.mxu0 %v4940
    %7776 = vmatmul.bf16.gmra.mxu0 %v490
    %v7777 = vpop.f32.mrf.mxu0
    %v7778 = vadd.f32 %v7765, %v7777
    %v7779 = vpop.f32.mrf.mxu0
    %7780 = vdwg.mxu0
    %7781 = vmatpush.bf16.msra.mxu0 %v5060
    %7782 = vmatpush.bf16.msra.mxu0 %v5052
    %7783 = vmatpush.bf16.msra.mxu0 %v5044
    %7784 = vmatpush.bf16.msra.mxu0 %v5036
    %7785 = vmatpush.bf16.msra.mxu0 %v5028
    %7786 = vmatpush.bf16.msra.mxu0 %v5020
    %7787 = vmatpush.bf16.msra.mxu0 %v5012
    %7788 = vmatpush.bf16.msra.mxu0 %v5004
    %7789 = vmatmul.bf16.gmra.mxu0 %v491
    %v7790 = vpop.f32.mrf.mxu0
    %v7791 = vadd.f32 %v7778, %v7790
    %v7792 = vpop.f32.mrf.mxu0
    %7793 = vdwg.mxu0
    %7794 = vmatpush.bf16.msra.mxu0 %v5124
    %7795 = vmatpush.bf16.msra.mxu0 %v5116
    %7796 = vmatpush.bf16.msra.mxu0 %v5108
    %7797 = vmatpush.bf16.msra.mxu0 %v5100
    %7798 = vmatpush.bf16.msra.mxu0 %v5092
    %7799 = vmatpush.bf16.msra.mxu0 %v5084
    %7800 = vmatpush.bf16.msra.mxu0 %v5076
    %7801 = vmatpush.bf16.msra.mxu0 %v5068
    %7802 = vmatmul.bf16.gmra.mxu0 %v492
    %v7803 = vpop.f32.mrf.mxu0
    %v7804 = vadd.f32 %v7791, %v7803
    %v7805 = vpop.f32.mrf.mxu0
    %7806 = vdwg.mxu0
    %7807 = vmatpush.bf16.msra.mxu0 %v5188
    %7808 = vmatpush.bf16.msra.mxu0 %v5180
    %7809 = vmatpush.bf16.msra.mxu0 %v5172
    %7810 = vmatpush.bf16.msra.mxu0 %v5164
    %7811 = vmatpush.bf16.msra.mxu0 %v5156
    %7812 = vmatpush.bf16.msra.mxu0 %v5148
    %7813 = vmatpush.bf16.msra.mxu0 %v5140
    %7814 = vmatpush.bf16.msra.mxu0 %v5132
    %7815 = vmatmul.bf16.gmra.mxu0 %v493
    %v7816 = vpop.f32.mrf.mxu0
    %v7817 = vadd.f32 %v7804, %v7816
    %v7818 = vpop.f32.mrf.mxu0
    %7819 = vdwg.mxu0
    %7820 = vmatpush.bf16.msra.mxu0 %v5252
    %7821 = vmatpush.bf16.msra.mxu0 %v5244
    %7822 = vmatpush.bf16.msra.mxu0 %v5236
    %7823 = vmatpush.bf16.msra.mxu0 %v5228
    %7824 = vmatpush.bf16.msra.mxu0 %v5220
    %7825 = vmatpush.bf16.msra.mxu0 %v5212
    %7826 = vmatpush.bf16.msra.mxu0 %v5204
    %7827 = vmatpush.bf16.msra.mxu0 %v5196
    %7828 = vmatmul.bf16.gmra.mxu0 %v494
    %v7829 = vpop.f32.mrf.mxu0
    %v7830 = vadd.f32 %v7817, %v7829
    %v7831 = vpop.f32.mrf.mxu0
    %7832 = vdwg.mxu0
    %7833 = vmatpush.bf16.msra.mxu0 %v5316
    %7834 = vmatpush.bf16.msra.mxu0 %v5308
    %7835 = vmatpush.bf16.msra.mxu0 %v5300
    %7836 = vmatpush.bf16.msra.mxu0 %v5292
    %7837 = vmatpush.bf16.msra.mxu0 %v5284
    %7838 = vmatpush.bf16.msra.mxu0 %v5276
    %7839 = vmatpush.bf16.msra.mxu0 %v5268
    %7840 = vmatpush.bf16.msra.mxu0 %v5260
    %7841 = vmatmul.bf16.gmra.mxu0 %v495
    %v7842 = vpop.f32.mrf.mxu0
    %v7843 = vadd.f32 %v7830, %v7842
    %v7844 = vpop.f32.mrf.mxu0
    %7845 = vdwg.mxu0
    %7846 = vmatpush.bf16.msra.mxu0 %v5380
    %7847 = vmatpush.bf16.msra.mxu0 %v5372
    %7848 = vmatpush.bf16.msra.mxu0 %v5364
    %7849 = vmatpush.bf16.msra.mxu0 %v5356
    %7850 = vmatpush.bf16.msra.mxu0 %v5348
    %7851 = vmatpush.bf16.msra.mxu0 %v5340
    %7852 = vmatpush.bf16.msra.mxu0 %v5332
    %7853 = vmatpush.bf16.msra.mxu0 %v5324
    %7854 = vmatmul.bf16.gmra.mxu0 %v496
    %v7855 = vpop.f32.mrf.mxu0
    %v7856 = vadd.f32 %v7843, %v7855
    %v7857 = vpop.f32.mrf.mxu0
    %7858 = vdwg.mxu0
    %7859 = vmatpush.bf16.msra.mxu0 %v5444
    %7860 = vmatpush.bf16.msra.mxu0 %v5436
    %7861 = vmatpush.bf16.msra.mxu0 %v5428
    %7862 = vmatpush.bf16.msra.mxu0 %v5420
    %7863 = vmatpush.bf16.msra.mxu0 %v5412
    %7864 = vmatpush.bf16.msra.mxu0 %v5404
    %7865 = vmatpush.bf16.msra.mxu0 %v5396
    %7866 = vmatpush.bf16.msra.mxu0 %v5388
    %7867 = vmatmul.bf16.gmra.mxu0 %v497
    %v7868 = vpop.f32.mrf.mxu0
    %v7869 = vadd.f32 %v7856, %v7868
    %v7870 = vpop.f32.mrf.mxu0
    %7871 = vdwg.mxu0
    %7872 = vmatpush.bf16.msra.mxu0 %v5508
    %7873 = vmatpush.bf16.msra.mxu0 %v5500
    %7874 = vmatpush.bf16.msra.mxu0 %v5492
    %7875 = vmatpush.bf16.msra.mxu0 %v5484
    %7876 = vmatpush.bf16.msra.mxu0 %v5476
    %7877 = vmatpush.bf16.msra.mxu0 %v5468
    %7878 = vmatpush.bf16.msra.mxu0 %v5460
    %7879 = vmatpush.bf16.msra.mxu0 %v5452
    %7880 = vmatmul.bf16.gmra.mxu0 %v498
    %v7881 = vpop.f32.mrf.mxu0
    %v7882 = vadd.f32 %v7869, %v7881
    %v7883 = vpop.f32.mrf.mxu0
    %7884 = vdwg.mxu0
    %7885 = vmatpush.bf16.msra.mxu0 %v5572
    %7886 = vmatpush.bf16.msra.mxu0 %v5564
    %7887 = vmatpush.bf16.msra.mxu0 %v5556
    %7888 = vmatpush.bf16.msra.mxu0 %v5548
    %7889 = vmatpush.bf16.msra.mxu0 %v5540
    %7890 = vmatpush.bf16.msra.mxu0 %v5532
    %7891 = vmatpush.bf16.msra.mxu0 %v5524
    %7892 = vmatpush.bf16.msra.mxu0 %v5516
    %7893 = vmatmul.bf16.gmra.mxu0 %v499
    %v7894 = vpop.f32.mrf.mxu0
    %v7895 = vadd.f32 %v7882, %v7894
    %v7896 = vpop.f32.mrf.mxu0
    %7897 = vdwg.mxu0
    %7898 = vmatpush.bf16.msra.mxu0 %v5636
    %7899 = vmatpush.bf16.msra.mxu0 %v5628
    %7900 = vmatpush.bf16.msra.mxu0 %v5620
    %7901 = vmatpush.bf16.msra.mxu0 %v5612
    %7902 = vmatpush.bf16.msra.mxu0 %v5604
    %7903 = vmatpush.bf16.msra.mxu0 %v5596
    %7904 = vmatpush.bf16.msra.mxu0 %v5588
    %7905 = vmatpush.bf16.msra.mxu0 %v5580
    %7906 = vmatmul.bf16.gmra.mxu0 %v500
    %v7907 = vpop.f32.mrf.mxu0
    %v7908 = vadd.f32 %v7895, %v7907
    %v7909 = vpop.f32.mrf.mxu0
    %7910 = vdwg.mxu0
    %7911 = vmatpush.bf16.msra.mxu0 %v4677
    %7912 = vmatpush.bf16.msra.mxu0 %v4669
    %7913 = vmatpush.bf16.msra.mxu0 %v4661
    %7914 = vmatpush.bf16.msra.mxu0 %v4653
    %7915 = vmatpush.bf16.msra.mxu0 %v4645
    %7916 = vmatpush.bf16.msra.mxu0 %v4637
    %7917 = vmatpush.bf16.msra.mxu0 %v4629
    %7918 = vmatpush.bf16.msra.mxu0 %v4621
    %7919 = vmatmul.bf16.gmra.mxu0 %v485
    %v7920 = vpop.f32.mrf.mxu0
    %v7921 = vadd.f32 %v1533, %v7920
    %v7922 = vpop.f32.mrf.mxu0
    %7923 = vdwg.mxu0
    %7924 = vmatpush.bf16.msra.mxu0 %v4741
    %7925 = vmatpush.bf16.msra.mxu0 %v4733
    %7926 = vmatpush.bf16.msra.mxu0 %v4725
    %7927 = vmatpush.bf16.msra.mxu0 %v4717
    %7928 = vmatpush.bf16.msra.mxu0 %v4709
    %7929 = vmatpush.bf16.msra.mxu0 %v4701
    %7930 = vmatpush.bf16.msra.mxu0 %v4693
    %7931 = vmatpush.bf16.msra.mxu0 %v4685
    %7932 = vmatmul.bf16.gmra.mxu0 %v486
    %v7933 = vpop.f32.mrf.mxu0
    %v7934 = vadd.f32 %v7921, %v7933
    %v7935 = vpop.f32.mrf.mxu0
    %7936 = vdwg.mxu0
    %7937 = vmatpush.bf16.msra.mxu0 %v4805
    %7938 = vmatpush.bf16.msra.mxu0 %v4797
    %7939 = vmatpush.bf16.msra.mxu0 %v4789
    %7940 = vmatpush.bf16.msra.mxu0 %v4781
    %7941 = vmatpush.bf16.msra.mxu0 %v4773
    %7942 = vmatpush.bf16.msra.mxu0 %v4765
    %7943 = vmatpush.bf16.msra.mxu0 %v4757
    %7944 = vmatpush.bf16.msra.mxu0 %v4749
    %7945 = vmatmul.bf16.gmra.mxu0 %v487
    %v7946 = vpop.f32.mrf.mxu0
    %v7947 = vadd.f32 %v7934, %v7946
    %v7948 = vpop.f32.mrf.mxu0
    %7949 = vdwg.mxu0
    %7950 = vmatpush.bf16.msra.mxu0 %v4869
    %7951 = vmatpush.bf16.msra.mxu0 %v4861
    %7952 = vmatpush.bf16.msra.mxu0 %v4853
    %7953 = vmatpush.bf16.msra.mxu0 %v4845
    %7954 = vmatpush.bf16.msra.mxu0 %v4837
    %7955 = vmatpush.bf16.msra.mxu0 %v4829
    %7956 = vmatpush.bf16.msra.mxu0 %v4821
    %7957 = vmatpush.bf16.msra.mxu0 %v4813
    %7958 = vmatmul.bf16.gmra.mxu0 %v488
    %v7959 = vpop.f32.mrf.mxu0
    %v7960 = vadd.f32 %v7947, %v7959
    %v7961 = vpop.f32.mrf.mxu0
    %7962 = vdwg.mxu0
    %7963 = vmatpush.bf16.msra.mxu0 %v4933
    %7964 = vmatpush.bf16.msra.mxu0 %v4925
    %7965 = vmatpush.bf16.msra.mxu0 %v4917
    %7966 = vmatpush.bf16.msra.mxu0 %v4909
    %7967 = vmatpush.bf16.msra.mxu0 %v4901
    %7968 = vmatpush.bf16.msra.mxu0 %v4893
    %7969 = vmatpush.bf16.msra.mxu0 %v4885
    %7970 = vmatpush.bf16.msra.mxu0 %v4877
    %7971 = vmatmul.bf16.gmra.mxu0 %v489
    %v7972 = vpop.f32.mrf.mxu0
    %v7973 = vadd.f32 %v7960, %v7972
    %v7974 = vpop.f32.mrf.mxu0
    %7975 = vdwg.mxu0
    %7976 = vmatpush.bf16.msra.mxu0 %v4997
    %7977 = vmatpush.bf16.msra.mxu0 %v4989
    %7978 = vmatpush.bf16.msra.mxu0 %v4981
    %7979 = vmatpush.bf16.msra.mxu0 %v4973
    %7980 = vmatpush.bf16.msra.mxu0 %v4965
    %7981 = vmatpush.bf16.msra.mxu0 %v4957
    %7982 = vmatpush.bf16.msra.mxu0 %v4949
    %7983 = vmatpush.bf16.msra.mxu0 %v4941
    %7984 = vmatmul.bf16.gmra.mxu0 %v490
    %v7985 = vpop.f32.mrf.mxu0
    %v7986 = vadd.f32 %v7973, %v7985
    %v7987 = vpop.f32.mrf.mxu0
    %7988 = vdwg.mxu0
    %7989 = vmatpush.bf16.msra.mxu0 %v5061
    %7990 = vmatpush.bf16.msra.mxu0 %v5053
    %7991 = vmatpush.bf16.msra.mxu0 %v5045
    %7992 = vmatpush.bf16.msra.mxu0 %v5037
    %7993 = vmatpush.bf16.msra.mxu0 %v5029
    %7994 = vmatpush.bf16.msra.mxu0 %v5021
    %7995 = vmatpush.bf16.msra.mxu0 %v5013
    %7996 = vmatpush.bf16.msra.mxu0 %v5005
    %7997 = vmatmul.bf16.gmra.mxu0 %v491
    %v7998 = vpop.f32.mrf.mxu0
    %v7999 = vadd.f32 %v7986, %v7998
    %v8000 = vpop.f32.mrf.mxu0
    %8001 = vdwg.mxu0
    %8002 = vmatpush.bf16.msra.mxu0 %v5125
    %8003 = vmatpush.bf16.msra.mxu0 %v5117
    %8004 = vmatpush.bf16.msra.mxu0 %v5109
    %8005 = vmatpush.bf16.msra.mxu0 %v5101
    %8006 = vmatpush.bf16.msra.mxu0 %v5093
    %8007 = vmatpush.bf16.msra.mxu0 %v5085
    %8008 = vmatpush.bf16.msra.mxu0 %v5077
    %8009 = vmatpush.bf16.msra.mxu0 %v5069
    %8010 = vmatmul.bf16.gmra.mxu0 %v492
    %v8011 = vpop.f32.mrf.mxu0
    %v8012 = vadd.f32 %v7999, %v8011
    %v8013 = vpop.f32.mrf.mxu0
    %8014 = vdwg.mxu0
    %8015 = vmatpush.bf16.msra.mxu0 %v5189
    %8016 = vmatpush.bf16.msra.mxu0 %v5181
    %8017 = vmatpush.bf16.msra.mxu0 %v5173
    %8018 = vmatpush.bf16.msra.mxu0 %v5165
    %8019 = vmatpush.bf16.msra.mxu0 %v5157
    %8020 = vmatpush.bf16.msra.mxu0 %v5149
    %8021 = vmatpush.bf16.msra.mxu0 %v5141
    %8022 = vmatpush.bf16.msra.mxu0 %v5133
    %8023 = vmatmul.bf16.gmra.mxu0 %v493
    %v8024 = vpop.f32.mrf.mxu0
    %v8025 = vadd.f32 %v8012, %v8024
    %v8026 = vpop.f32.mrf.mxu0
    %8027 = vdwg.mxu0
    %8028 = vmatpush.bf16.msra.mxu0 %v5253
    %8029 = vmatpush.bf16.msra.mxu0 %v5245
    %8030 = vmatpush.bf16.msra.mxu0 %v5237
    %8031 = vmatpush.bf16.msra.mxu0 %v5229
    %8032 = vmatpush.bf16.msra.mxu0 %v5221
    %8033 = vmatpush.bf16.msra.mxu0 %v5213
    %8034 = vmatpush.bf16.msra.mxu0 %v5205
    %8035 = vmatpush.bf16.msra.mxu0 %v5197
    %8036 = vmatmul.bf16.gmra.mxu0 %v494
    %v8037 = vpop.f32.mrf.mxu0
    %v8038 = vadd.f32 %v8025, %v8037
    %v8039 = vpop.f32.mrf.mxu0
    %8040 = vdwg.mxu0
    %8041 = vmatpush.bf16.msra.mxu0 %v5317
    %8042 = vmatpush.bf16.msra.mxu0 %v5309
    %8043 = vmatpush.bf16.msra.mxu0 %v5301
    %8044 = vmatpush.bf16.msra.mxu0 %v5293
    %8045 = vmatpush.bf16.msra.mxu0 %v5285
    %8046 = vmatpush.bf16.msra.mxu0 %v5277
    %8047 = vmatpush.bf16.msra.mxu0 %v5269
    %8048 = vmatpush.bf16.msra.mxu0 %v5261
    %8049 = vmatmul.bf16.gmra.mxu0 %v495
    %v8050 = vpop.f32.mrf.mxu0
    %v8051 = vadd.f32 %v8038, %v8050
    %v8052 = vpop.f32.mrf.mxu0
    %8053 = vdwg.mxu0
    %8054 = vmatpush.bf16.msra.mxu0 %v5381
    %8055 = vmatpush.bf16.msra.mxu0 %v5373
    %8056 = vmatpush.bf16.msra.mxu0 %v5365
    %8057 = vmatpush.bf16.msra.mxu0 %v5357
    %8058 = vmatpush.bf16.msra.mxu0 %v5349
    %8059 = vmatpush.bf16.msra.mxu0 %v5341
    %8060 = vmatpush.bf16.msra.mxu0 %v5333
    %8061 = vmatpush.bf16.msra.mxu0 %v5325
    %8062 = vmatmul.bf16.gmra.mxu0 %v496
    %v8063 = vpop.f32.mrf.mxu0
    %v8064 = vadd.f32 %v8051, %v8063
    %v8065 = vpop.f32.mrf.mxu0
    %8066 = vdwg.mxu0
    %8067 = vmatpush.bf16.msra.mxu0 %v5445
    %8068 = vmatpush.bf16.msra.mxu0 %v5437
    %8069 = vmatpush.bf16.msra.mxu0 %v5429
    %8070 = vmatpush.bf16.msra.mxu0 %v5421
    %8071 = vmatpush.bf16.msra.mxu0 %v5413
    %8072 = vmatpush.bf16.msra.mxu0 %v5405
    %8073 = vmatpush.bf16.msra.mxu0 %v5397
    %8074 = vmatpush.bf16.msra.mxu0 %v5389
    %8075 = vmatmul.bf16.gmra.mxu0 %v497
    %v8076 = vpop.f32.mrf.mxu0
    %v8077 = vadd.f32 %v8064, %v8076
    %v8078 = vpop.f32.mrf.mxu0
    %8079 = vdwg.mxu0
    %8080 = vmatpush.bf16.msra.mxu0 %v5509
    %8081 = vmatpush.bf16.msra.mxu0 %v5501
    %8082 = vmatpush.bf16.msra.mxu0 %v5493
    %8083 = vmatpush.bf16.msra.mxu0 %v5485
    %8084 = vmatpush.bf16.msra.mxu0 %v5477
    %8085 = vmatpush.bf16.msra.mxu0 %v5469
    %8086 = vmatpush.bf16.msra.mxu0 %v5461
    %8087 = vmatpush.bf16.msra.mxu0 %v5453
    %8088 = vmatmul.bf16.gmra.mxu0 %v498
    %v8089 = vpop.f32.mrf.mxu0
    %v8090 = vadd.f32 %v8077, %v8089
    %v8091 = vpop.f32.mrf.mxu0
    %8092 = vdwg.mxu0
    %8093 = vmatpush.bf16.msra.mxu0 %v5573
    %8094 = vmatpush.bf16.msra.mxu0 %v5565
    %8095 = vmatpush.bf16.msra.mxu0 %v5557
    %8096 = vmatpush.bf16.msra.mxu0 %v5549
    %8097 = vmatpush.bf16.msra.mxu0 %v5541
    %8098 = vmatpush.bf16.msra.mxu0 %v5533
    %8099 = vmatpush.bf16.msra.mxu0 %v5525
    %8100 = vmatpush.bf16.msra.mxu0 %v5517
    %8101 = vmatmul.bf16.gmra.mxu0 %v499
    %v8102 = vpop.f32.mrf.mxu0
    %v8103 = vadd.f32 %v8090, %v8102
    %v8104 = vpop.f32.mrf.mxu0
    %8105 = vdwg.mxu0
    %8106 = vmatpush.bf16.msra.mxu0 %v5637
    %8107 = vmatpush.bf16.msra.mxu0 %v5629
    %8108 = vmatpush.bf16.msra.mxu0 %v5621
    %8109 = vmatpush.bf16.msra.mxu0 %v5613
    %8110 = vmatpush.bf16.msra.mxu0 %v5605
    %8111 = vmatpush.bf16.msra.mxu0 %v5597
    %8112 = vmatpush.bf16.msra.mxu0 %v5589
    %8113 = vmatpush.bf16.msra.mxu0 %v5581
    %8114 = vmatmul.bf16.gmra.mxu0 %v500
    %v8115 = vpop.f32.mrf.mxu0
    %v8116 = vadd.f32 %v8103, %v8115
    %v8117 = vpop.f32.mrf.mxu0
    %8118 = vdwg.mxu0
    %8119 = vmatpush.bf16.msra.mxu0 %v4678
    %8120 = vmatpush.bf16.msra.mxu0 %v4670
    %8121 = vmatpush.bf16.msra.mxu0 %v4662
    %8122 = vmatpush.bf16.msra.mxu0 %v4654
    %8123 = vmatpush.bf16.msra.mxu0 %v4646
    %8124 = vmatpush.bf16.msra.mxu0 %v4638
    %8125 = vmatpush.bf16.msra.mxu0 %v4630
    %8126 = vmatpush.bf16.msra.mxu0 %v4622
    %8127 = vmatmul.bf16.gmra.mxu0 %v485
    %v8128 = vpop.f32.mrf.mxu0
    %v8129 = vadd.f32 %v1534, %v8128
    %v8130 = vpop.f32.mrf.mxu0
    %8131 = vdwg.mxu0
    %8132 = vmatpush.bf16.msra.mxu0 %v4742
    %8133 = vmatpush.bf16.msra.mxu0 %v4734
    %8134 = vmatpush.bf16.msra.mxu0 %v4726
    %8135 = vmatpush.bf16.msra.mxu0 %v4718
    %8136 = vmatpush.bf16.msra.mxu0 %v4710
    %8137 = vmatpush.bf16.msra.mxu0 %v4702
    %8138 = vmatpush.bf16.msra.mxu0 %v4694
    %8139 = vmatpush.bf16.msra.mxu0 %v4686
    %8140 = vmatmul.bf16.gmra.mxu0 %v486
    %v8141 = vpop.f32.mrf.mxu0
    %v8142 = vadd.f32 %v8129, %v8141
    %v8143 = vpop.f32.mrf.mxu0
    %8144 = vdwg.mxu0
    %8145 = vmatpush.bf16.msra.mxu0 %v4806
    %8146 = vmatpush.bf16.msra.mxu0 %v4798
    %8147 = vmatpush.bf16.msra.mxu0 %v4790
    %8148 = vmatpush.bf16.msra.mxu0 %v4782
    %8149 = vmatpush.bf16.msra.mxu0 %v4774
    %8150 = vmatpush.bf16.msra.mxu0 %v4766
    %8151 = vmatpush.bf16.msra.mxu0 %v4758
    %8152 = vmatpush.bf16.msra.mxu0 %v4750
    %8153 = vmatmul.bf16.gmra.mxu0 %v487
    %v8154 = vpop.f32.mrf.mxu0
    %v8155 = vadd.f32 %v8142, %v8154
    %v8156 = vpop.f32.mrf.mxu0
    %8157 = vdwg.mxu0
    %8158 = vmatpush.bf16.msra.mxu0 %v4870
    %8159 = vmatpush.bf16.msra.mxu0 %v4862
    %8160 = vmatpush.bf16.msra.mxu0 %v4854
    %8161 = vmatpush.bf16.msra.mxu0 %v4846
    %8162 = vmatpush.bf16.msra.mxu0 %v4838
    %8163 = vmatpush.bf16.msra.mxu0 %v4830
    %8164 = vmatpush.bf16.msra.mxu0 %v4822
    %8165 = vmatpush.bf16.msra.mxu0 %v4814
    %8166 = vmatmul.bf16.gmra.mxu0 %v488
    %v8167 = vpop.f32.mrf.mxu0
    %v8168 = vadd.f32 %v8155, %v8167
    %v8169 = vpop.f32.mrf.mxu0
    %8170 = vdwg.mxu0
    %8171 = vmatpush.bf16.msra.mxu0 %v4934
    %8172 = vmatpush.bf16.msra.mxu0 %v4926
    %8173 = vmatpush.bf16.msra.mxu0 %v4918
    %8174 = vmatpush.bf16.msra.mxu0 %v4910
    %8175 = vmatpush.bf16.msra.mxu0 %v4902
    %8176 = vmatpush.bf16.msra.mxu0 %v4894
    %8177 = vmatpush.bf16.msra.mxu0 %v4886
    %8178 = vmatpush.bf16.msra.mxu0 %v4878
    %8179 = vmatmul.bf16.gmra.mxu0 %v489
    %v8180 = vpop.f32.mrf.mxu0
    %v8181 = vadd.f32 %v8168, %v8180
    %v8182 = vpop.f32.mrf.mxu0
    %8183 = vdwg.mxu0
    %8184 = vmatpush.bf16.msra.mxu0 %v4998
    %8185 = vmatpush.bf16.msra.mxu0 %v4990
    %8186 = vmatpush.bf16.msra.mxu0 %v4982
    %8187 = vmatpush.bf16.msra.mxu0 %v4974
    %8188 = vmatpush.bf16.msra.mxu0 %v4966
    %8189 = vmatpush.bf16.msra.mxu0 %v4958
    %8190 = vmatpush.bf16.msra.mxu0 %v4950
    %8191 = vmatpush.bf16.msra.mxu0 %v4942
    %8192 = vmatmul.bf16.gmra.mxu0 %v490
    %v8193 = vpop.f32.mrf.mxu0
    %v8194 = vadd.f32 %v8181, %v8193
    %v8195 = vpop.f32.mrf.mxu0
    %8196 = vdwg.mxu0
    %8197 = vmatpush.bf16.msra.mxu0 %v5062
    %8198 = vmatpush.bf16.msra.mxu0 %v5054
    %8199 = vmatpush.bf16.msra.mxu0 %v5046
    %8200 = vmatpush.bf16.msra.mxu0 %v5038
    %8201 = vmatpush.bf16.msra.mxu0 %v5030
    %8202 = vmatpush.bf16.msra.mxu0 %v5022
    %8203 = vmatpush.bf16.msra.mxu0 %v5014
    %8204 = vmatpush.bf16.msra.mxu0 %v5006
    %8205 = vmatmul.bf16.gmra.mxu0 %v491
    %v8206 = vpop.f32.mrf.mxu0
    %v8207 = vadd.f32 %v8194, %v8206
    %v8208 = vpop.f32.mrf.mxu0
    %8209 = vdwg.mxu0
    %8210 = vmatpush.bf16.msra.mxu0 %v5126
    %8211 = vmatpush.bf16.msra.mxu0 %v5118
    %8212 = vmatpush.bf16.msra.mxu0 %v5110
    %8213 = vmatpush.bf16.msra.mxu0 %v5102
    %8214 = vmatpush.bf16.msra.mxu0 %v5094
    %8215 = vmatpush.bf16.msra.mxu0 %v5086
    %8216 = vmatpush.bf16.msra.mxu0 %v5078
    %8217 = vmatpush.bf16.msra.mxu0 %v5070
    %8218 = vmatmul.bf16.gmra.mxu0 %v492
    %v8219 = vpop.f32.mrf.mxu0
    %v8220 = vadd.f32 %v8207, %v8219
    %v8221 = vpop.f32.mrf.mxu0
    %8222 = vdwg.mxu0
    %8223 = vmatpush.bf16.msra.mxu0 %v5190
    %8224 = vmatpush.bf16.msra.mxu0 %v5182
    %8225 = vmatpush.bf16.msra.mxu0 %v5174
    %8226 = vmatpush.bf16.msra.mxu0 %v5166
    %8227 = vmatpush.bf16.msra.mxu0 %v5158
    %8228 = vmatpush.bf16.msra.mxu0 %v5150
    %8229 = vmatpush.bf16.msra.mxu0 %v5142
    %8230 = vmatpush.bf16.msra.mxu0 %v5134
    %8231 = vmatmul.bf16.gmra.mxu0 %v493
    %v8232 = vpop.f32.mrf.mxu0
    %v8233 = vadd.f32 %v8220, %v8232
    %v8234 = vpop.f32.mrf.mxu0
    %8235 = vdwg.mxu0
    %8236 = vmatpush.bf16.msra.mxu0 %v5254
    %8237 = vmatpush.bf16.msra.mxu0 %v5246
    %8238 = vmatpush.bf16.msra.mxu0 %v5238
    %8239 = vmatpush.bf16.msra.mxu0 %v5230
    %8240 = vmatpush.bf16.msra.mxu0 %v5222
    %8241 = vmatpush.bf16.msra.mxu0 %v5214
    %8242 = vmatpush.bf16.msra.mxu0 %v5206
    %8243 = vmatpush.bf16.msra.mxu0 %v5198
    %8244 = vmatmul.bf16.gmra.mxu0 %v494
    %v8245 = vpop.f32.mrf.mxu0
    %v8246 = vadd.f32 %v8233, %v8245
    %v8247 = vpop.f32.mrf.mxu0
    %8248 = vdwg.mxu0
    %8249 = vmatpush.bf16.msra.mxu0 %v5318
    %8250 = vmatpush.bf16.msra.mxu0 %v5310
    %8251 = vmatpush.bf16.msra.mxu0 %v5302
    %8252 = vmatpush.bf16.msra.mxu0 %v5294
    %8253 = vmatpush.bf16.msra.mxu0 %v5286
    %8254 = vmatpush.bf16.msra.mxu0 %v5278
    %8255 = vmatpush.bf16.msra.mxu0 %v5270
    %8256 = vmatpush.bf16.msra.mxu0 %v5262
    %8257 = vmatmul.bf16.gmra.mxu0 %v495
    %v8258 = vpop.f32.mrf.mxu0
    %v8259 = vadd.f32 %v8246, %v8258
    %v8260 = vpop.f32.mrf.mxu0
    %8261 = vdwg.mxu0
    %8262 = vmatpush.bf16.msra.mxu0 %v5382
    %8263 = vmatpush.bf16.msra.mxu0 %v5374
    %8264 = vmatpush.bf16.msra.mxu0 %v5366
    %8265 = vmatpush.bf16.msra.mxu0 %v5358
    %8266 = vmatpush.bf16.msra.mxu0 %v5350
    %8267 = vmatpush.bf16.msra.mxu0 %v5342
    %8268 = vmatpush.bf16.msra.mxu0 %v5334
    %8269 = vmatpush.bf16.msra.mxu0 %v5326
    %8270 = vmatmul.bf16.gmra.mxu0 %v496
    %v8271 = vpop.f32.mrf.mxu0
    %v8272 = vadd.f32 %v8259, %v8271
    %v8273 = vpop.f32.mrf.mxu0
    %8274 = vdwg.mxu0
    %8275 = vmatpush.bf16.msra.mxu0 %v5446
    %8276 = vmatpush.bf16.msra.mxu0 %v5438
    %8277 = vmatpush.bf16.msra.mxu0 %v5430
    %8278 = vmatpush.bf16.msra.mxu0 %v5422
    %8279 = vmatpush.bf16.msra.mxu0 %v5414
    %8280 = vmatpush.bf16.msra.mxu0 %v5406
    %8281 = vmatpush.bf16.msra.mxu0 %v5398
    %8282 = vmatpush.bf16.msra.mxu0 %v5390
    %8283 = vmatmul.bf16.gmra.mxu0 %v497
    %v8284 = vpop.f32.mrf.mxu0
    %v8285 = vadd.f32 %v8272, %v8284
    %v8286 = vpop.f32.mrf.mxu0
    %8287 = vdwg.mxu0
    %8288 = vmatpush.bf16.msra.mxu0 %v5510
    %8289 = vmatpush.bf16.msra.mxu0 %v5502
    %8290 = vmatpush.bf16.msra.mxu0 %v5494
    %8291 = vmatpush.bf16.msra.mxu0 %v5486
    %8292 = vmatpush.bf16.msra.mxu0 %v5478
    %8293 = vmatpush.bf16.msra.mxu0 %v5470
    %8294 = vmatpush.bf16.msra.mxu0 %v5462
    %8295 = vmatpush.bf16.msra.mxu0 %v5454
    %8296 = vmatmul.bf16.gmra.mxu0 %v498
    %v8297 = vpop.f32.mrf.mxu0
    %v8298 = vadd.f32 %v8285, %v8297
    %v8299 = vpop.f32.mrf.mxu0
    %8300 = vdwg.mxu0
    %8301 = vmatpush.bf16.msra.mxu0 %v5574
    %8302 = vmatpush.bf16.msra.mxu0 %v5566
    %8303 = vmatpush.bf16.msra.mxu0 %v5558
    %8304 = vmatpush.bf16.msra.mxu0 %v5550
    %8305 = vmatpush.bf16.msra.mxu0 %v5542
    %8306 = vmatpush.bf16.msra.mxu0 %v5534
    %8307 = vmatpush.bf16.msra.mxu0 %v5526
    %8308 = vmatpush.bf16.msra.mxu0 %v5518
    %8309 = vmatmul.bf16.gmra.mxu0 %v499
    %v8310 = vpop.f32.mrf.mxu0
    %v8311 = vadd.f32 %v8298, %v8310
    %v8312 = vpop.f32.mrf.mxu0
    %8313 = vdwg.mxu0
    %8314 = vmatpush.bf16.msra.mxu0 %v5638
    %8315 = vmatpush.bf16.msra.mxu0 %v5630
    %8316 = vmatpush.bf16.msra.mxu0 %v5622
    %8317 = vmatpush.bf16.msra.mxu0 %v5614
    %8318 = vmatpush.bf16.msra.mxu0 %v5606
    %8319 = vmatpush.bf16.msra.mxu0 %v5598
    %8320 = vmatpush.bf16.msra.mxu0 %v5590
    %8321 = vmatpush.bf16.msra.mxu0 %v5582
    %8322 = vmatmul.bf16.gmra.mxu0 %v500
    %v8323 = vpop.f32.mrf.mxu0
    %v8324 = vadd.f32 %v8311, %v8323
    %v8325 = vpop.f32.mrf.mxu0
    %8326 = vdwg.mxu0
    %v8327 = vmax.f32 %v6868, 0.0
    %v8328 = vmax.f32 %v7076, 0.0
    %v8329 = vmax.f32 %v7284, 0.0
    %v8330 = vmax.f32 %v7492, 0.0
    %v8331 = vmax.f32 %v7700, 0.0
    %v8332 = vmax.f32 %v7908, 0.0
    %v8333 = vmax.f32 %v8116, 0.0
    %v8334 = vmax.f32 %v8324, 0.0
    %v8335 = vpack.c.bf16 %v8327, %v8327
    %v8336 = vpack.c.bf16 %v8328, %v8328
    %v8337 = vpack.c.bf16 %v8329, %v8329
    %v8338 = vpack.c.bf16 %v8330, %v8330
    %v8339 = vpack.c.bf16 %v8331, %v8331
    %v8340 = vpack.c.bf16 %v8332, %v8332
    %v8341 = vpack.c.bf16 %v8333, %v8333
    %v8342 = vpack.c.bf16 %v8334, %v8334
    %v8343 = vld [vmem:[%s5] sm:$0xf]
    %v8344 = vld [vmem:[%s5 + $0x4] sm:$0xf]
    %v8345 = vld [vmem:[%s5 + $0x8] sm:$0xf]
    %v8346 = vld [vmem:[%s5 + $0xc] sm:$0xf]
    %v8347 = vld [vmem:[%s5 + $0x10] sm:$0xf]
    %v8348 = vld [vmem:[%s5 + $0x14] sm:$0xf]
    %v8349 = vld [vmem:[%s5 + $0x18] sm:$0xf]
    %v8350 = vld [vmem:[%s5 + $0x1c] sm:$0xf]
    %v8351 = vld [vmem:[%s5 + $0x20] sm:$0xf]
    %v8352 = vld [vmem:[%s5 + $0x24] sm:$0xf]
    %v8353 = vld [vmem:[%s5 + $0x28] sm:$0xf]
    %v8354 = vld [vmem:[%s5 + $0x2c] sm:$0xf]
    %v8355 = vld [vmem:[%s5 + $0x30] sm:$0xf]
    %v8356 = vld [vmem:[%s5 + $0x34] sm:$0xf]
    %v8357 = vld [vmem:[%s5 + $0x38] sm:$0xf]
    %v8358 = vld [vmem:[%s5 + $0x3c] sm:$0xf]
    %v8359 = vld [vmem:[%s5 + $0x40] sm:$0xf]
    %v8360 = vld [vmem:[%s5 + $0x44] sm:$0xf]
    %v8361 = vld [vmem:[%s5 + $0x48] sm:$0xf]
    %v8362 = vld [vmem:[%s5 + $0x4c] sm:$0xf]
    %v8363 = vld [vmem:[%s5 + $0x50] sm:$0xf]
    %v8364 = vld [vmem:[%s5 + $0x54] sm:$0xf]
    %v8365 = vld [vmem:[%s5 + $0x58] sm:$0xf]
    %v8366 = vld [vmem:[%s5 + $0x5c] sm:$0xf]
    %v8367 = vld [vmem:[%s5 + $0x60] sm:$0xf]
    %v8368 = vld [vmem:[%s5 + $0x64] sm:$0xf]
    %v8369 = vld [vmem:[%s5 + $0x68] sm:$0xf]
    %v8370 = vld [vmem:[%s5 + $0x6c] sm:$0xf]
    %v8371 = vld [vmem:[%s5 + $0x70] sm:$0xf]
    %v8372 = vld [vmem:[%s5 + $0x74] sm:$0xf]
    %v8373 = vld [vmem:[%s5 + $0x78] sm:$0xf]
    %v8374 = vld [vmem:[%s5 + $0x7c] sm:$0xf]
    %v8375 = vld [vmem:[%s5 + $0x80] sm:$0xf]
    %v8376 = vld [vmem:[%s5 + $0x84] sm:$0xf]
    %v8377 = vld [vmem:[%s5 + $0x88] sm:$0xf]
    %v8378 = vld [vmem:[%s5 + $0x8c] sm:$0xf]
    %v8379 = vld [vmem:[%s5 + $0x90] sm:$0xf]
    %v8380 = vld [vmem:[%s5 + $0x94] sm:$0xf]
    %v8381 = vld [vmem:[%s5 + $0x98] sm:$0xf]
    %v8382 = vld [vmem:[%s5 + $0x9c] sm:$0xf]
    %v8383 = vld [vmem:[%s5 + $0xa0] sm:$0xf]
    %v8384 = vld [vmem:[%s5 + $0xa4] sm:$0xf]
    %v8385 = vld [vmem:[%s5 + $0xa8] sm:$0xf]
    %v8386 = vld [vmem:[%s5 + $0xac] sm:$0xf]
    %v8387 = vld [vmem:[%s5 + $0xb0] sm:$0xf]
    %v8388 = vld [vmem:[%s5 + $0xb4] sm:$0xf]
    %v8389 = vld [vmem:[%s5 + $0xb8] sm:$0xf]
    %v8390 = vld [vmem:[%s5 + $0xbc] sm:$0xf]
    %v8391 = vld [vmem:[%s5 + $0xc0] sm:$0xf]
    %v8392 = vld [vmem:[%s5 + $0xc4] sm:$0xf]
    %v8393 = vld [vmem:[%s5 + $0xc8] sm:$0xf]
    %v8394 = vld [vmem:[%s5 + $0xcc] sm:$0xf]
    %v8395 = vld [vmem:[%s5 + $0xd0] sm:$0xf]
    %v8396 = vld [vmem:[%s5 + $0xd4] sm:$0xf]
    %v8397 = vld [vmem:[%s5 + $0xd8] sm:$0xf]
    %v8398 = vld [vmem:[%s5 + $0xdc] sm:$0xf]
    %v8399 = vld [vmem:[%s5 + $0xe0] sm:$0xf]
    %v8400 = vld [vmem:[%s5 + $0xe4] sm:$0xf]
    %v8401 = vld [vmem:[%s5 + $0xe8] sm:$0xf]
    %v8402 = vld [vmem:[%s5 + $0xec] sm:$0xf]
    %v8403 = vld [vmem:[%s5 + $0xf0] sm:$0xf]
    %v8404 = vld [vmem:[%s5 + $0xf4] sm:$0xf]
    %v8405 = vld [vmem:[%s5 + $0xf8] sm:$0xf]
    %v8406 = vld [vmem:[%s5 + $0xfc] sm:$0xf]
    %v8407 = vld [vmem:[%s5 + $0x100] sm:$0xf]
    %v8408 = vld [vmem:[%s5 + $0x104] sm:$0xf]
    %v8409 = vld [vmem:[%s5 + $0x108] sm:$0xf]
    %v8410 = vld [vmem:[%s5 + $0x10c] sm:$0xf]
    %v8411 = vld [vmem:[%s5 + $0x110] sm:$0xf]
    %v8412 = vld [vmem:[%s5 + $0x114] sm:$0xf]
    %v8413 = vld [vmem:[%s5 + $0x118] sm:$0xf]
    %v8414 = vld [vmem:[%s5 + $0x11c] sm:$0xf]
    %v8415 = vld [vmem:[%s5 + $0x120] sm:$0xf]
    %v8416 = vld [vmem:[%s5 + $0x124] sm:$0xf]
    %v8417 = vld [vmem:[%s5 + $0x128] sm:$0xf]
    %v8418 = vld [vmem:[%s5 + $0x12c] sm:$0xf]
    %v8419 = vld [vmem:[%s5 + $0x130] sm:$0xf]
    %v8420 = vld [vmem:[%s5 + $0x134] sm:$0xf]
    %v8421 = vld [vmem:[%s5 + $0x138] sm:$0xf]
    %v8422 = vld [vmem:[%s5 + $0x13c] sm:$0xf]
    %v8423 = vld [vmem:[%s5 + $0x140] sm:$0xf]
    %v8424 = vld [vmem:[%s5 + $0x144] sm:$0xf]
    %v8425 = vld [vmem:[%s5 + $0x148] sm:$0xf]
    %v8426 = vld [vmem:[%s5 + $0x14c] sm:$0xf]
    %v8427 = vld [vmem:[%s5 + $0x150] sm:$0xf]
    %v8428 = vld [vmem:[%s5 + $0x154] sm:$0xf]
    %v8429 = vld [vmem:[%s5 + $0x158] sm:$0xf]
    %v8430 = vld [vmem:[%s5 + $0x15c] sm:$0xf]
    %v8431 = vld [vmem:[%s5 + $0x160] sm:$0xf]
    %v8432 = vld [vmem:[%s5 + $0x164] sm:$0xf]
    %v8433 = vld [vmem:[%s5 + $0x168] sm:$0xf]
    %v8434 = vld [vmem:[%s5 + $0x16c] sm:$0xf]
    %v8435 = vld [vmem:[%s5 + $0x170] sm:$0xf]
    %v8436 = vld [vmem:[%s5 + $0x174] sm:$0xf]
    %v8437 = vld [vmem:[%s5 + $0x178] sm:$0xf]
    %v8438 = vld [vmem:[%s5 + $0x17c] sm:$0xf]
    %v8439 = vld [vmem:[%s5 + $0x180] sm:$0xf]
    %v8440 = vld [vmem:[%s5 + $0x184] sm:$0xf]
    %v8441 = vld [vmem:[%s5 + $0x188] sm:$0xf]
    %v8442 = vld [vmem:[%s5 + $0x18c] sm:$0xf]
    %v8443 = vld [vmem:[%s5 + $0x190] sm:$0xf]
    %v8444 = vld [vmem:[%s5 + $0x194] sm:$0xf]
    %v8445 = vld [vmem:[%s5 + $0x198] sm:$0xf]
    %v8446 = vld [vmem:[%s5 + $0x19c] sm:$0xf]
    %v8447 = vld [vmem:[%s5 + $0x1a0] sm:$0xf]
    %v8448 = vld [vmem:[%s5 + $0x1a4] sm:$0xf]
    %v8449 = vld [vmem:[%s5 + $0x1a8] sm:$0xf]
    %v8450 = vld [vmem:[%s5 + $0x1ac] sm:$0xf]
    %v8451 = vld [vmem:[%s5 + $0x1b0] sm:$0xf]
    %v8452 = vld [vmem:[%s5 + $0x1b4] sm:$0xf]
    %v8453 = vld [vmem:[%s5 + $0x1b8] sm:$0xf]
    %v8454 = vld [vmem:[%s5 + $0x1bc] sm:$0xf]
    %v8455 = vld [vmem:[%s5 + $0x1c0] sm:$0xf]
    %v8456 = vld [vmem:[%s5 + $0x1c4] sm:$0xf]
    %v8457 = vld [vmem:[%s5 + $0x1c8] sm:$0xf]
    %v8458 = vld [vmem:[%s5 + $0x1cc] sm:$0xf]
    %v8459 = vld [vmem:[%s5 + $0x1d0] sm:$0xf]
    %v8460 = vld [vmem:[%s5 + $0x1d4] sm:$0xf]
    %v8461 = vld [vmem:[%s5 + $0x1d8] sm:$0xf]
    %v8462 = vld [vmem:[%s5 + $0x1dc] sm:$0xf]
    %v8463 = vld [vmem:[%s5 + $0x1e0] sm:$0xf]
    %v8464 = vld [vmem:[%s5 + $0x1e4] sm:$0xf]
    %v8465 = vld [vmem:[%s5 + $0x1e8] sm:$0xf]
    %v8466 = vld [vmem:[%s5 + $0x1ec] sm:$0xf]
    %v8467 = vld [vmem:[%s5 + $0x1f0] sm:$0xf]
    %v8468 = vld [vmem:[%s5 + $0x1f4] sm:$0xf]
    %v8469 = vld [vmem:[%s5 + $0x1f8] sm:$0xf]
    %v8470 = vld [vmem:[%s5 + $0x1fc] sm:$0xf]
    %v8471 = vld [vmem:[%s6] sm:$0x1]
    %v8473 = vperm.slane %v8471, 0
    %v8603 = vunpack.c.l.b16 %v8343
    %v8604 = vunpack.c.l.b16 %v8344
    %v8605 = vunpack.c.l.b16 %v8345
    %v8606 = vunpack.c.l.b16 %v8346
    %v8607 = vunpack.c.l.b16 %v8347
    %v8608 = vunpack.c.l.b16 %v8348
    %v8609 = vunpack.c.l.b16 %v8349
    %v8610 = vunpack.c.l.b16 %v8350
    %v8611 = vunpack.c.l.b16 %v8351
    %v8612 = vunpack.c.l.b16 %v8352
    %v8613 = vunpack.c.l.b16 %v8353
    %v8614 = vunpack.c.l.b16 %v8354
    %v8615 = vunpack.c.l.b16 %v8355
    %v8616 = vunpack.c.l.b16 %v8356
    %v8617 = vunpack.c.l.b16 %v8357
    %v8618 = vunpack.c.l.b16 %v8358
    %v8619 = vunpack.c.l.b16 %v8359
    %v8620 = vunpack.c.l.b16 %v8360
    %v8621 = vunpack.c.l.b16 %v8361
    %v8622 = vunpack.c.l.b16 %v8362
    %v8623 = vunpack.c.l.b16 %v8363
    %v8624 = vunpack.c.l.b16 %v8364
    %v8625 = vunpack.c.l.b16 %v8365
    %v8626 = vunpack.c.l.b16 %v8366
    %v8627 = vunpack.c.l.b16 %v8367
    %v8628 = vunpack.c.l.b16 %v8368
    %v8629 = vunpack.c.l.b16 %v8369
    %v8630 = vunpack.c.l.b16 %v8370
    %v8631 = vunpack.c.l.b16 %v8371
    %v8632 = vunpack.c.l.b16 %v8372
    %v8633 = vunpack.c.l.b16 %v8373
    %v8634 = vunpack.c.l.b16 %v8374
    %v8635 = vunpack.c.l.b16 %v8375
    %v8636 = vunpack.c.l.b16 %v8376
    %v8637 = vunpack.c.l.b16 %v8377
    %v8638 = vunpack.c.l.b16 %v8378
    %v8639 = vunpack.c.l.b16 %v8379
    %v8640 = vunpack.c.l.b16 %v8380
    %v8641 = vunpack.c.l.b16 %v8381
    %v8642 = vunpack.c.l.b16 %v8382
    %v8643 = vunpack.c.l.b16 %v8383
    %v8644 = vunpack.c.l.b16 %v8384
    %v8645 = vunpack.c.l.b16 %v8385
    %v8646 = vunpack.c.l.b16 %v8386
    %v8647 = vunpack.c.l.b16 %v8387
    %v8648 = vunpack.c.l.b16 %v8388
    %v8649 = vunpack.c.l.b16 %v8389
    %v8650 = vunpack.c.l.b16 %v8390
    %v8651 = vunpack.c.l.b16 %v8391
    %v8652 = vunpack.c.l.b16 %v8392
    %v8653 = vunpack.c.l.b16 %v8393
    %v8654 = vunpack.c.l.b16 %v8394
    %v8655 = vunpack.c.l.b16 %v8395
    %v8656 = vunpack.c.l.b16 %v8396
    %v8657 = vunpack.c.l.b16 %v8397
    %v8658 = vunpack.c.l.b16 %v8398
    %v8659 = vunpack.c.l.b16 %v8399
    %v8660 = vunpack.c.l.b16 %v8400
    %v8661 = vunpack.c.l.b16 %v8401
    %v8662 = vunpack.c.l.b16 %v8402
    %v8663 = vunpack.c.l.b16 %v8403
    %v8664 = vunpack.c.l.b16 %v8404
    %v8665 = vunpack.c.l.b16 %v8405
    %v8666 = vunpack.c.l.b16 %v8406
    %v8667 = vunpack.c.l.b16 %v8407
    %v8668 = vunpack.c.l.b16 %v8408
    %v8669 = vunpack.c.l.b16 %v8409
    %v8670 = vunpack.c.l.b16 %v8410
    %v8671 = vunpack.c.l.b16 %v8411
    %v8672 = vunpack.c.l.b16 %v8412
    %v8673 = vunpack.c.l.b16 %v8413
    %v8674 = vunpack.c.l.b16 %v8414
    %v8675 = vunpack.c.l.b16 %v8415
    %v8676 = vunpack.c.l.b16 %v8416
    %v8677 = vunpack.c.l.b16 %v8417
    %v8678 = vunpack.c.l.b16 %v8418
    %v8679 = vunpack.c.l.b16 %v8419
    %v8680 = vunpack.c.l.b16 %v8420
    %v8681 = vunpack.c.l.b16 %v8421
    %v8682 = vunpack.c.l.b16 %v8422
    %v8683 = vunpack.c.l.b16 %v8423
    %v8684 = vunpack.c.l.b16 %v8424
    %v8685 = vunpack.c.l.b16 %v8425
    %v8686 = vunpack.c.l.b16 %v8426
    %v8687 = vunpack.c.l.b16 %v8427
    %v8688 = vunpack.c.l.b16 %v8428
    %v8689 = vunpack.c.l.b16 %v8429
    %v8690 = vunpack.c.l.b16 %v8430
    %v8691 = vunpack.c.l.b16 %v8431
    %v8692 = vunpack.c.l.b16 %v8432
    %v8693 = vunpack.c.l.b16 %v8433
    %v8694 = vunpack.c.l.b16 %v8434
    %v8695 = vunpack.c.l.b16 %v8435
    %v8696 = vunpack.c.l.b16 %v8436
    %v8697 = vunpack.c.l.b16 %v8437
    %v8698 = vunpack.c.l.b16 %v8438
    %v8699 = vunpack.c.l.b16 %v8439
    %v8700 = vunpack.c.l.b16 %v8440
    %v8701 = vunpack.c.l.b16 %v8441
    %v8702 = vunpack.c.l.b16 %v8442
    %v8703 = vunpack.c.l.b16 %v8443
    %v8704 = vunpack.c.l.b16 %v8444
    %v8705 = vunpack.c.l.b16 %v8445
    %v8706 = vunpack.c.l.b16 %v8446
    %v8707 = vunpack.c.l.b16 %v8447
    %v8708 = vunpack.c.l.b16 %v8448
    %v8709 = vunpack.c.l.b16 %v8449
    %v8710 = vunpack.c.l.b16 %v8450
    %v8711 = vunpack.c.l.b16 %v8451
    %v8712 = vunpack.c.l.b16 %v8452
    %v8713 = vunpack.c.l.b16 %v8453
    %v8714 = vunpack.c.l.b16 %v8454
    %v8715 = vunpack.c.l.b16 %v8455
    %v8716 = vunpack.c.l.b16 %v8456
    %v8717 = vunpack.c.l.b16 %v8457
    %v8718 = vunpack.c.l.b16 %v8458
    %v8719 = vunpack.c.l.b16 %v8459
    %v8720 = vunpack.c.l.b16 %v8460
    %v8721 = vunpack.c.l.b16 %v8461
    %v8722 = vunpack.c.l.b16 %v8462
    %v8723 = vunpack.c.l.b16 %v8463
    %v8724 = vunpack.c.l.b16 %v8464
    %v8725 = vunpack.c.l.b16 %v8465
    %v8726 = vunpack.c.l.b16 %v8466
    %v8727 = vunpack.c.l.b16 %v8467
    %v8728 = vunpack.c.l.b16 %v8468
    %v8729 = vunpack.c.l.b16 %v8469
    %v8730 = vunpack.c.l.b16 %v8470
    %v8731 = vpack.c.b16 %v8604, %v8603
    %v8732 = vpack.c.b16 %v8606, %v8605
    %v8733 = vpack.c.b16 %v8608, %v8607
    %v8734 = vpack.c.b16 %v8610, %v8609
    %v8735 = vpack.c.b16 %v8612, %v8611
    %v8736 = vpack.c.b16 %v8614, %v8613
    %v8737 = vpack.c.b16 %v8616, %v8615
    %v8738 = vpack.c.b16 %v8618, %v8617
    %v8739 = vpack.c.b16 %v8620, %v8619
    %v8740 = vpack.c.b16 %v8622, %v8621
    %v8741 = vpack.c.b16 %v8624, %v8623
    %v8742 = vpack.c.b16 %v8626, %v8625
    %v8743 = vpack.c.b16 %v8628, %v8627
    %v8744 = vpack.c.b16 %v8630, %v8629
    %v8745 = vpack.c.b16 %v8632, %v8631
    %v8746 = vpack.c.b16 %v8634, %v8633
    %v8747 = vpack.c.b16 %v8636, %v8635
    %v8748 = vpack.c.b16 %v8638, %v8637
    %v8749 = vpack.c.b16 %v8640, %v8639
    %v8750 = vpack.c.b16 %v8642, %v8641
    %v8751 = vpack.c.b16 %v8644, %v8643
    %v8752 = vpack.c.b16 %v8646, %v8645
    %v8753 = vpack.c.b16 %v8648, %v8647
    %v8754 = vpack.c.b16 %v8650, %v8649
    %v8755 = vpack.c.b16 %v8652, %v8651
    %v8756 = vpack.c.b16 %v8654, %v8653
    %v8757 = vpack.c.b16 %v8656, %v8655
    %v8758 = vpack.c.b16 %v8658, %v8657
    %v8759 = vpack.c.b16 %v8660, %v8659
    %v8760 = vpack.c.b16 %v8662, %v8661
    %v8761 = vpack.c.b16 %v8664, %v8663
    %v8762 = vpack.c.b16 %v8666, %v8665
    %v8763 = vpack.c.b16 %v8668, %v8667
    %v8764 = vpack.c.b16 %v8670, %v8669
    %v8765 = vpack.c.b16 %v8672, %v8671
    %v8766 = vpack.c.b16 %v8674, %v8673
    %v8767 = vpack.c.b16 %v8676, %v8675
    %v8768 = vpack.c.b16 %v8678, %v8677
    %v8769 = vpack.c.b16 %v8680, %v8679
    %v8770 = vpack.c.b16 %v8682, %v8681
    %v8771 = vpack.c.b16 %v8684, %v8683
    %v8772 = vpack.c.b16 %v8686, %v8685
    %v8773 = vpack.c.b16 %v8688, %v8687
    %v8774 = vpack.c.b16 %v8690, %v8689
    %v8775 = vpack.c.b16 %v8692, %v8691
    %v8776 = vpack.c.b16 %v8694, %v8693
    %v8777 = vpack.c.b16 %v8696, %v8695
    %v8778 = vpack.c.b16 %v8698, %v8697
    %v8779 = vpack.c.b16 %v8700, %v8699
    %v8780 = vpack.c.b16 %v8702, %v8701
    %v8781 = vpack.c.b16 %v8704, %v8703
    %v8782 = vpack.c.b16 %v8706, %v8705
    %v8783 = vpack.c.b16 %v8708, %v8707
    %v8784 = vpack.c.b16 %v8710, %v8709
    %v8785 = vpack.c.b16 %v8712, %v8711
    %v8786 = vpack.c.b16 %v8714, %v8713
    %v8787 = vpack.c.b16 %v8716, %v8715
    %v8788 = vpack.c.b16 %v8718, %v8717
    %v8789 = vpack.c.b16 %v8720, %v8719
    %v8790 = vpack.c.b16 %v8722, %v8721
    %v8791 = vpack.c.b16 %v8724, %v8723
    %v8792 = vpack.c.b16 %v8726, %v8725
    %v8793 = vpack.c.b16 %v8728, %v8727
    %v8794 = vpack.c.b16 %v8730, %v8729
    %8859 = vmatpush.bf16.msra.mxu0 %v8738
    %8860 = vmatpush.bf16.msra.mxu0 %v8737
    %8861 = vmatpush.bf16.msra.mxu0 %v8736
    %8862 = vmatpush.bf16.msra.mxu0 %v8735
    %8863 = vmatpush.bf16.msra.mxu0 %v8734
    %8864 = vmatpush.bf16.msra.mxu0 %v8733
    %8865 = vmatpush.bf16.msra.mxu0 %v8732
    %8866 = vmatpush.bf16.msra.mxu0 %v8731
    %8867 = vmatmul.bf16.gmra.mxu0 %v8335
    %v8868 = vpop.f32.mrf.mxu0
    %v8869 = vadd.f32 %v8473, %v8868
    %v8870 = vpop.f32.mrf.mxu0
    %8871 = vdwg.mxu0
    %8872 = vmatpush.bf16.msra.mxu0 %v8746
    %8873 = vmatpush.bf16.msra.mxu0 %v8745
    %8874 = vmatpush.bf16.msra.mxu0 %v8744
    %8875 = vmatpush.bf16.msra.mxu0 %v8743
    %8876 = vmatpush.bf16.msra.mxu0 %v8742
    %8877 = vmatpush.bf16.msra.mxu0 %v8741
    %8878 = vmatpush.bf16.msra.mxu0 %v8740
    %8879 = vmatpush.bf16.msra.mxu0 %v8739
    %8880 = vmatmul.bf16.gmra.mxu0 %v8336
    %v8881 = vpop.f32.mrf.mxu0
    %v8882 = vadd.f32 %v8869, %v8881
    %v8883 = vpop.f32.mrf.mxu0
    %8884 = vdwg.mxu0
    %8885 = vmatpush.bf16.msra.mxu0 %v8754
    %8886 = vmatpush.bf16.msra.mxu0 %v8753
    %8887 = vmatpush.bf16.msra.mxu0 %v8752
    %8888 = vmatpush.bf16.msra.mxu0 %v8751
    %8889 = vmatpush.bf16.msra.mxu0 %v8750
    %8890 = vmatpush.bf16.msra.mxu0 %v8749
    %8891 = vmatpush.bf16.msra.mxu0 %v8748
    %8892 = vmatpush.bf16.msra.mxu0 %v8747
    %8893 = vmatmul.bf16.gmra.mxu0 %v8337
    %v8894 = vpop.f32.mrf.mxu0
    %v8895 = vadd.f32 %v8882, %v8894
    %v8896 = vpop.f32.mrf.mxu0
    %8897 = vdwg.mxu0
    %8898 = vmatpush.bf16.msra.mxu0 %v8762
    %8899 = vmatpush.bf16.msra.mxu0 %v8761
    %8900 = vmatpush.bf16.msra.mxu0 %v8760
    %8901 = vmatpush.bf16.msra.mxu0 %v8759
    %8902 = vmatpush.bf16.msra.mxu0 %v8758
    %8903 = vmatpush.bf16.msra.mxu0 %v8757
    %8904 = vmatpush.bf16.msra.mxu0 %v8756
    %8905 = vmatpush.bf16.msra.mxu0 %v8755
    %8906 = vmatmul.bf16.gmra.mxu0 %v8338
    %v8907 = vpop.f32.mrf.mxu0
    %v8908 = vadd.f32 %v8895, %v8907
    %v8909 = vpop.f32.mrf.mxu0
    %8910 = vdwg.mxu0
    %8911 = vmatpush.bf16.msra.mxu0 %v8770
    %8912 = vmatpush.bf16.msra.mxu0 %v8769
    %8913 = vmatpush.bf16.msra.mxu0 %v8768
    %8914 = vmatpush.bf16.msra.mxu0 %v8767
    %8915 = vmatpush.bf16.msra.mxu0 %v8766
    %8916 = vmatpush.bf16.msra.mxu0 %v8765
    %8917 = vmatpush.bf16.msra.mxu0 %v8764
    %8918 = vmatpush.bf16.msra.mxu0 %v8763
    %8919 = vmatmul.bf16.gmra.mxu0 %v8339
    %v8920 = vpop.f32.mrf.mxu0
    %v8921 = vadd.f32 %v8908, %v8920
    %v8922 = vpop.f32.mrf.mxu0
    %8923 = vdwg.mxu0
    %8924 = vmatpush.bf16.msra.mxu0 %v8778
    %8925 = vmatpush.bf16.msra.mxu0 %v8777
    %8926 = vmatpush.bf16.msra.mxu0 %v8776
    %8927 = vmatpush.bf16.msra.mxu0 %v8775
    %8928 = vmatpush.bf16.msra.mxu0 %v8774
    %8929 = vmatpush.bf16.msra.mxu0 %v8773
    %8930 = vmatpush.bf16.msra.mxu0 %v8772
    %8931 = vmatpush.bf16.msra.mxu0 %v8771
    %8932 = vmatmul.bf16.gmra.mxu0 %v8340
    %v8933 = vpop.f32.mrf.mxu0
    %v8934 = vadd.f32 %v8921, %v8933
    %v8935 = vpop.f32.mrf.mxu0
    %8936 = vdwg.mxu0
    %8937 = vmatpush.bf16.msra.mxu0 %v8786
    %8938 = vmatpush.bf16.msra.mxu0 %v8785
    %8939 = vmatpush.bf16.msra.mxu0 %v8784
    %8940 = vmatpush.bf16.msra.mxu0 %v8783
    %8941 = vmatpush.bf16.msra.mxu0 %v8782
    %8942 = vmatpush.bf16.msra.mxu0 %v8781
    %8943 = vmatpush.bf16.msra.mxu0 %v8780
    %8944 = vmatpush.bf16.msra.mxu0 %v8779
    %8945 = vmatmul.bf16.gmra.mxu0 %v8341
    %v8946 = vpop.f32.mrf.mxu0
    %v8947 = vadd.f32 %v8934, %v8946
    %v8948 = vpop.f32.mrf.mxu0
    %8949 = vdwg.mxu0
    %8950 = vmatpush.bf16.msra.mxu0 %v8794
    %8951 = vmatpush.bf16.msra.mxu0 %v8793
    %8952 = vmatpush.bf16.msra.mxu0 %v8792
    %8953 = vmatpush.bf16.msra.mxu0 %v8791
    %8954 = vmatpush.bf16.msra.mxu0 %v8790
    %8955 = vmatpush.bf16.msra.mxu0 %v8789
    %8956 = vmatpush.bf16.msra.mxu0 %v8788
    %8957 = vmatpush.bf16.msra.mxu0 %v8787
    %8958 = vmatmul.bf16.gmra.mxu0 %v8342
    %v8959 = vpop.f32.mrf.mxu0
    %v8960 = vadd.f32 %v8947, %v8959
    %v8961 = vpop.f32.mrf.mxu0
    %8962 = vdwg.mxu0
    %vm8963 = vcmask 130048
    %8964 = vst.msk [vmem:[#allocation2] sm:$0xff] %vm8963, %v8960
    // Predicated region
    $region30: #{custom_network_forward.1} parent=1 // pred_check
      _
    $region31: #{custom_network_forward.1} parent=1 // pred_check_branch
      %8966 = sbr.rel (0) target = $region33
    $region32: #{custom_network_forward.1} parent=1 // pred_region
      %8968 = vsyncadd [#allocation3], 0
      %s8970 = sshll.u32 [#allocation2], 4
      %s8971 = int_to_ptr.vmem [resolvable:$true] %s8970
      %s8972 = sshll.u32 %s7, 4
      %s8973 = int_to_ptr.hbm [resolvable:$true] %s8972
      %8975 = dma.vmem_to_hbm [thread:$0]  %s8971, 128, %s8973, [#allocation3]
    $region33: #{custom_network_forward.1} parent=1 // pred_fallthru
      _
    // Predicated region
    $region34: #{custom_network_forward.1} parent=1 // pred_check
      _
    $region35: #{custom_network_forward.1} parent=1 // pred_check_branch
      %8977 = sbr.rel (0) target = $region37
    $region36: #{custom_network_forward.1} parent=1 // pred_region
      %8979 = dma.done [#allocation3], 128
    $region37: #{custom_network_forward.1} parent=1 // pred_fallthru
      _
    %8980 = vsyncpa [#allocation3], 1

</llo_original>
